<compile_context>
chip_gen: v7x
topology: tpu7x:2x2x1
jax: 0.10.0
libtpu: 0.0.40
codegen_flags: <defaults>
</compile_context>

<pallas_src>
import functools

import numpy as np
import jax
import jax.numpy as jnp
from jax import lax
from jax.experimental import pallas as pl
from jax.experimental.pallas import tpu as pltpu

_LOGIT_LANES = 128   # classifier logits padded to a full lane width


def _graphs_per_block(B, N, target_rows=128):
    """Pick G graphs per grid step: G*N ~ target_rows, G | B, grid >= 2 if B >= 2.

    target_rows=128 is the v5e sweet spot; 128-256 is fine on v6e/v7x too.
    """
    g = max(1, min(B, target_rows // max(N, 1)))
    if B >= 2:
        g = min(g, B // 2)            # keep >= 2 grid blocks (v7x: 2 TensorCores)
    g = max(g, 1)
    while B % g != 0:
        g -= 1
    return g


def _ggnn_kernel(num_steps, nodes_per_graph,
                 h0_ref, biasa_ref, adj_ref, wet_ref, wiht_ref, whht_ref,
                 bias_ref, wc_ref, bc_ref, out_ref):
    """One block of G graphs per grid step.

    h0_ref    (G*N, D)           f32  initial node states (features zero-padded)
    biasa_ref (G*N, D)           f32  hoisted edge bias: sum_e deg_e(dst) * b_e
    adj_ref   (1, E, G*N, G*N)   mxu  per-edge-type block-diagonal adjacency
    wet_ref   (E, D, D)          mxu  W_e^T per edge type
    wiht_ref  (3, D, D)          mxu  GRU W_ih^T per gate (r, z, n)
    whht_ref  (3, D, D)          mxu  GRU W_hh^T per gate (r, z, n)
    bias_ref  (4, D)             f32  rows: [b_ir+b_hr, b_iz+b_hz, b_in, b_hn]
    wc_ref    (D, 128)           f32  classifier W^T, zero lane-padded
    bc_ref    (1, 128)           f32  classifier bias, pad lanes = -1e30
    out_ref   (1, G_pad, 128)    f32  rows [0, G), cols [0, 2) hold the softmax
    """
    GN, D = h0_ref.shape
    N = nodes_per_graph
    G = GN // N
    E = adj_ref.shape[1]
    mxu = adj_ref.dtype

    def mdot(a, b):
        return jnp.dot(a, b, preferred_element_type=jnp.float32)

    b_r = bias_ref[0:1, :]
    b_z = bias_ref[1:2, :]
    b_in = bias_ref[2:3, :]
    b_hn = bias_ref[3:4, :]

    def step(_, h):
        h_m = h.astype(mxu)
        # --- message passing + aggregation: per edge type, no scratch, no regroup ---
        a = biasa_ref[...]                                   # (GN, D) f32
        for e in range(E):
            msg = mdot(h_m, wet_ref[e, :, :]).astype(mxu)    # (GN, D)
            a = a + mdot(adj_ref[0, e, :, :], msg)           # block-diag adj @ msg
        a_m = a.astype(mxu)
        # --- GRUCell(input=a, hidden=h): per-gate (D, D) matmuls, aligned tiles ---
        r = jax.nn.sigmoid(mdot(a_m, wiht_ref[0, :, :])
                           + mdot(h_m, whht_ref[0, :, :]) + b_r)
        z = jax.nn.sigmoid(mdot(a_m, wiht_ref[1, :, :])
                           + mdot(h_m, whht_ref[1, :, :]) + b_z)
        n = jnp.tanh(mdot(a_m, wiht_ref[2, :, :]) + b_in
                     + r * (mdot(h_m, whht_ref[2, :, :]) + b_hn))
        return (1.0 - z) * n + z * h

    # num_steps is a small static constant: fully unroll for one big basic block.
    h = lax.fori_loop(0, num_steps, step, h0_ref[...], unroll=True)

    # --- per-graph node sums -> (G_pad, D), one lane-dense classifier matmul ---
    g_pad = out_ref.shape[1]
    rows = [jnp.sum(h[g * N:(g + 1) * N, :], axis=0, keepdims=True)
            for g in range(G)]
    if G < g_pad:
        rows.append(jnp.zeros((g_pad - G, D), jnp.float32))
    gsum = jnp.concatenate(rows, axis=0)                     # (G_pad, D) f32
    logits = mdot(gsum, wc_ref[...]) + bc_ref[...]           # (G_pad, 128), pads=-1e30
    m = jnp.max(logits, axis=1, keepdims=True)
    p = jnp.exp(logits - m)                                  # pad lanes -> exactly 0
    out_ref[0, :, :] = p / jnp.sum(p, axis=1, keepdims=True)


def ggnn_sum_softmax(feats, adj, we, be, wih, whh, bih, bhh, wc, bc,
                     *, num_steps, mxu_dtype=jnp.bfloat16, target_rows=128):
    """Batched GGNNSum_softmax forward.

    feats : (B, N, input_dim)  node features (B graphs, N nodes per graph)
    adj   : (E, B, N, N)       adjacency per edge type, adj[e, b, dst, src] in {0,1}
    we/be : (E, D, D) / (E, D) per-edge-type Linear (GatedGraphConv)
    wih/whh/bih/bhh            GRUCell params, PyTorch gate order (r, z, n)
    wc/bc : (2, D) / (2,)      classifier
    """
    # TODO(synk): variable-size / sparse DGL graphs would need scalar-prefetch
    # gather of edge lists; this kernel assumes equal-size dense per-graph adjacency.
    E, B, N, _ = adj.shape
    d_in = feats.shape[-1]
    D = we.shape[-1]
    f32 = jnp.float32
    assert d_in <= D, "DGL GatedGraphConv requires in_feats <= out_feats"

    G = _graphs_per_block(B, N, target_rows)
    GN = G * N
    nb = B // G
    G_PAD = ((max(G, 8) + 7) // 8) * 8

    # bf16 (and other sub-32-bit) operands pack 16 rows per sublane tile; fall
    # back to f32 adjacency/weights if the node-row block is not 16-aligned.
    if jnp.dtype(mxu_dtype).itemsize < 4 and GN % 16 != 0:
        mxu_dtype = f32
    assert GN % 8 == 0, "G*N (node rows per block) must be a multiple of 8"

    # DGL GatedGraphConv: zero-pad features input_dim -> output_dim.
    h0 = jnp.pad(feats.reshape(B * N, d_in).astype(f32), ((0, 0), (0, D - d_in)))

    # Hoisted edge bias: adj is step-invariant, so sum_e adj_e @ (1 b_e^T)
    # = deg_e(dst) * b_e can be precomputed once (exact elementwise f32 math).
    deg = jnp.sum(adj.astype(f32), axis=3)                            # (E, B, N)
    bias_a = jnp.sum(deg[:, :, :, None] * be.astype(f32)[:, None, None, :],
                     axis=0).reshape(B * N, D)

    # Per-block, per-edge-type block-diagonal adjacency: (nb, E, GN, GN).
    adj_f = adj.astype(f32).reshape(E, nb, G, N, N)
    eyeg = jnp.eye(G, dtype=f32)
    adj_bd = jnp.einsum("ebgmn,gh->ebgmhn", adj_f, eyeg).reshape(E, nb, GN, GN)
    adj_blocks = jnp.transpose(adj_bd, (1, 0, 2, 3)).astype(mxu_dtype)

    # Pre-transposed weights, split per edge type / per gate (aligned (D, D) tiles).
    we_t = jnp.transpose(we.astype(f32), (0, 2, 1)).astype(mxu_dtype)          # (E, D, D)
    wih_t = jnp.stack([wih[g * D:(g + 1) * D, :].T
                       for g in range(3)]).astype(mxu_dtype)                   # (3, D, D)
    whh_t = jnp.stack([whh[g * D:(g + 1) * D, :].T
                       for g in range(3)]).astype(mxu_dtype)                   # (3, D, D)
    bias4 = jnp.stack([bih[0:D] + bhh[0:D],
                       bih[D:2 * D] + bhh[D:2 * D],
                       bih[2 * D:3 * D],
                       bhh[2 * D:3 * D]]).astype(f32)                          # (4, D)

    # Lane-padded classifier; -1e30 pad bias keeps the 128-lane softmax exact.
    wc_pad = jnp.zeros((D, _LOGIT_LANES), f32).at[:, :2].set(wc.T.astype(f32))
    bc_pad = jnp.full((1, _LOGIT_LANES), -1e30, f32).at[0, :2].set(
        bc.reshape(-1).astype(f32))

    # Scoped-VMEM budget: double-buffered blocks + headroom; no artificial 32 MiB
    # floor (v7x only has 64 MiB VMEM per TensorCore).
    def nbytes(shape, dt):
        n = 1
        for s in shape:
            n *= int(s)
        return n * jnp.dtype(dt).itemsize

    resident = 2 * (2 * nbytes((GN, D), f32)                 # h0 + bias_a blocks
                    + nbytes((E, GN, GN), mxu_dtype)         # adjacency block
                    + nbytes((E, D, D), mxu_dtype)
                    + 2 * nbytes((3, D, D), mxu_dtype)
                    + nbytes((4, D), f32)
                    + nbytes((D, _LOGIT_LANES), f32)
                    + nbytes((1, _LOGIT_LANES), f32)
                    + nbytes((1, G_PAD, _LOGIT_LANES), f32))
    vmem_limit = int(min(64 * 2**20, max(4 * resident, 4 * 2**20)))

    # Constant-index weight blocks stay double-buffered by default; at <64 KiB
    # total the extra copy is negligible even on v7x's 64 MiB VMEM.
    out = pl.pallas_call(
        functools.partial(_ggnn_kernel, num_steps, N),
        out_shape=jax.ShapeDtypeStruct((nb, G_PAD, _LOGIT_LANES), f32),
        grid=(nb,),
        in_specs=[
            pl.BlockSpec((GN, D), lambda b: (b, 0)),               # h0        (per block)
            pl.BlockSpec((GN, D), lambda b: (b, 0)),               # edge bias (per block)
            pl.BlockSpec((1, E, GN, GN), lambda b: (b, 0, 0, 0)),  # adjacency (per block)
            pl.BlockSpec((E, D, D), lambda b: (0, 0, 0)),          # W_e^T
            pl.BlockSpec((3, D, D), lambda b: (0, 0, 0)),          # GRU W_ih^T per gate
            pl.BlockSpec((3, D, D), lambda b: (0, 0, 0)),          # GRU W_hh^T per gate
            pl.BlockSpec((4, D), lambda b: (0, 0)),                # GRU biases
            pl.BlockSpec((D, _LOGIT_LANES), lambda b: (0, 0)),     # classifier W^T (padded)
            pl.BlockSpec((1, _LOGIT_LANES), lambda b: (0, 0)),     # classifier bias (padded)
        ],
        out_specs=pl.BlockSpec((1, G_PAD, _LOGIT_LANES), lambda b: (b, 0, 0)),
        compiler_params=pltpu.CompilerParams(
            dimension_semantics=("parallel",),      # blocks shard across v7x's 2 TCs
            vmem_limit_bytes=vmem_limit,
        ),
    )(h0, bias_a, adj_blocks, we_t, wih_t, whh_t, bias4, wc_pad, bc_pad)
    return out[:, :G, :2].reshape(B, 2)


# ------------------------- pure-JAX reference -------------------------------
def reference(feats, adj, we, be, wih, whh, bih, bhh, wc, bc,
              *, num_steps, mxu_dtype=None):
    """Per-edge-type GGNN + GRUCell + node-sum + linear + softmax.

    If mxu_dtype is not None, matmul inputs are cast to that dtype (f32
    accumulation), mirroring the kernel's mixed-precision MXU path.
    """
    E, B, N, _ = adj.shape
    d_in = feats.shape[-1]
    D = we.shape[-1]
    cast = (lambda x: x.astype(mxu_dtype)) if mxu_dtype is not None else (lambda x: x)

    def dot32(a, b):
        return jnp.dot(cast(a), cast(b), preferred_element_type=jnp.float32)

    h = jnp.pad(feats.reshape(B * N, d_in).astype(jnp.float32),
                ((0, 0), (0, D - d_in)))
    # Dense block-diagonal adjacency over the batched graphs.
    adj_np = np.zeros((E, B * N, B * N), np.float32)
    adj_host = np.asarray(adj, np.float32)
    for b in range(B):
        adj_np[:, b * N:(b + 1) * N, b * N:(b + 1) * N] = adj_host[:, b]
    adj_d = jnp.asarray(adj_np)
    deg = jnp.sum(adj_d, axis=2)                                    # (E, B*N)
    bias_a = jnp.sum(deg[:, :, None] * be.astype(jnp.float32)[:, None, :], axis=0)

    for _ in range(num_steps):
        a = bias_a
        for e in range(E):
            msg = dot32(h, we[e].T)
            if mxu_dtype is not None:
                msg = msg.astype(mxu_dtype)
            a = a + jnp.dot(cast(adj_d[e]), cast(msg),
                            preferred_element_type=jnp.float32)
        xg = dot32(a, wih.T) + bih.reshape(1, -1)
        hg = dot32(h, whh.T) + bhh.reshape(1, -1)
        r = jax.nn.sigmoid(xg[:, 0:D] + hg[:, 0:D])
        z = jax.nn.sigmoid(xg[:, D:2 * D] + hg[:, D:2 * D])
        n = jnp.tanh(xg[:, 2 * D:3 * D] + r * hg[:, 2 * D:3 * D])
        h = (1.0 - z) * n + z * h

    gsum = jnp.sum(h.reshape(B, N, D), axis=1)
    logits = jnp.dot(gsum, wc.T, precision=lax.Precision.HIGHEST,
                     preferred_element_type=jnp.float32) + bc.reshape(1, -1)
    return jax.nn.softmax(logits, axis=1)


if __name__ == "__main__":
    # Small, module-consistent shapes (exercises the G>1 graphs-per-block path).
    input_dim = 16        # GGNN in_feats
    output_dim = 32       # GGNN out_feats (= classifier in_features)
    max_edge_types = 3    # n_etypes
    num_steps = 8         # n_steps
    B = 8                 # graphs in batch
    N = 16                # nodes per graph

    key = jax.random.PRNGKey(0)
    ks = jax.random.split(key, 10)

    feats = jax.random.normal(ks[0], (B, N, input_dim), jnp.float32)
    adj = jax.random.bernoulli(ks[1], 0.25,
                               (max_edge_types, B, N, N)).astype(jnp.float32)

    s = 0.1
    we = s * jax.random.normal(ks[2], (max_edge_types, output_dim, output_dim), jnp.float32)
    be = s * jax.random.normal(ks[3], (max_edge_types, output_dim), jnp.float32)
    wih = s * jax.random.normal(ks[4], (3 * output_dim, output_dim), jnp.float32)
    whh = s * jax.random.normal(ks[5], (3 * output_dim, output_dim), jnp.float32)
    bih = s * jax.random.normal(ks[6], (3 * output_dim,), jnp.float32)
    bhh = s * jax.random.normal(ks[7], (3 * output_dim,), jnp.float32)
    wc = s * jax.random.normal(ks[8], (2, output_dim), jnp.float32)
    bc = s * jax.random.normal(ks[9], (2,), jnp.float32)

    out = ggnn_sum_softmax(feats, adj, we, be, wih, whh, bih, bhh, wc, bc,
                           num_steps=num_steps, mxu_dtype=jnp.bfloat16)
    out = jax.block_until_ready(out)
    assert out.shape == (B, 2)

    # Tight check vs. a reference that mirrors the kernel's bf16-input / f32-acc math.
    ref_matched = reference(feats, adj, we, be, wih, whh, bih, bhh, wc, bc,
                            num_steps=num_steps, mxu_dtype=jnp.bfloat16)
    # Loose check vs. the fully-f32 module semantics (covers bf16 quantization drift).
    ref_f32 = reference(feats, adj, we, be, wih, whh, bih, bhh, wc, bc,
                        num_steps=num_steps, mxu_dtype=None)

    out_np = np.asarray(out)
    np.testing.assert_allclose(out_np, np.asarray(ref_matched), rtol=1e-2, atol=1e-2)
    np.testing.assert_allclose(out_np, np.asarray(ref_f32), rtol=5e-2, atol=5e-2)
    np.testing.assert_allclose(out_np.sum(axis=1), np.ones(B), rtol=1e-5, atol=1e-5)

    print("KERNEL_OK")
</pallas_src>

<mosaic_0001>
module attributes {stable_mosaic.version = 11 : i64} {
  func.func @_ggnn_kernel(%arg0: i32, %arg1: memref<64x32xf32, #tpu.memory_space<vmem>>, %arg2: memref<64x32xf32, #tpu.memory_space<vmem>>, %arg3: memref<1x3x64x64xbf16, #tpu.memory_space<vmem>>, %arg4: memref<3x32x32xbf16, #tpu.memory_space<vmem>>, %arg5: memref<3x32x32xbf16, #tpu.memory_space<vmem>>, %arg6: memref<3x32x32xbf16, #tpu.memory_space<vmem>>, %arg7: memref<4x32xf32, #tpu.memory_space<vmem>>, %arg8: memref<32x128xf32, #tpu.memory_space<vmem>>, %arg9: memref<1x128xf32, #tpu.memory_space<vmem>>, %arg10: memref<1x8x128xf32, #tpu.memory_space<vmem>>) attributes {dimension_semantics = [#tpu.dimension_semantics<parallel>], iteration_bounds = array<i64: 2>, scalar_prefetch = 0 : i64, scratch_operands = 0 : i64, tpu.core_type = #tpu.core_type<tc>, window_params = [{transform_indices = @transform_0, window_bounds = array<i64: 64, 32>}, {transform_indices = @transform_1, window_bounds = array<i64: 64, 32>}, {transform_indices = @transform_2, window_bounds = array<i64: 1, 3, 64, 64>}, {pipeline_mode = #tpu.pipeline_mode<synchronous>, transform_indices = @transform_3, window_bounds = array<i64: 3, 32, 32>}, {pipeline_mode = #tpu.pipeline_mode<synchronous>, transform_indices = @transform_4, window_bounds = array<i64: 3, 32, 32>}, {pipeline_mode = #tpu.pipeline_mode<synchronous>, transform_indices = @transform_5, window_bounds = array<i64: 3, 32, 32>}, {pipeline_mode = #tpu.pipeline_mode<synchronous>, transform_indices = @transform_6, window_bounds = array<i64: 4, 32>}, {pipeline_mode = #tpu.pipeline_mode<synchronous>, transform_indices = @transform_7, window_bounds = array<i64: 32, 128>}, {pipeline_mode = #tpu.pipeline_mode<synchronous>, transform_indices = @transform_8, window_bounds = array<i64: 1, 128>}, {transform_indices = @transform_9, window_bounds = array<i64: 1, 8, 128>}]} {
    %c0 = arith.constant 0 : index
    %c0_0 = arith.constant 0 : index
    %0 = vector.load %arg7[%c0, %c0_0] : memref<4x32xf32, #tpu.memory_space<vmem>>, vector<1x32xf32>
    %c1 = arith.constant 1 : index
    %c0_1 = arith.constant 0 : index
    %1 = vector.load %arg7[%c1, %c0_1] : memref<4x32xf32, #tpu.memory_space<vmem>>, vector<1x32xf32>
    %c2 = arith.constant 2 : index
    %c0_2 = arith.constant 0 : index
    %2 = vector.load %arg7[%c2, %c0_2] : memref<4x32xf32, #tpu.memory_space<vmem>>, vector<1x32xf32>
    %c3 = arith.constant 3 : index
    %c0_3 = arith.constant 0 : index
    %3 = vector.load %arg7[%c3, %c0_3] : memref<4x32xf32, #tpu.memory_space<vmem>>, vector<1x32xf32>
    %c0_4 = arith.constant 0 : index
    %c0_5 = arith.constant 0 : index
    %4 = vector.load %arg1[%c0_4, %c0_5] : memref<64x32xf32, #tpu.memory_space<vmem>>, vector<64x32xf32>
    %c0_i32 = arith.constant 0 : i32
    %5 = arith.truncf %4 : vector<64x32xf32> to vector<64x32xbf16>
    %c0_6 = arith.constant 0 : index
    %c0_7 = arith.constant 0 : index
    %6 = vector.load %arg2[%c0_6, %c0_7] : memref<64x32xf32, #tpu.memory_space<vmem>>, vector<64x32xf32>
    %c0_8 = arith.constant 0 : index
    %c0_9 = arith.constant 0 : index
    %c0_10 = arith.constant 0 : index
    %7 = vector.load %arg4[%c0_8, %c0_9, %c0_10] : memref<3x32x32xbf16, #tpu.memory_space<vmem>>, vector<1x32x32xbf16>
    %8 = vector.shape_cast %7 : vector<1x32x32xbf16> to vector<32x32xbf16>
    %cst = arith.constant dense<0.000000e+00> : vector<64x32xf32>
    %9 = tpu.matmul %5, %8, %cst {dimension_numbers = #tpu.dot_dimension_numbers<[1], [0], [0], [1], [0, 0, 1, 1], [], []>} : vector<64x32xbf16>, vector<32x32xbf16>, vector<64x32xf32> -> vector<64x32xf32>
    %10 = arith.truncf %9 : vector<64x32xf32> to vector<64x32xbf16>
    %c0_11 = arith.constant 0 : index
    %c0_12 = arith.constant 0 : index
    %c0_13 = arith.constant 0 : index
    %c0_14 = arith.constant 0 : index
    %11 = vector.load %arg3[%c0_11, %c0_12, %c0_13, %c0_14] : memref<1x3x64x64xbf16, #tpu.memory_space<vmem>>, vector<1x1x64x64xbf16>
    %12 = vector.shape_cast %11 : vector<1x1x64x64xbf16> to vector<64x64xbf16>
    %cst_15 = arith.constant dense<0.000000e+00> : vector<64x32xf32>
    %13 = tpu.matmul %12, %10, %cst_15 {dimension_numbers = #tpu.dot_dimension_numbers<[1], [0], [0], [1], [0, 0, 1, 1], [], []>} : vector<64x64xbf16>, vector<64x32xbf16>, vector<64x32xf32> -> vector<64x32xf32>
    %14 = arith.addf %6, %13 : vector<64x32xf32>
    %c1_16 = arith.constant 1 : index
    %c0_17 = arith.constant 0 : index
    %c0_18 = arith.constant 0 : index
    %15 = vector.load %arg4[%c1_16, %c0_17, %c0_18] : memref<3x32x32xbf16, #tpu.memory_space<vmem>>, vector<1x32x32xbf16>
    %16 = vector.shape_cast %15 : vector<1x32x32xbf16> to vector<32x32xbf16>
    %cst_19 = arith.constant dense<0.000000e+00> : vector<64x32xf32>
    %17 = tpu.matmul %5, %16, %cst_19 {dimension_numbers = #tpu.dot_dimension_numbers<[1], [0], [0], [1], [0, 0, 1, 1], [], []>} : vector<64x32xbf16>, vector<32x32xbf16>, vector<64x32xf32> -> vector<64x32xf32>
    %18 = arith.truncf %17 : vector<64x32xf32> to vector<64x32xbf16>
    %c0_20 = arith.constant 0 : index
    %c1_21 = arith.constant 1 : index
    %c0_22 = arith.constant 0 : index
    %c0_23 = arith.constant 0 : index
    %19 = vector.load %arg3[%c0_20, %c1_21, %c0_22, %c0_23] : memref<1x3x64x64xbf16, #tpu.memory_space<vmem>>, vector<1x1x64x64xbf16>
    %20 = vector.shape_cast %19 : vector<1x1x64x64xbf16> to vector<64x64xbf16>
    %cst_24 = arith.constant dense<0.000000e+00> : vector<64x32xf32>
    %21 = tpu.matmul %20, %18, %cst_24 {dimension_numbers = #tpu.dot_dimension_numbers<[1], [0], [0], [1], [0, 0, 1, 1], [], []>} : vector<64x64xbf16>, vector<64x32xbf16>, vector<64x32xf32> -> vector<64x32xf32>
    %22 = arith.addf %14, %21 : vector<64x32xf32>
    %c2_25 = arith.constant 2 : index
    %c0_26 = arith.constant 0 : index
    %c0_27 = arith.constant 0 : index
    %23 = vector.load %arg4[%c2_25, %c0_26, %c0_27] : memref<3x32x32xbf16, #tpu.memory_space<vmem>>, vector<1x32x32xbf16>
    %24 = vector.shape_cast %23 : vector<1x32x32xbf16> to vector<32x32xbf16>
    %cst_28 = arith.constant dense<0.000000e+00> : vector<64x32xf32>
    %25 = tpu.matmul %5, %24, %cst_28 {dimension_numbers = #tpu.dot_dimension_numbers<[1], [0], [0], [1], [0, 0, 1, 1], [], []>} : vector<64x32xbf16>, vector<32x32xbf16>, vector<64x32xf32> -> vector<64x32xf32>
    %26 = arith.truncf %25 : vector<64x32xf32> to vector<64x32xbf16>
    %c0_29 = arith.constant 0 : index
    %c2_30 = arith.constant 2 : index
    %c0_31 = arith.constant 0 : index
    %c0_32 = arith.constant 0 : index
    %27 = vector.load %arg3[%c0_29, %c2_30, %c0_31, %c0_32] : memref<1x3x64x64xbf16, #tpu.memory_space<vmem>>, vector<1x1x64x64xbf16>
    %28 = vector.shape_cast %27 : vector<1x1x64x64xbf16> to vector<64x64xbf16>
    %cst_33 = arith.constant dense<0.000000e+00> : vector<64x32xf32>
    %29 = tpu.matmul %28, %26, %cst_33 {dimension_numbers = #tpu.dot_dimension_numbers<[1], [0], [0], [1], [0, 0, 1, 1], [], []>} : vector<64x64xbf16>, vector<64x32xbf16>, vector<64x32xf32> -> vector<64x32xf32>
    %30 = arith.addf %22, %29 : vector<64x32xf32>
    %31 = arith.truncf %30 : vector<64x32xf32> to vector<64x32xbf16>
    %c0_34 = arith.constant 0 : index
    %c0_35 = arith.constant 0 : index
    %c0_36 = arith.constant 0 : index
    %32 = vector.load %arg5[%c0_34, %c0_35, %c0_36] : memref<3x32x32xbf16, #tpu.memory_space<vmem>>, vector<1x32x32xbf16>
    %33 = vector.shape_cast %32 : vector<1x32x32xbf16> to vector<32x32xbf16>
    %cst_37 = arith.constant dense<0.000000e+00> : vector<64x32xf32>
    %34 = tpu.matmul %31, %33, %cst_37 {dimension_numbers = #tpu.dot_dimension_numbers<[1], [0], [0], [1], [0, 0, 1, 1], [], []>} : vector<64x32xbf16>, vector<32x32xbf16>, vector<64x32xf32> -> vector<64x32xf32>
    %c0_38 = arith.constant 0 : index
    %c0_39 = arith.constant 0 : index
    %c0_40 = arith.constant 0 : index
    %35 = vector.load %arg6[%c0_38, %c0_39, %c0_40] : memref<3x32x32xbf16, #tpu.memory_space<vmem>>, vector<1x32x32xbf16>
    %36 = vector.shape_cast %35 : vector<1x32x32xbf16> to vector<32x32xbf16>
    %cst_41 = arith.constant dense<0.000000e+00> : vector<64x32xf32>
    %37 = tpu.matmul %5, %36, %cst_41 {dimension_numbers = #tpu.dot_dimension_numbers<[1], [0], [0], [1], [0, 0, 1, 1], [], []>} : vector<64x32xbf16>, vector<32x32xbf16>, vector<64x32xf32> -> vector<64x32xf32>
    %38 = arith.addf %34, %37 : vector<64x32xf32>
    %39 = vector.broadcast %0 : vector<1x32xf32> to vector<64x32xf32>
    %40 = arith.addf %38, %39 : vector<64x32xf32>
    %41 = arith.negf %40 : vector<64x32xf32>
    %42 = math.exp %41 : vector<64x32xf32>
    %cst_42 = arith.constant 1.000000e+00 : f32
    %43 = vector.broadcast %cst_42 : f32 to vector<64x32xf32>
    %44 = arith.addf %43, %42 : vector<64x32xf32>
    %45 = arith.divf %43, %44 : vector<64x32xf32>
    %c1_43 = arith.constant 1 : index
    %c0_44 = arith.constant 0 : index
    %c0_45 = arith.constant 0 : index
    %46 = vector.load %arg5[%c1_43, %c0_44, %c0_45] : memref<3x32x32xbf16, #tpu.memory_space<vmem>>, vector<1x32x32xbf16>
    %47 = vector.shape_cast %46 : vector<1x32x32xbf16> to vector<32x32xbf16>
    %cst_46 = arith.constant dense<0.000000e+00> : vector<64x32xf32>
    %48 = tpu.matmul %31, %47, %cst_46 {dimension_numbers = #tpu.dot_dimension_numbers<[1], [0], [0], [1], [0, 0, 1, 1], [], []>} : vector<64x32xbf16>, vector<32x32xbf16>, vector<64x32xf32> -> vector<64x32xf32>
    %c1_47 = arith.constant 1 : index
    %c0_48 = arith.constant 0 : index
    %c0_49 = arith.constant 0 : index
    %49 = vector.load %arg6[%c1_47, %c0_48, %c0_49] : memref<3x32x32xbf16, #tpu.memory_space<vmem>>, vector<1x32x32xbf16>
    %50 = vector.shape_cast %49 : vector<1x32x32xbf16> to vector<32x32xbf16>
    %cst_50 = arith.constant dense<0.000000e+00> : vector<64x32xf32>
    %51 = tpu.matmul %5, %50, %cst_50 {dimension_numbers = #tpu.dot_dimension_numbers<[1], [0], [0], [1], [0, 0, 1, 1], [], []>} : vector<64x32xbf16>, vector<32x32xbf16>, vector<64x32xf32> -> vector<64x32xf32>
    %52 = arith.addf %48, %51 : vector<64x32xf32>
    %53 = vector.broadcast %1 : vector<1x32xf32> to vector<64x32xf32>
    %54 = arith.addf %52, %53 : vector<64x32xf32>
    %55 = arith.negf %54 : vector<64x32xf32>
    %56 = math.exp %55 : vector<64x32xf32>
    %cst_51 = arith.constant 1.000000e+00 : f32
    %57 = vector.broadcast %cst_51 : f32 to vector<64x32xf32>
    %58 = arith.addf %57, %56 : vector<64x32xf32>
    %59 = arith.divf %57, %58 : vector<64x32xf32>
    %c2_52 = arith.constant 2 : index
    %c0_53 = arith.constant 0 : index
    %c0_54 = arith.constant 0 : index
    %60 = vector.load %arg5[%c2_52, %c0_53, %c0_54] : memref<3x32x32xbf16, #tpu.memory_space<vmem>>, vector<1x32x32xbf16>
    %61 = vector.shape_cast %60 : vector<1x32x32xbf16> to vector<32x32xbf16>
    %cst_55 = arith.constant dense<0.000000e+00> : vector<64x32xf32>
    %62 = tpu.matmul %31, %61, %cst_55 {dimension_numbers = #tpu.dot_dimension_numbers<[1], [0], [0], [1], [0, 0, 1, 1], [], []>} : vector<64x32xbf16>, vector<32x32xbf16>, vector<64x32xf32> -> vector<64x32xf32>
    %63 = vector.broadcast %2 : vector<1x32xf32> to vector<64x32xf32>
    %64 = arith.addf %62, %63 : vector<64x32xf32>
    %c2_56 = arith.constant 2 : index
    %c0_57 = arith.constant 0 : index
    %c0_58 = arith.constant 0 : index
    %65 = vector.load %arg6[%c2_56, %c0_57, %c0_58] : memref<3x32x32xbf16, #tpu.memory_space<vmem>>, vector<1x32x32xbf16>
    %66 = vector.shape_cast %65 : vector<1x32x32xbf16> to vector<32x32xbf16>
    %cst_59 = arith.constant dense<0.000000e+00> : vector<64x32xf32>
    %67 = tpu.matmul %5, %66, %cst_59 {dimension_numbers = #tpu.dot_dimension_numbers<[1], [0], [0], [1], [0, 0, 1, 1], [], []>} : vector<64x32xbf16>, vector<32x32xbf16>, vector<64x32xf32> -> vector<64x32xf32>
    %68 = vector.broadcast %3 : vector<1x32xf32> to vector<64x32xf32>
    %69 = arith.addf %67, %68 : vector<64x32xf32>
    %70 = arith.mulf %45, %69 : vector<64x32xf32>
    %71 = arith.addf %64, %70 : vector<64x32xf32>
    %72 = math.tanh %71 : vector<64x32xf32>
    %cst_60 = arith.constant 1.000000e+00 : f32
    %73 = vector.broadcast %cst_60 : f32 to vector<64x32xf32>
    %74 = arith.subf %73, %59 : vector<64x32xf32>
    %75 = arith.mulf %74, %72 : vector<64x32xf32>
    %76 = arith.mulf %59, %4 : vector<64x32xf32>
    %77 = arith.addf %75, %76 : vector<64x32xf32>
    %c1_i32 = arith.constant 1 : i32
    %78 = arith.truncf %77 : vector<64x32xf32> to vector<64x32xbf16>
    %c0_61 = arith.constant 0 : index
    %c0_62 = arith.constant 0 : index
    %79 = vector.load %arg2[%c0_61, %c0_62] : memref<64x32xf32, #tpu.memory_space<vmem>>, vector<64x32xf32>
    %c0_63 = arith.constant 0 : index
    %c0_64 = arith.constant 0 : index
    %c0_65 = arith.constant 0 : index
    %80 = vector.load %arg4[%c0_63, %c0_64, %c0_65] : memref<3x32x32xbf16, #tpu.memory_space<vmem>>, vector<1x32x32xbf16>
    %81 = vector.shape_cast %80 : vector<1x32x32xbf16> to vector<32x32xbf16>
    %cst_66 = arith.constant dense<0.000000e+00> : vector<64x32xf32>
    %82 = tpu.matmul %78, %81, %cst_66 {dimension_numbers = #tpu.dot_dimension_numbers<[1], [0], [0], [1], [0, 0, 1, 1], [], []>} : vector<64x32xbf16>, vector<32x32xbf16>, vector<64x32xf32> -> vector<64x32xf32>
    %83 = arith.truncf %82 : vector<64x32xf32> to vector<64x32xbf16>
    %c0_67 = arith.constant 0 : index
    %c0_68 = arith.constant 0 : index
    %c0_69 = arith.constant 0 : index
    %c0_70 = arith.constant 0 : index
    %84 = vector.load %arg3[%c0_67, %c0_68, %c0_69, %c0_70] : memref<1x3x64x64xbf16, #tpu.memory_space<vmem>>, vector<1x1x64x64xbf16>
    %85 = vector.shape_cast %84 : vector<1x1x64x64xbf16> to vector<64x64xbf16>
    %cst_71 = arith.constant dense<0.000000e+00> : vector<64x32xf32>
    %86 = tpu.matmul %85, %83, %cst_71 {dimension_numbers = #tpu.dot_dimension_numbers<[1], [0], [0], [1], [0, 0, 1, 1], [], []>} : vector<64x64xbf16>, vector<64x32xbf16>, vector<64x32xf32> -> vector<64x32xf32>
    %87 = arith.addf %79, %86 : vector<64x32xf32>
    %c1_72 = arith.constant 1 : index
    %c0_73 = arith.constant 0 : index
    %c0_74 = arith.constant 0 : index
    %88 = vector.load %arg4[%c1_72, %c0_73, %c0_74] : memref<3x32x32xbf16, #tpu.memory_space<vmem>>, vector<1x32x32xbf16>
    %89 = vector.shape_cast %88 : vector<1x32x32xbf16> to vector<32x32xbf16>
    %cst_75 = arith.constant dense<0.000000e+00> : vector<64x32xf32>
    %90 = tpu.matmul %78, %89, %cst_75 {dimension_numbers = #tpu.dot_dimension_numbers<[1], [0], [0], [1], [0, 0, 1, 1], [], []>} : vector<64x32xbf16>, vector<32x32xbf16>, vector<64x32xf32> -> vector<64x32xf32>
    %91 = arith.truncf %90 : vector<64x32xf32> to vector<64x32xbf16>
    %c0_76 = arith.constant 0 : index
    %c1_77 = arith.constant 1 : index
    %c0_78 = arith.constant 0 : index
    %c0_79 = arith.constant 0 : index
    %92 = vector.load %arg3[%c0_76, %c1_77, %c0_78, %c0_79] : memref<1x3x64x64xbf16, #tpu.memory_space<vmem>>, vector<1x1x64x64xbf16>
    %93 = vector.shape_cast %92 : vector<1x1x64x64xbf16> to vector<64x64xbf16>
    %cst_80 = arith.constant dense<0.000000e+00> : vector<64x32xf32>
    %94 = tpu.matmul %93, %91, %cst_80 {dimension_numbers = #tpu.dot_dimension_numbers<[1], [0], [0], [1], [0, 0, 1, 1], [], []>} : vector<64x64xbf16>, vector<64x32xbf16>, vector<64x32xf32> -> vector<64x32xf32>
    %95 = arith.addf %87, %94 : vector<64x32xf32>
    %c2_81 = arith.constant 2 : index
    %c0_82 = arith.constant 0 : index
    %c0_83 = arith.constant 0 : index
    %96 = vector.load %arg4[%c2_81, %c0_82, %c0_83] : memref<3x32x32xbf16, #tpu.memory_space<vmem>>, vector<1x32x32xbf16>
    %97 = vector.shape_cast %96 : vector<1x32x32xbf16> to vector<32x32xbf16>
    %cst_84 = arith.constant dense<0.000000e+00> : vector<64x32xf32>
    %98 = tpu.matmul %78, %97, %cst_84 {dimension_numbers = #tpu.dot_dimension_numbers<[1], [0], [0], [1], [0, 0, 1, 1], [], []>} : vector<64x32xbf16>, vector<32x32xbf16>, vector<64x32xf32> -> vector<64x32xf32>
    %99 = arith.truncf %98 : vector<64x32xf32> to vector<64x32xbf16>
    %c0_85 = arith.constant 0 : index
    %c2_86 = arith.constant 2 : index
    %c0_87 = arith.constant 0 : index
    %c0_88 = arith.constant 0 : index
    %100 = vector.load %arg3[%c0_85, %c2_86, %c0_87, %c0_88] : memref<1x3x64x64xbf16, #tpu.memory_space<vmem>>, vector<1x1x64x64xbf16>
    %101 = vector.shape_cast %100 : vector<1x1x64x64xbf16> to vector<64x64xbf16>
    %cst_89 = arith.constant dense<0.000000e+00> : vector<64x32xf32>
    %102 = tpu.matmul %101, %99, %cst_89 {dimension_numbers = #tpu.dot_dimension_numbers<[1], [0], [0], [1], [0, 0, 1, 1], [], []>} : vector<64x64xbf16>, vector<64x32xbf16>, vector<64x32xf32> -> vector<64x32xf32>
    %103 = arith.addf %95, %102 : vector<64x32xf32>
    %104 = arith.truncf %103 : vector<64x32xf32> to vector<64x32xbf16>
    %c0_90 = arith.constant 0 : index
    %c0_91 = arith.constant 0 : index
    %c0_92 = arith.constant 0 : index
    %105 = vector.load %arg5[%c0_90, %c0_91, %c0_92] : memref<3x32x32xbf16, #tpu.memory_space<vmem>>, vector<1x32x32xbf16>
    %106 = vector.shape_cast %105 : vector<1x32x32xbf16> to vector<32x32xbf16>
    %cst_93 = arith.constant dense<0.000000e+00> : vector<64x32xf32>
    %107 = tpu.matmul %104, %106, %cst_93 {dimension_numbers = #tpu.dot_dimension_numbers<[1], [0], [0], [1], [0, 0, 1, 1], [], []>} : vector<64x32xbf16>, vector<32x32xbf16>, vector<64x32xf32> -> vector<64x32xf32>
    %c0_94 = arith.constant 0 : index
    %c0_95 = arith.constant 0 : index
    %c0_96 = arith.constant 0 : index
    %108 = vector.load %arg6[%c0_94, %c0_95, %c0_96] : memref<3x32x32xbf16, #tpu.memory_space<vmem>>, vector<1x32x32xbf16>
    %109 = vector.shape_cast %108 : vector<1x32x32xbf16> to vector<32x32xbf16>
    %cst_97 = arith.constant dense<0.000000e+00> : vector<64x32xf32>
    %110 = tpu.matmul %78, %109, %cst_97 {dimension_numbers = #tpu.dot_dimension_numbers<[1], [0], [0], [1], [0, 0, 1, 1], [], []>} : vector<64x32xbf16>, vector<32x32xbf16>, vector<64x32xf32> -> vector<64x32xf32>
    %111 = arith.addf %107, %110 : vector<64x32xf32>
    %112 = vector.broadcast %0 : vector<1x32xf32> to vector<64x32xf32>
    %113 = arith.addf %111, %112 : vector<64x32xf32>
    %114 = arith.negf %113 : vector<64x32xf32>
    %115 = math.exp %114 : vector<64x32xf32>
    %cst_98 = arith.constant 1.000000e+00 : f32
    %116 = vector.broadcast %cst_98 : f32 to vector<64x32xf32>
    %117 = arith.addf %116, %115 : vector<64x32xf32>
    %118 = arith.divf %116, %117 : vector<64x32xf32>
    %c1_99 = arith.constant 1 : index
    %c0_100 = arith.constant 0 : index
    %c0_101 = arith.constant 0 : index
    %119 = vector.load %arg5[%c1_99, %c0_100, %c0_101] : memref<3x32x32xbf16, #tpu.memory_space<vmem>>, vector<1x32x32xbf16>
    %120 = vector.shape_cast %119 : vector<1x32x32xbf16> to vector<32x32xbf16>
    %cst_102 = arith.constant dense<0.000000e+00> : vector<64x32xf32>
    %121 = tpu.matmul %104, %120, %cst_102 {dimension_numbers = #tpu.dot_dimension_numbers<[1], [0], [0], [1], [0, 0, 1, 1], [], []>} : vector<64x32xbf16>, vector<32x32xbf16>, vector<64x32xf32> -> vector<64x32xf32>
    %c1_103 = arith.constant 1 : index
    %c0_104 = arith.constant 0 : index
    %c0_105 = arith.constant 0 : index
    %122 = vector.load %arg6[%c1_103, %c0_104, %c0_105] : memref<3x32x32xbf16, #tpu.memory_space<vmem>>, vector<1x32x32xbf16>
    %123 = vector.shape_cast %122 : vector<1x32x32xbf16> to vector<32x32xbf16>
    %cst_106 = arith.constant dense<0.000000e+00> : vector<64x32xf32>
    %124 = tpu.matmul %78, %123, %cst_106 {dimension_numbers = #tpu.dot_dimension_numbers<[1], [0], [0], [1], [0, 0, 1, 1], [], []>} : vector<64x32xbf16>, vector<32x32xbf16>, vector<64x32xf32> -> vector<64x32xf32>
    %125 = arith.addf %121, %124 : vector<64x32xf32>
    %126 = vector.broadcast %1 : vector<1x32xf32> to vector<64x32xf32>
    %127 = arith.addf %125, %126 : vector<64x32xf32>
    %128 = arith.negf %127 : vector<64x32xf32>
    %129 = math.exp %128 : vector<64x32xf32>
    %cst_107 = arith.constant 1.000000e+00 : f32
    %130 = vector.broadcast %cst_107 : f32 to vector<64x32xf32>
    %131 = arith.addf %130, %129 : vector<64x32xf32>
    %132 = arith.divf %130, %131 : vector<64x32xf32>
    %c2_108 = arith.constant 2 : index
    %c0_109 = arith.constant 0 : index
    %c0_110 = arith.constant 0 : index
    %133 = vector.load %arg5[%c2_108, %c0_109, %c0_110] : memref<3x32x32xbf16, #tpu.memory_space<vmem>>, vector<1x32x32xbf16>
    %134 = vector.shape_cast %133 : vector<1x32x32xbf16> to vector<32x32xbf16>
    %cst_111 = arith.constant dense<0.000000e+00> : vector<64x32xf32>
    %135 = tpu.matmul %104, %134, %cst_111 {dimension_numbers = #tpu.dot_dimension_numbers<[1], [0], [0], [1], [0, 0, 1, 1], [], []>} : vector<64x32xbf16>, vector<32x32xbf16>, vector<64x32xf32> -> vector<64x32xf32>
    %136 = vector.broadcast %2 : vector<1x32xf32> to vector<64x32xf32>
    %137 = arith.addf %135, %136 : vector<64x32xf32>
    %c2_112 = arith.constant 2 : index
    %c0_113 = arith.constant 0 : index
    %c0_114 = arith.constant 0 : index
    %138 = vector.load %arg6[%c2_112, %c0_113, %c0_114] : memref<3x32x32xbf16, #tpu.memory_space<vmem>>, vector<1x32x32xbf16>
    %139 = vector.shape_cast %138 : vector<1x32x32xbf16> to vector<32x32xbf16>
    %cst_115 = arith.constant dense<0.000000e+00> : vector<64x32xf32>
    %140 = tpu.matmul %78, %139, %cst_115 {dimension_numbers = #tpu.dot_dimension_numbers<[1], [0], [0], [1], [0, 0, 1, 1], [], []>} : vector<64x32xbf16>, vector<32x32xbf16>, vector<64x32xf32> -> vector<64x32xf32>
    %141 = vector.broadcast %3 : vector<1x32xf32> to vector<64x32xf32>
    %142 = arith.addf %140, %141 : vector<64x32xf32>
    %143 = arith.mulf %118, %142 : vector<64x32xf32>
    %144 = arith.addf %137, %143 : vector<64x32xf32>
    %145 = math.tanh %144 : vector<64x32xf32>
    %cst_116 = arith.constant 1.000000e+00 : f32
    %146 = vector.broadcast %cst_116 : f32 to vector<64x32xf32>
    %147 = arith.subf %146, %132 : vector<64x32xf32>
    %148 = arith.mulf %147, %145 : vector<64x32xf32>
    %149 = arith.mulf %132, %77 : vector<64x32xf32>
    %150 = arith.addf %148, %149 : vector<64x32xf32>
    %c2_i32 = arith.constant 2 : i32
    %151 = arith.truncf %150 : vector<64x32xf32> to vector<64x32xbf16>
    %c0_117 = arith.constant 0 : index
    %c0_118 = arith.constant 0 : index
    %152 = vector.load %arg2[%c0_117, %c0_118] : memref<64x32xf32, #tpu.memory_space<vmem>>, vector<64x32xf32>
    %c0_119 = arith.constant 0 : index
    %c0_120 = arith.constant 0 : index
    %c0_121 = arith.constant 0 : index
    %153 = vector.load %arg4[%c0_119, %c0_120, %c0_121] : memref<3x32x32xbf16, #tpu.memory_space<vmem>>, vector<1x32x32xbf16>
    %154 = vector.shape_cast %153 : vector<1x32x32xbf16> to vector<32x32xbf16>
    %cst_122 = arith.constant dense<0.000000e+00> : vector<64x32xf32>
    %155 = tpu.matmul %151, %154, %cst_122 {dimension_numbers = #tpu.dot_dimension_numbers<[1], [0], [0], [1], [0, 0, 1, 1], [], []>} : vector<64x32xbf16>, vector<32x32xbf16>, vector<64x32xf32> -> vector<64x32xf32>
    %156 = arith.truncf %155 : vector<64x32xf32> to vector<64x32xbf16>
    %c0_123 = arith.constant 0 : index
    %c0_124 = arith.constant 0 : index
    %c0_125 = arith.constant 0 : index
    %c0_126 = arith.constant 0 : index
    %157 = vector.load %arg3[%c0_123, %c0_124, %c0_125, %c0_126] : memref<1x3x64x64xbf16, #tpu.memory_space<vmem>>, vector<1x1x64x64xbf16>
    %158 = vector.shape_cast %157 : vector<1x1x64x64xbf16> to vector<64x64xbf16>
    %cst_127 = arith.constant dense<0.000000e+00> : vector<64x32xf32>
    %159 = tpu.matmul %158, %156, %cst_127 {dimension_numbers = #tpu.dot_dimension_numbers<[1], [0], [0], [1], [0, 0, 1, 1], [], []>} : vector<64x64xbf16>, vector<64x32xbf16>, vector<64x32xf32> -> vector<64x32xf32>
    %160 = arith.addf %152, %159 : vector<64x32xf32>
    %c1_128 = arith.constant 1 : index
    %c0_129 = arith.constant 0 : index
    %c0_130 = arith.constant 0 : index
    %161 = vector.load %arg4[%c1_128, %c0_129, %c0_130] : memref<3x32x32xbf16, #tpu.memory_space<vmem>>, vector<1x32x32xbf16>
    %162 = vector.shape_cast %161 : vector<1x32x32xbf16> to vector<32x32xbf16>
    %cst_131 = arith.constant dense<0.000000e+00> : vector<64x32xf32>
    %163 = tpu.matmul %151, %162, %cst_131 {dimension_numbers = #tpu.dot_dimension_numbers<[1], [0], [0], [1], [0, 0, 1, 1], [], []>} : vector<64x32xbf16>, vector<32x32xbf16>, vector<64x32xf32> -> vector<64x32xf32>
    %164 = arith.truncf %163 : vector<64x32xf32> to vector<64x32xbf16>
    %c0_132 = arith.constant 0 : index
    %c1_133 = arith.constant 1 : index
    %c0_134 = arith.constant 0 : index
    %c0_135 = arith.constant 0 : index
    %165 = vector.load %arg3[%c0_132, %c1_133, %c0_134, %c0_135] : memref<1x3x64x64xbf16, #tpu.memory_space<vmem>>, vector<1x1x64x64xbf16>
    %166 = vector.shape_cast %165 : vector<1x1x64x64xbf16> to vector<64x64xbf16>
    %cst_136 = arith.constant dense<0.000000e+00> : vector<64x32xf32>
    %167 = tpu.matmul %166, %164, %cst_136 {dimension_numbers = #tpu.dot_dimension_numbers<[1], [0], [0], [1], [0, 0, 1, 1], [], []>} : vector<64x64xbf16>, vector<64x32xbf16>, vector<64x32xf32> -> vector<64x32xf32>
    %168 = arith.addf %160, %167 : vector<64x32xf32>
    %c2_137 = arith.constant 2 : index
    %c0_138 = arith.constant 0 : index
    %c0_139 = arith.constant 0 : index
    %169 = vector.load %arg4[%c2_137, %c0_138, %c0_139] : memref<3x32x32xbf16, #tpu.memory_space<vmem>>, vector<1x32x32xbf16>
    %170 = vector.shape_cast %169 : vector<1x32x32xbf16> to vector<32x32xbf16>
    %cst_140 = arith.constant dense<0.000000e+00> : vector<64x32xf32>
    %171 = tpu.matmul %151, %170, %cst_140 {dimension_numbers = #tpu.dot_dimension_numbers<[1], [0], [0], [1], [0, 0, 1, 1], [], []>} : vector<64x32xbf16>, vector<32x32xbf16>, vector<64x32xf32> -> vector<64x32xf32>
    %172 = arith.truncf %171 : vector<64x32xf32> to vector<64x32xbf16>
    %c0_141 = arith.constant 0 : index
    %c2_142 = arith.constant 2 : index
    %c0_143 = arith.constant 0 : index
    %c0_144 = arith.constant 0 : index
    %173 = vector.load %arg3[%c0_141, %c2_142, %c0_143, %c0_144] : memref<1x3x64x64xbf16, #tpu.memory_space<vmem>>, vector<1x1x64x64xbf16>
    %174 = vector.shape_cast %173 : vector<1x1x64x64xbf16> to vector<64x64xbf16>
    %cst_145 = arith.constant dense<0.000000e+00> : vector<64x32xf32>
    %175 = tpu.matmul %174, %172, %cst_145 {dimension_numbers = #tpu.dot_dimension_numbers<[1], [0], [0], [1], [0, 0, 1, 1], [], []>} : vector<64x64xbf16>, vector<64x32xbf16>, vector<64x32xf32> -> vector<64x32xf32>
    %176 = arith.addf %168, %175 : vector<64x32xf32>
    %177 = arith.truncf %176 : vector<64x32xf32> to vector<64x32xbf16>
    %c0_146 = arith.constant 0 : index
    %c0_147 = arith.constant 0 : index
    %c0_148 = arith.constant 0 : index
    %178 = vector.load %arg5[%c0_146, %c0_147, %c0_148] : memref<3x32x32xbf16, #tpu.memory_space<vmem>>, vector<1x32x32xbf16>
    %179 = vector.shape_cast %178 : vector<1x32x32xbf16> to vector<32x32xbf16>
    %cst_149 = arith.constant dense<0.000000e+00> : vector<64x32xf32>
    %180 = tpu.matmul %177, %179, %cst_149 {dimension_numbers = #tpu.dot_dimension_numbers<[1], [0], [0], [1], [0, 0, 1, 1], [], []>} : vector<64x32xbf16>, vector<32x32xbf16>, vector<64x32xf32> -> vector<64x32xf32>
    %c0_150 = arith.constant 0 : index
    %c0_151 = arith.constant 0 : index
    %c0_152 = arith.constant 0 : index
    %181 = vector.load %arg6[%c0_150, %c0_151, %c0_152] : memref<3x32x32xbf16, #tpu.memory_space<vmem>>, vector<1x32x32xbf16>
    %182 = vector.shape_cast %181 : vector<1x32x32xbf16> to vector<32x32xbf16>
    %cst_153 = arith.constant dense<0.000000e+00> : vector<64x32xf32>
    %183 = tpu.matmul %151, %182, %cst_153 {dimension_numbers = #tpu.dot_dimension_numbers<[1], [0], [0], [1], [0, 0, 1, 1], [], []>} : vector<64x32xbf16>, vector<32x32xbf16>, vector<64x32xf32> -> vector<64x32xf32>
    %184 = arith.addf %180, %183 : vector<64x32xf32>
    %185 = vector.broadcast %0 : vector<1x32xf32> to vector<64x32xf32>
    %186 = arith.addf %184, %185 : vector<64x32xf32>
    %187 = arith.negf %186 : vector<64x32xf32>
    %188 = math.exp %187 : vector<64x32xf32>
    %cst_154 = arith.constant 1.000000e+00 : f32
    %189 = vector.broadcast %cst_154 : f32 to vector<64x32xf32>
    %190 = arith.addf %189, %188 : vector<64x32xf32>
    %191 = arith.divf %189, %190 : vector<64x32xf32>
    %c1_155 = arith.constant 1 : index
    %c0_156 = arith.constant 0 : index
    %c0_157 = arith.constant 0 : index
    %192 = vector.load %arg5[%c1_155, %c0_156, %c0_157] : memref<3x32x32xbf16, #tpu.memory_space<vmem>>, vector<1x32x32xbf16>
    %193 = vector.shape_cast %192 : vector<1x32x32xbf16> to vector<32x32xbf16>
    %cst_158 = arith.constant dense<0.000000e+00> : vector<64x32xf32>
    %194 = tpu.matmul %177, %193, %cst_158 {dimension_numbers = #tpu.dot_dimension_numbers<[1], [0], [0], [1], [0, 0, 1, 1], [], []>} : vector<64x32xbf16>, vector<32x32xbf16>, vector<64x32xf32> -> vector<64x32xf32>
    %c1_159 = arith.constant 1 : index
    %c0_160 = arith.constant 0 : index
    %c0_161 = arith.constant 0 : index
    %195 = vector.load %arg6[%c1_159, %c0_160, %c0_161] : memref<3x32x32xbf16, #tpu.memory_space<vmem>>, vector<1x32x32xbf16>
    %196 = vector.shape_cast %195 : vector<1x32x32xbf16> to vector<32x32xbf16>
    %cst_162 = arith.constant dense<0.000000e+00> : vector<64x32xf32>
    %197 = tpu.matmul %151, %196, %cst_162 {dimension_numbers = #tpu.dot_dimension_numbers<[1], [0], [0], [1], [0, 0, 1, 1], [], []>} : vector<64x32xbf16>, vector<32x32xbf16>, vector<64x32xf32> -> vector<64x32xf32>
    %198 = arith.addf %194, %197 : vector<64x32xf32>
    %199 = vector.broadcast %1 : vector<1x32xf32> to vector<64x32xf32>
    %200 = arith.addf %198, %199 : vector<64x32xf32>
    %201 = arith.negf %200 : vector<64x32xf32>
    %202 = math.exp %201 : vector<64x32xf32>
    %cst_163 = arith.constant 1.000000e+00 : f32
    %203 = vector.broadcast %cst_163 : f32 to vector<64x32xf32>
    %204 = arith.addf %203, %202 : vector<64x32xf32>
    %205 = arith.divf %203, %204 : vector<64x32xf32>
    %c2_164 = arith.constant 2 : index
    %c0_165 = arith.constant 0 : index
    %c0_166 = arith.constant 0 : index
    %206 = vector.load %arg5[%c2_164, %c0_165, %c0_166] : memref<3x32x32xbf16, #tpu.memory_space<vmem>>, vector<1x32x32xbf16>
    %207 = vector.shape_cast %206 : vector<1x32x32xbf16> to vector<32x32xbf16>
    %cst_167 = arith.constant dense<0.000000e+00> : vector<64x32xf32>
    %208 = tpu.matmul %177, %207, %cst_167 {dimension_numbers = #tpu.dot_dimension_numbers<[1], [0], [0], [1], [0, 0, 1, 1], [], []>} : vector<64x32xbf16>, vector<32x32xbf16>, vector<64x32xf32> -> vector<64x32xf32>
    %209 = vector.broadcast %2 : vector<1x32xf32> to vector<64x32xf32>
    %210 = arith.addf %208, %209 : vector<64x32xf32>
    %c2_168 = arith.constant 2 : index
    %c0_169 = arith.constant 0 : index
    %c0_170 = arith.constant 0 : index
    %211 = vector.load %arg6[%c2_168, %c0_169, %c0_170] : memref<3x32x32xbf16, #tpu.memory_space<vmem>>, vector<1x32x32xbf16>
    %212 = vector.shape_cast %211 : vector<1x32x32xbf16> to vector<32x32xbf16>
    %cst_171 = arith.constant dense<0.000000e+00> : vector<64x32xf32>
    %213 = tpu.matmul %151, %212, %cst_171 {dimension_numbers = #tpu.dot_dimension_numbers<[1], [0], [0], [1], [0, 0, 1, 1], [], []>} : vector<64x32xbf16>, vector<32x32xbf16>, vector<64x32xf32> -> vector<64x32xf32>
    %214 = vector.broadcast %3 : vector<1x32xf32> to vector<64x32xf32>
    %215 = arith.addf %213, %214 : vector<64x32xf32>
    %216 = arith.mulf %191, %215 : vector<64x32xf32>
    %217 = arith.addf %210, %216 : vector<64x32xf32>
    %218 = math.tanh %217 : vector<64x32xf32>
    %cst_172 = arith.constant 1.000000e+00 : f32
    %219 = vector.broadcast %cst_172 : f32 to vector<64x32xf32>
    %220 = arith.subf %219, %205 : vector<64x32xf32>
    %221 = arith.mulf %220, %218 : vector<64x32xf32>
    %222 = arith.mulf %205, %150 : vector<64x32xf32>
    %223 = arith.addf %221, %222 : vector<64x32xf32>
    %c3_i32 = arith.constant 3 : i32
    %224 = arith.truncf %223 : vector<64x32xf32> to vector<64x32xbf16>
    %c0_173 = arith.constant 0 : index
    %c0_174 = arith.constant 0 : index
    %225 = vector.load %arg2[%c0_173, %c0_174] : memref<64x32xf32, #tpu.memory_space<vmem>>, vector<64x32xf32>
    %c0_175 = arith.constant 0 : index
    %c0_176 = arith.constant 0 : index
    %c0_177 = arith.constant 0 : index
    %226 = vector.load %arg4[%c0_175, %c0_176, %c0_177] : memref<3x32x32xbf16, #tpu.memory_space<vmem>>, vector<1x32x32xbf16>
    %227 = vector.shape_cast %226 : vector<1x32x32xbf16> to vector<32x32xbf16>
    %cst_178 = arith.constant dense<0.000000e+00> : vector<64x32xf32>
    %228 = tpu.matmul %224, %227, %cst_178 {dimension_numbers = #tpu.dot_dimension_numbers<[1], [0], [0], [1], [0, 0, 1, 1], [], []>} : vector<64x32xbf16>, vector<32x32xbf16>, vector<64x32xf32> -> vector<64x32xf32>
    %229 = arith.truncf %228 : vector<64x32xf32> to vector<64x32xbf16>
    %c0_179 = arith.constant 0 : index
    %c0_180 = arith.constant 0 : index
    %c0_181 = arith.constant 0 : index
    %c0_182 = arith.constant 0 : index
    %230 = vector.load %arg3[%c0_179, %c0_180, %c0_181, %c0_182] : memref<1x3x64x64xbf16, #tpu.memory_space<vmem>>, vector<1x1x64x64xbf16>
    %231 = vector.shape_cast %230 : vector<1x1x64x64xbf16> to vector<64x64xbf16>
    %cst_183 = arith.constant dense<0.000000e+00> : vector<64x32xf32>
    %232 = tpu.matmul %231, %229, %cst_183 {dimension_numbers = #tpu.dot_dimension_numbers<[1], [0], [0], [1], [0, 0, 1, 1], [], []>} : vector<64x64xbf16>, vector<64x32xbf16>, vector<64x32xf32> -> vector<64x32xf32>
    %233 = arith.addf %225, %232 : vector<64x32xf32>
    %c1_184 = arith.constant 1 : index
    %c0_185 = arith.constant 0 : index
    %c0_186 = arith.constant 0 : index
    %234 = vector.load %arg4[%c1_184, %c0_185, %c0_186] : memref<3x32x32xbf16, #tpu.memory_space<vmem>>, vector<1x32x32xbf16>
    %235 = vector.shape_cast %234 : vector<1x32x32xbf16> to vector<32x32xbf16>
    %cst_187 = arith.constant dense<0.000000e+00> : vector<64x32xf32>
    %236 = tpu.matmul %224, %235, %cst_187 {dimension_numbers = #tpu.dot_dimension_numbers<[1], [0], [0], [1], [0, 0, 1, 1], [], []>} : vector<64x32xbf16>, vector<32x32xbf16>, vector<64x32xf32> -> vector<64x32xf32>
    %237 = arith.truncf %236 : vector<64x32xf32> to vector<64x32xbf16>
    %c0_188 = arith.constant 0 : index
    %c1_189 = arith.constant 1 : index
    %c0_190 = arith.constant 0 : index
    %c0_191 = arith.constant 0 : index
    %238 = vector.load %arg3[%c0_188, %c1_189, %c0_190, %c0_191] : memref<1x3x64x64xbf16, #tpu.memory_space<vmem>>, vector<1x1x64x64xbf16>
    %239 = vector.shape_cast %238 : vector<1x1x64x64xbf16> to vector<64x64xbf16>
    %cst_192 = arith.constant dense<0.000000e+00> : vector<64x32xf32>
    %240 = tpu.matmul %239, %237, %cst_192 {dimension_numbers = #tpu.dot_dimension_numbers<[1], [0], [0], [1], [0, 0, 1, 1], [], []>} : vector<64x64xbf16>, vector<64x32xbf16>, vector<64x32xf32> -> vector<64x32xf32>
    %241 = arith.addf %233, %240 : vector<64x32xf32>
    %c2_193 = arith.constant 2 : index
    %c0_194 = arith.constant 0 : index
    %c0_195 = arith.constant 0 : index
    %242 = vector.load %arg4[%c2_193, %c0_194, %c0_195] : memref<3x32x32xbf16, #tpu.memory_space<vmem>>, vector<1x32x32xbf16>
    %243 = vector.shape_cast %242 : vector<1x32x32xbf16> to vector<32x32xbf16>
    %cst_196 = arith.constant dense<0.000000e+00> : vector<64x32xf32>
    %244 = tpu.matmul %224, %243, %cst_196 {dimension_numbers = #tpu.dot_dimension_numbers<[1], [0], [0], [1], [0, 0, 1, 1], [], []>} : vector<64x32xbf16>, vector<32x32xbf16>, vector<64x32xf32> -> vector<64x32xf32>
    %245 = arith.truncf %244 : vector<64x32xf32> to vector<64x32xbf16>
    %c0_197 = arith.constant 0 : index
    %c2_198 = arith.constant 2 : index
    %c0_199 = arith.constant 0 : index
    %c0_200 = arith.constant 0 : index
    %246 = vector.load %arg3[%c0_197, %c2_198, %c0_199, %c0_200] : memref<1x3x64x64xbf16, #tpu.memory_space<vmem>>, vector<1x1x64x64xbf16>
    %247 = vector.shape_cast %246 : vector<1x1x64x64xbf16> to vector<64x64xbf16>
    %cst_201 = arith.constant dense<0.000000e+00> : vector<64x32xf32>
    %248 = tpu.matmul %247, %245, %cst_201 {dimension_numbers = #tpu.dot_dimension_numbers<[1], [0], [0], [1], [0, 0, 1, 1], [], []>} : vector<64x64xbf16>, vector<64x32xbf16>, vector<64x32xf32> -> vector<64x32xf32>
    %249 = arith.addf %241, %248 : vector<64x32xf32>
    %250 = arith.truncf %249 : vector<64x32xf32> to vector<64x32xbf16>
    %c0_202 = arith.constant 0 : index
    %c0_203 = arith.constant 0 : index
    %c0_204 = arith.constant 0 : index
    %251 = vector.load %arg5[%c0_202, %c0_203, %c0_204] : memref<3x32x32xbf16, #tpu.memory_space<vmem>>, vector<1x32x32xbf16>
    %252 = vector.shape_cast %251 : vector<1x32x32xbf16> to vector<32x32xbf16>
    %cst_205 = arith.constant dense<0.000000e+00> : vector<64x32xf32>
    %253 = tpu.matmul %250, %252, %cst_205 {dimension_numbers = #tpu.dot_dimension_numbers<[1], [0], [0], [1], [0, 0, 1, 1], [], []>} : vector<64x32xbf16>, vector<32x32xbf16>, vector<64x32xf32> -> vector<64x32xf32>
    %c0_206 = arith.constant 0 : index
    %c0_207 = arith.constant 0 : index
    %c0_208 = arith.constant 0 : index
    %254 = vector.load %arg6[%c0_206, %c0_207, %c0_208] : memref<3x32x32xbf16, #tpu.memory_space<vmem>>, vector<1x32x32xbf16>
    %255 = vector.shape_cast %254 : vector<1x32x32xbf16> to vector<32x32xbf16>
    %cst_209 = arith.constant dense<0.000000e+00> : vector<64x32xf32>
    %256 = tpu.matmul %224, %255, %cst_209 {dimension_numbers = #tpu.dot_dimension_numbers<[1], [0], [0], [1], [0, 0, 1, 1], [], []>} : vector<64x32xbf16>, vector<32x32xbf16>, vector<64x32xf32> -> vector<64x32xf32>
    %257 = arith.addf %253, %256 : vector<64x32xf32>
    %258 = vector.broadcast %0 : vector<1x32xf32> to vector<64x32xf32>
    %259 = arith.addf %257, %258 : vector<64x32xf32>
    %260 = arith.negf %259 : vector<64x32xf32>
    %261 = math.exp %260 : vector<64x32xf32>
    %cst_210 = arith.constant 1.000000e+00 : f32
    %262 = vector.broadcast %cst_210 : f32 to vector<64x32xf32>
    %263 = arith.addf %262, %261 : vector<64x32xf32>
    %264 = arith.divf %262, %263 : vector<64x32xf32>
    %c1_211 = arith.constant 1 : index
    %c0_212 = arith.constant 0 : index
    %c0_213 = arith.constant 0 : index
    %265 = vector.load %arg5[%c1_211, %c0_212, %c0_213] : memref<3x32x32xbf16, #tpu.memory_space<vmem>>, vector<1x32x32xbf16>
    %266 = vector.shape_cast %265 : vector<1x32x32xbf16> to vector<32x32xbf16>
    %cst_214 = arith.constant dense<0.000000e+00> : vector<64x32xf32>
    %267 = tpu.matmul %250, %266, %cst_214 {dimension_numbers = #tpu.dot_dimension_numbers<[1], [0], [0], [1], [0, 0, 1, 1], [], []>} : vector<64x32xbf16>, vector<32x32xbf16>, vector<64x32xf32> -> vector<64x32xf32>
    %c1_215 = arith.constant 1 : index
    %c0_216 = arith.constant 0 : index
    %c0_217 = arith.constant 0 : index
    %268 = vector.load %arg6[%c1_215, %c0_216, %c0_217] : memref<3x32x32xbf16, #tpu.memory_space<vmem>>, vector<1x32x32xbf16>
    %269 = vector.shape_cast %268 : vector<1x32x32xbf16> to vector<32x32xbf16>
    %cst_218 = arith.constant dense<0.000000e+00> : vector<64x32xf32>
    %270 = tpu.matmul %224, %269, %cst_218 {dimension_numbers = #tpu.dot_dimension_numbers<[1], [0], [0], [1], [0, 0, 1, 1], [], []>} : vector<64x32xbf16>, vector<32x32xbf16>, vector<64x32xf32> -> vector<64x32xf32>
    %271 = arith.addf %267, %270 : vector<64x32xf32>
    %272 = vector.broadcast %1 : vector<1x32xf32> to vector<64x32xf32>
    %273 = arith.addf %271, %272 : vector<64x32xf32>
    %274 = arith.negf %273 : vector<64x32xf32>
    %275 = math.exp %274 : vector<64x32xf32>
    %cst_219 = arith.constant 1.000000e+00 : f32
    %276 = vector.broadcast %cst_219 : f32 to vector<64x32xf32>
    %277 = arith.addf %276, %275 : vector<64x32xf32>
    %278 = arith.divf %276, %277 : vector<64x32xf32>
    %c2_220 = arith.constant 2 : index
    %c0_221 = arith.constant 0 : index
    %c0_222 = arith.constant 0 : index
    %279 = vector.load %arg5[%c2_220, %c0_221, %c0_222] : memref<3x32x32xbf16, #tpu.memory_space<vmem>>, vector<1x32x32xbf16>
    %280 = vector.shape_cast %279 : vector<1x32x32xbf16> to vector<32x32xbf16>
    %cst_223 = arith.constant dense<0.000000e+00> : vector<64x32xf32>
    %281 = tpu.matmul %250, %280, %cst_223 {dimension_numbers = #tpu.dot_dimension_numbers<[1], [0], [0], [1], [0, 0, 1, 1], [], []>} : vector<64x32xbf16>, vector<32x32xbf16>, vector<64x32xf32> -> vector<64x32xf32>
    %282 = vector.broadcast %2 : vector<1x32xf32> to vector<64x32xf32>
    %283 = arith.addf %281, %282 : vector<64x32xf32>
    %c2_224 = arith.constant 2 : index
    %c0_225 = arith.constant 0 : index
    %c0_226 = arith.constant 0 : index
    %284 = vector.load %arg6[%c2_224, %c0_225, %c0_226] : memref<3x32x32xbf16, #tpu.memory_space<vmem>>, vector<1x32x32xbf16>
    %285 = vector.shape_cast %284 : vector<1x32x32xbf16> to vector<32x32xbf16>
    %cst_227 = arith.constant dense<0.000000e+00> : vector<64x32xf32>
    %286 = tpu.matmul %224, %285, %cst_227 {dimension_numbers = #tpu.dot_dimension_numbers<[1], [0], [0], [1], [0, 0, 1, 1], [], []>} : vector<64x32xbf16>, vector<32x32xbf16>, vector<64x32xf32> -> vector<64x32xf32>
    %287 = vector.broadcast %3 : vector<1x32xf32> to vector<64x32xf32>
    %288 = arith.addf %286, %287 : vector<64x32xf32>
    %289 = arith.mulf %264, %288 : vector<64x32xf32>
    %290 = arith.addf %283, %289 : vector<64x32xf32>
    %291 = math.tanh %290 : vector<64x32xf32>
    %cst_228 = arith.constant 1.000000e+00 : f32
    %292 = vector.broadcast %cst_228 : f32 to vector<64x32xf32>
    %293 = arith.subf %292, %278 : vector<64x32xf32>
    %294 = arith.mulf %293, %291 : vector<64x32xf32>
    %295 = arith.mulf %278, %223 : vector<64x32xf32>
    %296 = arith.addf %294, %295 : vector<64x32xf32>
    %c4_i32 = arith.constant 4 : i32
    %297 = arith.truncf %296 : vector<64x32xf32> to vector<64x32xbf16>
    %c0_229 = arith.constant 0 : index
    %c0_230 = arith.constant 0 : index
    %298 = vector.load %arg2[%c0_229, %c0_230] : memref<64x32xf32, #tpu.memory_space<vmem>>, vector<64x32xf32>
    %c0_231 = arith.constant 0 : index
    %c0_232 = arith.constant 0 : index
    %c0_233 = arith.constant 0 : index
    %299 = vector.load %arg4[%c0_231, %c0_232, %c0_233] : memref<3x32x32xbf16, #tpu.memory_space<vmem>>, vector<1x32x32xbf16>
    %300 = vector.shape_cast %299 : vector<1x32x32xbf16> to vector<32x32xbf16>
    %cst_234 = arith.constant dense<0.000000e+00> : vector<64x32xf32>
    %301 = tpu.matmul %297, %300, %cst_234 {dimension_numbers = #tpu.dot_dimension_numbers<[1], [0], [0], [1], [0, 0, 1, 1], [], []>} : vector<64x32xbf16>, vector<32x32xbf16>, vector<64x32xf32> -> vector<64x32xf32>
    %302 = arith.truncf %301 : vector<64x32xf32> to vector<64x32xbf16>
    %c0_235 = arith.constant 0 : index
    %c0_236 = arith.constant 0 : index
    %c0_237 = arith.constant 0 : index
    %c0_238 = arith.constant 0 : index
    %303 = vector.load %arg3[%c0_235, %c0_236, %c0_237, %c0_238] : memref<1x3x64x64xbf16, #tpu.memory_space<vmem>>, vector<1x1x64x64xbf16>
    %304 = vector.shape_cast %303 : vector<1x1x64x64xbf16> to vector<64x64xbf16>
    %cst_239 = arith.constant dense<0.000000e+00> : vector<64x32xf32>
    %305 = tpu.matmul %304, %302, %cst_239 {dimension_numbers = #tpu.dot_dimension_numbers<[1], [0], [0], [1], [0, 0, 1, 1], [], []>} : vector<64x64xbf16>, vector<64x32xbf16>, vector<64x32xf32> -> vector<64x32xf32>
    %306 = arith.addf %298, %305 : vector<64x32xf32>
    %c1_240 = arith.constant 1 : index
    %c0_241 = arith.constant 0 : index
    %c0_242 = arith.constant 0 : index
    %307 = vector.load %arg4[%c1_240, %c0_241, %c0_242] : memref<3x32x32xbf16, #tpu.memory_space<vmem>>, vector<1x32x32xbf16>
    %308 = vector.shape_cast %307 : vector<1x32x32xbf16> to vector<32x32xbf16>
    %cst_243 = arith.constant dense<0.000000e+00> : vector<64x32xf32>
    %309 = tpu.matmul %297, %308, %cst_243 {dimension_numbers = #tpu.dot_dimension_numbers<[1], [0], [0], [1], [0, 0, 1, 1], [], []>} : vector<64x32xbf16>, vector<32x32xbf16>, vector<64x32xf32> -> vector<64x32xf32>
    %310 = arith.truncf %309 : vector<64x32xf32> to vector<64x32xbf16>
    %c0_244 = arith.constant 0 : index
    %c1_245 = arith.constant 1 : index
    %c0_246 = arith.constant 0 : index
    %c0_247 = arith.constant 0 : index
    %311 = vector.load %arg3[%c0_244, %c1_245, %c0_246, %c0_247] : memref<1x3x64x64xbf16, #tpu.memory_space<vmem>>, vector<1x1x64x64xbf16>
    %312 = vector.shape_cast %311 : vector<1x1x64x64xbf16> to vector<64x64xbf16>
    %cst_248 = arith.constant dense<0.000000e+00> : vector<64x32xf32>
    %313 = tpu.matmul %312, %310, %cst_248 {dimension_numbers = #tpu.dot_dimension_numbers<[1], [0], [0], [1], [0, 0, 1, 1], [], []>} : vector<64x64xbf16>, vector<64x32xbf16>, vector<64x32xf32> -> vector<64x32xf32>
    %314 = arith.addf %306, %313 : vector<64x32xf32>
    %c2_249 = arith.constant 2 : index
    %c0_250 = arith.constant 0 : index
    %c0_251 = arith.constant 0 : index
    %315 = vector.load %arg4[%c2_249, %c0_250, %c0_251] : memref<3x32x32xbf16, #tpu.memory_space<vmem>>, vector<1x32x32xbf16>
    %316 = vector.shape_cast %315 : vector<1x32x32xbf16> to vector<32x32xbf16>
    %cst_252 = arith.constant dense<0.000000e+00> : vector<64x32xf32>
    %317 = tpu.matmul %297, %316, %cst_252 {dimension_numbers = #tpu.dot_dimension_numbers<[1], [0], [0], [1], [0, 0, 1, 1], [], []>} : vector<64x32xbf16>, vector<32x32xbf16>, vector<64x32xf32> -> vector<64x32xf32>
    %318 = arith.truncf %317 : vector<64x32xf32> to vector<64x32xbf16>
    %c0_253 = arith.constant 0 : index
    %c2_254 = arith.constant 2 : index
    %c0_255 = arith.constant 0 : index
    %c0_256 = arith.constant 0 : index
    %319 = vector.load %arg3[%c0_253, %c2_254, %c0_255, %c0_256] : memref<1x3x64x64xbf16, #tpu.memory_space<vmem>>, vector<1x1x64x64xbf16>
    %320 = vector.shape_cast %319 : vector<1x1x64x64xbf16> to vector<64x64xbf16>
    %cst_257 = arith.constant dense<0.000000e+00> : vector<64x32xf32>
    %321 = tpu.matmul %320, %318, %cst_257 {dimension_numbers = #tpu.dot_dimension_numbers<[1], [0], [0], [1], [0, 0, 1, 1], [], []>} : vector<64x64xbf16>, vector<64x32xbf16>, vector<64x32xf32> -> vector<64x32xf32>
    %322 = arith.addf %314, %321 : vector<64x32xf32>
    %323 = arith.truncf %322 : vector<64x32xf32> to vector<64x32xbf16>
    %c0_258 = arith.constant 0 : index
    %c0_259 = arith.constant 0 : index
    %c0_260 = arith.constant 0 : index
    %324 = vector.load %arg5[%c0_258, %c0_259, %c0_260] : memref<3x32x32xbf16, #tpu.memory_space<vmem>>, vector<1x32x32xbf16>
    %325 = vector.shape_cast %324 : vector<1x32x32xbf16> to vector<32x32xbf16>
    %cst_261 = arith.constant dense<0.000000e+00> : vector<64x32xf32>
    %326 = tpu.matmul %323, %325, %cst_261 {dimension_numbers = #tpu.dot_dimension_numbers<[1], [0], [0], [1], [0, 0, 1, 1], [], []>} : vector<64x32xbf16>, vector<32x32xbf16>, vector<64x32xf32> -> vector<64x32xf32>
    %c0_262 = arith.constant 0 : index
    %c0_263 = arith.constant 0 : index
    %c0_264 = arith.constant 0 : index
    %327 = vector.load %arg6[%c0_262, %c0_263, %c0_264] : memref<3x32x32xbf16, #tpu.memory_space<vmem>>, vector<1x32x32xbf16>
    %328 = vector.shape_cast %327 : vector<1x32x32xbf16> to vector<32x32xbf16>
    %cst_265 = arith.constant dense<0.000000e+00> : vector<64x32xf32>
    %329 = tpu.matmul %297, %328, %cst_265 {dimension_numbers = #tpu.dot_dimension_numbers<[1], [0], [0], [1], [0, 0, 1, 1], [], []>} : vector<64x32xbf16>, vector<32x32xbf16>, vector<64x32xf32> -> vector<64x32xf32>
    %330 = arith.addf %326, %329 : vector<64x32xf32>
    %331 = vector.broadcast %0 : vector<1x32xf32> to vector<64x32xf32>
    %332 = arith.addf %330, %331 : vector<64x32xf32>
    %333 = arith.negf %332 : vector<64x32xf32>
    %334 = math.exp %333 : vector<64x32xf32>
    %cst_266 = arith.constant 1.000000e+00 : f32
    %335 = vector.broadcast %cst_266 : f32 to vector<64x32xf32>
    %336 = arith.addf %335, %334 : vector<64x32xf32>
    %337 = arith.divf %335, %336 : vector<64x32xf32>
    %c1_267 = arith.constant 1 : index
    %c0_268 = arith.constant 0 : index
    %c0_269 = arith.constant 0 : index
    %338 = vector.load %arg5[%c1_267, %c0_268, %c0_269] : memref<3x32x32xbf16, #tpu.memory_space<vmem>>, vector<1x32x32xbf16>
    %339 = vector.shape_cast %338 : vector<1x32x32xbf16> to vector<32x32xbf16>
    %cst_270 = arith.constant dense<0.000000e+00> : vector<64x32xf32>
    %340 = tpu.matmul %323, %339, %cst_270 {dimension_numbers = #tpu.dot_dimension_numbers<[1], [0], [0], [1], [0, 0, 1, 1], [], []>} : vector<64x32xbf16>, vector<32x32xbf16>, vector<64x32xf32> -> vector<64x32xf32>
    %c1_271 = arith.constant 1 : index
    %c0_272 = arith.constant 0 : index
    %c0_273 = arith.constant 0 : index
    %341 = vector.load %arg6[%c1_271, %c0_272, %c0_273] : memref<3x32x32xbf16, #tpu.memory_space<vmem>>, vector<1x32x32xbf16>
    %342 = vector.shape_cast %341 : vector<1x32x32xbf16> to vector<32x32xbf16>
    %cst_274 = arith.constant dense<0.000000e+00> : vector<64x32xf32>
    %343 = tpu.matmul %297, %342, %cst_274 {dimension_numbers = #tpu.dot_dimension_numbers<[1], [0], [0], [1], [0, 0, 1, 1], [], []>} : vector<64x32xbf16>, vector<32x32xbf16>, vector<64x32xf32> -> vector<64x32xf32>
    %344 = arith.addf %340, %343 : vector<64x32xf32>
    %345 = vector.broadcast %1 : vector<1x32xf32> to vector<64x32xf32>
    %346 = arith.addf %344, %345 : vector<64x32xf32>
    %347 = arith.negf %346 : vector<64x32xf32>
    %348 = math.exp %347 : vector<64x32xf32>
    %cst_275 = arith.constant 1.000000e+00 : f32
    %349 = vector.broadcast %cst_275 : f32 to vector<64x32xf32>
    %350 = arith.addf %349, %348 : vector<64x32xf32>
    %351 = arith.divf %349, %350 : vector<64x32xf32>
    %c2_276 = arith.constant 2 : index
    %c0_277 = arith.constant 0 : index
    %c0_278 = arith.constant 0 : index
    %352 = vector.load %arg5[%c2_276, %c0_277, %c0_278] : memref<3x32x32xbf16, #tpu.memory_space<vmem>>, vector<1x32x32xbf16>
    %353 = vector.shape_cast %352 : vector<1x32x32xbf16> to vector<32x32xbf16>
    %cst_279 = arith.constant dense<0.000000e+00> : vector<64x32xf32>
    %354 = tpu.matmul %323, %353, %cst_279 {dimension_numbers = #tpu.dot_dimension_numbers<[1], [0], [0], [1], [0, 0, 1, 1], [], []>} : vector<64x32xbf16>, vector<32x32xbf16>, vector<64x32xf32> -> vector<64x32xf32>
    %355 = vector.broadcast %2 : vector<1x32xf32> to vector<64x32xf32>
    %356 = arith.addf %354, %355 : vector<64x32xf32>
    %c2_280 = arith.constant 2 : index
    %c0_281 = arith.constant 0 : index
    %c0_282 = arith.constant 0 : index
    %357 = vector.load %arg6[%c2_280, %c0_281, %c0_282] : memref<3x32x32xbf16, #tpu.memory_space<vmem>>, vector<1x32x32xbf16>
    %358 = vector.shape_cast %357 : vector<1x32x32xbf16> to vector<32x32xbf16>
    %cst_283 = arith.constant dense<0.000000e+00> : vector<64x32xf32>
    %359 = tpu.matmul %297, %358, %cst_283 {dimension_numbers = #tpu.dot_dimension_numbers<[1], [0], [0], [1], [0, 0, 1, 1], [], []>} : vector<64x32xbf16>, vector<32x32xbf16>, vector<64x32xf32> -> vector<64x32xf32>
    %360 = vector.broadcast %3 : vector<1x32xf32> to vector<64x32xf32>
    %361 = arith.addf %359, %360 : vector<64x32xf32>
    %362 = arith.mulf %337, %361 : vector<64x32xf32>
    %363 = arith.addf %356, %362 : vector<64x32xf32>
    %364 = math.tanh %363 : vector<64x32xf32>
    %cst_284 = arith.constant 1.000000e+00 : f32
    %365 = vector.broadcast %cst_284 : f32 to vector<64x32xf32>
    %366 = arith.subf %365, %351 : vector<64x32xf32>
    %367 = arith.mulf %366, %364 : vector<64x32xf32>
    %368 = arith.mulf %351, %296 : vector<64x32xf32>
    %369 = arith.addf %367, %368 : vector<64x32xf32>
    %c5_i32 = arith.constant 5 : i32
    %370 = arith.truncf %369 : vector<64x32xf32> to vector<64x32xbf16>
    %c0_285 = arith.constant 0 : index
    %c0_286 = arith.constant 0 : index
    %371 = vector.load %arg2[%c0_285, %c0_286] : memref<64x32xf32, #tpu.memory_space<vmem>>, vector<64x32xf32>
    %c0_287 = arith.constant 0 : index
    %c0_288 = arith.constant 0 : index
    %c0_289 = arith.constant 0 : index
    %372 = vector.load %arg4[%c0_287, %c0_288, %c0_289] : memref<3x32x32xbf16, #tpu.memory_space<vmem>>, vector<1x32x32xbf16>
    %373 = vector.shape_cast %372 : vector<1x32x32xbf16> to vector<32x32xbf16>
    %cst_290 = arith.constant dense<0.000000e+00> : vector<64x32xf32>
    %374 = tpu.matmul %370, %373, %cst_290 {dimension_numbers = #tpu.dot_dimension_numbers<[1], [0], [0], [1], [0, 0, 1, 1], [], []>} : vector<64x32xbf16>, vector<32x32xbf16>, vector<64x32xf32> -> vector<64x32xf32>
    %375 = arith.truncf %374 : vector<64x32xf32> to vector<64x32xbf16>
    %c0_291 = arith.constant 0 : index
    %c0_292 = arith.constant 0 : index
    %c0_293 = arith.constant 0 : index
    %c0_294 = arith.constant 0 : index
    %376 = vector.load %arg3[%c0_291, %c0_292, %c0_293, %c0_294] : memref<1x3x64x64xbf16, #tpu.memory_space<vmem>>, vector<1x1x64x64xbf16>
    %377 = vector.shape_cast %376 : vector<1x1x64x64xbf16> to vector<64x64xbf16>
    %cst_295 = arith.constant dense<0.000000e+00> : vector<64x32xf32>
    %378 = tpu.matmul %377, %375, %cst_295 {dimension_numbers = #tpu.dot_dimension_numbers<[1], [0], [0], [1], [0, 0, 1, 1], [], []>} : vector<64x64xbf16>, vector<64x32xbf16>, vector<64x32xf32> -> vector<64x32xf32>
    %379 = arith.addf %371, %378 : vector<64x32xf32>
    %c1_296 = arith.constant 1 : index
    %c0_297 = arith.constant 0 : index
    %c0_298 = arith.constant 0 : index
    %380 = vector.load %arg4[%c1_296, %c0_297, %c0_298] : memref<3x32x32xbf16, #tpu.memory_space<vmem>>, vector<1x32x32xbf16>
    %381 = vector.shape_cast %380 : vector<1x32x32xbf16> to vector<32x32xbf16>
    %cst_299 = arith.constant dense<0.000000e+00> : vector<64x32xf32>
    %382 = tpu.matmul %370, %381, %cst_299 {dimension_numbers = #tpu.dot_dimension_numbers<[1], [0], [0], [1], [0, 0, 1, 1], [], []>} : vector<64x32xbf16>, vector<32x32xbf16>, vector<64x32xf32> -> vector<64x32xf32>
    %383 = arith.truncf %382 : vector<64x32xf32> to vector<64x32xbf16>
    %c0_300 = arith.constant 0 : index
    %c1_301 = arith.constant 1 : index
    %c0_302 = arith.constant 0 : index
    %c0_303 = arith.constant 0 : index
    %384 = vector.load %arg3[%c0_300, %c1_301, %c0_302, %c0_303] : memref<1x3x64x64xbf16, #tpu.memory_space<vmem>>, vector<1x1x64x64xbf16>
    %385 = vector.shape_cast %384 : vector<1x1x64x64xbf16> to vector<64x64xbf16>
    %cst_304 = arith.constant dense<0.000000e+00> : vector<64x32xf32>
    %386 = tpu.matmul %385, %383, %cst_304 {dimension_numbers = #tpu.dot_dimension_numbers<[1], [0], [0], [1], [0, 0, 1, 1], [], []>} : vector<64x64xbf16>, vector<64x32xbf16>, vector<64x32xf32> -> vector<64x32xf32>
    %387 = arith.addf %379, %386 : vector<64x32xf32>
    %c2_305 = arith.constant 2 : index
    %c0_306 = arith.constant 0 : index
    %c0_307 = arith.constant 0 : index
    %388 = vector.load %arg4[%c2_305, %c0_306, %c0_307] : memref<3x32x32xbf16, #tpu.memory_space<vmem>>, vector<1x32x32xbf16>
    %389 = vector.shape_cast %388 : vector<1x32x32xbf16> to vector<32x32xbf16>
    %cst_308 = arith.constant dense<0.000000e+00> : vector<64x32xf32>
    %390 = tpu.matmul %370, %389, %cst_308 {dimension_numbers = #tpu.dot_dimension_numbers<[1], [0], [0], [1], [0, 0, 1, 1], [], []>} : vector<64x32xbf16>, vector<32x32xbf16>, vector<64x32xf32> -> vector<64x32xf32>
    %391 = arith.truncf %390 : vector<64x32xf32> to vector<64x32xbf16>
    %c0_309 = arith.constant 0 : index
    %c2_310 = arith.constant 2 : index
    %c0_311 = arith.constant 0 : index
    %c0_312 = arith.constant 0 : index
    %392 = vector.load %arg3[%c0_309, %c2_310, %c0_311, %c0_312] : memref<1x3x64x64xbf16, #tpu.memory_space<vmem>>, vector<1x1x64x64xbf16>
    %393 = vector.shape_cast %392 : vector<1x1x64x64xbf16> to vector<64x64xbf16>
    %cst_313 = arith.constant dense<0.000000e+00> : vector<64x32xf32>
    %394 = tpu.matmul %393, %391, %cst_313 {dimension_numbers = #tpu.dot_dimension_numbers<[1], [0], [0], [1], [0, 0, 1, 1], [], []>} : vector<64x64xbf16>, vector<64x32xbf16>, vector<64x32xf32> -> vector<64x32xf32>
    %395 = arith.addf %387, %394 : vector<64x32xf32>
    %396 = arith.truncf %395 : vector<64x32xf32> to vector<64x32xbf16>
    %c0_314 = arith.constant 0 : index
    %c0_315 = arith.constant 0 : index
    %c0_316 = arith.constant 0 : index
    %397 = vector.load %arg5[%c0_314, %c0_315, %c0_316] : memref<3x32x32xbf16, #tpu.memory_space<vmem>>, vector<1x32x32xbf16>
    %398 = vector.shape_cast %397 : vector<1x32x32xbf16> to vector<32x32xbf16>
    %cst_317 = arith.constant dense<0.000000e+00> : vector<64x32xf32>
    %399 = tpu.matmul %396, %398, %cst_317 {dimension_numbers = #tpu.dot_dimension_numbers<[1], [0], [0], [1], [0, 0, 1, 1], [], []>} : vector<64x32xbf16>, vector<32x32xbf16>, vector<64x32xf32> -> vector<64x32xf32>
    %c0_318 = arith.constant 0 : index
    %c0_319 = arith.constant 0 : index
    %c0_320 = arith.constant 0 : index
    %400 = vector.load %arg6[%c0_318, %c0_319, %c0_320] : memref<3x32x32xbf16, #tpu.memory_space<vmem>>, vector<1x32x32xbf16>
    %401 = vector.shape_cast %400 : vector<1x32x32xbf16> to vector<32x32xbf16>
    %cst_321 = arith.constant dense<0.000000e+00> : vector<64x32xf32>
    %402 = tpu.matmul %370, %401, %cst_321 {dimension_numbers = #tpu.dot_dimension_numbers<[1], [0], [0], [1], [0, 0, 1, 1], [], []>} : vector<64x32xbf16>, vector<32x32xbf16>, vector<64x32xf32> -> vector<64x32xf32>
    %403 = arith.addf %399, %402 : vector<64x32xf32>
    %404 = vector.broadcast %0 : vector<1x32xf32> to vector<64x32xf32>
    %405 = arith.addf %403, %404 : vector<64x32xf32>
    %406 = arith.negf %405 : vector<64x32xf32>
    %407 = math.exp %406 : vector<64x32xf32>
    %cst_322 = arith.constant 1.000000e+00 : f32
    %408 = vector.broadcast %cst_322 : f32 to vector<64x32xf32>
    %409 = arith.addf %408, %407 : vector<64x32xf32>
    %410 = arith.divf %408, %409 : vector<64x32xf32>
    %c1_323 = arith.constant 1 : index
    %c0_324 = arith.constant 0 : index
    %c0_325 = arith.constant 0 : index
    %411 = vector.load %arg5[%c1_323, %c0_324, %c0_325] : memref<3x32x32xbf16, #tpu.memory_space<vmem>>, vector<1x32x32xbf16>
    %412 = vector.shape_cast %411 : vector<1x32x32xbf16> to vector<32x32xbf16>
    %cst_326 = arith.constant dense<0.000000e+00> : vector<64x32xf32>
    %413 = tpu.matmul %396, %412, %cst_326 {dimension_numbers = #tpu.dot_dimension_numbers<[1], [0], [0], [1], [0, 0, 1, 1], [], []>} : vector<64x32xbf16>, vector<32x32xbf16>, vector<64x32xf32> -> vector<64x32xf32>
    %c1_327 = arith.constant 1 : index
    %c0_328 = arith.constant 0 : index
    %c0_329 = arith.constant 0 : index
    %414 = vector.load %arg6[%c1_327, %c0_328, %c0_329] : memref<3x32x32xbf16, #tpu.memory_space<vmem>>, vector<1x32x32xbf16>
    %415 = vector.shape_cast %414 : vector<1x32x32xbf16> to vector<32x32xbf16>
    %cst_330 = arith.constant dense<0.000000e+00> : vector<64x32xf32>
    %416 = tpu.matmul %370, %415, %cst_330 {dimension_numbers = #tpu.dot_dimension_numbers<[1], [0], [0], [1], [0, 0, 1, 1], [], []>} : vector<64x32xbf16>, vector<32x32xbf16>, vector<64x32xf32> -> vector<64x32xf32>
    %417 = arith.addf %413, %416 : vector<64x32xf32>
    %418 = vector.broadcast %1 : vector<1x32xf32> to vector<64x32xf32>
    %419 = arith.addf %417, %418 : vector<64x32xf32>
    %420 = arith.negf %419 : vector<64x32xf32>
    %421 = math.exp %420 : vector<64x32xf32>
    %cst_331 = arith.constant 1.000000e+00 : f32
    %422 = vector.broadcast %cst_331 : f32 to vector<64x32xf32>
    %423 = arith.addf %422, %421 : vector<64x32xf32>
    %424 = arith.divf %422, %423 : vector<64x32xf32>
    %c2_332 = arith.constant 2 : index
    %c0_333 = arith.constant 0 : index
    %c0_334 = arith.constant 0 : index
    %425 = vector.load %arg5[%c2_332, %c0_333, %c0_334] : memref<3x32x32xbf16, #tpu.memory_space<vmem>>, vector<1x32x32xbf16>
    %426 = vector.shape_cast %425 : vector<1x32x32xbf16> to vector<32x32xbf16>
    %cst_335 = arith.constant dense<0.000000e+00> : vector<64x32xf32>
    %427 = tpu.matmul %396, %426, %cst_335 {dimension_numbers = #tpu.dot_dimension_numbers<[1], [0], [0], [1], [0, 0, 1, 1], [], []>} : vector<64x32xbf16>, vector<32x32xbf16>, vector<64x32xf32> -> vector<64x32xf32>
    %428 = vector.broadcast %2 : vector<1x32xf32> to vector<64x32xf32>
    %429 = arith.addf %427, %428 : vector<64x32xf32>
    %c2_336 = arith.constant 2 : index
    %c0_337 = arith.constant 0 : index
    %c0_338 = arith.constant 0 : index
    %430 = vector.load %arg6[%c2_336, %c0_337, %c0_338] : memref<3x32x32xbf16, #tpu.memory_space<vmem>>, vector<1x32x32xbf16>
    %431 = vector.shape_cast %430 : vector<1x32x32xbf16> to vector<32x32xbf16>
    %cst_339 = arith.constant dense<0.000000e+00> : vector<64x32xf32>
    %432 = tpu.matmul %370, %431, %cst_339 {dimension_numbers = #tpu.dot_dimension_numbers<[1], [0], [0], [1], [0, 0, 1, 1], [], []>} : vector<64x32xbf16>, vector<32x32xbf16>, vector<64x32xf32> -> vector<64x32xf32>
    %433 = vector.broadcast %3 : vector<1x32xf32> to vector<64x32xf32>
    %434 = arith.addf %432, %433 : vector<64x32xf32>
    %435 = arith.mulf %410, %434 : vector<64x32xf32>
    %436 = arith.addf %429, %435 : vector<64x32xf32>
    %437 = math.tanh %436 : vector<64x32xf32>
    %cst_340 = arith.constant 1.000000e+00 : f32
    %438 = vector.broadcast %cst_340 : f32 to vector<64x32xf32>
    %439 = arith.subf %438, %424 : vector<64x32xf32>
    %440 = arith.mulf %439, %437 : vector<64x32xf32>
    %441 = arith.mulf %424, %369 : vector<64x32xf32>
    %442 = arith.addf %440, %441 : vector<64x32xf32>
    %c6_i32 = arith.constant 6 : i32
    %443 = arith.truncf %442 : vector<64x32xf32> to vector<64x32xbf16>
    %c0_341 = arith.constant 0 : index
    %c0_342 = arith.constant 0 : index
    %444 = vector.load %arg2[%c0_341, %c0_342] : memref<64x32xf32, #tpu.memory_space<vmem>>, vector<64x32xf32>
    %c0_343 = arith.constant 0 : index
    %c0_344 = arith.constant 0 : index
    %c0_345 = arith.constant 0 : index
    %445 = vector.load %arg4[%c0_343, %c0_344, %c0_345] : memref<3x32x32xbf16, #tpu.memory_space<vmem>>, vector<1x32x32xbf16>
    %446 = vector.shape_cast %445 : vector<1x32x32xbf16> to vector<32x32xbf16>
    %cst_346 = arith.constant dense<0.000000e+00> : vector<64x32xf32>
    %447 = tpu.matmul %443, %446, %cst_346 {dimension_numbers = #tpu.dot_dimension_numbers<[1], [0], [0], [1], [0, 0, 1, 1], [], []>} : vector<64x32xbf16>, vector<32x32xbf16>, vector<64x32xf32> -> vector<64x32xf32>
    %448 = arith.truncf %447 : vector<64x32xf32> to vector<64x32xbf16>
    %c0_347 = arith.constant 0 : index
    %c0_348 = arith.constant 0 : index
    %c0_349 = arith.constant 0 : index
    %c0_350 = arith.constant 0 : index
    %449 = vector.load %arg3[%c0_347, %c0_348, %c0_349, %c0_350] : memref<1x3x64x64xbf16, #tpu.memory_space<vmem>>, vector<1x1x64x64xbf16>
    %450 = vector.shape_cast %449 : vector<1x1x64x64xbf16> to vector<64x64xbf16>
    %cst_351 = arith.constant dense<0.000000e+00> : vector<64x32xf32>
    %451 = tpu.matmul %450, %448, %cst_351 {dimension_numbers = #tpu.dot_dimension_numbers<[1], [0], [0], [1], [0, 0, 1, 1], [], []>} : vector<64x64xbf16>, vector<64x32xbf16>, vector<64x32xf32> -> vector<64x32xf32>
    %452 = arith.addf %444, %451 : vector<64x32xf32>
    %c1_352 = arith.constant 1 : index
    %c0_353 = arith.constant 0 : index
    %c0_354 = arith.constant 0 : index
    %453 = vector.load %arg4[%c1_352, %c0_353, %c0_354] : memref<3x32x32xbf16, #tpu.memory_space<vmem>>, vector<1x32x32xbf16>
    %454 = vector.shape_cast %453 : vector<1x32x32xbf16> to vector<32x32xbf16>
    %cst_355 = arith.constant dense<0.000000e+00> : vector<64x32xf32>
    %455 = tpu.matmul %443, %454, %cst_355 {dimension_numbers = #tpu.dot_dimension_numbers<[1], [0], [0], [1], [0, 0, 1, 1], [], []>} : vector<64x32xbf16>, vector<32x32xbf16>, vector<64x32xf32> -> vector<64x32xf32>
    %456 = arith.truncf %455 : vector<64x32xf32> to vector<64x32xbf16>
    %c0_356 = arith.constant 0 : index
    %c1_357 = arith.constant 1 : index
    %c0_358 = arith.constant 0 : index
    %c0_359 = arith.constant 0 : index
    %457 = vector.load %arg3[%c0_356, %c1_357, %c0_358, %c0_359] : memref<1x3x64x64xbf16, #tpu.memory_space<vmem>>, vector<1x1x64x64xbf16>
    %458 = vector.shape_cast %457 : vector<1x1x64x64xbf16> to vector<64x64xbf16>
    %cst_360 = arith.constant dense<0.000000e+00> : vector<64x32xf32>
    %459 = tpu.matmul %458, %456, %cst_360 {dimension_numbers = #tpu.dot_dimension_numbers<[1], [0], [0], [1], [0, 0, 1, 1], [], []>} : vector<64x64xbf16>, vector<64x32xbf16>, vector<64x32xf32> -> vector<64x32xf32>
    %460 = arith.addf %452, %459 : vector<64x32xf32>
    %c2_361 = arith.constant 2 : index
    %c0_362 = arith.constant 0 : index
    %c0_363 = arith.constant 0 : index
    %461 = vector.load %arg4[%c2_361, %c0_362, %c0_363] : memref<3x32x32xbf16, #tpu.memory_space<vmem>>, vector<1x32x32xbf16>
    %462 = vector.shape_cast %461 : vector<1x32x32xbf16> to vector<32x32xbf16>
    %cst_364 = arith.constant dense<0.000000e+00> : vector<64x32xf32>
    %463 = tpu.matmul %443, %462, %cst_364 {dimension_numbers = #tpu.dot_dimension_numbers<[1], [0], [0], [1], [0, 0, 1, 1], [], []>} : vector<64x32xbf16>, vector<32x32xbf16>, vector<64x32xf32> -> vector<64x32xf32>
    %464 = arith.truncf %463 : vector<64x32xf32> to vector<64x32xbf16>
    %c0_365 = arith.constant 0 : index
    %c2_366 = arith.constant 2 : index
    %c0_367 = arith.constant 0 : index
    %c0_368 = arith.constant 0 : index
    %465 = vector.load %arg3[%c0_365, %c2_366, %c0_367, %c0_368] : memref<1x3x64x64xbf16, #tpu.memory_space<vmem>>, vector<1x1x64x64xbf16>
    %466 = vector.shape_cast %465 : vector<1x1x64x64xbf16> to vector<64x64xbf16>
    %cst_369 = arith.constant dense<0.000000e+00> : vector<64x32xf32>
    %467 = tpu.matmul %466, %464, %cst_369 {dimension_numbers = #tpu.dot_dimension_numbers<[1], [0], [0], [1], [0, 0, 1, 1], [], []>} : vector<64x64xbf16>, vector<64x32xbf16>, vector<64x32xf32> -> vector<64x32xf32>
    %468 = arith.addf %460, %467 : vector<64x32xf32>
    %469 = arith.truncf %468 : vector<64x32xf32> to vector<64x32xbf16>
    %c0_370 = arith.constant 0 : index
    %c0_371 = arith.constant 0 : index
    %c0_372 = arith.constant 0 : index
    %470 = vector.load %arg5[%c0_370, %c0_371, %c0_372] : memref<3x32x32xbf16, #tpu.memory_space<vmem>>, vector<1x32x32xbf16>
    %471 = vector.shape_cast %470 : vector<1x32x32xbf16> to vector<32x32xbf16>
    %cst_373 = arith.constant dense<0.000000e+00> : vector<64x32xf32>
    %472 = tpu.matmul %469, %471, %cst_373 {dimension_numbers = #tpu.dot_dimension_numbers<[1], [0], [0], [1], [0, 0, 1, 1], [], []>} : vector<64x32xbf16>, vector<32x32xbf16>, vector<64x32xf32> -> vector<64x32xf32>
    %c0_374 = arith.constant 0 : index
    %c0_375 = arith.constant 0 : index
    %c0_376 = arith.constant 0 : index
    %473 = vector.load %arg6[%c0_374, %c0_375, %c0_376] : memref<3x32x32xbf16, #tpu.memory_space<vmem>>, vector<1x32x32xbf16>
    %474 = vector.shape_cast %473 : vector<1x32x32xbf16> to vector<32x32xbf16>
    %cst_377 = arith.constant dense<0.000000e+00> : vector<64x32xf32>
    %475 = tpu.matmul %443, %474, %cst_377 {dimension_numbers = #tpu.dot_dimension_numbers<[1], [0], [0], [1], [0, 0, 1, 1], [], []>} : vector<64x32xbf16>, vector<32x32xbf16>, vector<64x32xf32> -> vector<64x32xf32>
    %476 = arith.addf %472, %475 : vector<64x32xf32>
    %477 = vector.broadcast %0 : vector<1x32xf32> to vector<64x32xf32>
    %478 = arith.addf %476, %477 : vector<64x32xf32>
    %479 = arith.negf %478 : vector<64x32xf32>
    %480 = math.exp %479 : vector<64x32xf32>
    %cst_378 = arith.constant 1.000000e+00 : f32
    %481 = vector.broadcast %cst_378 : f32 to vector<64x32xf32>
    %482 = arith.addf %481, %480 : vector<64x32xf32>
    %483 = arith.divf %481, %482 : vector<64x32xf32>
    %c1_379 = arith.constant 1 : index
    %c0_380 = arith.constant 0 : index
    %c0_381 = arith.constant 0 : index
    %484 = vector.load %arg5[%c1_379, %c0_380, %c0_381] : memref<3x32x32xbf16, #tpu.memory_space<vmem>>, vector<1x32x32xbf16>
    %485 = vector.shape_cast %484 : vector<1x32x32xbf16> to vector<32x32xbf16>
    %cst_382 = arith.constant dense<0.000000e+00> : vector<64x32xf32>
    %486 = tpu.matmul %469, %485, %cst_382 {dimension_numbers = #tpu.dot_dimension_numbers<[1], [0], [0], [1], [0, 0, 1, 1], [], []>} : vector<64x32xbf16>, vector<32x32xbf16>, vector<64x32xf32> -> vector<64x32xf32>
    %c1_383 = arith.constant 1 : index
    %c0_384 = arith.constant 0 : index
    %c0_385 = arith.constant 0 : index
    %487 = vector.load %arg6[%c1_383, %c0_384, %c0_385] : memref<3x32x32xbf16, #tpu.memory_space<vmem>>, vector<1x32x32xbf16>
    %488 = vector.shape_cast %487 : vector<1x32x32xbf16> to vector<32x32xbf16>
    %cst_386 = arith.constant dense<0.000000e+00> : vector<64x32xf32>
    %489 = tpu.matmul %443, %488, %cst_386 {dimension_numbers = #tpu.dot_dimension_numbers<[1], [0], [0], [1], [0, 0, 1, 1], [], []>} : vector<64x32xbf16>, vector<32x32xbf16>, vector<64x32xf32> -> vector<64x32xf32>
    %490 = arith.addf %486, %489 : vector<64x32xf32>
    %491 = vector.broadcast %1 : vector<1x32xf32> to vector<64x32xf32>
    %492 = arith.addf %490, %491 : vector<64x32xf32>
    %493 = arith.negf %492 : vector<64x32xf32>
    %494 = math.exp %493 : vector<64x32xf32>
    %cst_387 = arith.constant 1.000000e+00 : f32
    %495 = vector.broadcast %cst_387 : f32 to vector<64x32xf32>
    %496 = arith.addf %495, %494 : vector<64x32xf32>
    %497 = arith.divf %495, %496 : vector<64x32xf32>
    %c2_388 = arith.constant 2 : index
    %c0_389 = arith.constant 0 : index
    %c0_390 = arith.constant 0 : index
    %498 = vector.load %arg5[%c2_388, %c0_389, %c0_390] : memref<3x32x32xbf16, #tpu.memory_space<vmem>>, vector<1x32x32xbf16>
    %499 = vector.shape_cast %498 : vector<1x32x32xbf16> to vector<32x32xbf16>
    %cst_391 = arith.constant dense<0.000000e+00> : vector<64x32xf32>
    %500 = tpu.matmul %469, %499, %cst_391 {dimension_numbers = #tpu.dot_dimension_numbers<[1], [0], [0], [1], [0, 0, 1, 1], [], []>} : vector<64x32xbf16>, vector<32x32xbf16>, vector<64x32xf32> -> vector<64x32xf32>
    %501 = vector.broadcast %2 : vector<1x32xf32> to vector<64x32xf32>
    %502 = arith.addf %500, %501 : vector<64x32xf32>
    %c2_392 = arith.constant 2 : index
    %c0_393 = arith.constant 0 : index
    %c0_394 = arith.constant 0 : index
    %503 = vector.load %arg6[%c2_392, %c0_393, %c0_394] : memref<3x32x32xbf16, #tpu.memory_space<vmem>>, vector<1x32x32xbf16>
    %504 = vector.shape_cast %503 : vector<1x32x32xbf16> to vector<32x32xbf16>
    %cst_395 = arith.constant dense<0.000000e+00> : vector<64x32xf32>
    %505 = tpu.matmul %443, %504, %cst_395 {dimension_numbers = #tpu.dot_dimension_numbers<[1], [0], [0], [1], [0, 0, 1, 1], [], []>} : vector<64x32xbf16>, vector<32x32xbf16>, vector<64x32xf32> -> vector<64x32xf32>
    %506 = vector.broadcast %3 : vector<1x32xf32> to vector<64x32xf32>
    %507 = arith.addf %505, %506 : vector<64x32xf32>
    %508 = arith.mulf %483, %507 : vector<64x32xf32>
    %509 = arith.addf %502, %508 : vector<64x32xf32>
    %510 = math.tanh %509 : vector<64x32xf32>
    %cst_396 = arith.constant 1.000000e+00 : f32
    %511 = vector.broadcast %cst_396 : f32 to vector<64x32xf32>
    %512 = arith.subf %511, %497 : vector<64x32xf32>
    %513 = arith.mulf %512, %510 : vector<64x32xf32>
    %514 = arith.mulf %497, %442 : vector<64x32xf32>
    %515 = arith.addf %513, %514 : vector<64x32xf32>
    %c7_i32 = arith.constant 7 : i32
    %516 = arith.truncf %515 : vector<64x32xf32> to vector<64x32xbf16>
    %c0_397 = arith.constant 0 : index
    %c0_398 = arith.constant 0 : index
    %517 = vector.load %arg2[%c0_397, %c0_398] : memref<64x32xf32, #tpu.memory_space<vmem>>, vector<64x32xf32>
    %c0_399 = arith.constant 0 : index
    %c0_400 = arith.constant 0 : index
    %c0_401 = arith.constant 0 : index
    %518 = vector.load %arg4[%c0_399, %c0_400, %c0_401] : memref<3x32x32xbf16, #tpu.memory_space<vmem>>, vector<1x32x32xbf16>
    %519 = vector.shape_cast %518 : vector<1x32x32xbf16> to vector<32x32xbf16>
    %cst_402 = arith.constant dense<0.000000e+00> : vector<64x32xf32>
    %520 = tpu.matmul %516, %519, %cst_402 {dimension_numbers = #tpu.dot_dimension_numbers<[1], [0], [0], [1], [0, 0, 1, 1], [], []>} : vector<64x32xbf16>, vector<32x32xbf16>, vector<64x32xf32> -> vector<64x32xf32>
    %521 = arith.truncf %520 : vector<64x32xf32> to vector<64x32xbf16>
    %c0_403 = arith.constant 0 : index
    %c0_404 = arith.constant 0 : index
    %c0_405 = arith.constant 0 : index
    %c0_406 = arith.constant 0 : index
    %522 = vector.load %arg3[%c0_403, %c0_404, %c0_405, %c0_406] : memref<1x3x64x64xbf16, #tpu.memory_space<vmem>>, vector<1x1x64x64xbf16>
    %523 = vector.shape_cast %522 : vector<1x1x64x64xbf16> to vector<64x64xbf16>
    %cst_407 = arith.constant dense<0.000000e+00> : vector<64x32xf32>
    %524 = tpu.matmul %523, %521, %cst_407 {dimension_numbers = #tpu.dot_dimension_numbers<[1], [0], [0], [1], [0, 0, 1, 1], [], []>} : vector<64x64xbf16>, vector<64x32xbf16>, vector<64x32xf32> -> vector<64x32xf32>
    %525 = arith.addf %517, %524 : vector<64x32xf32>
    %c1_408 = arith.constant 1 : index
    %c0_409 = arith.constant 0 : index
    %c0_410 = arith.constant 0 : index
    %526 = vector.load %arg4[%c1_408, %c0_409, %c0_410] : memref<3x32x32xbf16, #tpu.memory_space<vmem>>, vector<1x32x32xbf16>
    %527 = vector.shape_cast %526 : vector<1x32x32xbf16> to vector<32x32xbf16>
    %cst_411 = arith.constant dense<0.000000e+00> : vector<64x32xf32>
    %528 = tpu.matmul %516, %527, %cst_411 {dimension_numbers = #tpu.dot_dimension_numbers<[1], [0], [0], [1], [0, 0, 1, 1], [], []>} : vector<64x32xbf16>, vector<32x32xbf16>, vector<64x32xf32> -> vector<64x32xf32>
    %529 = arith.truncf %528 : vector<64x32xf32> to vector<64x32xbf16>
    %c0_412 = arith.constant 0 : index
    %c1_413 = arith.constant 1 : index
    %c0_414 = arith.constant 0 : index
    %c0_415 = arith.constant 0 : index
    %530 = vector.load %arg3[%c0_412, %c1_413, %c0_414, %c0_415] : memref<1x3x64x64xbf16, #tpu.memory_space<vmem>>, vector<1x1x64x64xbf16>
    %531 = vector.shape_cast %530 : vector<1x1x64x64xbf16> to vector<64x64xbf16>
    %cst_416 = arith.constant dense<0.000000e+00> : vector<64x32xf32>
    %532 = tpu.matmul %531, %529, %cst_416 {dimension_numbers = #tpu.dot_dimension_numbers<[1], [0], [0], [1], [0, 0, 1, 1], [], []>} : vector<64x64xbf16>, vector<64x32xbf16>, vector<64x32xf32> -> vector<64x32xf32>
    %533 = arith.addf %525, %532 : vector<64x32xf32>
    %c2_417 = arith.constant 2 : index
    %c0_418 = arith.constant 0 : index
    %c0_419 = arith.constant 0 : index
    %534 = vector.load %arg4[%c2_417, %c0_418, %c0_419] : memref<3x32x32xbf16, #tpu.memory_space<vmem>>, vector<1x32x32xbf16>
    %535 = vector.shape_cast %534 : vector<1x32x32xbf16> to vector<32x32xbf16>
    %cst_420 = arith.constant dense<0.000000e+00> : vector<64x32xf32>
    %536 = tpu.matmul %516, %535, %cst_420 {dimension_numbers = #tpu.dot_dimension_numbers<[1], [0], [0], [1], [0, 0, 1, 1], [], []>} : vector<64x32xbf16>, vector<32x32xbf16>, vector<64x32xf32> -> vector<64x32xf32>
    %537 = arith.truncf %536 : vector<64x32xf32> to vector<64x32xbf16>
    %c0_421 = arith.constant 0 : index
    %c2_422 = arith.constant 2 : index
    %c0_423 = arith.constant 0 : index
    %c0_424 = arith.constant 0 : index
    %538 = vector.load %arg3[%c0_421, %c2_422, %c0_423, %c0_424] : memref<1x3x64x64xbf16, #tpu.memory_space<vmem>>, vector<1x1x64x64xbf16>
    %539 = vector.shape_cast %538 : vector<1x1x64x64xbf16> to vector<64x64xbf16>
    %cst_425 = arith.constant dense<0.000000e+00> : vector<64x32xf32>
    %540 = tpu.matmul %539, %537, %cst_425 {dimension_numbers = #tpu.dot_dimension_numbers<[1], [0], [0], [1], [0, 0, 1, 1], [], []>} : vector<64x64xbf16>, vector<64x32xbf16>, vector<64x32xf32> -> vector<64x32xf32>
    %541 = arith.addf %533, %540 : vector<64x32xf32>
    %542 = arith.truncf %541 : vector<64x32xf32> to vector<64x32xbf16>
    %c0_426 = arith.constant 0 : index
    %c0_427 = arith.constant 0 : index
    %c0_428 = arith.constant 0 : index
    %543 = vector.load %arg5[%c0_426, %c0_427, %c0_428] : memref<3x32x32xbf16, #tpu.memory_space<vmem>>, vector<1x32x32xbf16>
    %544 = vector.shape_cast %543 : vector<1x32x32xbf16> to vector<32x32xbf16>
    %cst_429 = arith.constant dense<0.000000e+00> : vector<64x32xf32>
    %545 = tpu.matmul %542, %544, %cst_429 {dimension_numbers = #tpu.dot_dimension_numbers<[1], [0], [0], [1], [0, 0, 1, 1], [], []>} : vector<64x32xbf16>, vector<32x32xbf16>, vector<64x32xf32> -> vector<64x32xf32>
    %c0_430 = arith.constant 0 : index
    %c0_431 = arith.constant 0 : index
    %c0_432 = arith.constant 0 : index
    %546 = vector.load %arg6[%c0_430, %c0_431, %c0_432] : memref<3x32x32xbf16, #tpu.memory_space<vmem>>, vector<1x32x32xbf16>
    %547 = vector.shape_cast %546 : vector<1x32x32xbf16> to vector<32x32xbf16>
    %cst_433 = arith.constant dense<0.000000e+00> : vector<64x32xf32>
    %548 = tpu.matmul %516, %547, %cst_433 {dimension_numbers = #tpu.dot_dimension_numbers<[1], [0], [0], [1], [0, 0, 1, 1], [], []>} : vector<64x32xbf16>, vector<32x32xbf16>, vector<64x32xf32> -> vector<64x32xf32>
    %549 = arith.addf %545, %548 : vector<64x32xf32>
    %550 = vector.broadcast %0 : vector<1x32xf32> to vector<64x32xf32>
    %551 = arith.addf %549, %550 : vector<64x32xf32>
    %552 = arith.negf %551 : vector<64x32xf32>
    %553 = math.exp %552 : vector<64x32xf32>
    %cst_434 = arith.constant 1.000000e+00 : f32
    %554 = vector.broadcast %cst_434 : f32 to vector<64x32xf32>
    %555 = arith.addf %554, %553 : vector<64x32xf32>
    %556 = arith.divf %554, %555 : vector<64x32xf32>
    %c1_435 = arith.constant 1 : index
    %c0_436 = arith.constant 0 : index
    %c0_437 = arith.constant 0 : index
    %557 = vector.load %arg5[%c1_435, %c0_436, %c0_437] : memref<3x32x32xbf16, #tpu.memory_space<vmem>>, vector<1x32x32xbf16>
    %558 = vector.shape_cast %557 : vector<1x32x32xbf16> to vector<32x32xbf16>
    %cst_438 = arith.constant dense<0.000000e+00> : vector<64x32xf32>
    %559 = tpu.matmul %542, %558, %cst_438 {dimension_numbers = #tpu.dot_dimension_numbers<[1], [0], [0], [1], [0, 0, 1, 1], [], []>} : vector<64x32xbf16>, vector<32x32xbf16>, vector<64x32xf32> -> vector<64x32xf32>
    %c1_439 = arith.constant 1 : index
    %c0_440 = arith.constant 0 : index
    %c0_441 = arith.constant 0 : index
    %560 = vector.load %arg6[%c1_439, %c0_440, %c0_441] : memref<3x32x32xbf16, #tpu.memory_space<vmem>>, vector<1x32x32xbf16>
    %561 = vector.shape_cast %560 : vector<1x32x32xbf16> to vector<32x32xbf16>
    %cst_442 = arith.constant dense<0.000000e+00> : vector<64x32xf32>
    %562 = tpu.matmul %516, %561, %cst_442 {dimension_numbers = #tpu.dot_dimension_numbers<[1], [0], [0], [1], [0, 0, 1, 1], [], []>} : vector<64x32xbf16>, vector<32x32xbf16>, vector<64x32xf32> -> vector<64x32xf32>
    %563 = arith.addf %559, %562 : vector<64x32xf32>
    %564 = vector.broadcast %1 : vector<1x32xf32> to vector<64x32xf32>
    %565 = arith.addf %563, %564 : vector<64x32xf32>
    %566 = arith.negf %565 : vector<64x32xf32>
    %567 = math.exp %566 : vector<64x32xf32>
    %cst_443 = arith.constant 1.000000e+00 : f32
    %568 = vector.broadcast %cst_443 : f32 to vector<64x32xf32>
    %569 = arith.addf %568, %567 : vector<64x32xf32>
    %570 = arith.divf %568, %569 : vector<64x32xf32>
    %c2_444 = arith.constant 2 : index
    %c0_445 = arith.constant 0 : index
    %c0_446 = arith.constant 0 : index
    %571 = vector.load %arg5[%c2_444, %c0_445, %c0_446] : memref<3x32x32xbf16, #tpu.memory_space<vmem>>, vector<1x32x32xbf16>
    %572 = vector.shape_cast %571 : vector<1x32x32xbf16> to vector<32x32xbf16>
    %cst_447 = arith.constant dense<0.000000e+00> : vector<64x32xf32>
    %573 = tpu.matmul %542, %572, %cst_447 {dimension_numbers = #tpu.dot_dimension_numbers<[1], [0], [0], [1], [0, 0, 1, 1], [], []>} : vector<64x32xbf16>, vector<32x32xbf16>, vector<64x32xf32> -> vector<64x32xf32>
    %574 = vector.broadcast %2 : vector<1x32xf32> to vector<64x32xf32>
    %575 = arith.addf %573, %574 : vector<64x32xf32>
    %c2_448 = arith.constant 2 : index
    %c0_449 = arith.constant 0 : index
    %c0_450 = arith.constant 0 : index
    %576 = vector.load %arg6[%c2_448, %c0_449, %c0_450] : memref<3x32x32xbf16, #tpu.memory_space<vmem>>, vector<1x32x32xbf16>
    %577 = vector.shape_cast %576 : vector<1x32x32xbf16> to vector<32x32xbf16>
    %cst_451 = arith.constant dense<0.000000e+00> : vector<64x32xf32>
    %578 = tpu.matmul %516, %577, %cst_451 {dimension_numbers = #tpu.dot_dimension_numbers<[1], [0], [0], [1], [0, 0, 1, 1], [], []>} : vector<64x32xbf16>, vector<32x32xbf16>, vector<64x32xf32> -> vector<64x32xf32>
    %579 = vector.broadcast %3 : vector<1x32xf32> to vector<64x32xf32>
    %580 = arith.addf %578, %579 : vector<64x32xf32>
    %581 = arith.mulf %556, %580 : vector<64x32xf32>
    %582 = arith.addf %575, %581 : vector<64x32xf32>
    %583 = math.tanh %582 : vector<64x32xf32>
    %cst_452 = arith.constant 1.000000e+00 : f32
    %584 = vector.broadcast %cst_452 : f32 to vector<64x32xf32>
    %585 = arith.subf %584, %570 : vector<64x32xf32>
    %586 = arith.mulf %585, %583 : vector<64x32xf32>
    %587 = arith.mulf %570, %515 : vector<64x32xf32>
    %588 = arith.addf %586, %587 : vector<64x32xf32>
    %589 = vector.extract_strided_slice %588 {offsets = [0, 0], sizes = [16, 32], strides = [1, 1]} : vector<64x32xf32> to vector<16x32xf32>
    %cst_453 = arith.constant dense<0.000000e+00> : vector<32xf32>
    %590 = vector.multi_reduction <add>, %589, %cst_453 [0] : vector<16x32xf32> to vector<32xf32>
    %591 = vector.shape_cast %590 : vector<32xf32> to vector<1x32xf32>
    %592 = vector.extract_strided_slice %588 {offsets = [16, 0], sizes = [16, 32], strides = [1, 1]} : vector<64x32xf32> to vector<16x32xf32>
    %cst_454 = arith.constant dense<0.000000e+00> : vector<32xf32>
    %593 = vector.multi_reduction <add>, %592, %cst_454 [0] : vector<16x32xf32> to vector<32xf32>
    %594 = vector.shape_cast %593 : vector<32xf32> to vector<1x32xf32>
    %595 = vector.extract_strided_slice %588 {offsets = [32, 0], sizes = [16, 32], strides = [1, 1]} : vector<64x32xf32> to vector<16x32xf32>
    %cst_455 = arith.constant dense<0.000000e+00> : vector<32xf32>
    %596 = vector.multi_reduction <add>, %595, %cst_455 [0] : vector<16x32xf32> to vector<32xf32>
    %597 = vector.shape_cast %596 : vector<32xf32> to vector<1x32xf32>
    %598 = vector.extract_strided_slice %588 {offsets = [48, 0], sizes = [16, 32], strides = [1, 1]} : vector<64x32xf32> to vector<16x32xf32>
    %cst_456 = arith.constant dense<0.000000e+00> : vector<32xf32>
    %599 = vector.multi_reduction <add>, %598, %cst_456 [0] : vector<16x32xf32> to vector<32xf32>
    %600 = vector.shape_cast %599 : vector<32xf32> to vector<1x32xf32>
    %cst_457 = arith.constant 0.000000e+00 : f32
    %601 = vector.broadcast %cst_457 : f32 to vector<4x32xf32>
    %602 = tpu.concatenate %591, %594, %597, %600, %601 in 0 : vector<1x32xf32>, vector<1x32xf32>, vector<1x32xf32>, vector<1x32xf32>, vector<4x32xf32> -> vector<8x32xf32>
    %c0_458 = arith.constant 0 : index
    %c0_459 = arith.constant 0 : index
    %603 = vector.load %arg8[%c0_458, %c0_459] : memref<32x128xf32, #tpu.memory_space<vmem>>, vector<32x128xf32>
    %cst_460 = arith.constant dense<0.000000e+00> : vector<8x128xf32>
    %604 = tpu.matmul %602, %603, %cst_460 {dimension_numbers = #tpu.dot_dimension_numbers<[1], [0], [0], [1], [0, 0, 1, 1], [], []>} : vector<8x32xf32>, vector<32x128xf32>, vector<8x128xf32> -> vector<8x128xf32>
    %c0_461 = arith.constant 0 : index
    %c0_462 = arith.constant 0 : index
    %605 = vector.load %arg9[%c0_461, %c0_462] : memref<1x128xf32, #tpu.memory_space<vmem>>, vector<1x128xf32>
    %606 = vector.broadcast %605 : vector<1x128xf32> to vector<8x128xf32>
    %607 = arith.addf %604, %606 : vector<8x128xf32>
    %cst_463 = arith.constant dense<0xFF800000> : vector<8xf32>
    %608 = vector.multi_reduction <maximumf>, %607, %cst_463 [1] : vector<8x128xf32> to vector<8xf32>
    %609 = vector.shape_cast %608 : vector<8xf32> to vector<8x1xf32>
    %610 = vector.broadcast %609 : vector<8x1xf32> to vector<8x128xf32>
    %611 = arith.subf %607, %610 : vector<8x128xf32>
    %612 = math.exp %611 : vector<8x128xf32>
    %cst_464 = arith.constant dense<0.000000e+00> : vector<8xf32>
    %613 = vector.multi_reduction <add>, %612, %cst_464 [1] : vector<8x128xf32> to vector<8xf32>
    %614 = vector.shape_cast %613 : vector<8xf32> to vector<8x1xf32>
    %615 = vector.broadcast %614 : vector<8x1xf32> to vector<8x128xf32>
    %616 = arith.divf %612, %615 : vector<8x128xf32>
    %c0_465 = arith.constant 0 : index
    %c0_466 = arith.constant 0 : index
    %c0_467 = arith.constant 0 : index
    %617 = vector.load %arg10[%c0_465, %c0_466, %c0_467] : memref<1x8x128xf32, #tpu.memory_space<vmem>>, vector<1x8x128xf32>
    %618 = vector.shape_cast %617 : vector<1x8x128xf32> to vector<8x128xf32>
    %619 = vector.shape_cast %616 : vector<8x128xf32> to vector<1x8x128xf32>
    tpu.vector_store %arg10[%c0_465, %c0_466, %c0_467], %619 {strides = array<i32>} : memref<1x8x128xf32, #tpu.memory_space<vmem>>, vector<1x8x128xf32>,
    return
  }
  func.func @transform_0(%arg0: i32) -> (i32, i32) {
    %c0_i32 = arith.constant 0 : i32
    %c0_i32_0 = arith.constant 0 : i32
    return %arg0, %c0_i32 : i32, i32
  }
  func.func @transform_1(%arg0: i32) -> (i32, i32) {
    %c0_i32 = arith.constant 0 : i32
    %c0_i32_0 = arith.constant 0 : i32
    return %arg0, %c0_i32 : i32, i32
  }
  func.func @transform_2(%arg0: i32) -> (i32, i32, i32, i32) {
    %c0_i32 = arith.constant 0 : i32
    %c0_i32_0 = arith.constant 0 : i32
    %c0_i32_1 = arith.constant 0 : i32
    %c0_i32_2 = arith.constant 0 : i32
    return %arg0, %c0_i32, %c0_i32_0, %c0_i32_1 : i32, i32, i32, i32
  }
  func.func @transform_3(%arg0: i32) -> (i32, i32, i32) {
    %c0_i32 = arith.constant 0 : i32
    %c0_i32_0 = arith.constant 0 : i32
    %c0_i32_1 = arith.constant 0 : i32
    %c0_i32_2 = arith.constant 0 : i32
    return %c0_i32, %c0_i32_0, %c0_i32_1 : i32, i32, i32
  }
  func.func @transform_4(%arg0: i32) -> (i32, i32, i32) {
    %c0_i32 = arith.constant 0 : i32
    %c0_i32_0 = arith.constant 0 : i32
    %c0_i32_1 = arith.constant 0 : i32
    %c0_i32_2 = arith.constant 0 : i32
    return %c0_i32, %c0_i32_0, %c0_i32_1 : i32, i32, i32
  }
  func.func @transform_5(%arg0: i32) -> (i32, i32, i32) {
    %c0_i32 = arith.constant 0 : i32
    %c0_i32_0 = arith.constant 0 : i32
    %c0_i32_1 = arith.constant 0 : i32
    %c0_i32_2 = arith.constant 0 : i32
    return %c0_i32, %c0_i32_0, %c0_i32_1 : i32, i32, i32
  }
  func.func @transform_6(%arg0: i32) -> (i32, i32) {
    %c0_i32 = arith.constant 0 : i32
    %c0_i32_0 = arith.constant 0 : i32
    %c0_i32_1 = arith.constant 0 : i32
    return %c0_i32, %c0_i32_0 : i32, i32
  }
  func.func @transform_7(%arg0: i32) -> (i32, i32) {
    %c0_i32 = arith.constant 0 : i32
    %c0_i32_0 = arith.constant 0 : i32
    %c0_i32_1 = arith.constant 0 : i32
    return %c0_i32, %c0_i32_0 : i32, i32
  }
  func.func @transform_8(%arg0: i32) -> (i32, i32) {
    %c0_i32 = arith.constant 0 : i32
    %c0_i32_0 = arith.constant 0 : i32
    %c0_i32_1 = arith.constant 0 : i32
    return %c0_i32, %c0_i32_0 : i32, i32
  }
  func.func @transform_9(%arg0: i32) -> (i32, i32, i32) {
    %c0_i32 = arith.constant 0 : i32
    %c0_i32_0 = arith.constant 0 : i32
    %c0_i32_1 = arith.constant 0 : i32
    return %arg0, %c0_i32, %c0_i32_0 : i32, i32, i32
  }
}

</mosaic_0001>

<llo_original>
// kernel: tpu_custom_call.1
$region0: #{tpu_custom_call.1}
  #allocation0 [shape = 'u32[]', space=smem, size = 0x4, offset = 0x4, fixed_abs, tag = 'smem constant byte address 0x4 - core index']
  #allocation1 [shape = 'u32[144,128]{1,0:T(1,128)}', space=vmem, size = 0x12000, scoped, tag = 'internal scratch']
  %s0 = inlined_call_operand.vmem [shape: f32[128,32], index: 0, kind: input, shape index: {}]
  %s1 = inlined_call_operand.vmem [shape: f32[128,32], index: 1, kind: input, shape index: {}]
  %s2 = inlined_call_operand.vmem [shape: bf16[2,3,64,64], index: 2, kind: input, shape index: {}]
  %s3 = inlined_call_operand.vmem [shape: bf16[3,32,32], index: 3, kind: input, shape index: {}]
  %s4 = inlined_call_operand.vmem [shape: bf16[3,32,32], index: 4, kind: input, shape index: {}]
  %s5 = inlined_call_operand.vmem [shape: bf16[3,32,32], index: 5, kind: input, shape index: {}]
  %s6 = inlined_call_operand.vmem [shape: f32[4,32], index: 6, kind: input, shape index: {}]
  %s7 = inlined_call_operand.hbm [shape: f32[32,128], index: 7, kind: input, shape index: {}]
  %s8 = inlined_call_operand.vmem [shape: f32[1,128], index: 8, kind: input, shape index: {}]
  %s9 = inlined_call_operand.hbm [shape: f32[2,8,128], index: 9, kind: output, shape index: {}]
  %s10 = sld [smem:[#allocation0]]
  $region73: #{tpu_custom_call.1} parent=0
    _
  %s12 = ssub.s32 1, %s10
  %s13 = scalar_select 0, %s12, %s10
  $region1: #{tpu_custom_call.1} parent=0
    #allocation2 [shape = 'u8[16384]{0}', space=vmem, size = 0x4000, scoped, tag = 'input window, operand 7, single buffered']
    #allocation3 [shape = 's32[2]{0}', space=sflag, size = 0x8, scoped, tag = 'scoped memory for tpu_custom_call.1']
    #allocation4 [shape = 's32[2]{0}', space=sflag, size = 0x8, scoped, tag = 'scoped memory for tpu_custom_call.1']
    #allocation5 [shape = 'u8[8192]{0}', space=vmem, size = 0x2000, scoped, tag = 'output window, operand 0']
    %14 = vsyncpa [#allocation3], 0
    %15 = vsyncpa [#allocation4], 0
    %s16 = scalar_lea.sflag [#allocation4], 1
    %17 = vsyncpa %s16, 0
    loop: start=0, step=1, limit=4
    $region2: #{tpu_custom_call.1} parent=1 // loop_pre_header
      _
    $region3: #{tpu_custom_call.1} parent=1 // loop_header
      %s19 = sphi 0, %s23
      %p20 = scmp.ge.s32.totalorder %s19, 4
      %s29 = sphi 0, %s31
      %s32 = sphi 0, %s29
      %s33 = sphi 0, %s32
      %s49 = sphi 0, %s33
      %s55 = sphi 0, %s57
      %s58 = sphi 0, %s55
      %s59 = sphi 0, %s58
      %s75 = sphi 0, %s59
      %s81 = sphi 0, %s83
      %s84 = sphi 0, %s81
      %s85 = sphi 0, %s84
      %s101 = sphi 0, %s85
      %s105 = sphi 0, %s105
      %s107 = sphi 0, %s105
      %s108 = sphi 0, %s107
      %s122 = sphi 0, %s108
      %s126 = sphi 0, %s126
      %s128 = sphi 0, %s126
      %s129 = sphi 0, %s128
      %s143 = sphi 0, %s129
      %s147 = sphi 0, %s147
      %s149 = sphi 0, %s147
      %s150 = sphi 0, %s149
      %s164 = sphi 0, %s150
      %s168 = sphi 0, %s168
      %s170 = sphi 0, %s168
      %s171 = sphi 0, %s170
      %s185 = sphi 0, %s171
      %s189 = sphi 0, %s189
      %s191 = sphi 0, %s189
      %s192 = sphi 0, %s191
      %s206 = sphi 0, %s192
      %s210 = sphi 0, %s210
      %s212 = sphi 0, %s210
      %s213 = sphi 0, %s212
      %s227 = sphi 0, %s213
      %s233 = sphi 0, %s235
      %s236 = sphi 0, %s233
      %s237 = sphi 0, %s236
      %s253 = sphi 0, %s237
    $region4: #{tpu_custom_call.1} parent=1 // loop_header_branch
      %22 = sbr.rel (%p20) target = $region8
    $region5: #{tpu_custom_call.1} parent=1 // loop_body
      %s24 = ssub.s32 %s19, 1
      %s25 = ssub.s32 %s19, 2
      %s26 = sadd.s32 %s19, 1
      %s27 = ssub.s32 %s19, %s26
      %p28 = scmp.eq.s32.totalorder %s27, 0
      %s30 = sadd.s32 %s29, 1
      %s31 = scalar_select %p28, %s29, %s30
      %p34 = pneg %p28
      %p35 = scmp.eq.s32.totalorder %s19, 1
      %p36 = por %p34, %p35
      %p37 = scmp.ne.s32.totalorder %s29, %s32
      %p38 = scmp.eq.s32.totalorder %s19, 0
      %p39 = por %p37, %p38
      %p40 = scmp.ne.s32.totalorder %s29, %s32
      %p41 = scmp.eq.s32.totalorder %s24, 1
      %p42 = por %p40, %p41
      %p43 = scmp.ne.s32.totalorder %s32, %s33
      %p44 = scmp.eq.s32.totalorder %s24, 0
      %p45 = por %p43, %p44
      %p46 = scmp.ne.s32.totalorder %s32, %s33
      %p47 = scmp.eq.s32.totalorder %s25, 1
      %p48 = por %p46, %p47
      %p50 = scmp.ne.s32.totalorder %s33, %s49
      %p51 = scmp.eq.s32.totalorder %s25, 0
      %p52 = por %p50, %p51
      %s53 = ssub.s32 %s19, %s26
      %p54 = scmp.eq.s32.totalorder %s53, 0
      %s56 = sadd.s32 %s55, 1
      %s57 = scalar_select %p54, %s55, %s56
      %p60 = pneg %p54
      %p61 = scmp.eq.s32.totalorder %s19, 1
      %p62 = por %p60, %p61
      %p63 = scmp.ne.s32.totalorder %s55, %s58
      %p64 = scmp.eq.s32.totalorder %s19, 0
      %p65 = por %p63, %p64
      %p66 = scmp.ne.s32.totalorder %s55, %s58
      %p67 = scmp.eq.s32.totalorder %s24, 1
      %p68 = por %p66, %p67
      %p69 = scmp.ne.s32.totalorder %s58, %s59
      %p70 = scmp.eq.s32.totalorder %s24, 0
      %p71 = por %p69, %p70
      %p72 = scmp.ne.s32.totalorder %s58, %s59
      %p73 = scmp.eq.s32.totalorder %s25, 1
      %p74 = por %p72, %p73
      %p76 = scmp.ne.s32.totalorder %s59, %s75
      %p77 = scmp.eq.s32.totalorder %s25, 0
      %p78 = por %p76, %p77
      %s79 = ssub.s32 %s19, %s26
      %p80 = scmp.eq.s32.totalorder %s79, 0
      %s82 = sadd.s32 %s81, 1
      %s83 = scalar_select %p80, %s81, %s82
      %p86 = pneg %p80
      %p87 = scmp.eq.s32.totalorder %s19, 1
      %p88 = por %p86, %p87
      %p89 = scmp.ne.s32.totalorder %s81, %s84
      %p90 = scmp.eq.s32.totalorder %s19, 0
      %p91 = por %p89, %p90
      %p92 = scmp.ne.s32.totalorder %s81, %s84
      %p93 = scmp.eq.s32.totalorder %s24, 1
      %p94 = por %p92, %p93
      %p95 = scmp.ne.s32.totalorder %s84, %s85
      %p96 = scmp.eq.s32.totalorder %s24, 0
      %p97 = por %p95, %p96
      %p98 = scmp.ne.s32.totalorder %s84, %s85
      %p99 = scmp.eq.s32.totalorder %s25, 1
      %p100 = por %p98, %p99
      %p102 = scmp.ne.s32.totalorder %s85, %s101
      %p103 = scmp.eq.s32.totalorder %s25, 0
      %p104 = por %p102, %p103
      %s106 = sadd.s32 %s105, 1
      %p109 = scmp.eq.s32.totalorder %s19, 1
      %p110 = scmp.ne.s32.totalorder %s105, %s107
      %p111 = scmp.eq.s32.totalorder %s19, 0
      %p112 = por %p110, %p111
      %p113 = scmp.ne.s32.totalorder %s105, %s107
      %p114 = scmp.eq.s32.totalorder %s24, 1
      %p115 = por %p113, %p114
      %p116 = scmp.ne.s32.totalorder %s107, %s108
      %p117 = scmp.eq.s32.totalorder %s24, 0
      %p118 = por %p116, %p117
      %p119 = scmp.ne.s32.totalorder %s107, %s108
      %p120 = scmp.eq.s32.totalorder %s25, 1
      %p121 = por %p119, %p120
      %p123 = scmp.ne.s32.totalorder %s108, %s122
      %p124 = scmp.eq.s32.totalorder %s25, 0
      %p125 = por %p123, %p124
      %s127 = sadd.s32 %s126, 1
      %p130 = scmp.eq.s32.totalorder %s19, 1
      %p131 = scmp.ne.s32.totalorder %s126, %s128
      %p132 = scmp.eq.s32.totalorder %s19, 0
      %p133 = por %p131, %p132
      %p134 = scmp.ne.s32.totalorder %s126, %s128
      %p135 = scmp.eq.s32.totalorder %s24, 1
      %p136 = por %p134, %p135
      %p137 = scmp.ne.s32.totalorder %s128, %s129
      %p138 = scmp.eq.s32.totalorder %s24, 0
      %p139 = por %p137, %p138
      %p140 = scmp.ne.s32.totalorder %s128, %s129
      %p141 = scmp.eq.s32.totalorder %s25, 1
      %p142 = por %p140, %p141
      %p144 = scmp.ne.s32.totalorder %s129, %s143
      %p145 = scmp.eq.s32.totalorder %s25, 0
      %p146 = por %p144, %p145
      %s148 = sadd.s32 %s147, 1
      %p151 = scmp.eq.s32.totalorder %s19, 1
      %p152 = scmp.ne.s32.totalorder %s147, %s149
      %p153 = scmp.eq.s32.totalorder %s19, 0
      %p154 = por %p152, %p153
      %p155 = scmp.ne.s32.totalorder %s147, %s149
      %p156 = scmp.eq.s32.totalorder %s24, 1
      %p157 = por %p155, %p156
      %p158 = scmp.ne.s32.totalorder %s149, %s150
      %p159 = scmp.eq.s32.totalorder %s24, 0
      %p160 = por %p158, %p159
      %p161 = scmp.ne.s32.totalorder %s149, %s150
      %p162 = scmp.eq.s32.totalorder %s25, 1
      %p163 = por %p161, %p162
      %p165 = scmp.ne.s32.totalorder %s150, %s164
      %p166 = scmp.eq.s32.totalorder %s25, 0
      %p167 = por %p165, %p166
      %s169 = sadd.s32 %s168, 1
      %p172 = scmp.eq.s32.totalorder %s19, 1
      %p173 = scmp.ne.s32.totalorder %s168, %s170
      %p174 = scmp.eq.s32.totalorder %s19, 0
      %p175 = por %p173, %p174
      %p176 = scmp.ne.s32.totalorder %s168, %s170
      %p177 = scmp.eq.s32.totalorder %s24, 1
      %p178 = por %p176, %p177
      %p179 = scmp.ne.s32.totalorder %s170, %s171
      %p180 = scmp.eq.s32.totalorder %s24, 0
      %p181 = por %p179, %p180
      %p182 = scmp.ne.s32.totalorder %s170, %s171
      %p183 = scmp.eq.s32.totalorder %s25, 1
      %p184 = por %p182, %p183
      %p186 = scmp.ne.s32.totalorder %s171, %s185
      %p187 = scmp.eq.s32.totalorder %s25, 0
      %p188 = por %p186, %p187
      %s190 = sadd.s32 %s189, 1
      %p193 = scmp.eq.s32.totalorder %s19, 1
      %p194 = scmp.ne.s32.totalorder %s189, %s191
      %p195 = scmp.eq.s32.totalorder %s19, 0
      %p196 = por %p194, %p195
      %p197 = scmp.ne.s32.totalorder %s189, %s191
      %p198 = scmp.eq.s32.totalorder %s24, 1
      %p199 = por %p197, %p198
      %p200 = scmp.ne.s32.totalorder %s191, %s192
      %p201 = scmp.eq.s32.totalorder %s24, 0
      %p202 = por %p200, %p201
      %p203 = scmp.ne.s32.totalorder %s191, %s192
      %p204 = scmp.eq.s32.totalorder %s25, 1
      %p205 = por %p203, %p204
      %p207 = scmp.ne.s32.totalorder %s192, %s206
      %p208 = scmp.eq.s32.totalorder %s25, 0
      %p209 = por %p207, %p208
      %s211 = sadd.s32 %s210, 1
      %p214 = scmp.eq.s32.totalorder %s19, 1
      %p215 = scmp.ne.s32.totalorder %s210, %s212
      %p216 = scmp.eq.s32.totalorder %s19, 0
      %p217 = por %p215, %p216
      %p218 = scmp.ne.s32.totalorder %s210, %s212
      %p219 = scmp.eq.s32.totalorder %s24, 1
      %p220 = por %p218, %p219
      %p221 = scmp.ne.s32.totalorder %s212, %s213
      %p222 = scmp.eq.s32.totalorder %s24, 0
      %p223 = por %p221, %p222
      %p224 = scmp.ne.s32.totalorder %s212, %s213
      %p225 = scmp.eq.s32.totalorder %s25, 1
      %p226 = por %p224, %p225
      %p228 = scmp.ne.s32.totalorder %s213, %s227
      %p229 = scmp.eq.s32.totalorder %s25, 0
      %p230 = por %p228, %p229
      %s231 = ssub.s32 %s19, %s26
      %p232 = scmp.eq.s32.totalorder %s231, 0
      %s234 = sadd.s32 %s233, 1
      %s235 = scalar_select %p232, %s233, %s234
      %p238 = pneg %p232
      %p239 = scmp.eq.s32.totalorder %s19, 1
      %p240 = por %p238, %p239
      %p241 = scmp.ne.s32.totalorder %s233, %s236
      %p242 = scmp.eq.s32.totalorder %s19, 0
      %p243 = por %p241, %p242
      %p244 = scmp.ne.s32.totalorder %s233, %s236
      %p245 = scmp.eq.s32.totalorder %s24, 1
      %p246 = por %p244, %p245
      %p247 = scmp.ne.s32.totalorder %s236, %s237
      %p248 = scmp.eq.s32.totalorder %s24, 0
      %p249 = por %p247, %p248
      %p250 = scmp.ne.s32.totalorder %s236, %s237
      %p251 = scmp.eq.s32.totalorder %s25, 1
      %p252 = por %p250, %p251
      %p254 = scmp.ne.s32.totalorder %s237, %s253
      %p255 = scmp.eq.s32.totalorder %s25, 0
      %p256 = por %p254, %p255
      %p257 = scmp.le.s32.totalorder 1, %s19
      %p258 = scmp.lt.s32.totalorder %s19, 3
      %p259 = pnand %p257, %p258
      %p260 = pneg %p259
      // Predicated region
      $region9: #{tpu_custom_call.1} parent=5 // pred_check
        _
      $region10: #{tpu_custom_call.1} parent=5 // pred_check_branch
        %262 = sbr.rel (%p259) target = $region12
      $region11: #{tpu_custom_call.1} parent=5 // pred_region
        %s263 = ssub.s32 %s19, 1
        // Predicated region
        $region13: #{tpu_custom_call.1} parent=11 // pred_check
          %p264 = pneg %p118
        $region14: #{tpu_custom_call.1} parent=11 // pred_check_branch
          %266 = sbr.rel (%p264) target = $region16
        $region15: #{tpu_custom_call.1} parent=11 // pred_region
          _
        $region16: #{tpu_custom_call.1} parent=11 // pred_fallthru
          _
        // Predicated region
        $region17: #{tpu_custom_call.1} parent=11 // pred_check
          %p267 = pneg %p139
        $region18: #{tpu_custom_call.1} parent=11 // pred_check_branch
          %269 = sbr.rel (%p267) target = $region20
        $region19: #{tpu_custom_call.1} parent=11 // pred_region
          _
        $region20: #{tpu_custom_call.1} parent=11 // pred_fallthru
          _
        // Predicated region
        $region21: #{tpu_custom_call.1} parent=11 // pred_check
          %p270 = pneg %p160
        $region22: #{tpu_custom_call.1} parent=11 // pred_check_branch
          %272 = sbr.rel (%p270) target = $region24
        $region23: #{tpu_custom_call.1} parent=11 // pred_region
          _
        $region24: #{tpu_custom_call.1} parent=11 // pred_fallthru
          _
        // Predicated region
        $region25: #{tpu_custom_call.1} parent=11 // pred_check
          %p273 = pneg %p181
        $region26: #{tpu_custom_call.1} parent=11 // pred_check_branch
          %275 = sbr.rel (%p273) target = $region28
        $region27: #{tpu_custom_call.1} parent=11 // pred_region
          _
        $region28: #{tpu_custom_call.1} parent=11 // pred_fallthru
          _
        // Predicated region
        $region29: #{tpu_custom_call.1} parent=11 // pred_check
          %p276 = pneg %p202
        $region30: #{tpu_custom_call.1} parent=11 // pred_check_branch
          %278 = sbr.rel (%p276) target = $region32
        $region31: #{tpu_custom_call.1} parent=11 // pred_region
          %s280 = ssub.s32 512, 512
          %281 = vsyncadd [#allocation3], %s280
          %s282 = sshll.u32 [#allocation2], 4
          %s283 = int_to_ptr.vmem [resolvable:$true] %s282
          %288 = dma.hbm_to_vmem [thread:$0]  %s7, 512, %s283, [#allocation3], 128, 128, 8
        $region32: #{tpu_custom_call.1} parent=11 // pred_fallthru
          _
        // Predicated region
        $region33: #{tpu_custom_call.1} parent=11 // pred_check
          %p289 = pneg %p223
        $region34: #{tpu_custom_call.1} parent=11 // pred_check_branch
          %291 = sbr.rel (%p289) target = $region36
        $region35: #{tpu_custom_call.1} parent=11 // pred_region
          _
        $region36: #{tpu_custom_call.1} parent=11 // pred_fallthru
          _
      $region12: #{tpu_custom_call.1} parent=5 // pred_fallthru
        _
      %p292 = scmp.lt.s32.totalorder %s19, 2
      // Predicated region
      $region37: #{tpu_custom_call.1} parent=5 // pred_check
        %p293 = pneg %p292
      $region38: #{tpu_custom_call.1} parent=5 // pred_check_branch
        %295 = sbr.rel (%p293) target = $region40
      $region39: #{tpu_custom_call.1} parent=5 // pred_region
        // Predicated region
        $region41: #{tpu_custom_call.1} parent=39 // pred_check
          %p296 = pneg %p39
        $region42: #{tpu_custom_call.1} parent=39 // pred_check_branch
          %298 = sbr.rel (%p296) target = $region44
        $region43: #{tpu_custom_call.1} parent=39 // pred_region
          %s299 = smul.u32 8, %s19
          %p300 = scmp.lt.s32.totalorder %s299, 15
          %s301 = scalar_select %p300, %s299, 15
          %s302 = smul.addr %s301, 8
          %s303 = scalar_lea.vmem %s0, %s302
          %s304 = smul.u32 8, %s19
        $region44: #{tpu_custom_call.1} parent=39 // pred_fallthru
          _
        // Predicated region
        $region45: #{tpu_custom_call.1} parent=39 // pred_check
          %p305 = pneg %p65
        $region46: #{tpu_custom_call.1} parent=39 // pred_check_branch
          %307 = sbr.rel (%p305) target = $region48
        $region47: #{tpu_custom_call.1} parent=39 // pred_region
          %s308 = smul.u32 8, %s19
          %p309 = scmp.lt.s32.totalorder %s308, 15
          %s310 = scalar_select %p309, %s308, 15
          %s311 = smul.addr %s310, 8
          %s312 = scalar_lea.vmem %s1, %s311
          %s313 = smul.u32 8, %s19
        $region48: #{tpu_custom_call.1} parent=39 // pred_fallthru
          _
        // Predicated region
        $region49: #{tpu_custom_call.1} parent=39 // pred_check
          %p314 = pneg %p91
        $region50: #{tpu_custom_call.1} parent=39 // pred_check_branch
          %316 = sbr.rel (%p314) target = $region52
        $region51: #{tpu_custom_call.1} parent=39 // pred_region
          %p317 = scmp.lt.s32.totalorder %s19, 1
          %s318 = scalar_select %p317, %s19, 1
          %s319 = smul.addr %s318, 24
          %s320 = smul.addr %s319, 4
          %s321 = scalar_lea.vmem %s2, %s320
        $region52: #{tpu_custom_call.1} parent=39 // pred_fallthru
          _
      $region40: #{tpu_custom_call.1} parent=5 // pred_fallthru
        _
      %p322 = scmp.le.s32.totalorder 1, %s19
      %p323 = scmp.lt.s32.totalorder %s19, 3
      %p324 = pnand %p322, %p323
      %p325 = pneg %p324
      // Predicated region
      $region53: #{tpu_custom_call.1} parent=5 // pred_check
        _
      $region54: #{tpu_custom_call.1} parent=5 // pred_check_branch
        %327 = sbr.rel (%p324) target = $region56
      $region55: #{tpu_custom_call.1} parent=5 // pred_region
        %s328 = ssub.s32 %s19, 1
        // Predicated region
        $region57: #{tpu_custom_call.1} parent=55 // pred_check
          %p329 = pneg %p202
        $region58: #{tpu_custom_call.1} parent=55 // pred_check_branch
          %331 = sbr.rel (%p329) target = $region60
        $region59: #{tpu_custom_call.1} parent=55 // pred_region
          %332 = dma.done [#allocation3], 512
        $region60: #{tpu_custom_call.1} parent=55 // pred_fallthru
          _
        %s333 = smul.u32 8, %s24
        %p334 = scmp.lt.s32.totalorder %s333, 15
        %s335 = scalar_select %p334, %s333, 15
        %s336 = smul.addr %s335, 8
        %s337 = scalar_lea.vmem %s0, %s336
        %p338 = pneg %p45
        %p339 = pneg %p42
        %s340 = smul.u32 8, %s24
        %p341 = scmp.lt.s32.totalorder %s340, 15
        %s342 = scalar_select %p341, %s340, 15
        %s343 = smul.addr %s342, 8
        %s344 = scalar_lea.vmem %s1, %s343
        %p345 = pneg %p71
        %p346 = pneg %p68
        %p347 = scmp.lt.s32.totalorder %s24, 1
        %s348 = scalar_select %p347, %s24, 1
        %s349 = smul.addr %s348, 24
        %s350 = smul.addr %s349, 4
        %s351 = scalar_lea.vmem %s2, %s350
        %p352 = pneg %p97
        %p353 = pneg %p94
        %p354 = pneg %p118
        %p355 = pneg %p115
        %p356 = pneg %p139
        %p357 = pneg %p136
        %p358 = pneg %p160
        %p359 = pneg %p157
        %p360 = pneg %p181
        %p361 = pneg %p178
        %p362 = pneg %p202
        %p363 = pneg %p199
        %p364 = pneg %p223
        %p365 = pneg %p220
        %p366 = pneg %p249
        %p367 = pneg %p246
        %s368 = sand.u32 %s236, 1
        %s369 = scalar_lea.sflag [#allocation4], %s368
        %s370 = sand.u32 %s236, 1
        %s371 = smul.addr %s370, 8
        %s372 = scalar_lea.vmem [#allocation5], %s371
        %s373 = smul.u32 8, %s24
        %p374 = scmp.lt.s32.totalorder %s373, 15
        %s375 = scalar_select %p374, %s373, 15
        %s376 = smul.addr %s375, 8
        %s377 = scalar_lea.vmem %s0, %s376
        %s378 = smul.u32 8, %s24
        %s379 = smul.u32 8, %s24
        %p380 = scmp.lt.s32.totalorder %s379, 15
        %s381 = scalar_select %p380, %s379, 15
        %s382 = smul.addr %s381, 8
        %s383 = scalar_lea.vmem %s1, %s382
        %s384 = smul.u32 8, %s24
        %p385 = scmp.lt.s32.totalorder %s24, 1
        %s386 = scalar_select %p385, %s24, 1
        %s387 = smul.addr %s386, 24
        %s388 = smul.addr %s387, 4
        %s389 = scalar_lea.vmem %s2, %s388
        %v391 = vld [vmem:[%s6] sm:$0x1]
        %v392 = vld [vmem:[%s6 + $0x1] sm:$0x1]
        %v393 = vld [vmem:[%s6 + $0x2] sm:$0x1]
        %v394 = vld [vmem:[%s6 + $0x3] sm:$0x1]
        %v395 = vld [vmem:[%s377] sm:$0xff]
        %v396 = vld [vmem:[%s377 + $0x8] sm:$0xff]
        %v397 = vld [vmem:[%s377 + $0x10] sm:$0xff]
        %v398 = vld [vmem:[%s377 + $0x18] sm:$0xff]
        %v399 = vld [vmem:[%s377 + $0x20] sm:$0xff]
        %v400 = vld [vmem:[%s377 + $0x28] sm:$0xff]
        %v401 = vld [vmem:[%s377 + $0x30] sm:$0xff]
        %v402 = vld [vmem:[%s377 + $0x38] sm:$0xff]
        %v403 = vpack.c.bf16 %v396, %v395
        %v404 = vpack.c.bf16 %v398, %v397
        %v405 = vpack.c.bf16 %v400, %v399
        %v406 = vpack.c.bf16 %v402, %v401
        %v407 = vld [vmem:[%s383] sm:$0xff]
        %v408 = vld [vmem:[%s383 + $0x8] sm:$0xff]
        %v409 = vld [vmem:[%s383 + $0x10] sm:$0xff]
        %v410 = vld [vmem:[%s383 + $0x18] sm:$0xff]
        %v411 = vld [vmem:[%s383 + $0x20] sm:$0xff]
        %v412 = vld [vmem:[%s383 + $0x28] sm:$0xff]
        %v413 = vld [vmem:[%s383 + $0x30] sm:$0xff]
        %v414 = vld [vmem:[%s383 + $0x38] sm:$0xff]
        %v415 = vld [vmem:[%s3] sm:$0xf]
        %v416 = vld [vmem:[%s3 + $0x4] sm:$0xf]
        %v417 = vld [vmem:[%s3 + $0x8] sm:$0xf]
        %v418 = vld [vmem:[%s3 + $0xc] sm:$0xf]
        %v423 = vunpack.c.l.b16 %v415
        %v424 = vunpack.c.l.b16 %v416
        %v425 = vunpack.c.l.b16 %v417
        %v426 = vunpack.c.l.b16 %v418
        %v427 = vpack.c.b16 %v424, %v423
        %v428 = vpack.c.b16 %v426, %v425
        %vm431 = vcmask 261120
        %v433 = vsel %vm431, %v403, 0
        %v436 = vsel %vm431, %v404, 0
        %v439 = vsel %vm431, %v405, 0
        %v442 = vsel %vm431, %v406, 0
        %444 = vmatprep.subr.bf16.mxu0 0
        %445 = vmatpush1.bf16.msra.mxu0 %v427
        %446 = vmatprep.subr.bf16.mxu0 0
        %447 = vmatpush1.bf16.msra.mxu0 %v428
        %448 = vmatprep.subr.bf16.mxu0 0
        %449 = vmatpush1.bf16.msra.mxu0 0
        %450 = vmatprep.subr.bf16.mxu0 0
        %451 = vmatpush1.bf16.msra.mxu0 0
        %452 = vmatprep.subr.bf16.mxu0 0
        %453 = vmatpush1.bf16.msra.mxu0 0
        %454 = vmatprep.subr.bf16.mxu0 0
        %455 = vmatpush1.bf16.msra.mxu0 0
        %456 = vmatprep.subr.bf16.mxu0 0
        %457 = vmatpush1.bf16.msra.mxu0 0
        %458 = vmatprep.subr.bf16.mxu0 0
        %459 = vmatpush1.bf16.msra.mxu0 0
        %460 = vmatprep.subr.bf16.mxu0 0
        %461 = vmatpush1.bf16.msra.mxu0 0
        %462 = vmatprep.subr.bf16.mxu0 0
        %463 = vmatpush1.bf16.msra.mxu0 0
        %464 = vmatprep.subr.bf16.mxu0 0
        %465 = vmatpush1.bf16.msra.mxu0 0
        %466 = vmatprep.subr.bf16.mxu0 0
        %467 = vmatpush1.bf16.msra.mxu0 0
        %468 = vmatprep.subr.bf16.mxu0 0
        %469 = vmatpush1.bf16.msra.mxu0 0
        %470 = vmatprep.subr.bf16.mxu0 0
        %471 = vmatpush1.bf16.msra.mxu0 0
        %472 = vmatprep.subr.bf16.mxu0 0
        %473 = vmatpush1.bf16.msra.mxu0 0
        %474 = vmatprep.subr.bf16.mxu0 0
        %475 = vmatpush1.bf16.msra.mxu0 0
        %476 = vmatprep.mubr.bf16.mxu0 0
        %477 = vmatmul.mubr.bf16.gmra.mrb[0].mxu0 %v433
        %v478 = vpop.f32.mrb[0].mxu0
        %v479 = vadd.f32 0.0, %v478
        %v480 = vpop.f32.mrb[0].mxu0
        %v481 = vpop.f32.mrb[0].mxu0
        %v482 = vadd.f32 0.0, %v481
        %v483 = vpop.f32.mrb[0].mxu0
        %484 = vmatprep.mubr.bf16.mxu0 0
        %485 = vmatmul.mubr.bf16.gmra.mrb[0].mxu0 %v436
        %v486 = vpop.f32.mrb[0].mxu0
        %v487 = vadd.f32 0.0, %v486
        %v488 = vpop.f32.mrb[0].mxu0
        %v489 = vpop.f32.mrb[0].mxu0
        %v490 = vadd.f32 0.0, %v489
        %v491 = vpop.f32.mrb[0].mxu0
        %492 = vmatprep.mubr.bf16.mxu0 0
        %493 = vmatmul.mubr.bf16.gmra.mrb[0].mxu0 %v439
        %v494 = vpop.f32.mrb[0].mxu0
        %v495 = vadd.f32 0.0, %v494
        %v496 = vpop.f32.mrb[0].mxu0
        %v497 = vpop.f32.mrb[0].mxu0
        %v498 = vadd.f32 0.0, %v497
        %v499 = vpop.f32.mrb[0].mxu0
        %500 = vmatprep.mubr.bf16.mxu0 0
        %501 = vmatmul.mubr.bf16.gmra.mrb[0].mxu0 %v442
        %v502 = vpop.f32.mrb[0].mxu0
        %v503 = vadd.f32 0.0, %v502
        %v504 = vpop.f32.mrb[0].mxu0
        %v505 = vpop.f32.mrb[0].mxu0
        %v506 = vadd.f32 0.0, %v505
        %v507 = vpop.f32.mrb[0].mxu0
        %508 = vdwg.mxu0
        %v509 = vpack.c.bf16 %v482, %v479
        %v510 = vpack.c.bf16 %v490, %v487
        %v511 = vpack.c.bf16 %v498, %v495
        %v512 = vpack.c.bf16 %v506, %v503
        %v513 = vld [vmem:[%s389] sm:$0xf]
        %v514 = vld [vmem:[%s389 + $0x4] sm:$0xf]
        %v515 = vld [vmem:[%s389 + $0x8] sm:$0xf]
        %v516 = vld [vmem:[%s389 + $0xc] sm:$0xf]
        %v517 = vld [vmem:[%s389 + $0x10] sm:$0xf]
        %v518 = vld [vmem:[%s389 + $0x14] sm:$0xf]
        %v519 = vld [vmem:[%s389 + $0x18] sm:$0xf]
        %v520 = vld [vmem:[%s389 + $0x1c] sm:$0xf]
        %v529 = vunpack.c.l.b16 %v513
        %v530 = vunpack.c.l.b16 %v514
        %v531 = vunpack.c.l.b16 %v515
        %v532 = vunpack.c.l.b16 %v516
        %v533 = vunpack.c.l.b16 %v517
        %v534 = vunpack.c.l.b16 %v518
        %v535 = vunpack.c.l.b16 %v519
        %v536 = vunpack.c.l.b16 %v520
        %v537 = vpack.c.b16 %v530, %v529
        %v538 = vpack.c.b16 %v532, %v531
        %v539 = vpack.c.b16 %v534, %v533
        %v540 = vpack.c.b16 %v536, %v535
        %vm541 = vcmask 523264
        %v543 = vsel %vm541, %v537, 0
        %v546 = vsel %vm541, %v538, 0
        %v549 = vsel %vm541, %v539, 0
        %v552 = vsel %vm541, %v540, 0
        %554 = vmatprep.subr.bf16.mxu0 0
        %555 = vmatpush1.bf16.msra.mxu0 %v509
        %556 = vmatprep.subr.bf16.mxu0 0
        %557 = vmatpush1.bf16.msra.mxu0 %v510
        %558 = vmatprep.subr.bf16.mxu0 0
        %559 = vmatpush1.bf16.msra.mxu0 %v511
        %560 = vmatprep.subr.bf16.mxu0 0
        %561 = vmatpush1.bf16.msra.mxu0 %v512
        %562 = vmatprep.subr.bf16.mxu0 0
        %563 = vmatpush1.bf16.msra.mxu0 0
        %564 = vmatprep.subr.bf16.mxu0 0
        %565 = vmatpush1.bf16.msra.mxu0 0
        %566 = vmatprep.subr.bf16.mxu0 0
        %567 = vmatpush1.bf16.msra.mxu0 0
        %568 = vmatprep.subr.bf16.mxu0 0
        %569 = vmatpush1.bf16.msra.mxu0 0
        %570 = vmatprep.subr.bf16.mxu0 0
        %571 = vmatpush1.bf16.msra.mxu0 0
        %572 = vmatprep.subr.bf16.mxu0 0
        %573 = vmatpush1.bf16.msra.mxu0 0
        %574 = vmatprep.subr.bf16.mxu0 0
        %575 = vmatpush1.bf16.msra.mxu0 0
        %576 = vmatprep.subr.bf16.mxu0 0
        %577 = vmatpush1.bf16.msra.mxu0 0
        %578 = vmatprep.subr.bf16.mxu0 0
        %579 = vmatpush1.bf16.msra.mxu0 0
        %580 = vmatprep.subr.bf16.mxu0 0
        %581 = vmatpush1.bf16.msra.mxu0 0
        %582 = vmatprep.subr.bf16.mxu0 0
        %583 = vmatpush1.bf16.msra.mxu0 0
        %584 = vmatprep.subr.bf16.mxu0 0
        %585 = vmatpush1.bf16.msra.mxu0 0
        %586 = vmatprep.mubr.bf16.mxu0 0
        %587 = vmatmul.mubr.bf16.gmra.mrb[0].mxu0 %v543
        %v588 = vpop.f32.mrb[0].mxu0
        %v589 = vadd.f32 0.0, %v588
        %v590 = vpop.f32.mrb[0].mxu0
        %v591 = vpop.f32.mrb[0].mxu0
        %v592 = vadd.f32 0.0, %v591
        %v593 = vpop.f32.mrb[0].mxu0
        %594 = vmatprep.mubr.bf16.mxu0 0
        %595 = vmatmul.mubr.bf16.gmra.mrb[0].mxu0 %v546
        %v596 = vpop.f32.mrb[0].mxu0
        %v597 = vadd.f32 0.0, %v596
        %v598 = vpop.f32.mrb[0].mxu0
        %v599 = vpop.f32.mrb[0].mxu0
        %v600 = vadd.f32 0.0, %v599
        %v601 = vpop.f32.mrb[0].mxu0
        %602 = vmatprep.mubr.bf16.mxu0 0
        %603 = vmatmul.mubr.bf16.gmra.mrb[0].mxu0 %v549
        %v604 = vpop.f32.mrb[0].mxu0
        %v605 = vadd.f32 0.0, %v604
        %v606 = vpop.f32.mrb[0].mxu0
        %v607 = vpop.f32.mrb[0].mxu0
        %v608 = vadd.f32 0.0, %v607
        %v609 = vpop.f32.mrb[0].mxu0
        %610 = vmatprep.mubr.bf16.mxu0 0
        %611 = vmatmul.mubr.bf16.gmra.mrb[0].mxu0 %v552
        %v612 = vpop.f32.mrb[0].mxu0
        %v613 = vadd.f32 0.0, %v612
        %v614 = vpop.f32.mrb[0].mxu0
        %v615 = vpop.f32.mrb[0].mxu0
        %v616 = vadd.f32 0.0, %v615
        %v617 = vpop.f32.mrb[0].mxu0
        %618 = vdwg.mxu0
        %v619 = vadd.f32 %v407, %v589
        %v620 = vadd.f32 %v408, %v592
        %v621 = vadd.f32 %v409, %v597
        %v622 = vadd.f32 %v410, %v600
        %v623 = vadd.f32 %v411, %v605
        %v624 = vadd.f32 %v412, %v608
        %v625 = vadd.f32 %v413, %v613
        %v626 = vadd.f32 %v414, %v616
        %s627 = scalar_lea.vmem %s3, 16
        %v628 = vld [vmem:[%s627] sm:$0xf]
        %v629 = vld [vmem:[%s627 + $0x4] sm:$0xf]
        %v630 = vld [vmem:[%s627 + $0x8] sm:$0xf]
        %v631 = vld [vmem:[%s627 + $0xc] sm:$0xf]
        %v636 = vunpack.c.l.b16 %v628
        %v637 = vunpack.c.l.b16 %v629
        %v638 = vunpack.c.l.b16 %v630
        %v639 = vunpack.c.l.b16 %v631
        %v640 = vpack.c.b16 %v637, %v636
        %v641 = vpack.c.b16 %v639, %v638
        %644 = vmatprep.subr.bf16.mxu0 0
        %645 = vmatpush1.bf16.msra.mxu0 %v640
        %646 = vmatprep.subr.bf16.mxu0 0
        %647 = vmatpush1.bf16.msra.mxu0 %v641
        %648 = vmatprep.subr.bf16.mxu0 0
        %649 = vmatpush1.bf16.msra.mxu0 0
        %650 = vmatprep.subr.bf16.mxu0 0
        %651 = vmatpush1.bf16.msra.mxu0 0
        %652 = vmatprep.subr.bf16.mxu0 0
        %653 = vmatpush1.bf16.msra.mxu0 0
        %654 = vmatprep.subr.bf16.mxu0 0
        %655 = vmatpush1.bf16.msra.mxu0 0
        %656 = vmatprep.subr.bf16.mxu0 0
        %657 = vmatpush1.bf16.msra.mxu0 0
        %658 = vmatprep.subr.bf16.mxu0 0
        %659 = vmatpush1.bf16.msra.mxu0 0
        %660 = vmatprep.subr.bf16.mxu0 0
        %661 = vmatpush1.bf16.msra.mxu0 0
        %662 = vmatprep.subr.bf16.mxu0 0
        %663 = vmatpush1.bf16.msra.mxu0 0
        %664 = vmatprep.subr.bf16.mxu0 0
        %665 = vmatpush1.bf16.msra.mxu0 0
        %666 = vmatprep.subr.bf16.mxu0 0
        %667 = vmatpush1.bf16.msra.mxu0 0
        %668 = vmatprep.subr.bf16.mxu0 0
        %669 = vmatpush1.bf16.msra.mxu0 0
        %670 = vmatprep.subr.bf16.mxu0 0
        %671 = vmatpush1.bf16.msra.mxu0 0
        %672 = vmatprep.subr.bf16.mxu0 0
        %673 = vmatpush1.bf16.msra.mxu0 0
        %674 = vmatprep.subr.bf16.mxu0 0
        %675 = vmatpush1.bf16.msra.mxu0 0
        %676 = vmatprep.mubr.bf16.mxu0 0
        %677 = vmatmul.mubr.bf16.gmra.mrb[0].mxu0 %v433
        %v678 = vpop.f32.mrb[0].mxu0
        %v679 = vadd.f32 0.0, %v678
        %v680 = vpop.f32.mrb[0].mxu0
        %v681 = vpop.f32.mrb[0].mxu0
        %v682 = vadd.f32 0.0, %v681
        %v683 = vpop.f32.mrb[0].mxu0
        %684 = vmatprep.mubr.bf16.mxu0 0
        %685 = vmatmul.mubr.bf16.gmra.mrb[0].mxu0 %v436
        %v686 = vpop.f32.mrb[0].mxu0
        %v687 = vadd.f32 0.0, %v686
        %v688 = vpop.f32.mrb[0].mxu0
        %v689 = vpop.f32.mrb[0].mxu0
        %v690 = vadd.f32 0.0, %v689
        %v691 = vpop.f32.mrb[0].mxu0
        %692 = vmatprep.mubr.bf16.mxu0 0
        %693 = vmatmul.mubr.bf16.gmra.mrb[0].mxu0 %v439
        %v694 = vpop.f32.mrb[0].mxu0
        %v695 = vadd.f32 0.0, %v694
        %v696 = vpop.f32.mrb[0].mxu0
        %v697 = vpop.f32.mrb[0].mxu0
        %v698 = vadd.f32 0.0, %v697
        %v699 = vpop.f32.mrb[0].mxu0
        %700 = vmatprep.mubr.bf16.mxu0 0
        %701 = vmatmul.mubr.bf16.gmra.mrb[0].mxu0 %v442
        %v702 = vpop.f32.mrb[0].mxu0
        %v703 = vadd.f32 0.0, %v702
        %v704 = vpop.f32.mrb[0].mxu0
        %v705 = vpop.f32.mrb[0].mxu0
        %v706 = vadd.f32 0.0, %v705
        %v707 = vpop.f32.mrb[0].mxu0
        %708 = vdwg.mxu0
        %v709 = vpack.c.bf16 %v682, %v679
        %v710 = vpack.c.bf16 %v690, %v687
        %v711 = vpack.c.bf16 %v698, %v695
        %v712 = vpack.c.bf16 %v706, %v703
        %s713 = scalar_lea.vmem %s389, 32
        %v714 = vld [vmem:[%s713] sm:$0xf]
        %v715 = vld [vmem:[%s713 + $0x4] sm:$0xf]
        %v716 = vld [vmem:[%s713 + $0x8] sm:$0xf]
        %v717 = vld [vmem:[%s713 + $0xc] sm:$0xf]
        %v718 = vld [vmem:[%s713 + $0x10] sm:$0xf]
        %v719 = vld [vmem:[%s713 + $0x14] sm:$0xf]
        %v720 = vld [vmem:[%s713 + $0x18] sm:$0xf]
        %v721 = vld [vmem:[%s713 + $0x1c] sm:$0xf]
        %v730 = vunpack.c.l.b16 %v714
        %v731 = vunpack.c.l.b16 %v715
        %v732 = vunpack.c.l.b16 %v716
        %v733 = vunpack.c.l.b16 %v717
        %v734 = vunpack.c.l.b16 %v718
        %v735 = vunpack.c.l.b16 %v719
        %v736 = vunpack.c.l.b16 %v720
        %v737 = vunpack.c.l.b16 %v721
        %v738 = vpack.c.b16 %v731, %v730
        %v739 = vpack.c.b16 %v733, %v732
        %v740 = vpack.c.b16 %v735, %v734
        %v741 = vpack.c.b16 %v737, %v736
        %v743 = vsel %vm541, %v738, 0
        %v746 = vsel %vm541, %v739, 0
        %v749 = vsel %vm541, %v740, 0
        %v752 = vsel %vm541, %v741, 0
        %754 = vmatprep.subr.bf16.mxu0 0
        %755 = vmatpush1.bf16.msra.mxu0 %v709
        %756 = vmatprep.subr.bf16.mxu0 0
        %757 = vmatpush1.bf16.msra.mxu0 %v710
        %758 = vmatprep.subr.bf16.mxu0 0
        %759 = vmatpush1.bf16.msra.mxu0 %v711
        %760 = vmatprep.subr.bf16.mxu0 0
        %761 = vmatpush1.bf16.msra.mxu0 %v712
        %762 = vmatprep.subr.bf16.mxu0 0
        %763 = vmatpush1.bf16.msra.mxu0 0
        %764 = vmatprep.subr.bf16.mxu0 0
        %765 = vmatpush1.bf16.msra.mxu0 0
        %766 = vmatprep.subr.bf16.mxu0 0
        %767 = vmatpush1.bf16.msra.mxu0 0
        %768 = vmatprep.subr.bf16.mxu0 0
        %769 = vmatpush1.bf16.msra.mxu0 0
        %770 = vmatprep.subr.bf16.mxu0 0
        %771 = vmatpush1.bf16.msra.mxu0 0
        %772 = vmatprep.subr.bf16.mxu0 0
        %773 = vmatpush1.bf16.msra.mxu0 0
        %774 = vmatprep.subr.bf16.mxu0 0
        %775 = vmatpush1.bf16.msra.mxu0 0
        %776 = vmatprep.subr.bf16.mxu0 0
        %777 = vmatpush1.bf16.msra.mxu0 0
        %778 = vmatprep.subr.bf16.mxu0 0
        %779 = vmatpush1.bf16.msra.mxu0 0
        %780 = vmatprep.subr.bf16.mxu0 0
        %781 = vmatpush1.bf16.msra.mxu0 0
        %782 = vmatprep.subr.bf16.mxu0 0
        %783 = vmatpush1.bf16.msra.mxu0 0
        %784 = vmatprep.subr.bf16.mxu0 0
        %785 = vmatpush1.bf16.msra.mxu0 0
        %786 = vmatprep.mubr.bf16.mxu0 0
        %787 = vmatmul.mubr.bf16.gmra.mrb[0].mxu0 %v743
        %v788 = vpop.f32.mrb[0].mxu0
        %v789 = vadd.f32 0.0, %v788
        %v790 = vpop.f32.mrb[0].mxu0
        %v791 = vpop.f32.mrb[0].mxu0
        %v792 = vadd.f32 0.0, %v791
        %v793 = vpop.f32.mrb[0].mxu0
        %794 = vmatprep.mubr.bf16.mxu0 0
        %795 = vmatmul.mubr.bf16.gmra.mrb[0].mxu0 %v746
        %v796 = vpop.f32.mrb[0].mxu0
        %v797 = vadd.f32 0.0, %v796
        %v798 = vpop.f32.mrb[0].mxu0
        %v799 = vpop.f32.mrb[0].mxu0
        %v800 = vadd.f32 0.0, %v799
        %v801 = vpop.f32.mrb[0].mxu0
        %802 = vmatprep.mubr.bf16.mxu0 0
        %803 = vmatmul.mubr.bf16.gmra.mrb[0].mxu0 %v749
        %v804 = vpop.f32.mrb[0].mxu0
        %v805 = vadd.f32 0.0, %v804
        %v806 = vpop.f32.mrb[0].mxu0
        %v807 = vpop.f32.mrb[0].mxu0
        %v808 = vadd.f32 0.0, %v807
        %v809 = vpop.f32.mrb[0].mxu0
        %810 = vmatprep.mubr.bf16.mxu0 0
        %811 = vmatmul.mubr.bf16.gmra.mrb[0].mxu0 %v752
        %v812 = vpop.f32.mrb[0].mxu0
        %v813 = vadd.f32 0.0, %v812
        %v814 = vpop.f32.mrb[0].mxu0
        %v815 = vpop.f32.mrb[0].mxu0
        %v816 = vadd.f32 0.0, %v815
        %v817 = vpop.f32.mrb[0].mxu0
        %818 = vdwg.mxu0
        %v819 = vadd.f32 %v619, %v789
        %v820 = vadd.f32 %v620, %v792
        %v821 = vadd.f32 %v621, %v797
        %v822 = vadd.f32 %v622, %v800
        %v823 = vadd.f32 %v623, %v805
        %v824 = vadd.f32 %v624, %v808
        %v825 = vadd.f32 %v625, %v813
        %v826 = vadd.f32 %v626, %v816
        %s827 = scalar_lea.vmem %s3, 32
        %v828 = vld [vmem:[%s827] sm:$0xf]
        %v829 = vld [vmem:[%s827 + $0x4] sm:$0xf]
        %v830 = vld [vmem:[%s827 + $0x8] sm:$0xf]
        %v831 = vld [vmem:[%s827 + $0xc] sm:$0xf]
        %v836 = vunpack.c.l.b16 %v828
        %v837 = vunpack.c.l.b16 %v829
        %v838 = vunpack.c.l.b16 %v830
        %v839 = vunpack.c.l.b16 %v831
        %v840 = vpack.c.b16 %v837, %v836
        %v841 = vpack.c.b16 %v839, %v838
        %844 = vmatprep.subr.bf16.mxu0 0
        %845 = vmatpush1.bf16.msra.mxu0 %v840
        %846 = vmatprep.subr.bf16.mxu0 0
        %847 = vmatpush1.bf16.msra.mxu0 %v841
        %848 = vmatprep.subr.bf16.mxu0 0
        %849 = vmatpush1.bf16.msra.mxu0 0
        %850 = vmatprep.subr.bf16.mxu0 0
        %851 = vmatpush1.bf16.msra.mxu0 0
        %852 = vmatprep.subr.bf16.mxu0 0
        %853 = vmatpush1.bf16.msra.mxu0 0
        %854 = vmatprep.subr.bf16.mxu0 0
        %855 = vmatpush1.bf16.msra.mxu0 0
        %856 = vmatprep.subr.bf16.mxu0 0
        %857 = vmatpush1.bf16.msra.mxu0 0
        %858 = vmatprep.subr.bf16.mxu0 0
        %859 = vmatpush1.bf16.msra.mxu0 0
        %860 = vmatprep.subr.bf16.mxu0 0
        %861 = vmatpush1.bf16.msra.mxu0 0
        %862 = vmatprep.subr.bf16.mxu0 0
        %863 = vmatpush1.bf16.msra.mxu0 0
        %864 = vmatprep.subr.bf16.mxu0 0
        %865 = vmatpush1.bf16.msra.mxu0 0
        %866 = vmatprep.subr.bf16.mxu0 0
        %867 = vmatpush1.bf16.msra.mxu0 0
        %868 = vmatprep.subr.bf16.mxu0 0
        %869 = vmatpush1.bf16.msra.mxu0 0
        %870 = vmatprep.subr.bf16.mxu0 0
        %871 = vmatpush1.bf16.msra.mxu0 0
        %872 = vmatprep.subr.bf16.mxu0 0
        %873 = vmatpush1.bf16.msra.mxu0 0
        %874 = vmatprep.subr.bf16.mxu0 0
        %875 = vmatpush1.bf16.msra.mxu0 0
        %876 = vmatprep.mubr.bf16.mxu0 0
        %877 = vmatmul.mubr.bf16.gmra.mrb[0].mxu0 %v433
        %v878 = vpop.f32.mrb[0].mxu0
        %v879 = vadd.f32 0.0, %v878
        %v880 = vpop.f32.mrb[0].mxu0
        %v881 = vpop.f32.mrb[0].mxu0
        %v882 = vadd.f32 0.0, %v881
        %v883 = vpop.f32.mrb[0].mxu0
        %884 = vmatprep.mubr.bf16.mxu0 0
        %885 = vmatmul.mubr.bf16.gmra.mrb[0].mxu0 %v436
        %v886 = vpop.f32.mrb[0].mxu0
        %v887 = vadd.f32 0.0, %v886
        %v888 = vpop.f32.mrb[0].mxu0
        %v889 = vpop.f32.mrb[0].mxu0
        %v890 = vadd.f32 0.0, %v889
        %v891 = vpop.f32.mrb[0].mxu0
        %892 = vmatprep.mubr.bf16.mxu0 0
        %893 = vmatmul.mubr.bf16.gmra.mrb[0].mxu0 %v439
        %v894 = vpop.f32.mrb[0].mxu0
        %v895 = vadd.f32 0.0, %v894
        %v896 = vpop.f32.mrb[0].mxu0
        %v897 = vpop.f32.mrb[0].mxu0
        %v898 = vadd.f32 0.0, %v897
        %v899 = vpop.f32.mrb[0].mxu0
        %900 = vmatprep.mubr.bf16.mxu0 0
        %901 = vmatmul.mubr.bf16.gmra.mrb[0].mxu0 %v442
        %v902 = vpop.f32.mrb[0].mxu0
        %v903 = vadd.f32 0.0, %v902
        %v904 = vpop.f32.mrb[0].mxu0
        %v905 = vpop.f32.mrb[0].mxu0
        %v906 = vadd.f32 0.0, %v905
        %v907 = vpop.f32.mrb[0].mxu0
        %908 = vdwg.mxu0
        %v909 = vpack.c.bf16 %v882, %v879
        %v910 = vpack.c.bf16 %v890, %v887
        %v911 = vpack.c.bf16 %v898, %v895
        %v912 = vpack.c.bf16 %v906, %v903
        %s913 = scalar_lea.vmem %s389, 64
        %v914 = vld [vmem:[%s913] sm:$0xf]
        %v915 = vld [vmem:[%s913 + $0x4] sm:$0xf]
        %v916 = vld [vmem:[%s913 + $0x8] sm:$0xf]
        %v917 = vld [vmem:[%s913 + $0xc] sm:$0xf]
        %v918 = vld [vmem:[%s913 + $0x10] sm:$0xf]
        %v919 = vld [vmem:[%s913 + $0x14] sm:$0xf]
        %v920 = vld [vmem:[%s913 + $0x18] sm:$0xf]
        %v921 = vld [vmem:[%s913 + $0x1c] sm:$0xf]
        %v930 = vunpack.c.l.b16 %v914
        %v931 = vunpack.c.l.b16 %v915
        %v932 = vunpack.c.l.b16 %v916
        %v933 = vunpack.c.l.b16 %v917
        %v934 = vunpack.c.l.b16 %v918
        %v935 = vunpack.c.l.b16 %v919
        %v936 = vunpack.c.l.b16 %v920
        %v937 = vunpack.c.l.b16 %v921
        %v938 = vpack.c.b16 %v931, %v930
        %v939 = vpack.c.b16 %v933, %v932
        %v940 = vpack.c.b16 %v935, %v934
        %v941 = vpack.c.b16 %v937, %v936
        %v943 = vsel %vm541, %v938, 0
        %v946 = vsel %vm541, %v939, 0
        %v949 = vsel %vm541, %v940, 0
        %v952 = vsel %vm541, %v941, 0
        %954 = vmatprep.subr.bf16.mxu0 0
        %955 = vmatpush1.bf16.msra.mxu0 %v909
        %956 = vmatprep.subr.bf16.mxu0 0
        %957 = vmatpush1.bf16.msra.mxu0 %v910
        %958 = vmatprep.subr.bf16.mxu0 0
        %959 = vmatpush1.bf16.msra.mxu0 %v911
        %960 = vmatprep.subr.bf16.mxu0 0
        %961 = vmatpush1.bf16.msra.mxu0 %v912
        %962 = vmatprep.subr.bf16.mxu0 0
        %963 = vmatpush1.bf16.msra.mxu0 0
        %964 = vmatprep.subr.bf16.mxu0 0
        %965 = vmatpush1.bf16.msra.mxu0 0
        %966 = vmatprep.subr.bf16.mxu0 0
        %967 = vmatpush1.bf16.msra.mxu0 0
        %968 = vmatprep.subr.bf16.mxu0 0
        %969 = vmatpush1.bf16.msra.mxu0 0
        %970 = vmatprep.subr.bf16.mxu0 0
        %971 = vmatpush1.bf16.msra.mxu0 0
        %972 = vmatprep.subr.bf16.mxu0 0
        %973 = vmatpush1.bf16.msra.mxu0 0
        %974 = vmatprep.subr.bf16.mxu0 0
        %975 = vmatpush1.bf16.msra.mxu0 0
        %976 = vmatprep.subr.bf16.mxu0 0
        %977 = vmatpush1.bf16.msra.mxu0 0
        %978 = vmatprep.subr.bf16.mxu0 0
        %979 = vmatpush1.bf16.msra.mxu0 0
        %980 = vmatprep.subr.bf16.mxu0 0
        %981 = vmatpush1.bf16.msra.mxu0 0
        %982 = vmatprep.subr.bf16.mxu0 0
        %983 = vmatpush1.bf16.msra.mxu0 0
        %984 = vmatprep.subr.bf16.mxu0 0
        %985 = vmatpush1.bf16.msra.mxu0 0
        %986 = vmatprep.mubr.bf16.mxu0 0
        %987 = vmatmul.mubr.bf16.gmra.mrb[0].mxu0 %v943
        %v988 = vpop.f32.mrb[0].mxu0
        %v989 = vadd.f32 0.0, %v988
        %v990 = vpop.f32.mrb[0].mxu0
        %v991 = vpop.f32.mrb[0].mxu0
        %v992 = vadd.f32 0.0, %v991
        %v993 = vpop.f32.mrb[0].mxu0
        %994 = vmatprep.mubr.bf16.mxu0 0
        %995 = vmatmul.mubr.bf16.gmra.mrb[0].mxu0 %v946
        %v996 = vpop.f32.mrb[0].mxu0
        %v997 = vadd.f32 0.0, %v996
        %v998 = vpop.f32.mrb[0].mxu0
        %v999 = vpop.f32.mrb[0].mxu0
        %v1000 = vadd.f32 0.0, %v999
        %v1001 = vpop.f32.mrb[0].mxu0
        %1002 = vmatprep.mubr.bf16.mxu0 0
        %1003 = vmatmul.mubr.bf16.gmra.mrb[0].mxu0 %v949
        %v1004 = vpop.f32.mrb[0].mxu0
        %v1005 = vadd.f32 0.0, %v1004
        %v1006 = vpop.f32.mrb[0].mxu0
        %v1007 = vpop.f32.mrb[0].mxu0
        %v1008 = vadd.f32 0.0, %v1007
        %v1009 = vpop.f32.mrb[0].mxu0
        %1010 = vmatprep.mubr.bf16.mxu0 0
        %1011 = vmatmul.mubr.bf16.gmra.mrb[0].mxu0 %v952
        %v1012 = vpop.f32.mrb[0].mxu0
        %v1013 = vadd.f32 0.0, %v1012
        %v1014 = vpop.f32.mrb[0].mxu0
        %v1015 = vpop.f32.mrb[0].mxu0
        %v1016 = vadd.f32 0.0, %v1015
        %v1017 = vpop.f32.mrb[0].mxu0
        %1018 = vdwg.mxu0
        %v1019 = vadd.f32 %v819, %v989
        %v1020 = vadd.f32 %v820, %v992
        %v1021 = vadd.f32 %v821, %v997
        %v1022 = vadd.f32 %v822, %v1000
        %v1023 = vadd.f32 %v823, %v1005
        %v1024 = vadd.f32 %v824, %v1008
        %v1025 = vadd.f32 %v825, %v1013
        %v1026 = vadd.f32 %v826, %v1016
        %v1027 = vpack.c.bf16 %v1020, %v1019
        %v1028 = vpack.c.bf16 %v1022, %v1021
        %v1029 = vpack.c.bf16 %v1024, %v1023
        %v1030 = vpack.c.bf16 %v1026, %v1025
        %v1031 = vld [vmem:[%s4] sm:$0xf]
        %v1032 = vld [vmem:[%s4 + $0x4] sm:$0xf]
        %v1033 = vld [vmem:[%s4 + $0x8] sm:$0xf]
        %v1034 = vld [vmem:[%s4 + $0xc] sm:$0xf]
        %v1035 = vld [vmem:[%s5] sm:$0xf]
        %v1036 = vld [vmem:[%s5 + $0x4] sm:$0xf]
        %v1037 = vld [vmem:[%s5 + $0x8] sm:$0xf]
        %v1038 = vld [vmem:[%s5 + $0xc] sm:$0xf]
        %v1043 = vunpack.c.l.b16 %v1035
        %v1044 = vunpack.c.l.b16 %v1036
        %v1045 = vunpack.c.l.b16 %v1037
        %v1046 = vunpack.c.l.b16 %v1038
        %v1047 = vpack.c.b16 %v1044, %v1043
        %v1048 = vpack.c.b16 %v1046, %v1045
        %1051 = vmatprep.subr.bf16.mxu0 0
        %1052 = vmatpush1.bf16.msra.mxu0 %v1047
        %1053 = vmatprep.subr.bf16.mxu0 0
        %1054 = vmatpush1.bf16.msra.mxu0 %v1048
        %1055 = vmatprep.subr.bf16.mxu0 0
        %1056 = vmatpush1.bf16.msra.mxu0 0
        %1057 = vmatprep.subr.bf16.mxu0 0
        %1058 = vmatpush1.bf16.msra.mxu0 0
        %1059 = vmatprep.subr.bf16.mxu0 0
        %1060 = vmatpush1.bf16.msra.mxu0 0
        %1061 = vmatprep.subr.bf16.mxu0 0
        %1062 = vmatpush1.bf16.msra.mxu0 0
        %1063 = vmatprep.subr.bf16.mxu0 0
        %1064 = vmatpush1.bf16.msra.mxu0 0
        %1065 = vmatprep.subr.bf16.mxu0 0
        %1066 = vmatpush1.bf16.msra.mxu0 0
        %1067 = vmatprep.subr.bf16.mxu0 0
        %1068 = vmatpush1.bf16.msra.mxu0 0
        %1069 = vmatprep.subr.bf16.mxu0 0
        %1070 = vmatpush1.bf16.msra.mxu0 0
        %1071 = vmatprep.subr.bf16.mxu0 0
        %1072 = vmatpush1.bf16.msra.mxu0 0
        %1073 = vmatprep.subr.bf16.mxu0 0
        %1074 = vmatpush1.bf16.msra.mxu0 0
        %1075 = vmatprep.subr.bf16.mxu0 0
        %1076 = vmatpush1.bf16.msra.mxu0 0
        %1077 = vmatprep.subr.bf16.mxu0 0
        %1078 = vmatpush1.bf16.msra.mxu0 0
        %1079 = vmatprep.subr.bf16.mxu0 0
        %1080 = vmatpush1.bf16.msra.mxu0 0
        %1081 = vmatprep.subr.bf16.mxu0 0
        %1082 = vmatpush1.bf16.msra.mxu0 0
        %1083 = vmatprep.mubr.bf16.mxu0 0
        %1084 = vmatmul.mubr.bf16.gmra.mrb[0].mxu0 %v433
        %v1085 = vpop.f32.mrb[0].mxu0
        %v1086 = vadd.f32 0.0, %v1085
        %v1087 = vpop.f32.mrb[0].mxu0
        %v1088 = vpop.f32.mrb[0].mxu0
        %v1089 = vadd.f32 0.0, %v1088
        %v1090 = vpop.f32.mrb[0].mxu0
        %1091 = vmatprep.mubr.bf16.mxu0 0
        %1092 = vmatmul.mubr.bf16.gmra.mrb[0].mxu0 %v436
        %v1093 = vpop.f32.mrb[0].mxu0
        %v1094 = vadd.f32 0.0, %v1093
        %v1095 = vpop.f32.mrb[0].mxu0
        %v1096 = vpop.f32.mrb[0].mxu0
        %v1097 = vadd.f32 0.0, %v1096
        %v1098 = vpop.f32.mrb[0].mxu0
        %1099 = vmatprep.mubr.bf16.mxu0 0
        %1100 = vmatmul.mubr.bf16.gmra.mrb[0].mxu0 %v439
        %v1101 = vpop.f32.mrb[0].mxu0
        %v1102 = vadd.f32 0.0, %v1101
        %v1103 = vpop.f32.mrb[0].mxu0
        %v1104 = vpop.f32.mrb[0].mxu0
        %v1105 = vadd.f32 0.0, %v1104
        %v1106 = vpop.f32.mrb[0].mxu0
        %1107 = vmatprep.mubr.bf16.mxu0 0
        %1108 = vmatmul.mubr.bf16.gmra.mrb[0].mxu0 %v442
        %v1109 = vpop.f32.mrb[0].mxu0
        %v1110 = vadd.f32 0.0, %v1109
        %v1111 = vpop.f32.mrb[0].mxu0
        %v1112 = vpop.f32.mrb[0].mxu0
        %v1113 = vadd.f32 0.0, %v1112
        %v1114 = vpop.f32.mrb[0].mxu0
        %1115 = vdwg.mxu0
        %v1120 = vunpack.c.l.b16 %v1031
        %v1121 = vunpack.c.l.b16 %v1032
        %v1122 = vunpack.c.l.b16 %v1033
        %v1123 = vunpack.c.l.b16 %v1034
        %v1124 = vpack.c.b16 %v1121, %v1120
        %v1125 = vpack.c.b16 %v1123, %v1122
        %v1129 = vsel %vm431, %v1027, 0
        %v1132 = vsel %vm431, %v1028, 0
        %v1135 = vsel %vm431, %v1029, 0
        %v1138 = vsel %vm431, %v1030, 0
        %1140 = vmatprep.subr.bf16.mxu0 0
        %1141 = vmatpush1.bf16.msra.mxu0 %v1124
        %1142 = vmatprep.subr.bf16.mxu0 0
        %1143 = vmatpush1.bf16.msra.mxu0 %v1125
        %1144 = vmatprep.subr.bf16.mxu0 0
        %1145 = vmatpush1.bf16.msra.mxu0 0
        %1146 = vmatprep.subr.bf16.mxu0 0
        %1147 = vmatpush1.bf16.msra.mxu0 0
        %1148 = vmatprep.subr.bf16.mxu0 0
        %1149 = vmatpush1.bf16.msra.mxu0 0
        %1150 = vmatprep.subr.bf16.mxu0 0
        %1151 = vmatpush1.bf16.msra.mxu0 0
        %1152 = vmatprep.subr.bf16.mxu0 0
        %1153 = vmatpush1.bf16.msra.mxu0 0
        %1154 = vmatprep.subr.bf16.mxu0 0
        %1155 = vmatpush1.bf16.msra.mxu0 0
        %1156 = vmatprep.subr.bf16.mxu0 0
        %1157 = vmatpush1.bf16.msra.mxu0 0
        %1158 = vmatprep.subr.bf16.mxu0 0
        %1159 = vmatpush1.bf16.msra.mxu0 0
        %1160 = vmatprep.subr.bf16.mxu0 0
        %1161 = vmatpush1.bf16.msra.mxu0 0
        %1162 = vmatprep.subr.bf16.mxu0 0
        %1163 = vmatpush1.bf16.msra.mxu0 0
        %1164 = vmatprep.subr.bf16.mxu0 0
        %1165 = vmatpush1.bf16.msra.mxu0 0
        %1166 = vmatprep.subr.bf16.mxu0 0
        %1167 = vmatpush1.bf16.msra.mxu0 0
        %1168 = vmatprep.subr.bf16.mxu0 0
        %1169 = vmatpush1.bf16.msra.mxu0 0
        %1170 = vmatprep.subr.bf16.mxu0 0
        %1171 = vmatpush1.bf16.msra.mxu0 0
        %1172 = vmatprep.mubr.bf16.mxu0 0
        %1173 = vmatmul.mubr.bf16.gmra.mrb[0].mxu0 %v1129
        %v1174 = vpop.f32.mrb[0].mxu0
        %v1175 = vadd.f32 %v1086, %v1174
        %v1176 = vpop.f32.mrb[0].mxu0
        %v1177 = vpop.f32.mrb[0].mxu0
        %v1178 = vadd.f32 %v1089, %v1177
        %v1179 = vpop.f32.mrb[0].mxu0
        %1180 = vmatprep.mubr.bf16.mxu0 0
        %1181 = vmatmul.mubr.bf16.gmra.mrb[0].mxu0 %v1132
        %v1182 = vpop.f32.mrb[0].mxu0
        %v1183 = vadd.f32 %v1094, %v1182
        %v1184 = vpop.f32.mrb[0].mxu0
        %v1185 = vpop.f32.mrb[0].mxu0
        %v1186 = vadd.f32 %v1097, %v1185
        %v1187 = vpop.f32.mrb[0].mxu0
        %1188 = vmatprep.mubr.bf16.mxu0 0
        %1189 = vmatmul.mubr.bf16.gmra.mrb[0].mxu0 %v1135
        %v1190 = vpop.f32.mrb[0].mxu0
        %v1191 = vadd.f32 %v1102, %v1190
        %v1192 = vpop.f32.mrb[0].mxu0
        %v1193 = vpop.f32.mrb[0].mxu0
        %v1194 = vadd.f32 %v1105, %v1193
        %v1195 = vpop.f32.mrb[0].mxu0
        %1196 = vmatprep.mubr.bf16.mxu0 0
        %1197 = vmatmul.mubr.bf16.gmra.mrb[0].mxu0 %v1138
        %v1198 = vpop.f32.mrb[0].mxu0
        %v1199 = vadd.f32 %v1110, %v1198
        %v1200 = vpop.f32.mrb[0].mxu0
        %v1201 = vpop.f32.mrb[0].mxu0
        %v1202 = vadd.f32 %v1113, %v1201
        %v1203 = vpop.f32.mrb[0].mxu0
        %1204 = vdwg.mxu0
        %v1205 = vlaneseq
        %v1206 = vshrl.u32 %v1205, 7
        %v1207 = vsub.s32 0, %v1206
        %v1208 = vrot.slane %v391, %v1207
        %v1209 = vadd.f32 %v1175, %v1208
        %v1210 = vadd.f32 %v1178, %v1208
        %v1211 = vadd.f32 %v1183, %v1208
        %v1212 = vadd.f32 %v1186, %v1208
        %v1213 = vadd.f32 %v1191, %v1208
        %v1214 = vadd.f32 %v1194, %v1208
        %v1215 = vadd.f32 %v1199, %v1208
        %v1216 = vadd.f32 %v1202, %v1208
        %v1217 = vxor.u32 %v1209, 2147483648
        %v1218 = vxor.u32 %v1210, 2147483648
        %v1219 = vxor.u32 %v1211, 2147483648
        %v1220 = vxor.u32 %v1212, 2147483648
        %v1221 = vxor.u32 %v1213, 2147483648
        %v1222 = vxor.u32 %v1214, 2147483648
        %v1223 = vxor.u32 %v1215, 2147483648
        %v1224 = vxor.u32 %v1216, 2147483648
        %v1225 = vmul.f32 %v1217, 1.442695
        %v1226 = vpow.pop %v1225
        %v1227 = vmul.f32 %v1218, 1.442695
        %v1228 = vpow.pop %v1227
        %v1229 = vmul.f32 %v1219, 1.442695
        %v1230 = vpow.pop %v1229
        %v1231 = vmul.f32 %v1220, 1.442695
        %v1232 = vpow.pop %v1231
        %v1233 = vmul.f32 %v1221, 1.442695
        %v1234 = vpow.pop %v1233
        %v1235 = vmul.f32 %v1222, 1.442695
        %v1236 = vpow.pop %v1235
        %v1237 = vmul.f32 %v1223, 1.442695
        %v1238 = vpow.pop %v1237
        %v1239 = vmul.f32 %v1224, 1.442695
        %v1240 = vpow.pop %v1239
        %v1241 = vadd.f32 %v1226, 1.0
        %v1242 = vadd.f32 %v1228, 1.0
        %v1243 = vadd.f32 %v1230, 1.0
        %v1244 = vadd.f32 %v1232, 1.0
        %v1245 = vadd.f32 %v1234, 1.0
        %v1246 = vadd.f32 %v1236, 1.0
        %v1247 = vadd.f32 %v1238, 1.0
        %v1248 = vadd.f32 %v1240, 1.0
        %v1249 = vrcp.pop %v1241
        %v1250 = vmul.f32 1.0, %v1249
        %v1251 = vrcp.pop %v1242
        %v1252 = vmul.f32 1.0, %v1251
        %v1253 = vrcp.pop %v1243
        %v1254 = vmul.f32 1.0, %v1253
        %v1255 = vrcp.pop %v1244
        %v1256 = vmul.f32 1.0, %v1255
        %v1257 = vrcp.pop %v1245
        %v1258 = vmul.f32 1.0, %v1257
        %v1259 = vrcp.pop %v1246
        %v1260 = vmul.f32 1.0, %v1259
        %v1261 = vrcp.pop %v1247
        %v1262 = vmul.f32 1.0, %v1261
        %v1263 = vrcp.pop %v1248
        %v1264 = vmul.f32 1.0, %v1263
        %s1265 = scalar_lea.vmem %s4, 16
        %v1266 = vld [vmem:[%s1265] sm:$0xf]
        %v1267 = vld [vmem:[%s1265 + $0x4] sm:$0xf]
        %v1268 = vld [vmem:[%s1265 + $0x8] sm:$0xf]
        %v1269 = vld [vmem:[%s1265 + $0xc] sm:$0xf]
        %s1270 = scalar_lea.vmem %s5, 16
        %v1271 = vld [vmem:[%s1270] sm:$0xf]
        %v1272 = vld [vmem:[%s1270 + $0x4] sm:$0xf]
        %v1273 = vld [vmem:[%s1270 + $0x8] sm:$0xf]
        %v1274 = vld [vmem:[%s1270 + $0xc] sm:$0xf]
        %v1279 = vunpack.c.l.b16 %v1271
        %v1280 = vunpack.c.l.b16 %v1272
        %v1281 = vunpack.c.l.b16 %v1273
        %v1282 = vunpack.c.l.b16 %v1274
        %v1283 = vpack.c.b16 %v1280, %v1279
        %v1284 = vpack.c.b16 %v1282, %v1281
        %1287 = vmatprep.subr.bf16.mxu0 0
        %1288 = vmatpush1.bf16.msra.mxu0 %v1283
        %1289 = vmatprep.subr.bf16.mxu0 0
        %1290 = vmatpush1.bf16.msra.mxu0 %v1284
        %1291 = vmatprep.subr.bf16.mxu0 0
        %1292 = vmatpush1.bf16.msra.mxu0 0
        %1293 = vmatprep.subr.bf16.mxu0 0
        %1294 = vmatpush1.bf16.msra.mxu0 0
        %1295 = vmatprep.subr.bf16.mxu0 0
        %1296 = vmatpush1.bf16.msra.mxu0 0
        %1297 = vmatprep.subr.bf16.mxu0 0
        %1298 = vmatpush1.bf16.msra.mxu0 0
        %1299 = vmatprep.subr.bf16.mxu0 0
        %1300 = vmatpush1.bf16.msra.mxu0 0
        %1301 = vmatprep.subr.bf16.mxu0 0
        %1302 = vmatpush1.bf16.msra.mxu0 0
        %1303 = vmatprep.subr.bf16.mxu0 0
        %1304 = vmatpush1.bf16.msra.mxu0 0
        %1305 = vmatprep.subr.bf16.mxu0 0
        %1306 = vmatpush1.bf16.msra.mxu0 0
        %1307 = vmatprep.subr.bf16.mxu0 0
        %1308 = vmatpush1.bf16.msra.mxu0 0
        %1309 = vmatprep.subr.bf16.mxu0 0
        %1310 = vmatpush1.bf16.msra.mxu0 0
        %1311 = vmatprep.subr.bf16.mxu0 0
        %1312 = vmatpush1.bf16.msra.mxu0 0
        %1313 = vmatprep.subr.bf16.mxu0 0
        %1314 = vmatpush1.bf16.msra.mxu0 0
        %1315 = vmatprep.subr.bf16.mxu0 0
        %1316 = vmatpush1.bf16.msra.mxu0 0
        %1317 = vmatprep.subr.bf16.mxu0 0
        %1318 = vmatpush1.bf16.msra.mxu0 0
        %1319 = vmatprep.mubr.bf16.mxu0 0
        %1320 = vmatmul.mubr.bf16.gmra.mrb[0].mxu0 %v433
        %v1321 = vpop.f32.mrb[0].mxu0
        %v1322 = vadd.f32 0.0, %v1321
        %v1323 = vpop.f32.mrb[0].mxu0
        %v1324 = vpop.f32.mrb[0].mxu0
        %v1325 = vadd.f32 0.0, %v1324
        %v1326 = vpop.f32.mrb[0].mxu0
        %1327 = vmatprep.mubr.bf16.mxu0 0
        %1328 = vmatmul.mubr.bf16.gmra.mrb[0].mxu0 %v436
        %v1329 = vpop.f32.mrb[0].mxu0
        %v1330 = vadd.f32 0.0, %v1329
        %v1331 = vpop.f32.mrb[0].mxu0
        %v1332 = vpop.f32.mrb[0].mxu0
        %v1333 = vadd.f32 0.0, %v1332
        %v1334 = vpop.f32.mrb[0].mxu0
        %1335 = vmatprep.mubr.bf16.mxu0 0
        %1336 = vmatmul.mubr.bf16.gmra.mrb[0].mxu0 %v439
        %v1337 = vpop.f32.mrb[0].mxu0
        %v1338 = vadd.f32 0.0, %v1337
        %v1339 = vpop.f32.mrb[0].mxu0
        %v1340 = vpop.f32.mrb[0].mxu0
        %v1341 = vadd.f32 0.0, %v1340
        %v1342 = vpop.f32.mrb[0].mxu0
        %1343 = vmatprep.mubr.bf16.mxu0 0
        %1344 = vmatmul.mubr.bf16.gmra.mrb[0].mxu0 %v442
        %v1345 = vpop.f32.mrb[0].mxu0
        %v1346 = vadd.f32 0.0, %v1345
        %v1347 = vpop.f32.mrb[0].mxu0
        %v1348 = vpop.f32.mrb[0].mxu0
        %v1349 = vadd.f32 0.0, %v1348
        %v1350 = vpop.f32.mrb[0].mxu0
        %1351 = vdwg.mxu0
        %v1356 = vunpack.c.l.b16 %v1266
        %v1357 = vunpack.c.l.b16 %v1267
        %v1358 = vunpack.c.l.b16 %v1268
        %v1359 = vunpack.c.l.b16 %v1269
        %v1360 = vpack.c.b16 %v1357, %v1356
        %v1361 = vpack.c.b16 %v1359, %v1358
        %1364 = vmatprep.subr.bf16.mxu0 0
        %1365 = vmatpush1.bf16.msra.mxu0 %v1360
        %1366 = vmatprep.subr.bf16.mxu0 0
        %1367 = vmatpush1.bf16.msra.mxu0 %v1361
        %1368 = vmatprep.subr.bf16.mxu0 0
        %1369 = vmatpush1.bf16.msra.mxu0 0
        %1370 = vmatprep.subr.bf16.mxu0 0
        %1371 = vmatpush1.bf16.msra.mxu0 0
        %1372 = vmatprep.subr.bf16.mxu0 0
        %1373 = vmatpush1.bf16.msra.mxu0 0
        %1374 = vmatprep.subr.bf16.mxu0 0
        %1375 = vmatpush1.bf16.msra.mxu0 0
        %1376 = vmatprep.subr.bf16.mxu0 0
        %1377 = vmatpush1.bf16.msra.mxu0 0
        %1378 = vmatprep.subr.bf16.mxu0 0
        %1379 = vmatpush1.bf16.msra.mxu0 0
        %1380 = vmatprep.subr.bf16.mxu0 0
        %1381 = vmatpush1.bf16.msra.mxu0 0
        %1382 = vmatprep.subr.bf16.mxu0 0
        %1383 = vmatpush1.bf16.msra.mxu0 0
        %1384 = vmatprep.subr.bf16.mxu0 0
        %1385 = vmatpush1.bf16.msra.mxu0 0
        %1386 = vmatprep.subr.bf16.mxu0 0
        %1387 = vmatpush1.bf16.msra.mxu0 0
        %1388 = vmatprep.subr.bf16.mxu0 0
        %1389 = vmatpush1.bf16.msra.mxu0 0
        %1390 = vmatprep.subr.bf16.mxu0 0
        %1391 = vmatpush1.bf16.msra.mxu0 0
        %1392 = vmatprep.subr.bf16.mxu0 0
        %1393 = vmatpush1.bf16.msra.mxu0 0
        %1394 = vmatprep.subr.bf16.mxu0 0
        %1395 = vmatpush1.bf16.msra.mxu0 0
        %1396 = vmatprep.mubr.bf16.mxu0 0
        %1397 = vmatmul.mubr.bf16.gmra.mrb[0].mxu0 %v1129
        %v1398 = vpop.f32.mrb[0].mxu0
        %v1399 = vadd.f32 %v1322, %v1398
        %v1400 = vpop.f32.mrb[0].mxu0
        %v1401 = vpop.f32.mrb[0].mxu0
        %v1402 = vadd.f32 %v1325, %v1401
        %v1403 = vpop.f32.mrb[0].mxu0
        %1404 = vmatprep.mubr.bf16.mxu0 0
        %1405 = vmatmul.mubr.bf16.gmra.mrb[0].mxu0 %v1132
        %v1406 = vpop.f32.mrb[0].mxu0
        %v1407 = vadd.f32 %v1330, %v1406
        %v1408 = vpop.f32.mrb[0].mxu0
        %v1409 = vpop.f32.mrb[0].mxu0
        %v1410 = vadd.f32 %v1333, %v1409
        %v1411 = vpop.f32.mrb[0].mxu0
        %1412 = vmatprep.mubr.bf16.mxu0 0
        %1413 = vmatmul.mubr.bf16.gmra.mrb[0].mxu0 %v1135
        %v1414 = vpop.f32.mrb[0].mxu0
        %v1415 = vadd.f32 %v1338, %v1414
        %v1416 = vpop.f32.mrb[0].mxu0
        %v1417 = vpop.f32.mrb[0].mxu0
        %v1418 = vadd.f32 %v1341, %v1417
        %v1419 = vpop.f32.mrb[0].mxu0
        %1420 = vmatprep.mubr.bf16.mxu0 0
        %1421 = vmatmul.mubr.bf16.gmra.mrb[0].mxu0 %v1138
        %v1422 = vpop.f32.mrb[0].mxu0
        %v1423 = vadd.f32 %v1346, %v1422
        %v1424 = vpop.f32.mrb[0].mxu0
        %v1425 = vpop.f32.mrb[0].mxu0
        %v1426 = vadd.f32 %v1349, %v1425
        %v1427 = vpop.f32.mrb[0].mxu0
        %1428 = vdwg.mxu0
        %v1429 = vlaneseq
        %v1430 = vshrl.u32 %v1429, 7
        %v1431 = vsub.s32 0, %v1430
        %v1432 = vrot.slane %v392, %v1431
        %v1433 = vadd.f32 %v1399, %v1432
        %v1434 = vadd.f32 %v1402, %v1432
        %v1435 = vadd.f32 %v1407, %v1432
        %v1436 = vadd.f32 %v1410, %v1432
        %v1437 = vadd.f32 %v1415, %v1432
        %v1438 = vadd.f32 %v1418, %v1432
        %v1439 = vadd.f32 %v1423, %v1432
        %v1440 = vadd.f32 %v1426, %v1432
        %v1441 = vxor.u32 %v1433, 2147483648
        %v1442 = vxor.u32 %v1434, 2147483648
        %v1443 = vxor.u32 %v1435, 2147483648
        %v1444 = vxor.u32 %v1436, 2147483648
        %v1445 = vxor.u32 %v1437, 2147483648
        %v1446 = vxor.u32 %v1438, 2147483648
        %v1447 = vxor.u32 %v1439, 2147483648
        %v1448 = vxor.u32 %v1440, 2147483648
        %v1449 = vmul.f32 %v1441, 1.442695
        %v1450 = vpow.pop %v1449
        %v1451 = vmul.f32 %v1442, 1.442695
        %v1452 = vpow.pop %v1451
        %v1453 = vmul.f32 %v1443, 1.442695
        %v1454 = vpow.pop %v1453
        %v1455 = vmul.f32 %v1444, 1.442695
        %v1456 = vpow.pop %v1455
        %v1457 = vmul.f32 %v1445, 1.442695
        %v1458 = vpow.pop %v1457
        %v1459 = vmul.f32 %v1446, 1.442695
        %v1460 = vpow.pop %v1459
        %v1461 = vmul.f32 %v1447, 1.442695
        %v1462 = vpow.pop %v1461
        %v1463 = vmul.f32 %v1448, 1.442695
        %v1464 = vpow.pop %v1463
        %v1465 = vadd.f32 %v1450, 1.0
        %v1466 = vadd.f32 %v1452, 1.0
        %v1467 = vadd.f32 %v1454, 1.0
        %v1468 = vadd.f32 %v1456, 1.0
        %v1469 = vadd.f32 %v1458, 1.0
        %v1470 = vadd.f32 %v1460, 1.0
        %v1471 = vadd.f32 %v1462, 1.0
        %v1472 = vadd.f32 %v1464, 1.0
        %v1473 = vrcp.pop %v1465
        %v1474 = vmul.f32 1.0, %v1473
        %v1475 = vrcp.pop %v1466
        %v1476 = vmul.f32 1.0, %v1475
        %v1477 = vrcp.pop %v1467
        %v1478 = vmul.f32 1.0, %v1477
        %v1479 = vrcp.pop %v1468
        %v1480 = vmul.f32 1.0, %v1479
        %v1481 = vrcp.pop %v1469
        %v1482 = vmul.f32 1.0, %v1481
        %v1483 = vrcp.pop %v1470
        %v1484 = vmul.f32 1.0, %v1483
        %v1485 = vrcp.pop %v1471
        %v1486 = vmul.f32 1.0, %v1485
        %v1487 = vrcp.pop %v1472
        %v1488 = vmul.f32 1.0, %v1487
        %s1489 = scalar_lea.vmem %s4, 32
        %v1490 = vld [vmem:[%s1489] sm:$0xf]
        %v1491 = vld [vmem:[%s1489 + $0x4] sm:$0xf]
        %v1492 = vld [vmem:[%s1489 + $0x8] sm:$0xf]
        %v1493 = vld [vmem:[%s1489 + $0xc] sm:$0xf]
        %v1494 = vlaneseq
        %v1495 = vshrl.u32 %v1494, 7
        %v1496 = vsub.s32 0, %v1495
        %v1497 = vrot.slane %v393, %v1496
        %v1502 = vunpack.c.l.b16 %v1490
        %v1503 = vunpack.c.l.b16 %v1491
        %v1504 = vunpack.c.l.b16 %v1492
        %v1505 = vunpack.c.l.b16 %v1493
        %v1506 = vpack.c.b16 %v1503, %v1502
        %v1507 = vpack.c.b16 %v1505, %v1504
        %1510 = vmatprep.subr.bf16.mxu0 0
        %1511 = vmatpush1.bf16.msra.mxu0 %v1506
        %1512 = vmatprep.subr.bf16.mxu0 0
        %1513 = vmatpush1.bf16.msra.mxu0 %v1507
        %1514 = vmatprep.subr.bf16.mxu0 0
        %1515 = vmatpush1.bf16.msra.mxu0 0
        %1516 = vmatprep.subr.bf16.mxu0 0
        %1517 = vmatpush1.bf16.msra.mxu0 0
        %1518 = vmatprep.subr.bf16.mxu0 0
        %1519 = vmatpush1.bf16.msra.mxu0 0
        %1520 = vmatprep.subr.bf16.mxu0 0
        %1521 = vmatpush1.bf16.msra.mxu0 0
        %1522 = vmatprep.subr.bf16.mxu0 0
        %1523 = vmatpush1.bf16.msra.mxu0 0
        %1524 = vmatprep.subr.bf16.mxu0 0
        %1525 = vmatpush1.bf16.msra.mxu0 0
        %1526 = vmatprep.subr.bf16.mxu0 0
        %1527 = vmatpush1.bf16.msra.mxu0 0
        %1528 = vmatprep.subr.bf16.mxu0 0
        %1529 = vmatpush1.bf16.msra.mxu0 0
        %1530 = vmatprep.subr.bf16.mxu0 0
        %1531 = vmatpush1.bf16.msra.mxu0 0
        %1532 = vmatprep.subr.bf16.mxu0 0
        %1533 = vmatpush1.bf16.msra.mxu0 0
        %1534 = vmatprep.subr.bf16.mxu0 0
        %1535 = vmatpush1.bf16.msra.mxu0 0
        %1536 = vmatprep.subr.bf16.mxu0 0
        %1537 = vmatpush1.bf16.msra.mxu0 0
        %1538 = vmatprep.subr.bf16.mxu0 0
        %1539 = vmatpush1.bf16.msra.mxu0 0
        %1540 = vmatprep.subr.bf16.mxu0 0
        %1541 = vmatpush1.bf16.msra.mxu0 0
        %1542 = vmatprep.mubr.bf16.mxu0 0
        %1543 = vmatmul.mubr.bf16.gmra.mrb[0].mxu0 %v1129
        %v1544 = vpop.f32.mrb[0].mxu0
        %v1545 = vadd.f32 %v1497, %v1544
        %v1546 = vpop.f32.mrb[0].mxu0
        %v1547 = vpop.f32.mrb[0].mxu0
        %v1548 = vadd.f32 %v1497, %v1547
        %v1549 = vpop.f32.mrb[0].mxu0
        %1550 = vmatprep.mubr.bf16.mxu0 0
        %1551 = vmatmul.mubr.bf16.gmra.mrb[0].mxu0 %v1132
        %v1552 = vpop.f32.mrb[0].mxu0
        %v1553 = vadd.f32 %v1497, %v1552
        %v1554 = vpop.f32.mrb[0].mxu0
        %v1555 = vpop.f32.mrb[0].mxu0
        %v1556 = vadd.f32 %v1497, %v1555
        %v1557 = vpop.f32.mrb[0].mxu0
        %1558 = vmatprep.mubr.bf16.mxu0 0
        %1559 = vmatmul.mubr.bf16.gmra.mrb[0].mxu0 %v1135
        %v1560 = vpop.f32.mrb[0].mxu0
        %v1561 = vadd.f32 %v1497, %v1560
        %v1562 = vpop.f32.mrb[0].mxu0
        %v1563 = vpop.f32.mrb[0].mxu0
        %v1564 = vadd.f32 %v1497, %v1563
        %v1565 = vpop.f32.mrb[0].mxu0
        %1566 = vmatprep.mubr.bf16.mxu0 0
        %1567 = vmatmul.mubr.bf16.gmra.mrb[0].mxu0 %v1138
        %v1568 = vpop.f32.mrb[0].mxu0
        %v1569 = vadd.f32 %v1497, %v1568
        %v1570 = vpop.f32.mrb[0].mxu0
        %v1571 = vpop.f32.mrb[0].mxu0
        %v1572 = vadd.f32 %v1497, %v1571
        %v1573 = vpop.f32.mrb[0].mxu0
        %1574 = vdwg.mxu0
        %s1575 = scalar_lea.vmem %s5, 32
        %v1576 = vld [vmem:[%s1575] sm:$0xf]
        %v1577 = vld [vmem:[%s1575 + $0x4] sm:$0xf]
        %v1578 = vld [vmem:[%s1575 + $0x8] sm:$0xf]
        %v1579 = vld [vmem:[%s1575 + $0xc] sm:$0xf]
        %v1580 = vlaneseq
        %v1581 = vshrl.u32 %v1580, 7
        %v1582 = vsub.s32 0, %v1581
        %v1583 = vrot.slane %v394, %v1582
        %v1588 = vunpack.c.l.b16 %v1576
        %v1589 = vunpack.c.l.b16 %v1577
        %v1590 = vunpack.c.l.b16 %v1578
        %v1591 = vunpack.c.l.b16 %v1579
        %v1592 = vpack.c.b16 %v1589, %v1588
        %v1593 = vpack.c.b16 %v1591, %v1590
        %1596 = vmatprep.subr.bf16.mxu0 0
        %1597 = vmatpush1.bf16.msra.mxu0 %v1592
        %1598 = vmatprep.subr.bf16.mxu0 0
        %1599 = vmatpush1.bf16.msra.mxu0 %v1593
        %1600 = vmatprep.subr.bf16.mxu0 0
        %1601 = vmatpush1.bf16.msra.mxu0 0
        %1602 = vmatprep.subr.bf16.mxu0 0
        %1603 = vmatpush1.bf16.msra.mxu0 0
        %1604 = vmatprep.subr.bf16.mxu0 0
        %1605 = vmatpush1.bf16.msra.mxu0 0
        %1606 = vmatprep.subr.bf16.mxu0 0
        %1607 = vmatpush1.bf16.msra.mxu0 0
        %1608 = vmatprep.subr.bf16.mxu0 0
        %1609 = vmatpush1.bf16.msra.mxu0 0
        %1610 = vmatprep.subr.bf16.mxu0 0
        %1611 = vmatpush1.bf16.msra.mxu0 0
        %1612 = vmatprep.subr.bf16.mxu0 0
        %1613 = vmatpush1.bf16.msra.mxu0 0
        %1614 = vmatprep.subr.bf16.mxu0 0
        %1615 = vmatpush1.bf16.msra.mxu0 0
        %1616 = vmatprep.subr.bf16.mxu0 0
        %1617 = vmatpush1.bf16.msra.mxu0 0
        %1618 = vmatprep.subr.bf16.mxu0 0
        %1619 = vmatpush1.bf16.msra.mxu0 0
        %1620 = vmatprep.subr.bf16.mxu0 0
        %1621 = vmatpush1.bf16.msra.mxu0 0
        %1622 = vmatprep.subr.bf16.mxu0 0
        %1623 = vmatpush1.bf16.msra.mxu0 0
        %1624 = vmatprep.subr.bf16.mxu0 0
        %1625 = vmatpush1.bf16.msra.mxu0 0
        %1626 = vmatprep.subr.bf16.mxu0 0
        %1627 = vmatpush1.bf16.msra.mxu0 0
        %1628 = vmatprep.mubr.bf16.mxu0 0
        %1629 = vmatmul.mubr.bf16.gmra.mrb[0].mxu0 %v433
        %v1630 = vpop.f32.mrb[0].mxu0
        %v1631 = vadd.f32 %v1583, %v1630
        %v1632 = vpop.f32.mrb[0].mxu0
        %v1633 = vpop.f32.mrb[0].mxu0
        %v1634 = vadd.f32 %v1583, %v1633
        %v1635 = vpop.f32.mrb[0].mxu0
        %1636 = vmatprep.mubr.bf16.mxu0 0
        %1637 = vmatmul.mubr.bf16.gmra.mrb[0].mxu0 %v436
        %v1638 = vpop.f32.mrb[0].mxu0
        %v1639 = vadd.f32 %v1583, %v1638
        %v1640 = vpop.f32.mrb[0].mxu0
        %v1641 = vpop.f32.mrb[0].mxu0
        %v1642 = vadd.f32 %v1583, %v1641
        %v1643 = vpop.f32.mrb[0].mxu0
        %1644 = vmatprep.mubr.bf16.mxu0 0
        %1645 = vmatmul.mubr.bf16.gmra.mrb[0].mxu0 %v439
        %v1646 = vpop.f32.mrb[0].mxu0
        %v1647 = vadd.f32 %v1583, %v1646
        %v1648 = vpop.f32.mrb[0].mxu0
        %v1649 = vpop.f32.mrb[0].mxu0
        %v1650 = vadd.f32 %v1583, %v1649
        %v1651 = vpop.f32.mrb[0].mxu0
        %1652 = vmatprep.mubr.bf16.mxu0 0
        %1653 = vmatmul.mubr.bf16.gmra.mrb[0].mxu0 %v442
        %v1654 = vpop.f32.mrb[0].mxu0
        %v1655 = vadd.f32 %v1583, %v1654
        %v1656 = vpop.f32.mrb[0].mxu0
        %v1657 = vpop.f32.mrb[0].mxu0
        %v1658 = vadd.f32 %v1583, %v1657
        %v1659 = vpop.f32.mrb[0].mxu0
        %1660 = vdwg.mxu0
        %v1661 = vmul.f32 %v1250, %v1631
        %v1662 = vmul.f32 %v1252, %v1634
        %v1663 = vmul.f32 %v1254, %v1639
        %v1664 = vmul.f32 %v1256, %v1642
        %v1665 = vmul.f32 %v1258, %v1647
        %v1666 = vmul.f32 %v1260, %v1650
        %v1667 = vmul.f32 %v1262, %v1655
        %v1668 = vmul.f32 %v1264, %v1658
        %v1669 = vadd.f32 %v1545, %v1661
        %v1670 = vadd.f32 %v1548, %v1662
        %v1671 = vadd.f32 %v1553, %v1663
        %v1672 = vadd.f32 %v1556, %v1664
        %v1673 = vadd.f32 %v1561, %v1665
        %v1674 = vadd.f32 %v1564, %v1666
        %v1675 = vadd.f32 %v1569, %v1667
        %v1676 = vadd.f32 %v1572, %v1668
        %v1677 = vtanh.pop %v1669
        %v1678 = vtanh.pop %v1670
        %v1679 = vtanh.pop %v1671
        %v1680 = vtanh.pop %v1672
        %v1681 = vtanh.pop %v1673
        %v1682 = vtanh.pop %v1674
        %v1683 = vtanh.pop %v1675
        %v1684 = vtanh.pop %v1676
        %v1685 = vsub.f32 1.0, %v1474
        %v1686 = vsub.f32 1.0, %v1476
        %v1687 = vsub.f32 1.0, %v1478
        %v1688 = vsub.f32 1.0, %v1480
        %v1689 = vsub.f32 1.0, %v1482
        %v1690 = vsub.f32 1.0, %v1484
        %v1691 = vsub.f32 1.0, %v1486
        %v1692 = vsub.f32 1.0, %v1488
        %v1693 = vmul.f32 %v1685, %v1677
        %v1694 = vmul.f32 %v1686, %v1678
        %v1695 = vmul.f32 %v1687, %v1679
        %v1696 = vmul.f32 %v1688, %v1680
        %v1697 = vmul.f32 %v1689, %v1681
        %v1698 = vmul.f32 %v1690, %v1682
        %v1699 = vmul.f32 %v1691, %v1683
        %v1700 = vmul.f32 %v1692, %v1684
        %v1701 = vmul.f32 %v1474, %v395
        %v1702 = vmul.f32 %v1476, %v396
        %v1703 = vmul.f32 %v1478, %v397
        %v1704 = vmul.f32 %v1480, %v398
        %v1705 = vmul.f32 %v1482, %v399
        %v1706 = vmul.f32 %v1484, %v400
        %v1707 = vmul.f32 %v1486, %v401
        %v1708 = vmul.f32 %v1488, %v402
        %v1709 = vadd.f32 %v1693, %v1701
        %v1710 = vadd.f32 %v1694, %v1702
        %v1711 = vadd.f32 %v1695, %v1703
        %v1712 = vadd.f32 %v1696, %v1704
        %v1713 = vadd.f32 %v1697, %v1705
        %v1714 = vadd.f32 %v1698, %v1706
        %v1715 = vadd.f32 %v1699, %v1707
        %v1716 = vadd.f32 %v1700, %v1708
        %v1717 = vpack.c.bf16 %v1710, %v1709
        %v1718 = vpack.c.bf16 %v1712, %v1711
        %v1719 = vpack.c.bf16 %v1714, %v1713
        %v1720 = vpack.c.bf16 %v1716, %v1715
        %v1722 = vsel %vm431, %v1717, 0
        %v1725 = vsel %vm431, %v1718, 0
        %v1728 = vsel %vm431, %v1719, 0
        %v1731 = vsel %vm431, %v1720, 0
        %1733 = vmatprep.subr.bf16.mxu0 0
        %1734 = vmatpush1.bf16.msra.mxu0 %v427
        %1735 = vmatprep.subr.bf16.mxu0 0
        %1736 = vmatpush1.bf16.msra.mxu0 %v428
        %1737 = vmatprep.subr.bf16.mxu0 0
        %1738 = vmatpush1.bf16.msra.mxu0 0
        %1739 = vmatprep.subr.bf16.mxu0 0
        %1740 = vmatpush1.bf16.msra.mxu0 0
        %1741 = vmatprep.subr.bf16.mxu0 0
        %1742 = vmatpush1.bf16.msra.mxu0 0
        %1743 = vmatprep.subr.bf16.mxu0 0
        %1744 = vmatpush1.bf16.msra.mxu0 0
        %1745 = vmatprep.subr.bf16.mxu0 0
        %1746 = vmatpush1.bf16.msra.mxu0 0
        %1747 = vmatprep.subr.bf16.mxu0 0
        %1748 = vmatpush1.bf16.msra.mxu0 0
        %1749 = vmatprep.subr.bf16.mxu0 0
        %1750 = vmatpush1.bf16.msra.mxu0 0
        %1751 = vmatprep.subr.bf16.mxu0 0
        %1752 = vmatpush1.bf16.msra.mxu0 0
        %1753 = vmatprep.subr.bf16.mxu0 0
        %1754 = vmatpush1.bf16.msra.mxu0 0
        %1755 = vmatprep.subr.bf16.mxu0 0
        %1756 = vmatpush1.bf16.msra.mxu0 0
        %1757 = vmatprep.subr.bf16.mxu0 0
        %1758 = vmatpush1.bf16.msra.mxu0 0
        %1759 = vmatprep.subr.bf16.mxu0 0
        %1760 = vmatpush1.bf16.msra.mxu0 0
        %1761 = vmatprep.subr.bf16.mxu0 0
        %1762 = vmatpush1.bf16.msra.mxu0 0
        %1763 = vmatprep.subr.bf16.mxu0 0
        %1764 = vmatpush1.bf16.msra.mxu0 0
        %1765 = vmatprep.mubr.bf16.mxu0 0
        %1766 = vmatmul.mubr.bf16.gmra.mrb[0].mxu0 %v1722
        %v1767 = vpop.f32.mrb[0].mxu0
        %v1768 = vadd.f32 0.0, %v1767
        %v1769 = vpop.f32.mrb[0].mxu0
        %v1770 = vpop.f32.mrb[0].mxu0
        %v1771 = vadd.f32 0.0, %v1770
        %v1772 = vpop.f32.mrb[0].mxu0
        %1773 = vmatprep.mubr.bf16.mxu0 0
        %1774 = vmatmul.mubr.bf16.gmra.mrb[0].mxu0 %v1725
        %v1775 = vpop.f32.mrb[0].mxu0
        %v1776 = vadd.f32 0.0, %v1775
        %v1777 = vpop.f32.mrb[0].mxu0
        %v1778 = vpop.f32.mrb[0].mxu0
        %v1779 = vadd.f32 0.0, %v1778
        %v1780 = vpop.f32.mrb[0].mxu0
        %1781 = vmatprep.mubr.bf16.mxu0 0
        %1782 = vmatmul.mubr.bf16.gmra.mrb[0].mxu0 %v1728
        %v1783 = vpop.f32.mrb[0].mxu0
        %v1784 = vadd.f32 0.0, %v1783
        %v1785 = vpop.f32.mrb[0].mxu0
        %v1786 = vpop.f32.mrb[0].mxu0
        %v1787 = vadd.f32 0.0, %v1786
        %v1788 = vpop.f32.mrb[0].mxu0
        %1789 = vmatprep.mubr.bf16.mxu0 0
        %1790 = vmatmul.mubr.bf16.gmra.mrb[0].mxu0 %v1731
        %v1791 = vpop.f32.mrb[0].mxu0
        %v1792 = vadd.f32 0.0, %v1791
        %v1793 = vpop.f32.mrb[0].mxu0
        %v1794 = vpop.f32.mrb[0].mxu0
        %v1795 = vadd.f32 0.0, %v1794
        %v1796 = vpop.f32.mrb[0].mxu0
        %1797 = vdwg.mxu0
        %v1798 = vpack.c.bf16 %v1771, %v1768
        %v1799 = vpack.c.bf16 %v1779, %v1776
        %v1800 = vpack.c.bf16 %v1787, %v1784
        %v1801 = vpack.c.bf16 %v1795, %v1792
        %1802 = vmatprep.subr.bf16.mxu0 0
        %1803 = vmatpush1.bf16.msra.mxu0 %v1798
        %1804 = vmatprep.subr.bf16.mxu0 0
        %1805 = vmatpush1.bf16.msra.mxu0 %v1799
        %1806 = vmatprep.subr.bf16.mxu0 0
        %1807 = vmatpush1.bf16.msra.mxu0 %v1800
        %1808 = vmatprep.subr.bf16.mxu0 0
        %1809 = vmatpush1.bf16.msra.mxu0 %v1801
        %1810 = vmatprep.subr.bf16.mxu0 0
        %1811 = vmatpush1.bf16.msra.mxu0 0
        %1812 = vmatprep.subr.bf16.mxu0 0
        %1813 = vmatpush1.bf16.msra.mxu0 0
        %1814 = vmatprep.subr.bf16.mxu0 0
        %1815 = vmatpush1.bf16.msra.mxu0 0
        %1816 = vmatprep.subr.bf16.mxu0 0
        %1817 = vmatpush1.bf16.msra.mxu0 0
        %1818 = vmatprep.subr.bf16.mxu0 0
        %1819 = vmatpush1.bf16.msra.mxu0 0
        %1820 = vmatprep.subr.bf16.mxu0 0
        %1821 = vmatpush1.bf16.msra.mxu0 0
        %1822 = vmatprep.subr.bf16.mxu0 0
        %1823 = vmatpush1.bf16.msra.mxu0 0
        %1824 = vmatprep.subr.bf16.mxu0 0
        %1825 = vmatpush1.bf16.msra.mxu0 0
        %1826 = vmatprep.subr.bf16.mxu0 0
        %1827 = vmatpush1.bf16.msra.mxu0 0
        %1828 = vmatprep.subr.bf16.mxu0 0
        %1829 = vmatpush1.bf16.msra.mxu0 0
        %1830 = vmatprep.subr.bf16.mxu0 0
        %1831 = vmatpush1.bf16.msra.mxu0 0
        %1832 = vmatprep.subr.bf16.mxu0 0
        %1833 = vmatpush1.bf16.msra.mxu0 0
        %1834 = vmatprep.mubr.bf16.mxu0 0
        %1835 = vmatmul.mubr.bf16.gmra.mrb[0].mxu0 %v543
        %v1836 = vpop.f32.mrb[0].mxu0
        %v1837 = vadd.f32 0.0, %v1836
        %v1838 = vpop.f32.mrb[0].mxu0
        %v1839 = vpop.f32.mrb[0].mxu0
        %v1840 = vadd.f32 0.0, %v1839
        %v1841 = vpop.f32.mrb[0].mxu0
        %1842 = vmatprep.mubr.bf16.mxu0 0
        %1843 = vmatmul.mubr.bf16.gmra.mrb[0].mxu0 %v546
        %v1844 = vpop.f32.mrb[0].mxu0
        %v1845 = vadd.f32 0.0, %v1844
        %v1846 = vpop.f32.mrb[0].mxu0
        %v1847 = vpop.f32.mrb[0].mxu0
        %v1848 = vadd.f32 0.0, %v1847
        %v1849 = vpop.f32.mrb[0].mxu0
        %1850 = vmatprep.mubr.bf16.mxu0 0
        %1851 = vmatmul.mubr.bf16.gmra.mrb[0].mxu0 %v549
        %v1852 = vpop.f32.mrb[0].mxu0
        %v1853 = vadd.f32 0.0, %v1852
        %v1854 = vpop.f32.mrb[0].mxu0
        %v1855 = vpop.f32.mrb[0].mxu0
        %v1856 = vadd.f32 0.0, %v1855
        %v1857 = vpop.f32.mrb[0].mxu0
        %1858 = vmatprep.mubr.bf16.mxu0 0
        %1859 = vmatmul.mubr.bf16.gmra.mrb[0].mxu0 %v552
        %v1860 = vpop.f32.mrb[0].mxu0
        %v1861 = vadd.f32 0.0, %v1860
        %v1862 = vpop.f32.mrb[0].mxu0
        %v1863 = vpop.f32.mrb[0].mxu0
        %v1864 = vadd.f32 0.0, %v1863
        %v1865 = vpop.f32.mrb[0].mxu0
        %1866 = vdwg.mxu0
        %v1867 = vadd.f32 %v407, %v1837
        %v1868 = vadd.f32 %v408, %v1840
        %v1869 = vadd.f32 %v409, %v1845
        %v1870 = vadd.f32 %v410, %v1848
        %v1871 = vadd.f32 %v411, %v1853
        %v1872 = vadd.f32 %v412, %v1856
        %v1873 = vadd.f32 %v413, %v1861
        %v1874 = vadd.f32 %v414, %v1864
        %1875 = vmatprep.subr.bf16.mxu0 0
        %1876 = vmatpush1.bf16.msra.mxu0 %v640
        %1877 = vmatprep.subr.bf16.mxu0 0
        %1878 = vmatpush1.bf16.msra.mxu0 %v641
        %1879 = vmatprep.subr.bf16.mxu0 0
        %1880 = vmatpush1.bf16.msra.mxu0 0
        %1881 = vmatprep.subr.bf16.mxu0 0
        %1882 = vmatpush1.bf16.msra.mxu0 0
        %1883 = vmatprep.subr.bf16.mxu0 0
        %1884 = vmatpush1.bf16.msra.mxu0 0
        %1885 = vmatprep.subr.bf16.mxu0 0
        %1886 = vmatpush1.bf16.msra.mxu0 0
        %1887 = vmatprep.subr.bf16.mxu0 0
        %1888 = vmatpush1.bf16.msra.mxu0 0
        %1889 = vmatprep.subr.bf16.mxu0 0
        %1890 = vmatpush1.bf16.msra.mxu0 0
        %1891 = vmatprep.subr.bf16.mxu0 0
        %1892 = vmatpush1.bf16.msra.mxu0 0
        %1893 = vmatprep.subr.bf16.mxu0 0
        %1894 = vmatpush1.bf16.msra.mxu0 0
        %1895 = vmatprep.subr.bf16.mxu0 0
        %1896 = vmatpush1.bf16.msra.mxu0 0
        %1897 = vmatprep.subr.bf16.mxu0 0
        %1898 = vmatpush1.bf16.msra.mxu0 0
        %1899 = vmatprep.subr.bf16.mxu0 0
        %1900 = vmatpush1.bf16.msra.mxu0 0
        %1901 = vmatprep.subr.bf16.mxu0 0
        %1902 = vmatpush1.bf16.msra.mxu0 0
        %1903 = vmatprep.subr.bf16.mxu0 0
        %1904 = vmatpush1.bf16.msra.mxu0 0
        %1905 = vmatprep.subr.bf16.mxu0 0
        %1906 = vmatpush1.bf16.msra.mxu0 0
        %1907 = vmatprep.mubr.bf16.mxu0 0
        %1908 = vmatmul.mubr.bf16.gmra.mrb[0].mxu0 %v1722
        %v1909 = vpop.f32.mrb[0].mxu0
        %v1910 = vadd.f32 0.0, %v1909
        %v1911 = vpop.f32.mrb[0].mxu0
        %v1912 = vpop.f32.mrb[0].mxu0
        %v1913 = vadd.f32 0.0, %v1912
        %v1914 = vpop.f32.mrb[0].mxu0
        %1915 = vmatprep.mubr.bf16.mxu0 0
        %1916 = vmatmul.mubr.bf16.gmra.mrb[0].mxu0 %v1725
        %v1917 = vpop.f32.mrb[0].mxu0
        %v1918 = vadd.f32 0.0, %v1917
        %v1919 = vpop.f32.mrb[0].mxu0
        %v1920 = vpop.f32.mrb[0].mxu0
        %v1921 = vadd.f32 0.0, %v1920
        %v1922 = vpop.f32.mrb[0].mxu0
        %1923 = vmatprep.mubr.bf16.mxu0 0
        %1924 = vmatmul.mubr.bf16.gmra.mrb[0].mxu0 %v1728
        %v1925 = vpop.f32.mrb[0].mxu0
        %v1926 = vadd.f32 0.0, %v1925
        %v1927 = vpop.f32.mrb[0].mxu0
        %v1928 = vpop.f32.mrb[0].mxu0
        %v1929 = vadd.f32 0.0, %v1928
        %v1930 = vpop.f32.mrb[0].mxu0
        %1931 = vmatprep.mubr.bf16.mxu0 0
        %1932 = vmatmul.mubr.bf16.gmra.mrb[0].mxu0 %v1731
        %v1933 = vpop.f32.mrb[0].mxu0
        %v1934 = vadd.f32 0.0, %v1933
        %v1935 = vpop.f32.mrb[0].mxu0
        %v1936 = vpop.f32.mrb[0].mxu0
        %v1937 = vadd.f32 0.0, %v1936
        %v1938 = vpop.f32.mrb[0].mxu0
        %1939 = vdwg.mxu0
        %v1940 = vpack.c.bf16 %v1913, %v1910
        %v1941 = vpack.c.bf16 %v1921, %v1918
        %v1942 = vpack.c.bf16 %v1929, %v1926
        %v1943 = vpack.c.bf16 %v1937, %v1934
        %1944 = vmatprep.subr.bf16.mxu0 0
        %1945 = vmatpush1.bf16.msra.mxu0 %v1940
        %1946 = vmatprep.subr.bf16.mxu0 0
        %1947 = vmatpush1.bf16.msra.mxu0 %v1941
        %1948 = vmatprep.subr.bf16.mxu0 0
        %1949 = vmatpush1.bf16.msra.mxu0 %v1942
        %1950 = vmatprep.subr.bf16.mxu0 0
        %1951 = vmatpush1.bf16.msra.mxu0 %v1943
        %1952 = vmatprep.subr.bf16.mxu0 0
        %1953 = vmatpush1.bf16.msra.mxu0 0
        %1954 = vmatprep.subr.bf16.mxu0 0
        %1955 = vmatpush1.bf16.msra.mxu0 0
        %1956 = vmatprep.subr.bf16.mxu0 0
        %1957 = vmatpush1.bf16.msra.mxu0 0
        %1958 = vmatprep.subr.bf16.mxu0 0
        %1959 = vmatpush1.bf16.msra.mxu0 0
        %1960 = vmatprep.subr.bf16.mxu0 0
        %1961 = vmatpush1.bf16.msra.mxu0 0
        %1962 = vmatprep.subr.bf16.mxu0 0
        %1963 = vmatpush1.bf16.msra.mxu0 0
        %1964 = vmatprep.subr.bf16.mxu0 0
        %1965 = vmatpush1.bf16.msra.mxu0 0
        %1966 = vmatprep.subr.bf16.mxu0 0
        %1967 = vmatpush1.bf16.msra.mxu0 0
        %1968 = vmatprep.subr.bf16.mxu0 0
        %1969 = vmatpush1.bf16.msra.mxu0 0
        %1970 = vmatprep.subr.bf16.mxu0 0
        %1971 = vmatpush1.bf16.msra.mxu0 0
        %1972 = vmatprep.subr.bf16.mxu0 0
        %1973 = vmatpush1.bf16.msra.mxu0 0
        %1974 = vmatprep.subr.bf16.mxu0 0
        %1975 = vmatpush1.bf16.msra.mxu0 0
        %1976 = vmatprep.mubr.bf16.mxu0 0
        %1977 = vmatmul.mubr.bf16.gmra.mrb[0].mxu0 %v743
        %v1978 = vpop.f32.mrb[0].mxu0
        %v1979 = vadd.f32 0.0, %v1978
        %v1980 = vpop.f32.mrb[0].mxu0
        %v1981 = vpop.f32.mrb[0].mxu0
        %v1982 = vadd.f32 0.0, %v1981
        %v1983 = vpop.f32.mrb[0].mxu0
        %1984 = vmatprep.mubr.bf16.mxu0 0
        %1985 = vmatmul.mubr.bf16.gmra.mrb[0].mxu0 %v746
        %v1986 = vpop.f32.mrb[0].mxu0
        %v1987 = vadd.f32 0.0, %v1986
        %v1988 = vpop.f32.mrb[0].mxu0
        %v1989 = vpop.f32.mrb[0].mxu0
        %v1990 = vadd.f32 0.0, %v1989
        %v1991 = vpop.f32.mrb[0].mxu0
        %1992 = vmatprep.mubr.bf16.mxu0 0
        %1993 = vmatmul.mubr.bf16.gmra.mrb[0].mxu0 %v749
        %v1994 = vpop.f32.mrb[0].mxu0
        %v1995 = vadd.f32 0.0, %v1994
        %v1996 = vpop.f32.mrb[0].mxu0
        %v1997 = vpop.f32.mrb[0].mxu0
        %v1998 = vadd.f32 0.0, %v1997
        %v1999 = vpop.f32.mrb[0].mxu0
        %2000 = vmatprep.mubr.bf16.mxu0 0
        %2001 = vmatmul.mubr.bf16.gmra.mrb[0].mxu0 %v752
        %v2002 = vpop.f32.mrb[0].mxu0
        %v2003 = vadd.f32 0.0, %v2002
        %v2004 = vpop.f32.mrb[0].mxu0
        %v2005 = vpop.f32.mrb[0].mxu0
        %v2006 = vadd.f32 0.0, %v2005
        %v2007 = vpop.f32.mrb[0].mxu0
        %2008 = vdwg.mxu0
        %v2009 = vadd.f32 %v1867, %v1979
        %v2010 = vadd.f32 %v1868, %v1982
        %v2011 = vadd.f32 %v1869, %v1987
        %v2012 = vadd.f32 %v1870, %v1990
        %v2013 = vadd.f32 %v1871, %v1995
        %v2014 = vadd.f32 %v1872, %v1998
        %v2015 = vadd.f32 %v1873, %v2003
        %v2016 = vadd.f32 %v1874, %v2006
        %2017 = vmatprep.subr.bf16.mxu0 0
        %2018 = vmatpush1.bf16.msra.mxu0 %v840
        %2019 = vmatprep.subr.bf16.mxu0 0
        %2020 = vmatpush1.bf16.msra.mxu0 %v841
        %2021 = vmatprep.subr.bf16.mxu0 0
        %2022 = vmatpush1.bf16.msra.mxu0 0
        %2023 = vmatprep.subr.bf16.mxu0 0
        %2024 = vmatpush1.bf16.msra.mxu0 0
        %2025 = vmatprep.subr.bf16.mxu0 0
        %2026 = vmatpush1.bf16.msra.mxu0 0
        %2027 = vmatprep.subr.bf16.mxu0 0
        %2028 = vmatpush1.bf16.msra.mxu0 0
        %2029 = vmatprep.subr.bf16.mxu0 0
        %2030 = vmatpush1.bf16.msra.mxu0 0
        %2031 = vmatprep.subr.bf16.mxu0 0
        %2032 = vmatpush1.bf16.msra.mxu0 0
        %2033 = vmatprep.subr.bf16.mxu0 0
        %2034 = vmatpush1.bf16.msra.mxu0 0
        %2035 = vmatprep.subr.bf16.mxu0 0
        %2036 = vmatpush1.bf16.msra.mxu0 0
        %2037 = vmatprep.subr.bf16.mxu0 0
        %2038 = vmatpush1.bf16.msra.mxu0 0
        %2039 = vmatprep.subr.bf16.mxu0 0
        %2040 = vmatpush1.bf16.msra.mxu0 0
        %2041 = vmatprep.subr.bf16.mxu0 0
        %2042 = vmatpush1.bf16.msra.mxu0 0
        %2043 = vmatprep.subr.bf16.mxu0 0
        %2044 = vmatpush1.bf16.msra.mxu0 0
        %2045 = vmatprep.subr.bf16.mxu0 0
        %2046 = vmatpush1.bf16.msra.mxu0 0
        %2047 = vmatprep.subr.bf16.mxu0 0
        %2048 = vmatpush1.bf16.msra.mxu0 0
        %2049 = vmatprep.mubr.bf16.mxu0 0
        %2050 = vmatmul.mubr.bf16.gmra.mrb[0].mxu0 %v1722
        %v2051 = vpop.f32.mrb[0].mxu0
        %v2052 = vadd.f32 0.0, %v2051
        %v2053 = vpop.f32.mrb[0].mxu0
        %v2054 = vpop.f32.mrb[0].mxu0
        %v2055 = vadd.f32 0.0, %v2054
        %v2056 = vpop.f32.mrb[0].mxu0
        %2057 = vmatprep.mubr.bf16.mxu0 0
        %2058 = vmatmul.mubr.bf16.gmra.mrb[0].mxu0 %v1725
        %v2059 = vpop.f32.mrb[0].mxu0
        %v2060 = vadd.f32 0.0, %v2059
        %v2061 = vpop.f32.mrb[0].mxu0
        %v2062 = vpop.f32.mrb[0].mxu0
        %v2063 = vadd.f32 0.0, %v2062
        %v2064 = vpop.f32.mrb[0].mxu0
        %2065 = vmatprep.mubr.bf16.mxu0 0
        %2066 = vmatmul.mubr.bf16.gmra.mrb[0].mxu0 %v1728
        %v2067 = vpop.f32.mrb[0].mxu0
        %v2068 = vadd.f32 0.0, %v2067
        %v2069 = vpop.f32.mrb[0].mxu0
        %v2070 = vpop.f32.mrb[0].mxu0
        %v2071 = vadd.f32 0.0, %v2070
        %v2072 = vpop.f32.mrb[0].mxu0
        %2073 = vmatprep.mubr.bf16.mxu0 0
        %2074 = vmatmul.mubr.bf16.gmra.mrb[0].mxu0 %v1731
        %v2075 = vpop.f32.mrb[0].mxu0
        %v2076 = vadd.f32 0.0, %v2075
        %v2077 = vpop.f32.mrb[0].mxu0
        %v2078 = vpop.f32.mrb[0].mxu0
        %v2079 = vadd.f32 0.0, %v2078
        %v2080 = vpop.f32.mrb[0].mxu0
        %2081 = vdwg.mxu0
        %v2082 = vpack.c.bf16 %v2055, %v2052
        %v2083 = vpack.c.bf16 %v2063, %v2060
        %v2084 = vpack.c.bf16 %v2071, %v2068
        %v2085 = vpack.c.bf16 %v2079, %v2076
        %2086 = vmatprep.subr.bf16.mxu0 0
        %2087 = vmatpush1.bf16.msra.mxu0 %v2082
        %2088 = vmatprep.subr.bf16.mxu0 0
        %2089 = vmatpush1.bf16.msra.mxu0 %v2083
        %2090 = vmatprep.subr.bf16.mxu0 0
        %2091 = vmatpush1.bf16.msra.mxu0 %v2084
        %2092 = vmatprep.subr.bf16.mxu0 0
        %2093 = vmatpush1.bf16.msra.mxu0 %v2085
        %2094 = vmatprep.subr.bf16.mxu0 0
        %2095 = vmatpush1.bf16.msra.mxu0 0
        %2096 = vmatprep.subr.bf16.mxu0 0
        %2097 = vmatpush1.bf16.msra.mxu0 0
        %2098 = vmatprep.subr.bf16.mxu0 0
        %2099 = vmatpush1.bf16.msra.mxu0 0
        %2100 = vmatprep.subr.bf16.mxu0 0
        %2101 = vmatpush1.bf16.msra.mxu0 0
        %2102 = vmatprep.subr.bf16.mxu0 0
        %2103 = vmatpush1.bf16.msra.mxu0 0
        %2104 = vmatprep.subr.bf16.mxu0 0
        %2105 = vmatpush1.bf16.msra.mxu0 0
        %2106 = vmatprep.subr.bf16.mxu0 0
        %2107 = vmatpush1.bf16.msra.mxu0 0
        %2108 = vmatprep.subr.bf16.mxu0 0
        %2109 = vmatpush1.bf16.msra.mxu0 0
        %2110 = vmatprep.subr.bf16.mxu0 0
        %2111 = vmatpush1.bf16.msra.mxu0 0
        %2112 = vmatprep.subr.bf16.mxu0 0
        %2113 = vmatpush1.bf16.msra.mxu0 0
        %2114 = vmatprep.subr.bf16.mxu0 0
        %2115 = vmatpush1.bf16.msra.mxu0 0
        %2116 = vmatprep.subr.bf16.mxu0 0
        %2117 = vmatpush1.bf16.msra.mxu0 0
        %2118 = vmatprep.mubr.bf16.mxu0 0
        %2119 = vmatmul.mubr.bf16.gmra.mrb[0].mxu0 %v943
        %v2120 = vpop.f32.mrb[0].mxu0
        %v2121 = vadd.f32 0.0, %v2120
        %v2122 = vpop.f32.mrb[0].mxu0
        %v2123 = vpop.f32.mrb[0].mxu0
        %v2124 = vadd.f32 0.0, %v2123
        %v2125 = vpop.f32.mrb[0].mxu0
        %2126 = vmatprep.mubr.bf16.mxu0 0
        %2127 = vmatmul.mubr.bf16.gmra.mrb[0].mxu0 %v946
        %v2128 = vpop.f32.mrb[0].mxu0
        %v2129 = vadd.f32 0.0, %v2128
        %v2130 = vpop.f32.mrb[0].mxu0
        %v2131 = vpop.f32.mrb[0].mxu0
        %v2132 = vadd.f32 0.0, %v2131
        %v2133 = vpop.f32.mrb[0].mxu0
        %2134 = vmatprep.mubr.bf16.mxu0 0
        %2135 = vmatmul.mubr.bf16.gmra.mrb[0].mxu0 %v949
        %v2136 = vpop.f32.mrb[0].mxu0
        %v2137 = vadd.f32 0.0, %v2136
        %v2138 = vpop.f32.mrb[0].mxu0
        %v2139 = vpop.f32.mrb[0].mxu0
        %v2140 = vadd.f32 0.0, %v2139
        %v2141 = vpop.f32.mrb[0].mxu0
        %2142 = vmatprep.mubr.bf16.mxu0 0
        %2143 = vmatmul.mubr.bf16.gmra.mrb[0].mxu0 %v952
        %v2144 = vpop.f32.mrb[0].mxu0
        %v2145 = vadd.f32 0.0, %v2144
        %v2146 = vpop.f32.mrb[0].mxu0
        %v2147 = vpop.f32.mrb[0].mxu0
        %v2148 = vadd.f32 0.0, %v2147
        %v2149 = vpop.f32.mrb[0].mxu0
        %2150 = vdwg.mxu0
        %v2151 = vadd.f32 %v2009, %v2121
        %v2152 = vadd.f32 %v2010, %v2124
        %v2153 = vadd.f32 %v2011, %v2129
        %v2154 = vadd.f32 %v2012, %v2132
        %v2155 = vadd.f32 %v2013, %v2137
        %v2156 = vadd.f32 %v2014, %v2140
        %v2157 = vadd.f32 %v2015, %v2145
        %v2158 = vadd.f32 %v2016, %v2148
        %v2159 = vpack.c.bf16 %v2152, %v2151
        %v2160 = vpack.c.bf16 %v2154, %v2153
        %v2161 = vpack.c.bf16 %v2156, %v2155
        %v2162 = vpack.c.bf16 %v2158, %v2157
        %2163 = vmatprep.subr.bf16.mxu0 0
        %2164 = vmatpush1.bf16.msra.mxu0 %v1047
        %2165 = vmatprep.subr.bf16.mxu0 0
        %2166 = vmatpush1.bf16.msra.mxu0 %v1048
        %2167 = vmatprep.subr.bf16.mxu0 0
        %2168 = vmatpush1.bf16.msra.mxu0 0
        %2169 = vmatprep.subr.bf16.mxu0 0
        %2170 = vmatpush1.bf16.msra.mxu0 0
        %2171 = vmatprep.subr.bf16.mxu0 0
        %2172 = vmatpush1.bf16.msra.mxu0 0
        %2173 = vmatprep.subr.bf16.mxu0 0
        %2174 = vmatpush1.bf16.msra.mxu0 0
        %2175 = vmatprep.subr.bf16.mxu0 0
        %2176 = vmatpush1.bf16.msra.mxu0 0
        %2177 = vmatprep.subr.bf16.mxu0 0
        %2178 = vmatpush1.bf16.msra.mxu0 0
        %2179 = vmatprep.subr.bf16.mxu0 0
        %2180 = vmatpush1.bf16.msra.mxu0 0
        %2181 = vmatprep.subr.bf16.mxu0 0
        %2182 = vmatpush1.bf16.msra.mxu0 0
        %2183 = vmatprep.subr.bf16.mxu0 0
        %2184 = vmatpush1.bf16.msra.mxu0 0
        %2185 = vmatprep.subr.bf16.mxu0 0
        %2186 = vmatpush1.bf16.msra.mxu0 0
        %2187 = vmatprep.subr.bf16.mxu0 0
        %2188 = vmatpush1.bf16.msra.mxu0 0
        %2189 = vmatprep.subr.bf16.mxu0 0
        %2190 = vmatpush1.bf16.msra.mxu0 0
        %2191 = vmatprep.subr.bf16.mxu0 0
        %2192 = vmatpush1.bf16.msra.mxu0 0
        %2193 = vmatprep.subr.bf16.mxu0 0
        %2194 = vmatpush1.bf16.msra.mxu0 0
        %2195 = vmatprep.mubr.bf16.mxu0 0
        %2196 = vmatmul.mubr.bf16.gmra.mrb[0].mxu0 %v1722
        %v2197 = vpop.f32.mrb[0].mxu0
        %v2198 = vadd.f32 0.0, %v2197
        %v2199 = vpop.f32.mrb[0].mxu0
        %v2200 = vpop.f32.mrb[0].mxu0
        %v2201 = vadd.f32 0.0, %v2200
        %v2202 = vpop.f32.mrb[0].mxu0
        %2203 = vmatprep.mubr.bf16.mxu0 0
        %2204 = vmatmul.mubr.bf16.gmra.mrb[0].mxu0 %v1725
        %v2205 = vpop.f32.mrb[0].mxu0
        %v2206 = vadd.f32 0.0, %v2205
        %v2207 = vpop.f32.mrb[0].mxu0
        %v2208 = vpop.f32.mrb[0].mxu0
        %v2209 = vadd.f32 0.0, %v2208
        %v2210 = vpop.f32.mrb[0].mxu0
        %2211 = vmatprep.mubr.bf16.mxu0 0
        %2212 = vmatmul.mubr.bf16.gmra.mrb[0].mxu0 %v1728
        %v2213 = vpop.f32.mrb[0].mxu0
        %v2214 = vadd.f32 0.0, %v2213
        %v2215 = vpop.f32.mrb[0].mxu0
        %v2216 = vpop.f32.mrb[0].mxu0
        %v2217 = vadd.f32 0.0, %v2216
        %v2218 = vpop.f32.mrb[0].mxu0
        %2219 = vmatprep.mubr.bf16.mxu0 0
        %2220 = vmatmul.mubr.bf16.gmra.mrb[0].mxu0 %v1731
        %v2221 = vpop.f32.mrb[0].mxu0
        %v2222 = vadd.f32 0.0, %v2221
        %v2223 = vpop.f32.mrb[0].mxu0
        %v2224 = vpop.f32.mrb[0].mxu0
        %v2225 = vadd.f32 0.0, %v2224
        %v2226 = vpop.f32.mrb[0].mxu0
        %2227 = vdwg.mxu0
        %v2229 = vsel %vm431, %v2159, 0
        %v2232 = vsel %vm431, %v2160, 0
        %v2235 = vsel %vm431, %v2161, 0
        %v2238 = vsel %vm431, %v2162, 0
        %2240 = vmatprep.subr.bf16.mxu0 0
        %2241 = vmatpush1.bf16.msra.mxu0 %v1124
        %2242 = vmatprep.subr.bf16.mxu0 0
        %2243 = vmatpush1.bf16.msra.mxu0 %v1125
        %2244 = vmatprep.subr.bf16.mxu0 0
        %2245 = vmatpush1.bf16.msra.mxu0 0
        %2246 = vmatprep.subr.bf16.mxu0 0
        %2247 = vmatpush1.bf16.msra.mxu0 0
        %2248 = vmatprep.subr.bf16.mxu0 0
        %2249 = vmatpush1.bf16.msra.mxu0 0
        %2250 = vmatprep.subr.bf16.mxu0 0
        %2251 = vmatpush1.bf16.msra.mxu0 0
        %2252 = vmatprep.subr.bf16.mxu0 0
        %2253 = vmatpush1.bf16.msra.mxu0 0
        %2254 = vmatprep.subr.bf16.mxu0 0
        %2255 = vmatpush1.bf16.msra.mxu0 0
        %2256 = vmatprep.subr.bf16.mxu0 0
        %2257 = vmatpush1.bf16.msra.mxu0 0
        %2258 = vmatprep.subr.bf16.mxu0 0
        %2259 = vmatpush1.bf16.msra.mxu0 0
        %2260 = vmatprep.subr.bf16.mxu0 0
        %2261 = vmatpush1.bf16.msra.mxu0 0
        %2262 = vmatprep.subr.bf16.mxu0 0
        %2263 = vmatpush1.bf16.msra.mxu0 0
        %2264 = vmatprep.subr.bf16.mxu0 0
        %2265 = vmatpush1.bf16.msra.mxu0 0
        %2266 = vmatprep.subr.bf16.mxu0 0
        %2267 = vmatpush1.bf16.msra.mxu0 0
        %2268 = vmatprep.subr.bf16.mxu0 0
        %2269 = vmatpush1.bf16.msra.mxu0 0
        %2270 = vmatprep.subr.bf16.mxu0 0
        %2271 = vmatpush1.bf16.msra.mxu0 0
        %2272 = vmatprep.mubr.bf16.mxu0 0
        %2273 = vmatmul.mubr.bf16.gmra.mrb[0].mxu0 %v2229
        %v2274 = vpop.f32.mrb[0].mxu0
        %v2275 = vadd.f32 %v2198, %v2274
        %v2276 = vpop.f32.mrb[0].mxu0
        %v2277 = vpop.f32.mrb[0].mxu0
        %v2278 = vadd.f32 %v2201, %v2277
        %v2279 = vpop.f32.mrb[0].mxu0
        %2280 = vmatprep.mubr.bf16.mxu0 0
        %2281 = vmatmul.mubr.bf16.gmra.mrb[0].mxu0 %v2232
        %v2282 = vpop.f32.mrb[0].mxu0
        %v2283 = vadd.f32 %v2206, %v2282
        %v2284 = vpop.f32.mrb[0].mxu0
        %v2285 = vpop.f32.mrb[0].mxu0
        %v2286 = vadd.f32 %v2209, %v2285
        %v2287 = vpop.f32.mrb[0].mxu0
        %2288 = vmatprep.mubr.bf16.mxu0 0
        %2289 = vmatmul.mubr.bf16.gmra.mrb[0].mxu0 %v2235
        %v2290 = vpop.f32.mrb[0].mxu0
        %v2291 = vadd.f32 %v2214, %v2290
        %v2292 = vpop.f32.mrb[0].mxu0
        %v2293 = vpop.f32.mrb[0].mxu0
        %v2294 = vadd.f32 %v2217, %v2293
        %v2295 = vpop.f32.mrb[0].mxu0
        %2296 = vmatprep.mubr.bf16.mxu0 0
        %2297 = vmatmul.mubr.bf16.gmra.mrb[0].mxu0 %v2238
        %v2298 = vpop.f32.mrb[0].mxu0
        %v2299 = vadd.f32 %v2222, %v2298
        %v2300 = vpop.f32.mrb[0].mxu0
        %v2301 = vpop.f32.mrb[0].mxu0
        %v2302 = vadd.f32 %v2225, %v2301
        %v2303 = vpop.f32.mrb[0].mxu0
        %2304 = vdwg.mxu0
        %v2305 = vadd.f32 %v2275, %v1208
        %v2306 = vadd.f32 %v2278, %v1208
        %v2307 = vadd.f32 %v2283, %v1208
        %v2308 = vadd.f32 %v2286, %v1208
        %v2309 = vadd.f32 %v2291, %v1208
        %v2310 = vadd.f32 %v2294, %v1208
        %v2311 = vadd.f32 %v2299, %v1208
        %v2312 = vadd.f32 %v2302, %v1208
        %v2313 = vxor.u32 %v2305, 2147483648
        %v2314 = vxor.u32 %v2306, 2147483648
        %v2315 = vxor.u32 %v2307, 2147483648
        %v2316 = vxor.u32 %v2308, 2147483648
        %v2317 = vxor.u32 %v2309, 2147483648
        %v2318 = vxor.u32 %v2310, 2147483648
        %v2319 = vxor.u32 %v2311, 2147483648
        %v2320 = vxor.u32 %v2312, 2147483648
        %v2321 = vmul.f32 %v2313, 1.442695
        %v2322 = vpow.pop %v2321
        %v2323 = vmul.f32 %v2314, 1.442695
        %v2324 = vpow.pop %v2323
        %v2325 = vmul.f32 %v2315, 1.442695
        %v2326 = vpow.pop %v2325
        %v2327 = vmul.f32 %v2316, 1.442695
        %v2328 = vpow.pop %v2327
        %v2329 = vmul.f32 %v2317, 1.442695
        %v2330 = vpow.pop %v2329
        %v2331 = vmul.f32 %v2318, 1.442695
        %v2332 = vpow.pop %v2331
        %v2333 = vmul.f32 %v2319, 1.442695
        %v2334 = vpow.pop %v2333
        %v2335 = vmul.f32 %v2320, 1.442695
        %v2336 = vpow.pop %v2335
        %v2337 = vadd.f32 %v2322, 1.0
        %v2338 = vadd.f32 %v2324, 1.0
        %v2339 = vadd.f32 %v2326, 1.0
        %v2340 = vadd.f32 %v2328, 1.0
        %v2341 = vadd.f32 %v2330, 1.0
        %v2342 = vadd.f32 %v2332, 1.0
        %v2343 = vadd.f32 %v2334, 1.0
        %v2344 = vadd.f32 %v2336, 1.0
        %v2345 = vrcp.pop %v2337
        %v2346 = vmul.f32 1.0, %v2345
        %v2347 = vrcp.pop %v2338
        %v2348 = vmul.f32 1.0, %v2347
        %v2349 = vrcp.pop %v2339
        %v2350 = vmul.f32 1.0, %v2349
        %v2351 = vrcp.pop %v2340
        %v2352 = vmul.f32 1.0, %v2351
        %v2353 = vrcp.pop %v2341
        %v2354 = vmul.f32 1.0, %v2353
        %v2355 = vrcp.pop %v2342
        %v2356 = vmul.f32 1.0, %v2355
        %v2357 = vrcp.pop %v2343
        %v2358 = vmul.f32 1.0, %v2357
        %v2359 = vrcp.pop %v2344
        %v2360 = vmul.f32 1.0, %v2359
        %2361 = vmatprep.subr.bf16.mxu0 0
        %2362 = vmatpush1.bf16.msra.mxu0 %v1283
        %2363 = vmatprep.subr.bf16.mxu0 0
        %2364 = vmatpush1.bf16.msra.mxu0 %v1284
        %2365 = vmatprep.subr.bf16.mxu0 0
        %2366 = vmatpush1.bf16.msra.mxu0 0
        %2367 = vmatprep.subr.bf16.mxu0 0
        %2368 = vmatpush1.bf16.msra.mxu0 0
        %2369 = vmatprep.subr.bf16.mxu0 0
        %2370 = vmatpush1.bf16.msra.mxu0 0
        %2371 = vmatprep.subr.bf16.mxu0 0
        %2372 = vmatpush1.bf16.msra.mxu0 0
        %2373 = vmatprep.subr.bf16.mxu0 0
        %2374 = vmatpush1.bf16.msra.mxu0 0
        %2375 = vmatprep.subr.bf16.mxu0 0
        %2376 = vmatpush1.bf16.msra.mxu0 0
        %2377 = vmatprep.subr.bf16.mxu0 0
        %2378 = vmatpush1.bf16.msra.mxu0 0
        %2379 = vmatprep.subr.bf16.mxu0 0
        %2380 = vmatpush1.bf16.msra.mxu0 0
        %2381 = vmatprep.subr.bf16.mxu0 0
        %2382 = vmatpush1.bf16.msra.mxu0 0
        %2383 = vmatprep.subr.bf16.mxu0 0
        %2384 = vmatpush1.bf16.msra.mxu0 0
        %2385 = vmatprep.subr.bf16.mxu0 0
        %2386 = vmatpush1.bf16.msra.mxu0 0
        %2387 = vmatprep.subr.bf16.mxu0 0
        %2388 = vmatpush1.bf16.msra.mxu0 0
        %2389 = vmatprep.subr.bf16.mxu0 0
        %2390 = vmatpush1.bf16.msra.mxu0 0
        %2391 = vmatprep.subr.bf16.mxu0 0
        %2392 = vmatpush1.bf16.msra.mxu0 0
        %2393 = vmatprep.mubr.bf16.mxu0 0
        %2394 = vmatmul.mubr.bf16.gmra.mrb[0].mxu0 %v1722
        %v2395 = vpop.f32.mrb[0].mxu0
        %v2396 = vadd.f32 0.0, %v2395
        %v2397 = vpop.f32.mrb[0].mxu0
        %v2398 = vpop.f32.mrb[0].mxu0
        %v2399 = vadd.f32 0.0, %v2398
        %v2400 = vpop.f32.mrb[0].mxu0
        %2401 = vmatprep.mubr.bf16.mxu0 0
        %2402 = vmatmul.mubr.bf16.gmra.mrb[0].mxu0 %v1725
        %v2403 = vpop.f32.mrb[0].mxu0
        %v2404 = vadd.f32 0.0, %v2403
        %v2405 = vpop.f32.mrb[0].mxu0
        %v2406 = vpop.f32.mrb[0].mxu0
        %v2407 = vadd.f32 0.0, %v2406
        %v2408 = vpop.f32.mrb[0].mxu0
        %2409 = vmatprep.mubr.bf16.mxu0 0
        %2410 = vmatmul.mubr.bf16.gmra.mrb[0].mxu0 %v1728
        %v2411 = vpop.f32.mrb[0].mxu0
        %v2412 = vadd.f32 0.0, %v2411
        %v2413 = vpop.f32.mrb[0].mxu0
        %v2414 = vpop.f32.mrb[0].mxu0
        %v2415 = vadd.f32 0.0, %v2414
        %v2416 = vpop.f32.mrb[0].mxu0
        %2417 = vmatprep.mubr.bf16.mxu0 0
        %2418 = vmatmul.mubr.bf16.gmra.mrb[0].mxu0 %v1731
        %v2419 = vpop.f32.mrb[0].mxu0
        %v2420 = vadd.f32 0.0, %v2419
        %v2421 = vpop.f32.mrb[0].mxu0
        %v2422 = vpop.f32.mrb[0].mxu0
        %v2423 = vadd.f32 0.0, %v2422
        %v2424 = vpop.f32.mrb[0].mxu0
        %2425 = vdwg.mxu0
        %2426 = vmatprep.subr.bf16.mxu0 0
        %2427 = vmatpush1.bf16.msra.mxu0 %v1360
        %2428 = vmatprep.subr.bf16.mxu0 0
        %2429 = vmatpush1.bf16.msra.mxu0 %v1361
        %2430 = vmatprep.subr.bf16.mxu0 0
        %2431 = vmatpush1.bf16.msra.mxu0 0
        %2432 = vmatprep.subr.bf16.mxu0 0
        %2433 = vmatpush1.bf16.msra.mxu0 0
        %2434 = vmatprep.subr.bf16.mxu0 0
        %2435 = vmatpush1.bf16.msra.mxu0 0
        %2436 = vmatprep.subr.bf16.mxu0 0
        %2437 = vmatpush1.bf16.msra.mxu0 0
        %2438 = vmatprep.subr.bf16.mxu0 0
        %2439 = vmatpush1.bf16.msra.mxu0 0
        %2440 = vmatprep.subr.bf16.mxu0 0
        %2441 = vmatpush1.bf16.msra.mxu0 0
        %2442 = vmatprep.subr.bf16.mxu0 0
        %2443 = vmatpush1.bf16.msra.mxu0 0
        %2444 = vmatprep.subr.bf16.mxu0 0
        %2445 = vmatpush1.bf16.msra.mxu0 0
        %2446 = vmatprep.subr.bf16.mxu0 0
        %2447 = vmatpush1.bf16.msra.mxu0 0
        %2448 = vmatprep.subr.bf16.mxu0 0
        %2449 = vmatpush1.bf16.msra.mxu0 0
        %2450 = vmatprep.subr.bf16.mxu0 0
        %2451 = vmatpush1.bf16.msra.mxu0 0
        %2452 = vmatprep.subr.bf16.mxu0 0
        %2453 = vmatpush1.bf16.msra.mxu0 0
        %2454 = vmatprep.subr.bf16.mxu0 0
        %2455 = vmatpush1.bf16.msra.mxu0 0
        %2456 = vmatprep.subr.bf16.mxu0 0
        %2457 = vmatpush1.bf16.msra.mxu0 0
        %2458 = vmatprep.mubr.bf16.mxu0 0
        %2459 = vmatmul.mubr.bf16.gmra.mrb[0].mxu0 %v2229
        %v2460 = vpop.f32.mrb[0].mxu0
        %v2461 = vadd.f32 %v2396, %v2460
        %v2462 = vpop.f32.mrb[0].mxu0
        %v2463 = vpop.f32.mrb[0].mxu0
        %v2464 = vadd.f32 %v2399, %v2463
        %v2465 = vpop.f32.mrb[0].mxu0
        %2466 = vmatprep.mubr.bf16.mxu0 0
        %2467 = vmatmul.mubr.bf16.gmra.mrb[0].mxu0 %v2232
        %v2468 = vpop.f32.mrb[0].mxu0
        %v2469 = vadd.f32 %v2404, %v2468
        %v2470 = vpop.f32.mrb[0].mxu0
        %v2471 = vpop.f32.mrb[0].mxu0
        %v2472 = vadd.f32 %v2407, %v2471
        %v2473 = vpop.f32.mrb[0].mxu0
        %2474 = vmatprep.mubr.bf16.mxu0 0
        %2475 = vmatmul.mubr.bf16.gmra.mrb[0].mxu0 %v2235
        %v2476 = vpop.f32.mrb[0].mxu0
        %v2477 = vadd.f32 %v2412, %v2476
        %v2478 = vpop.f32.mrb[0].mxu0
        %v2479 = vpop.f32.mrb[0].mxu0
        %v2480 = vadd.f32 %v2415, %v2479
        %v2481 = vpop.f32.mrb[0].mxu0
        %2482 = vmatprep.mubr.bf16.mxu0 0
        %2483 = vmatmul.mubr.bf16.gmra.mrb[0].mxu0 %v2238
        %v2484 = vpop.f32.mrb[0].mxu0
        %v2485 = vadd.f32 %v2420, %v2484
        %v2486 = vpop.f32.mrb[0].mxu0
        %v2487 = vpop.f32.mrb[0].mxu0
        %v2488 = vadd.f32 %v2423, %v2487
        %v2489 = vpop.f32.mrb[0].mxu0
        %2490 = vdwg.mxu0
        %v2491 = vadd.f32 %v2461, %v1432
        %v2492 = vadd.f32 %v2464, %v1432
        %v2493 = vadd.f32 %v2469, %v1432
        %v2494 = vadd.f32 %v2472, %v1432
        %v2495 = vadd.f32 %v2477, %v1432
        %v2496 = vadd.f32 %v2480, %v1432
        %v2497 = vadd.f32 %v2485, %v1432
        %v2498 = vadd.f32 %v2488, %v1432
        %v2499 = vxor.u32 %v2491, 2147483648
        %v2500 = vxor.u32 %v2492, 2147483648
        %v2501 = vxor.u32 %v2493, 2147483648
        %v2502 = vxor.u32 %v2494, 2147483648
        %v2503 = vxor.u32 %v2495, 2147483648
        %v2504 = vxor.u32 %v2496, 2147483648
        %v2505 = vxor.u32 %v2497, 2147483648
        %v2506 = vxor.u32 %v2498, 2147483648
        %v2507 = vmul.f32 %v2499, 1.442695
        %v2508 = vpow.pop %v2507
        %v2509 = vmul.f32 %v2500, 1.442695
        %v2510 = vpow.pop %v2509
        %v2511 = vmul.f32 %v2501, 1.442695
        %v2512 = vpow.pop %v2511
        %v2513 = vmul.f32 %v2502, 1.442695
        %v2514 = vpow.pop %v2513
        %v2515 = vmul.f32 %v2503, 1.442695
        %v2516 = vpow.pop %v2515
        %v2517 = vmul.f32 %v2504, 1.442695
        %v2518 = vpow.pop %v2517
        %v2519 = vmul.f32 %v2505, 1.442695
        %v2520 = vpow.pop %v2519
        %v2521 = vmul.f32 %v2506, 1.442695
        %v2522 = vpow.pop %v2521
        %v2523 = vadd.f32 %v2508, 1.0
        %v2524 = vadd.f32 %v2510, 1.0
        %v2525 = vadd.f32 %v2512, 1.0
        %v2526 = vadd.f32 %v2514, 1.0
        %v2527 = vadd.f32 %v2516, 1.0
        %v2528 = vadd.f32 %v2518, 1.0
        %v2529 = vadd.f32 %v2520, 1.0
        %v2530 = vadd.f32 %v2522, 1.0
        %v2531 = vrcp.pop %v2523
        %v2532 = vmul.f32 1.0, %v2531
        %v2533 = vrcp.pop %v2524
        %v2534 = vmul.f32 1.0, %v2533
        %v2535 = vrcp.pop %v2525
        %v2536 = vmul.f32 1.0, %v2535
        %v2537 = vrcp.pop %v2526
        %v2538 = vmul.f32 1.0, %v2537
        %v2539 = vrcp.pop %v2527
        %v2540 = vmul.f32 1.0, %v2539
        %v2541 = vrcp.pop %v2528
        %v2542 = vmul.f32 1.0, %v2541
        %v2543 = vrcp.pop %v2529
        %v2544 = vmul.f32 1.0, %v2543
        %v2545 = vrcp.pop %v2530
        %v2546 = vmul.f32 1.0, %v2545
        %2547 = vmatprep.subr.bf16.mxu0 0
        %2548 = vmatpush1.bf16.msra.mxu0 %v1506
        %2549 = vmatprep.subr.bf16.mxu0 0
        %2550 = vmatpush1.bf16.msra.mxu0 %v1507
        %2551 = vmatprep.subr.bf16.mxu0 0
        %2552 = vmatpush1.bf16.msra.mxu0 0
        %2553 = vmatprep.subr.bf16.mxu0 0
        %2554 = vmatpush1.bf16.msra.mxu0 0
        %2555 = vmatprep.subr.bf16.mxu0 0
        %2556 = vmatpush1.bf16.msra.mxu0 0
        %2557 = vmatprep.subr.bf16.mxu0 0
        %2558 = vmatpush1.bf16.msra.mxu0 0
        %2559 = vmatprep.subr.bf16.mxu0 0
        %2560 = vmatpush1.bf16.msra.mxu0 0
        %2561 = vmatprep.subr.bf16.mxu0 0
        %2562 = vmatpush1.bf16.msra.mxu0 0
        %2563 = vmatprep.subr.bf16.mxu0 0
        %2564 = vmatpush1.bf16.msra.mxu0 0
        %2565 = vmatprep.subr.bf16.mxu0 0
        %2566 = vmatpush1.bf16.msra.mxu0 0
        %2567 = vmatprep.subr.bf16.mxu0 0
        %2568 = vmatpush1.bf16.msra.mxu0 0
        %2569 = vmatprep.subr.bf16.mxu0 0
        %2570 = vmatpush1.bf16.msra.mxu0 0
        %2571 = vmatprep.subr.bf16.mxu0 0
        %2572 = vmatpush1.bf16.msra.mxu0 0
        %2573 = vmatprep.subr.bf16.mxu0 0
        %2574 = vmatpush1.bf16.msra.mxu0 0
        %2575 = vmatprep.subr.bf16.mxu0 0
        %2576 = vmatpush1.bf16.msra.mxu0 0
        %2577 = vmatprep.subr.bf16.mxu0 0
        %2578 = vmatpush1.bf16.msra.mxu0 0
        %2579 = vmatprep.mubr.bf16.mxu0 0
        %2580 = vmatmul.mubr.bf16.gmra.mrb[0].mxu0 %v2229
        %v2581 = vpop.f32.mrb[0].mxu0
        %v2582 = vadd.f32 %v1497, %v2581
        %v2583 = vpop.f32.mrb[0].mxu0
        %v2584 = vpop.f32.mrb[0].mxu0
        %v2585 = vadd.f32 %v1497, %v2584
        %v2586 = vpop.f32.mrb[0].mxu0
        %2587 = vmatprep.mubr.bf16.mxu0 0
        %2588 = vmatmul.mubr.bf16.gmra.mrb[0].mxu0 %v2232
        %v2589 = vpop.f32.mrb[0].mxu0
        %v2590 = vadd.f32 %v1497, %v2589
        %v2591 = vpop.f32.mrb[0].mxu0
        %v2592 = vpop.f32.mrb[0].mxu0
        %v2593 = vadd.f32 %v1497, %v2592
        %v2594 = vpop.f32.mrb[0].mxu0
        %2595 = vmatprep.mubr.bf16.mxu0 0
        %2596 = vmatmul.mubr.bf16.gmra.mrb[0].mxu0 %v2235
        %v2597 = vpop.f32.mrb[0].mxu0
        %v2598 = vadd.f32 %v1497, %v2597
        %v2599 = vpop.f32.mrb[0].mxu0
        %v2600 = vpop.f32.mrb[0].mxu0
        %v2601 = vadd.f32 %v1497, %v2600
        %v2602 = vpop.f32.mrb[0].mxu0
        %2603 = vmatprep.mubr.bf16.mxu0 0
        %2604 = vmatmul.mubr.bf16.gmra.mrb[0].mxu0 %v2238
        %v2605 = vpop.f32.mrb[0].mxu0
        %v2606 = vadd.f32 %v1497, %v2605
        %v2607 = vpop.f32.mrb[0].mxu0
        %v2608 = vpop.f32.mrb[0].mxu0
        %v2609 = vadd.f32 %v1497, %v2608
        %v2610 = vpop.f32.mrb[0].mxu0
        %2611 = vdwg.mxu0
        %2612 = vmatprep.subr.bf16.mxu0 0
        %2613 = vmatpush1.bf16.msra.mxu0 %v1592
        %2614 = vmatprep.subr.bf16.mxu0 0
        %2615 = vmatpush1.bf16.msra.mxu0 %v1593
        %2616 = vmatprep.subr.bf16.mxu0 0
        %2617 = vmatpush1.bf16.msra.mxu0 0
        %2618 = vmatprep.subr.bf16.mxu0 0
        %2619 = vmatpush1.bf16.msra.mxu0 0
        %2620 = vmatprep.subr.bf16.mxu0 0
        %2621 = vmatpush1.bf16.msra.mxu0 0
        %2622 = vmatprep.subr.bf16.mxu0 0
        %2623 = vmatpush1.bf16.msra.mxu0 0
        %2624 = vmatprep.subr.bf16.mxu0 0
        %2625 = vmatpush1.bf16.msra.mxu0 0
        %2626 = vmatprep.subr.bf16.mxu0 0
        %2627 = vmatpush1.bf16.msra.mxu0 0
        %2628 = vmatprep.subr.bf16.mxu0 0
        %2629 = vmatpush1.bf16.msra.mxu0 0
        %2630 = vmatprep.subr.bf16.mxu0 0
        %2631 = vmatpush1.bf16.msra.mxu0 0
        %2632 = vmatprep.subr.bf16.mxu0 0
        %2633 = vmatpush1.bf16.msra.mxu0 0
        %2634 = vmatprep.subr.bf16.mxu0 0
        %2635 = vmatpush1.bf16.msra.mxu0 0
        %2636 = vmatprep.subr.bf16.mxu0 0
        %2637 = vmatpush1.bf16.msra.mxu0 0
        %2638 = vmatprep.subr.bf16.mxu0 0
        %2639 = vmatpush1.bf16.msra.mxu0 0
        %2640 = vmatprep.subr.bf16.mxu0 0
        %2641 = vmatpush1.bf16.msra.mxu0 0
        %2642 = vmatprep.subr.bf16.mxu0 0
        %2643 = vmatpush1.bf16.msra.mxu0 0
        %2644 = vmatprep.mubr.bf16.mxu0 0
        %2645 = vmatmul.mubr.bf16.gmra.mrb[0].mxu0 %v1722
        %v2646 = vpop.f32.mrb[0].mxu0
        %v2647 = vadd.f32 %v1583, %v2646
        %v2648 = vpop.f32.mrb[0].mxu0
        %v2649 = vpop.f32.mrb[0].mxu0
        %v2650 = vadd.f32 %v1583, %v2649
        %v2651 = vpop.f32.mrb[0].mxu0
        %2652 = vmatprep.mubr.bf16.mxu0 0
        %2653 = vmatmul.mubr.bf16.gmra.mrb[0].mxu0 %v1725
        %v2654 = vpop.f32.mrb[0].mxu0
        %v2655 = vadd.f32 %v1583, %v2654
        %v2656 = vpop.f32.mrb[0].mxu0
        %v2657 = vpop.f32.mrb[0].mxu0
        %v2658 = vadd.f32 %v1583, %v2657
        %v2659 = vpop.f32.mrb[0].mxu0
        %2660 = vmatprep.mubr.bf16.mxu0 0
        %2661 = vmatmul.mubr.bf16.gmra.mrb[0].mxu0 %v1728
        %v2662 = vpop.f32.mrb[0].mxu0
        %v2663 = vadd.f32 %v1583, %v2662
        %v2664 = vpop.f32.mrb[0].mxu0
        %v2665 = vpop.f32.mrb[0].mxu0
        %v2666 = vadd.f32 %v1583, %v2665
        %v2667 = vpop.f32.mrb[0].mxu0
        %2668 = vmatprep.mubr.bf16.mxu0 0
        %2669 = vmatmul.mubr.bf16.gmra.mrb[0].mxu0 %v1731
        %v2670 = vpop.f32.mrb[0].mxu0
        %v2671 = vadd.f32 %v1583, %v2670
        %v2672 = vpop.f32.mrb[0].mxu0
        %v2673 = vpop.f32.mrb[0].mxu0
        %v2674 = vadd.f32 %v1583, %v2673
        %v2675 = vpop.f32.mrb[0].mxu0
        %2676 = vdwg.mxu0
        %v2677 = vmul.f32 %v2346, %v2647
        %v2678 = vmul.f32 %v2348, %v2650
        %v2679 = vmul.f32 %v2350, %v2655
        %v2680 = vmul.f32 %v2352, %v2658
        %v2681 = vmul.f32 %v2354, %v2663
        %v2682 = vmul.f32 %v2356, %v2666
        %v2683 = vmul.f32 %v2358, %v2671
        %v2684 = vmul.f32 %v2360, %v2674
        %v2685 = vadd.f32 %v2582, %v2677
        %v2686 = vadd.f32 %v2585, %v2678
        %v2687 = vadd.f32 %v2590, %v2679
        %v2688 = vadd.f32 %v2593, %v2680
        %v2689 = vadd.f32 %v2598, %v2681
        %v2690 = vadd.f32 %v2601, %v2682
        %v2691 = vadd.f32 %v2606, %v2683
        %v2692 = vadd.f32 %v2609, %v2684
        %v2693 = vtanh.pop %v2685
        %v2694 = vtanh.pop %v2686
        %v2695 = vtanh.pop %v2687
        %v2696 = vtanh.pop %v2688
        %v2697 = vtanh.pop %v2689
        %v2698 = vtanh.pop %v2690
        %v2699 = vtanh.pop %v2691
        %v2700 = vtanh.pop %v2692
        %v2701 = vsub.f32 1.0, %v2532
        %v2702 = vsub.f32 1.0, %v2534
        %v2703 = vsub.f32 1.0, %v2536
        %v2704 = vsub.f32 1.0, %v2538
        %v2705 = vsub.f32 1.0, %v2540
        %v2706 = vsub.f32 1.0, %v2542
        %v2707 = vsub.f32 1.0, %v2544
        %v2708 = vsub.f32 1.0, %v2546
        %v2709 = vmul.f32 %v2701, %v2693
        %v2710 = vmul.f32 %v2702, %v2694
        %v2711 = vmul.f32 %v2703, %v2695
        %v2712 = vmul.f32 %v2704, %v2696
        %v2713 = vmul.f32 %v2705, %v2697
        %v2714 = vmul.f32 %v2706, %v2698
        %v2715 = vmul.f32 %v2707, %v2699
        %v2716 = vmul.f32 %v2708, %v2700
        %v2717 = vmul.f32 %v2532, %v1709
        %v2718 = vmul.f32 %v2534, %v1710
        %v2719 = vmul.f32 %v2536, %v1711
        %v2720 = vmul.f32 %v2538, %v1712
        %v2721 = vmul.f32 %v2540, %v1713
        %v2722 = vmul.f32 %v2542, %v1714
        %v2723 = vmul.f32 %v2544, %v1715
        %v2724 = vmul.f32 %v2546, %v1716
        %v2725 = vadd.f32 %v2709, %v2717
        %v2726 = vadd.f32 %v2710, %v2718
        %v2727 = vadd.f32 %v2711, %v2719
        %v2728 = vadd.f32 %v2712, %v2720
        %v2729 = vadd.f32 %v2713, %v2721
        %v2730 = vadd.f32 %v2714, %v2722
        %v2731 = vadd.f32 %v2715, %v2723
        %v2732 = vadd.f32 %v2716, %v2724
        %v2733 = vpack.c.bf16 %v2726, %v2725
        %v2734 = vpack.c.bf16 %v2728, %v2727
        %v2735 = vpack.c.bf16 %v2730, %v2729
        %v2736 = vpack.c.bf16 %v2732, %v2731
        %v2738 = vsel %vm431, %v2733, 0
        %v2741 = vsel %vm431, %v2734, 0
        %v2744 = vsel %vm431, %v2735, 0
        %v2747 = vsel %vm431, %v2736, 0
        %2749 = vmatprep.subr.bf16.mxu0 0
        %2750 = vmatpush1.bf16.msra.mxu0 %v427
        %2751 = vmatprep.subr.bf16.mxu0 0
        %2752 = vmatpush1.bf16.msra.mxu0 %v428
        %2753 = vmatprep.subr.bf16.mxu0 0
        %2754 = vmatpush1.bf16.msra.mxu0 0
        %2755 = vmatprep.subr.bf16.mxu0 0
        %2756 = vmatpush1.bf16.msra.mxu0 0
        %2757 = vmatprep.subr.bf16.mxu0 0
        %2758 = vmatpush1.bf16.msra.mxu0 0
        %2759 = vmatprep.subr.bf16.mxu0 0
        %2760 = vmatpush1.bf16.msra.mxu0 0
        %2761 = vmatprep.subr.bf16.mxu0 0
        %2762 = vmatpush1.bf16.msra.mxu0 0
        %2763 = vmatprep.subr.bf16.mxu0 0
        %2764 = vmatpush1.bf16.msra.mxu0 0
        %2765 = vmatprep.subr.bf16.mxu0 0
        %2766 = vmatpush1.bf16.msra.mxu0 0
        %2767 = vmatprep.subr.bf16.mxu0 0
        %2768 = vmatpush1.bf16.msra.mxu0 0
        %2769 = vmatprep.subr.bf16.mxu0 0
        %2770 = vmatpush1.bf16.msra.mxu0 0
        %2771 = vmatprep.subr.bf16.mxu0 0
        %2772 = vmatpush1.bf16.msra.mxu0 0
        %2773 = vmatprep.subr.bf16.mxu0 0
        %2774 = vmatpush1.bf16.msra.mxu0 0
        %2775 = vmatprep.subr.bf16.mxu0 0
        %2776 = vmatpush1.bf16.msra.mxu0 0
        %2777 = vmatprep.subr.bf16.mxu0 0
        %2778 = vmatpush1.bf16.msra.mxu0 0
        %2779 = vmatprep.subr.bf16.mxu0 0
        %2780 = vmatpush1.bf16.msra.mxu0 0
        %2781 = vmatprep.mubr.bf16.mxu0 0
        %2782 = vmatmul.mubr.bf16.gmra.mrb[0].mxu0 %v2738
        %v2783 = vpop.f32.mrb[0].mxu0
        %v2784 = vadd.f32 0.0, %v2783
        %v2785 = vpop.f32.mrb[0].mxu0
        %v2786 = vpop.f32.mrb[0].mxu0
        %v2787 = vadd.f32 0.0, %v2786
        %v2788 = vpop.f32.mrb[0].mxu0
        %2789 = vmatprep.mubr.bf16.mxu0 0
        %2790 = vmatmul.mubr.bf16.gmra.mrb[0].mxu0 %v2741
        %v2791 = vpop.f32.mrb[0].mxu0
        %v2792 = vadd.f32 0.0, %v2791
        %v2793 = vpop.f32.mrb[0].mxu0
        %v2794 = vpop.f32.mrb[0].mxu0
        %v2795 = vadd.f32 0.0, %v2794
        %v2796 = vpop.f32.mrb[0].mxu0
        %2797 = vmatprep.mubr.bf16.mxu0 0
        %2798 = vmatmul.mubr.bf16.gmra.mrb[0].mxu0 %v2744
        %v2799 = vpop.f32.mrb[0].mxu0
        %v2800 = vadd.f32 0.0, %v2799
        %v2801 = vpop.f32.mrb[0].mxu0
        %v2802 = vpop.f32.mrb[0].mxu0
        %v2803 = vadd.f32 0.0, %v2802
        %v2804 = vpop.f32.mrb[0].mxu0
        %2805 = vmatprep.mubr.bf16.mxu0 0
        %2806 = vmatmul.mubr.bf16.gmra.mrb[0].mxu0 %v2747
        %v2807 = vpop.f32.mrb[0].mxu0
        %v2808 = vadd.f32 0.0, %v2807
        %v2809 = vpop.f32.mrb[0].mxu0
        %v2810 = vpop.f32.mrb[0].mxu0
        %v2811 = vadd.f32 0.0, %v2810
        %v2812 = vpop.f32.mrb[0].mxu0
        %2813 = vdwg.mxu0
        %v2814 = vpack.c.bf16 %v2787, %v2784
        %v2815 = vpack.c.bf16 %v2795, %v2792
        %v2816 = vpack.c.bf16 %v2803, %v2800
        %v2817 = vpack.c.bf16 %v2811, %v2808
        %2818 = vmatprep.subr.bf16.mxu0 0
        %2819 = vmatpush1.bf16.msra.mxu0 %v2814
        %2820 = vmatprep.subr.bf16.mxu0 0
        %2821 = vmatpush1.bf16.msra.mxu0 %v2815
        %2822 = vmatprep.subr.bf16.mxu0 0
        %2823 = vmatpush1.bf16.msra.mxu0 %v2816
        %2824 = vmatprep.subr.bf16.mxu0 0
        %2825 = vmatpush1.bf16.msra.mxu0 %v2817
        %2826 = vmatprep.subr.bf16.mxu0 0
        %2827 = vmatpush1.bf16.msra.mxu0 0
        %2828 = vmatprep.subr.bf16.mxu0 0
        %2829 = vmatpush1.bf16.msra.mxu0 0
        %2830 = vmatprep.subr.bf16.mxu0 0
        %2831 = vmatpush1.bf16.msra.mxu0 0
        %2832 = vmatprep.subr.bf16.mxu0 0
        %2833 = vmatpush1.bf16.msra.mxu0 0
        %2834 = vmatprep.subr.bf16.mxu0 0
        %2835 = vmatpush1.bf16.msra.mxu0 0
        %2836 = vmatprep.subr.bf16.mxu0 0
        %2837 = vmatpush1.bf16.msra.mxu0 0
        %2838 = vmatprep.subr.bf16.mxu0 0
        %2839 = vmatpush1.bf16.msra.mxu0 0
        %2840 = vmatprep.subr.bf16.mxu0 0
        %2841 = vmatpush1.bf16.msra.mxu0 0
        %2842 = vmatprep.subr.bf16.mxu0 0
        %2843 = vmatpush1.bf16.msra.mxu0 0
        %2844 = vmatprep.subr.bf16.mxu0 0
        %2845 = vmatpush1.bf16.msra.mxu0 0
        %2846 = vmatprep.subr.bf16.mxu0 0
        %2847 = vmatpush1.bf16.msra.mxu0 0
        %2848 = vmatprep.subr.bf16.mxu0 0
        %2849 = vmatpush1.bf16.msra.mxu0 0
        %2850 = vmatprep.mubr.bf16.mxu0 0
        %2851 = vmatmul.mubr.bf16.gmra.mrb[0].mxu0 %v543
        %v2852 = vpop.f32.mrb[0].mxu0
        %v2853 = vadd.f32 0.0, %v2852
        %v2854 = vpop.f32.mrb[0].mxu0
        %v2855 = vpop.f32.mrb[0].mxu0
        %v2856 = vadd.f32 0.0, %v2855
        %v2857 = vpop.f32.mrb[0].mxu0
        %2858 = vmatprep.mubr.bf16.mxu0 0
        %2859 = vmatmul.mubr.bf16.gmra.mrb[0].mxu0 %v546
        %v2860 = vpop.f32.mrb[0].mxu0
        %v2861 = vadd.f32 0.0, %v2860
        %v2862 = vpop.f32.mrb[0].mxu0
        %v2863 = vpop.f32.mrb[0].mxu0
        %v2864 = vadd.f32 0.0, %v2863
        %v2865 = vpop.f32.mrb[0].mxu0
        %2866 = vmatprep.mubr.bf16.mxu0 0
        %2867 = vmatmul.mubr.bf16.gmra.mrb[0].mxu0 %v549
        %v2868 = vpop.f32.mrb[0].mxu0
        %v2869 = vadd.f32 0.0, %v2868
        %v2870 = vpop.f32.mrb[0].mxu0
        %v2871 = vpop.f32.mrb[0].mxu0
        %v2872 = vadd.f32 0.0, %v2871
        %v2873 = vpop.f32.mrb[0].mxu0
        %2874 = vmatprep.mubr.bf16.mxu0 0
        %2875 = vmatmul.mubr.bf16.gmra.mrb[0].mxu0 %v552
        %v2876 = vpop.f32.mrb[0].mxu0
        %v2877 = vadd.f32 0.0, %v2876
        %v2878 = vpop.f32.mrb[0].mxu0
        %v2879 = vpop.f32.mrb[0].mxu0
        %v2880 = vadd.f32 0.0, %v2879
        %v2881 = vpop.f32.mrb[0].mxu0
        %2882 = vdwg.mxu0
        %v2883 = vadd.f32 %v407, %v2853
        %v2884 = vadd.f32 %v408, %v2856
        %v2885 = vadd.f32 %v409, %v2861
        %v2886 = vadd.f32 %v410, %v2864
        %v2887 = vadd.f32 %v411, %v2869
        %v2888 = vadd.f32 %v412, %v2872
        %v2889 = vadd.f32 %v413, %v2877
        %v2890 = vadd.f32 %v414, %v2880
        %2891 = vmatprep.subr.bf16.mxu0 0
        %2892 = vmatpush1.bf16.msra.mxu0 %v640
        %2893 = vmatprep.subr.bf16.mxu0 0
        %2894 = vmatpush1.bf16.msra.mxu0 %v641
        %2895 = vmatprep.subr.bf16.mxu0 0
        %2896 = vmatpush1.bf16.msra.mxu0 0
        %2897 = vmatprep.subr.bf16.mxu0 0
        %2898 = vmatpush1.bf16.msra.mxu0 0
        %2899 = vmatprep.subr.bf16.mxu0 0
        %2900 = vmatpush1.bf16.msra.mxu0 0
        %2901 = vmatprep.subr.bf16.mxu0 0
        %2902 = vmatpush1.bf16.msra.mxu0 0
        %2903 = vmatprep.subr.bf16.mxu0 0
        %2904 = vmatpush1.bf16.msra.mxu0 0
        %2905 = vmatprep.subr.bf16.mxu0 0
        %2906 = vmatpush1.bf16.msra.mxu0 0
        %2907 = vmatprep.subr.bf16.mxu0 0
        %2908 = vmatpush1.bf16.msra.mxu0 0
        %2909 = vmatprep.subr.bf16.mxu0 0
        %2910 = vmatpush1.bf16.msra.mxu0 0
        %2911 = vmatprep.subr.bf16.mxu0 0
        %2912 = vmatpush1.bf16.msra.mxu0 0
        %2913 = vmatprep.subr.bf16.mxu0 0
        %2914 = vmatpush1.bf16.msra.mxu0 0
        %2915 = vmatprep.subr.bf16.mxu0 0
        %2916 = vmatpush1.bf16.msra.mxu0 0
        %2917 = vmatprep.subr.bf16.mxu0 0
        %2918 = vmatpush1.bf16.msra.mxu0 0
        %2919 = vmatprep.subr.bf16.mxu0 0
        %2920 = vmatpush1.bf16.msra.mxu0 0
        %2921 = vmatprep.subr.bf16.mxu0 0
        %2922 = vmatpush1.bf16.msra.mxu0 0
        %2923 = vmatprep.mubr.bf16.mxu0 0
        %2924 = vmatmul.mubr.bf16.gmra.mrb[0].mxu0 %v2738
        %v2925 = vpop.f32.mrb[0].mxu0
        %v2926 = vadd.f32 0.0, %v2925
        %v2927 = vpop.f32.mrb[0].mxu0
        %v2928 = vpop.f32.mrb[0].mxu0
        %v2929 = vadd.f32 0.0, %v2928
        %v2930 = vpop.f32.mrb[0].mxu0
        %2931 = vmatprep.mubr.bf16.mxu0 0
        %2932 = vmatmul.mubr.bf16.gmra.mrb[0].mxu0 %v2741
        %v2933 = vpop.f32.mrb[0].mxu0
        %v2934 = vadd.f32 0.0, %v2933
        %v2935 = vpop.f32.mrb[0].mxu0
        %v2936 = vpop.f32.mrb[0].mxu0
        %v2937 = vadd.f32 0.0, %v2936
        %v2938 = vpop.f32.mrb[0].mxu0
        %2939 = vmatprep.mubr.bf16.mxu0 0
        %2940 = vmatmul.mubr.bf16.gmra.mrb[0].mxu0 %v2744
        %v2941 = vpop.f32.mrb[0].mxu0
        %v2942 = vadd.f32 0.0, %v2941
        %v2943 = vpop.f32.mrb[0].mxu0
        %v2944 = vpop.f32.mrb[0].mxu0
        %v2945 = vadd.f32 0.0, %v2944
        %v2946 = vpop.f32.mrb[0].mxu0
        %2947 = vmatprep.mubr.bf16.mxu0 0
        %2948 = vmatmul.mubr.bf16.gmra.mrb[0].mxu0 %v2747
        %v2949 = vpop.f32.mrb[0].mxu0
        %v2950 = vadd.f32 0.0, %v2949
        %v2951 = vpop.f32.mrb[0].mxu0
        %v2952 = vpop.f32.mrb[0].mxu0
        %v2953 = vadd.f32 0.0, %v2952
        %v2954 = vpop.f32.mrb[0].mxu0
        %2955 = vdwg.mxu0
        %v2956 = vpack.c.bf16 %v2929, %v2926
        %v2957 = vpack.c.bf16 %v2937, %v2934
        %v2958 = vpack.c.bf16 %v2945, %v2942
        %v2959 = vpack.c.bf16 %v2953, %v2950
        %2960 = vmatprep.subr.bf16.mxu0 0
        %2961 = vmatpush1.bf16.msra.mxu0 %v2956
        %2962 = vmatprep.subr.bf16.mxu0 0
        %2963 = vmatpush1.bf16.msra.mxu0 %v2957
        %2964 = vmatprep.subr.bf16.mxu0 0
        %2965 = vmatpush1.bf16.msra.mxu0 %v2958
        %2966 = vmatprep.subr.bf16.mxu0 0
        %2967 = vmatpush1.bf16.msra.mxu0 %v2959
        %2968 = vmatprep.subr.bf16.mxu0 0
        %2969 = vmatpush1.bf16.msra.mxu0 0
        %2970 = vmatprep.subr.bf16.mxu0 0
        %2971 = vmatpush1.bf16.msra.mxu0 0
        %2972 = vmatprep.subr.bf16.mxu0 0
        %2973 = vmatpush1.bf16.msra.mxu0 0
        %2974 = vmatprep.subr.bf16.mxu0 0
        %2975 = vmatpush1.bf16.msra.mxu0 0
        %2976 = vmatprep.subr.bf16.mxu0 0
        %2977 = vmatpush1.bf16.msra.mxu0 0
        %2978 = vmatprep.subr.bf16.mxu0 0
        %2979 = vmatpush1.bf16.msra.mxu0 0
        %2980 = vmatprep.subr.bf16.mxu0 0
        %2981 = vmatpush1.bf16.msra.mxu0 0
        %2982 = vmatprep.subr.bf16.mxu0 0
        %2983 = vmatpush1.bf16.msra.mxu0 0
        %2984 = vmatprep.subr.bf16.mxu0 0
        %2985 = vmatpush1.bf16.msra.mxu0 0
        %2986 = vmatprep.subr.bf16.mxu0 0
        %2987 = vmatpush1.bf16.msra.mxu0 0
        %2988 = vmatprep.subr.bf16.mxu0 0
        %2989 = vmatpush1.bf16.msra.mxu0 0
        %2990 = vmatprep.subr.bf16.mxu0 0
        %2991 = vmatpush1.bf16.msra.mxu0 0
        %2992 = vmatprep.mubr.bf16.mxu0 0
        %2993 = vmatmul.mubr.bf16.gmra.mrb[0].mxu0 %v743
        %v2994 = vpop.f32.mrb[0].mxu0
        %v2995 = vadd.f32 0.0, %v2994
        %v2996 = vpop.f32.mrb[0].mxu0
        %v2997 = vpop.f32.mrb[0].mxu0
        %v2998 = vadd.f32 0.0, %v2997
        %v2999 = vpop.f32.mrb[0].mxu0
        %3000 = vmatprep.mubr.bf16.mxu0 0
        %3001 = vmatmul.mubr.bf16.gmra.mrb[0].mxu0 %v746
        %v3002 = vpop.f32.mrb[0].mxu0
        %v3003 = vadd.f32 0.0, %v3002
        %v3004 = vpop.f32.mrb[0].mxu0
        %v3005 = vpop.f32.mrb[0].mxu0
        %v3006 = vadd.f32 0.0, %v3005
        %v3007 = vpop.f32.mrb[0].mxu0
        %3008 = vmatprep.mubr.bf16.mxu0 0
        %3009 = vmatmul.mubr.bf16.gmra.mrb[0].mxu0 %v749
        %v3010 = vpop.f32.mrb[0].mxu0
        %v3011 = vadd.f32 0.0, %v3010
        %v3012 = vpop.f32.mrb[0].mxu0
        %v3013 = vpop.f32.mrb[0].mxu0
        %v3014 = vadd.f32 0.0, %v3013
        %v3015 = vpop.f32.mrb[0].mxu0
        %3016 = vmatprep.mubr.bf16.mxu0 0
        %3017 = vmatmul.mubr.bf16.gmra.mrb[0].mxu0 %v752
        %v3018 = vpop.f32.mrb[0].mxu0
        %v3019 = vadd.f32 0.0, %v3018
        %v3020 = vpop.f32.mrb[0].mxu0
        %v3021 = vpop.f32.mrb[0].mxu0
        %v3022 = vadd.f32 0.0, %v3021
        %v3023 = vpop.f32.mrb[0].mxu0
        %3024 = vdwg.mxu0
        %v3025 = vadd.f32 %v2883, %v2995
        %v3026 = vadd.f32 %v2884, %v2998
        %v3027 = vadd.f32 %v2885, %v3003
        %v3028 = vadd.f32 %v2886, %v3006
        %v3029 = vadd.f32 %v2887, %v3011
        %v3030 = vadd.f32 %v2888, %v3014
        %v3031 = vadd.f32 %v2889, %v3019
        %v3032 = vadd.f32 %v2890, %v3022
        %3033 = vmatprep.subr.bf16.mxu0 0
        %3034 = vmatpush1.bf16.msra.mxu0 %v840
        %3035 = vmatprep.subr.bf16.mxu0 0
        %3036 = vmatpush1.bf16.msra.mxu0 %v841
        %3037 = vmatprep.subr.bf16.mxu0 0
        %3038 = vmatpush1.bf16.msra.mxu0 0
        %3039 = vmatprep.subr.bf16.mxu0 0
        %3040 = vmatpush1.bf16.msra.mxu0 0
        %3041 = vmatprep.subr.bf16.mxu0 0
        %3042 = vmatpush1.bf16.msra.mxu0 0
        %3043 = vmatprep.subr.bf16.mxu0 0
        %3044 = vmatpush1.bf16.msra.mxu0 0
        %3045 = vmatprep.subr.bf16.mxu0 0
        %3046 = vmatpush1.bf16.msra.mxu0 0
        %3047 = vmatprep.subr.bf16.mxu0 0
        %3048 = vmatpush1.bf16.msra.mxu0 0
        %3049 = vmatprep.subr.bf16.mxu0 0
        %3050 = vmatpush1.bf16.msra.mxu0 0
        %3051 = vmatprep.subr.bf16.mxu0 0
        %3052 = vmatpush1.bf16.msra.mxu0 0
        %3053 = vmatprep.subr.bf16.mxu0 0
        %3054 = vmatpush1.bf16.msra.mxu0 0
        %3055 = vmatprep.subr.bf16.mxu0 0
        %3056 = vmatpush1.bf16.msra.mxu0 0
        %3057 = vmatprep.subr.bf16.mxu0 0
        %3058 = vmatpush1.bf16.msra.mxu0 0
        %3059 = vmatprep.subr.bf16.mxu0 0
        %3060 = vmatpush1.bf16.msra.mxu0 0
        %3061 = vmatprep.subr.bf16.mxu0 0
        %3062 = vmatpush1.bf16.msra.mxu0 0
        %3063 = vmatprep.subr.bf16.mxu0 0
        %3064 = vmatpush1.bf16.msra.mxu0 0
        %3065 = vmatprep.mubr.bf16.mxu0 0
        %3066 = vmatmul.mubr.bf16.gmra.mrb[0].mxu0 %v2738
        %v3067 = vpop.f32.mrb[0].mxu0
        %v3068 = vadd.f32 0.0, %v3067
        %v3069 = vpop.f32.mrb[0].mxu0
        %v3070 = vpop.f32.mrb[0].mxu0
        %v3071 = vadd.f32 0.0, %v3070
        %v3072 = vpop.f32.mrb[0].mxu0
        %3073 = vmatprep.mubr.bf16.mxu0 0
        %3074 = vmatmul.mubr.bf16.gmra.mrb[0].mxu0 %v2741
        %v3075 = vpop.f32.mrb[0].mxu0
        %v3076 = vadd.f32 0.0, %v3075
        %v3077 = vpop.f32.mrb[0].mxu0
        %v3078 = vpop.f32.mrb[0].mxu0
        %v3079 = vadd.f32 0.0, %v3078
        %v3080 = vpop.f32.mrb[0].mxu0
        %3081 = vmatprep.mubr.bf16.mxu0 0
        %3082 = vmatmul.mubr.bf16.gmra.mrb[0].mxu0 %v2744
        %v3083 = vpop.f32.mrb[0].mxu0
        %v3084 = vadd.f32 0.0, %v3083
        %v3085 = vpop.f32.mrb[0].mxu0
        %v3086 = vpop.f32.mrb[0].mxu0
        %v3087 = vadd.f32 0.0, %v3086
        %v3088 = vpop.f32.mrb[0].mxu0
        %3089 = vmatprep.mubr.bf16.mxu0 0
        %3090 = vmatmul.mubr.bf16.gmra.mrb[0].mxu0 %v2747
        %v3091 = vpop.f32.mrb[0].mxu0
        %v3092 = vadd.f32 0.0, %v3091
        %v3093 = vpop.f32.mrb[0].mxu0
        %v3094 = vpop.f32.mrb[0].mxu0
        %v3095 = vadd.f32 0.0, %v3094
        %v3096 = vpop.f32.mrb[0].mxu0
        %3097 = vdwg.mxu0
        %v3098 = vpack.c.bf16 %v3071, %v3068
        %v3099 = vpack.c.bf16 %v3079, %v3076
        %v3100 = vpack.c.bf16 %v3087, %v3084
        %v3101 = vpack.c.bf16 %v3095, %v3092
        %3102 = vmatprep.subr.bf16.mxu0 0
        %3103 = vmatpush1.bf16.msra.mxu0 %v3098
        %3104 = vmatprep.subr.bf16.mxu0 0
        %3105 = vmatpush1.bf16.msra.mxu0 %v3099
        %3106 = vmatprep.subr.bf16.mxu0 0
        %3107 = vmatpush1.bf16.msra.mxu0 %v3100
        %3108 = vmatprep.subr.bf16.mxu0 0
        %3109 = vmatpush1.bf16.msra.mxu0 %v3101
        %3110 = vmatprep.subr.bf16.mxu0 0
        %3111 = vmatpush1.bf16.msra.mxu0 0
        %3112 = vmatprep.subr.bf16.mxu0 0
        %3113 = vmatpush1.bf16.msra.mxu0 0
        %3114 = vmatprep.subr.bf16.mxu0 0
        %3115 = vmatpush1.bf16.msra.mxu0 0
        %3116 = vmatprep.subr.bf16.mxu0 0
        %3117 = vmatpush1.bf16.msra.mxu0 0
        %3118 = vmatprep.subr.bf16.mxu0 0
        %3119 = vmatpush1.bf16.msra.mxu0 0
        %3120 = vmatprep.subr.bf16.mxu0 0
        %3121 = vmatpush1.bf16.msra.mxu0 0
        %3122 = vmatprep.subr.bf16.mxu0 0
        %3123 = vmatpush1.bf16.msra.mxu0 0
        %3124 = vmatprep.subr.bf16.mxu0 0
        %3125 = vmatpush1.bf16.msra.mxu0 0
        %3126 = vmatprep.subr.bf16.mxu0 0
        %3127 = vmatpush1.bf16.msra.mxu0 0
        %3128 = vmatprep.subr.bf16.mxu0 0
        %3129 = vmatpush1.bf16.msra.mxu0 0
        %3130 = vmatprep.subr.bf16.mxu0 0
        %3131 = vmatpush1.bf16.msra.mxu0 0
        %3132 = vmatprep.subr.bf16.mxu0 0
        %3133 = vmatpush1.bf16.msra.mxu0 0
        %3134 = vmatprep.mubr.bf16.mxu0 0
        %3135 = vmatmul.mubr.bf16.gmra.mrb[0].mxu0 %v943
        %v3136 = vpop.f32.mrb[0].mxu0
        %v3137 = vadd.f32 0.0, %v3136
        %v3138 = vpop.f32.mrb[0].mxu0
        %v3139 = vpop.f32.mrb[0].mxu0
        %v3140 = vadd.f32 0.0, %v3139
        %v3141 = vpop.f32.mrb[0].mxu0
        %3142 = vmatprep.mubr.bf16.mxu0 0
        %3143 = vmatmul.mubr.bf16.gmra.mrb[0].mxu0 %v946
        %v3144 = vpop.f32.mrb[0].mxu0
        %v3145 = vadd.f32 0.0, %v3144
        %v3146 = vpop.f32.mrb[0].mxu0
        %v3147 = vpop.f32.mrb[0].mxu0
        %v3148 = vadd.f32 0.0, %v3147
        %v3149 = vpop.f32.mrb[0].mxu0
        %3150 = vmatprep.mubr.bf16.mxu0 0
        %3151 = vmatmul.mubr.bf16.gmra.mrb[0].mxu0 %v949
        %v3152 = vpop.f32.mrb[0].mxu0
        %v3153 = vadd.f32 0.0, %v3152
        %v3154 = vpop.f32.mrb[0].mxu0
        %v3155 = vpop.f32.mrb[0].mxu0
        %v3156 = vadd.f32 0.0, %v3155
        %v3157 = vpop.f32.mrb[0].mxu0
        %3158 = vmatprep.mubr.bf16.mxu0 0
        %3159 = vmatmul.mubr.bf16.gmra.mrb[0].mxu0 %v952
        %v3160 = vpop.f32.mrb[0].mxu0
        %v3161 = vadd.f32 0.0, %v3160
        %v3162 = vpop.f32.mrb[0].mxu0
        %v3163 = vpop.f32.mrb[0].mxu0
        %v3164 = vadd.f32 0.0, %v3163
        %v3165 = vpop.f32.mrb[0].mxu0
        %3166 = vdwg.mxu0
        %v3167 = vadd.f32 %v3025, %v3137
        %v3168 = vadd.f32 %v3026, %v3140
        %v3169 = vadd.f32 %v3027, %v3145
        %v3170 = vadd.f32 %v3028, %v3148
        %v3171 = vadd.f32 %v3029, %v3153
        %v3172 = vadd.f32 %v3030, %v3156
        %v3173 = vadd.f32 %v3031, %v3161
        %v3174 = vadd.f32 %v3032, %v3164
        %v3175 = vpack.c.bf16 %v3168, %v3167
        %v3176 = vpack.c.bf16 %v3170, %v3169
        %v3177 = vpack.c.bf16 %v3172, %v3171
        %v3178 = vpack.c.bf16 %v3174, %v3173
        %3179 = vmatprep.subr.bf16.mxu0 0
        %3180 = vmatpush1.bf16.msra.mxu0 %v1047
        %3181 = vmatprep.subr.bf16.mxu0 0
        %3182 = vmatpush1.bf16.msra.mxu0 %v1048
        %3183 = vmatprep.subr.bf16.mxu0 0
        %3184 = vmatpush1.bf16.msra.mxu0 0
        %3185 = vmatprep.subr.bf16.mxu0 0
        %3186 = vmatpush1.bf16.msra.mxu0 0
        %3187 = vmatprep.subr.bf16.mxu0 0
        %3188 = vmatpush1.bf16.msra.mxu0 0
        %3189 = vmatprep.subr.bf16.mxu0 0
        %3190 = vmatpush1.bf16.msra.mxu0 0
        %3191 = vmatprep.subr.bf16.mxu0 0
        %3192 = vmatpush1.bf16.msra.mxu0 0
        %3193 = vmatprep.subr.bf16.mxu0 0
        %3194 = vmatpush1.bf16.msra.mxu0 0
        %3195 = vmatprep.subr.bf16.mxu0 0
        %3196 = vmatpush1.bf16.msra.mxu0 0
        %3197 = vmatprep.subr.bf16.mxu0 0
        %3198 = vmatpush1.bf16.msra.mxu0 0
        %3199 = vmatprep.subr.bf16.mxu0 0
        %3200 = vmatpush1.bf16.msra.mxu0 0
        %3201 = vmatprep.subr.bf16.mxu0 0
        %3202 = vmatpush1.bf16.msra.mxu0 0
        %3203 = vmatprep.subr.bf16.mxu0 0
        %3204 = vmatpush1.bf16.msra.mxu0 0
        %3205 = vmatprep.subr.bf16.mxu0 0
        %3206 = vmatpush1.bf16.msra.mxu0 0
        %3207 = vmatprep.subr.bf16.mxu0 0
        %3208 = vmatpush1.bf16.msra.mxu0 0
        %3209 = vmatprep.subr.bf16.mxu0 0
        %3210 = vmatpush1.bf16.msra.mxu0 0
        %3211 = vmatprep.mubr.bf16.mxu0 0
        %3212 = vmatmul.mubr.bf16.gmra.mrb[0].mxu0 %v2738
        %v3213 = vpop.f32.mrb[0].mxu0
        %v3214 = vadd.f32 0.0, %v3213
        %v3215 = vpop.f32.mrb[0].mxu0
        %v3216 = vpop.f32.mrb[0].mxu0
        %v3217 = vadd.f32 0.0, %v3216
        %v3218 = vpop.f32.mrb[0].mxu0
        %3219 = vmatprep.mubr.bf16.mxu0 0
        %3220 = vmatmul.mubr.bf16.gmra.mrb[0].mxu0 %v2741
        %v3221 = vpop.f32.mrb[0].mxu0
        %v3222 = vadd.f32 0.0, %v3221
        %v3223 = vpop.f32.mrb[0].mxu0
        %v3224 = vpop.f32.mrb[0].mxu0
        %v3225 = vadd.f32 0.0, %v3224
        %v3226 = vpop.f32.mrb[0].mxu0
        %3227 = vmatprep.mubr.bf16.mxu0 0
        %3228 = vmatmul.mubr.bf16.gmra.mrb[0].mxu0 %v2744
        %v3229 = vpop.f32.mrb[0].mxu0
        %v3230 = vadd.f32 0.0, %v3229
        %v3231 = vpop.f32.mrb[0].mxu0
        %v3232 = vpop.f32.mrb[0].mxu0
        %v3233 = vadd.f32 0.0, %v3232
        %v3234 = vpop.f32.mrb[0].mxu0
        %3235 = vmatprep.mubr.bf16.mxu0 0
        %3236 = vmatmul.mubr.bf16.gmra.mrb[0].mxu0 %v2747
        %v3237 = vpop.f32.mrb[0].mxu0
        %v3238 = vadd.f32 0.0, %v3237
        %v3239 = vpop.f32.mrb[0].mxu0
        %v3240 = vpop.f32.mrb[0].mxu0
        %v3241 = vadd.f32 0.0, %v3240
        %v3242 = vpop.f32.mrb[0].mxu0
        %3243 = vdwg.mxu0
        %v3245 = vsel %vm431, %v3175, 0
        %v3248 = vsel %vm431, %v3176, 0
        %v3251 = vsel %vm431, %v3177, 0
        %v3254 = vsel %vm431, %v3178, 0
        %3256 = vmatprep.subr.bf16.mxu0 0
        %3257 = vmatpush1.bf16.msra.mxu0 %v1124
        %3258 = vmatprep.subr.bf16.mxu0 0
        %3259 = vmatpush1.bf16.msra.mxu0 %v1125
        %3260 = vmatprep.subr.bf16.mxu0 0
        %3261 = vmatpush1.bf16.msra.mxu0 0
        %3262 = vmatprep.subr.bf16.mxu0 0
        %3263 = vmatpush1.bf16.msra.mxu0 0
        %3264 = vmatprep.subr.bf16.mxu0 0
        %3265 = vmatpush1.bf16.msra.mxu0 0
        %3266 = vmatprep.subr.bf16.mxu0 0
        %3267 = vmatpush1.bf16.msra.mxu0 0
        %3268 = vmatprep.subr.bf16.mxu0 0
        %3269 = vmatpush1.bf16.msra.mxu0 0
        %3270 = vmatprep.subr.bf16.mxu0 0
        %3271 = vmatpush1.bf16.msra.mxu0 0
        %3272 = vmatprep.subr.bf16.mxu0 0
        %3273 = vmatpush1.bf16.msra.mxu0 0
        %3274 = vmatprep.subr.bf16.mxu0 0
        %3275 = vmatpush1.bf16.msra.mxu0 0
        %3276 = vmatprep.subr.bf16.mxu0 0
        %3277 = vmatpush1.bf16.msra.mxu0 0
        %3278 = vmatprep.subr.bf16.mxu0 0
        %3279 = vmatpush1.bf16.msra.mxu0 0
        %3280 = vmatprep.subr.bf16.mxu0 0
        %3281 = vmatpush1.bf16.msra.mxu0 0
        %3282 = vmatprep.subr.bf16.mxu0 0
        %3283 = vmatpush1.bf16.msra.mxu0 0
        %3284 = vmatprep.subr.bf16.mxu0 0
        %3285 = vmatpush1.bf16.msra.mxu0 0
        %3286 = vmatprep.subr.bf16.mxu0 0
        %3287 = vmatpush1.bf16.msra.mxu0 0
        %3288 = vmatprep.mubr.bf16.mxu0 0
        %3289 = vmatmul.mubr.bf16.gmra.mrb[0].mxu0 %v3245
        %v3290 = vpop.f32.mrb[0].mxu0
        %v3291 = vadd.f32 %v3214, %v3290
        %v3292 = vpop.f32.mrb[0].mxu0
        %v3293 = vpop.f32.mrb[0].mxu0
        %v3294 = vadd.f32 %v3217, %v3293
        %v3295 = vpop.f32.mrb[0].mxu0
        %3296 = vmatprep.mubr.bf16.mxu0 0
        %3297 = vmatmul.mubr.bf16.gmra.mrb[0].mxu0 %v3248
        %v3298 = vpop.f32.mrb[0].mxu0
        %v3299 = vadd.f32 %v3222, %v3298
        %v3300 = vpop.f32.mrb[0].mxu0
        %v3301 = vpop.f32.mrb[0].mxu0
        %v3302 = vadd.f32 %v3225, %v3301
        %v3303 = vpop.f32.mrb[0].mxu0
        %3304 = vmatprep.mubr.bf16.mxu0 0
        %3305 = vmatmul.mubr.bf16.gmra.mrb[0].mxu0 %v3251
        %v3306 = vpop.f32.mrb[0].mxu0
        %v3307 = vadd.f32 %v3230, %v3306
        %v3308 = vpop.f32.mrb[0].mxu0
        %v3309 = vpop.f32.mrb[0].mxu0
        %v3310 = vadd.f32 %v3233, %v3309
        %v3311 = vpop.f32.mrb[0].mxu0
        %3312 = vmatprep.mubr.bf16.mxu0 0
        %3313 = vmatmul.mubr.bf16.gmra.mrb[0].mxu0 %v3254
        %v3314 = vpop.f32.mrb[0].mxu0
        %v3315 = vadd.f32 %v3238, %v3314
        %v3316 = vpop.f32.mrb[0].mxu0
        %v3317 = vpop.f32.mrb[0].mxu0
        %v3318 = vadd.f32 %v3241, %v3317
        %v3319 = vpop.f32.mrb[0].mxu0
        %3320 = vdwg.mxu0
        %v3321 = vadd.f32 %v3291, %v1208
        %v3322 = vadd.f32 %v3294, %v1208
        %v3323 = vadd.f32 %v3299, %v1208
        %v3324 = vadd.f32 %v3302, %v1208
        %v3325 = vadd.f32 %v3307, %v1208
        %v3326 = vadd.f32 %v3310, %v1208
        %v3327 = vadd.f32 %v3315, %v1208
        %v3328 = vadd.f32 %v3318, %v1208
        %v3329 = vxor.u32 %v3321, 2147483648
        %v3330 = vxor.u32 %v3322, 2147483648
        %v3331 = vxor.u32 %v3323, 2147483648
        %v3332 = vxor.u32 %v3324, 2147483648
        %v3333 = vxor.u32 %v3325, 2147483648
        %v3334 = vxor.u32 %v3326, 2147483648
        %v3335 = vxor.u32 %v3327, 2147483648
        %v3336 = vxor.u32 %v3328, 2147483648
        %v3337 = vmul.f32 %v3329, 1.442695
        %v3338 = vpow.pop %v3337
        %v3339 = vmul.f32 %v3330, 1.442695
        %v3340 = vpow.pop %v3339
        %v3341 = vmul.f32 %v3331, 1.442695
        %v3342 = vpow.pop %v3341
        %v3343 = vmul.f32 %v3332, 1.442695
        %v3344 = vpow.pop %v3343
        %v3345 = vmul.f32 %v3333, 1.442695
        %v3346 = vpow.pop %v3345
        %v3347 = vmul.f32 %v3334, 1.442695
        %v3348 = vpow.pop %v3347
        %v3349 = vmul.f32 %v3335, 1.442695
        %v3350 = vpow.pop %v3349
        %v3351 = vmul.f32 %v3336, 1.442695
        %v3352 = vpow.pop %v3351
        %v3353 = vadd.f32 %v3338, 1.0
        %v3354 = vadd.f32 %v3340, 1.0
        %v3355 = vadd.f32 %v3342, 1.0
        %v3356 = vadd.f32 %v3344, 1.0
        %v3357 = vadd.f32 %v3346, 1.0
        %v3358 = vadd.f32 %v3348, 1.0
        %v3359 = vadd.f32 %v3350, 1.0
        %v3360 = vadd.f32 %v3352, 1.0
        %v3361 = vrcp.pop %v3353
        %v3362 = vmul.f32 1.0, %v3361
        %v3363 = vrcp.pop %v3354
        %v3364 = vmul.f32 1.0, %v3363
        %v3365 = vrcp.pop %v3355
        %v3366 = vmul.f32 1.0, %v3365
        %v3367 = vrcp.pop %v3356
        %v3368 = vmul.f32 1.0, %v3367
        %v3369 = vrcp.pop %v3357
        %v3370 = vmul.f32 1.0, %v3369
        %v3371 = vrcp.pop %v3358
        %v3372 = vmul.f32 1.0, %v3371
        %v3373 = vrcp.pop %v3359
        %v3374 = vmul.f32 1.0, %v3373
        %v3375 = vrcp.pop %v3360
        %v3376 = vmul.f32 1.0, %v3375
        %3377 = vmatprep.subr.bf16.mxu0 0
        %3378 = vmatpush1.bf16.msra.mxu0 %v1283
        %3379 = vmatprep.subr.bf16.mxu0 0
        %3380 = vmatpush1.bf16.msra.mxu0 %v1284
        %3381 = vmatprep.subr.bf16.mxu0 0
        %3382 = vmatpush1.bf16.msra.mxu0 0
        %3383 = vmatprep.subr.bf16.mxu0 0
        %3384 = vmatpush1.bf16.msra.mxu0 0
        %3385 = vmatprep.subr.bf16.mxu0 0
        %3386 = vmatpush1.bf16.msra.mxu0 0
        %3387 = vmatprep.subr.bf16.mxu0 0
        %3388 = vmatpush1.bf16.msra.mxu0 0
        %3389 = vmatprep.subr.bf16.mxu0 0
        %3390 = vmatpush1.bf16.msra.mxu0 0
        %3391 = vmatprep.subr.bf16.mxu0 0
        %3392 = vmatpush1.bf16.msra.mxu0 0
        %3393 = vmatprep.subr.bf16.mxu0 0
        %3394 = vmatpush1.bf16.msra.mxu0 0
        %3395 = vmatprep.subr.bf16.mxu0 0
        %3396 = vmatpush1.bf16.msra.mxu0 0
        %3397 = vmatprep.subr.bf16.mxu0 0
        %3398 = vmatpush1.bf16.msra.mxu0 0
        %3399 = vmatprep.subr.bf16.mxu0 0
        %3400 = vmatpush1.bf16.msra.mxu0 0
        %3401 = vmatprep.subr.bf16.mxu0 0
        %3402 = vmatpush1.bf16.msra.mxu0 0
        %3403 = vmatprep.subr.bf16.mxu0 0
        %3404 = vmatpush1.bf16.msra.mxu0 0
        %3405 = vmatprep.subr.bf16.mxu0 0
        %3406 = vmatpush1.bf16.msra.mxu0 0
        %3407 = vmatprep.subr.bf16.mxu0 0
        %3408 = vmatpush1.bf16.msra.mxu0 0
        %3409 = vmatprep.mubr.bf16.mxu0 0
        %3410 = vmatmul.mubr.bf16.gmra.mrb[0].mxu0 %v2738
        %v3411 = vpop.f32.mrb[0].mxu0
        %v3412 = vadd.f32 0.0, %v3411
        %v3413 = vpop.f32.mrb[0].mxu0
        %v3414 = vpop.f32.mrb[0].mxu0
        %v3415 = vadd.f32 0.0, %v3414
        %v3416 = vpop.f32.mrb[0].mxu0
        %3417 = vmatprep.mubr.bf16.mxu0 0
        %3418 = vmatmul.mubr.bf16.gmra.mrb[0].mxu0 %v2741
        %v3419 = vpop.f32.mrb[0].mxu0
        %v3420 = vadd.f32 0.0, %v3419
        %v3421 = vpop.f32.mrb[0].mxu0
        %v3422 = vpop.f32.mrb[0].mxu0
        %v3423 = vadd.f32 0.0, %v3422
        %v3424 = vpop.f32.mrb[0].mxu0
        %3425 = vmatprep.mubr.bf16.mxu0 0
        %3426 = vmatmul.mubr.bf16.gmra.mrb[0].mxu0 %v2744
        %v3427 = vpop.f32.mrb[0].mxu0
        %v3428 = vadd.f32 0.0, %v3427
        %v3429 = vpop.f32.mrb[0].mxu0
        %v3430 = vpop.f32.mrb[0].mxu0
        %v3431 = vadd.f32 0.0, %v3430
        %v3432 = vpop.f32.mrb[0].mxu0
        %3433 = vmatprep.mubr.bf16.mxu0 0
        %3434 = vmatmul.mubr.bf16.gmra.mrb[0].mxu0 %v2747
        %v3435 = vpop.f32.mrb[0].mxu0
        %v3436 = vadd.f32 0.0, %v3435
        %v3437 = vpop.f32.mrb[0].mxu0
        %v3438 = vpop.f32.mrb[0].mxu0
        %v3439 = vadd.f32 0.0, %v3438
        %v3440 = vpop.f32.mrb[0].mxu0
        %3441 = vdwg.mxu0
        %3442 = vmatprep.subr.bf16.mxu0 0
        %3443 = vmatpush1.bf16.msra.mxu0 %v1360
        %3444 = vmatprep.subr.bf16.mxu0 0
        %3445 = vmatpush1.bf16.msra.mxu0 %v1361
        %3446 = vmatprep.subr.bf16.mxu0 0
        %3447 = vmatpush1.bf16.msra.mxu0 0
        %3448 = vmatprep.subr.bf16.mxu0 0
        %3449 = vmatpush1.bf16.msra.mxu0 0
        %3450 = vmatprep.subr.bf16.mxu0 0
        %3451 = vmatpush1.bf16.msra.mxu0 0
        %3452 = vmatprep.subr.bf16.mxu0 0
        %3453 = vmatpush1.bf16.msra.mxu0 0
        %3454 = vmatprep.subr.bf16.mxu0 0
        %3455 = vmatpush1.bf16.msra.mxu0 0
        %3456 = vmatprep.subr.bf16.mxu0 0
        %3457 = vmatpush1.bf16.msra.mxu0 0
        %3458 = vmatprep.subr.bf16.mxu0 0
        %3459 = vmatpush1.bf16.msra.mxu0 0
        %3460 = vmatprep.subr.bf16.mxu0 0
        %3461 = vmatpush1.bf16.msra.mxu0 0
        %3462 = vmatprep.subr.bf16.mxu0 0
        %3463 = vmatpush1.bf16.msra.mxu0 0
        %3464 = vmatprep.subr.bf16.mxu0 0
        %3465 = vmatpush1.bf16.msra.mxu0 0
        %3466 = vmatprep.subr.bf16.mxu0 0
        %3467 = vmatpush1.bf16.msra.mxu0 0
        %3468 = vmatprep.subr.bf16.mxu0 0
        %3469 = vmatpush1.bf16.msra.mxu0 0
        %3470 = vmatprep.subr.bf16.mxu0 0
        %3471 = vmatpush1.bf16.msra.mxu0 0
        %3472 = vmatprep.subr.bf16.mxu0 0
        %3473 = vmatpush1.bf16.msra.mxu0 0
        %3474 = vmatprep.mubr.bf16.mxu0 0
        %3475 = vmatmul.mubr.bf16.gmra.mrb[0].mxu0 %v3245
        %v3476 = vpop.f32.mrb[0].mxu0
        %v3477 = vadd.f32 %v3412, %v3476
        %v3478 = vpop.f32.mrb[0].mxu0
        %v3479 = vpop.f32.mrb[0].mxu0
        %v3480 = vadd.f32 %v3415, %v3479
        %v3481 = vpop.f32.mrb[0].mxu0
        %3482 = vmatprep.mubr.bf16.mxu0 0
        %3483 = vmatmul.mubr.bf16.gmra.mrb[0].mxu0 %v3248
        %v3484 = vpop.f32.mrb[0].mxu0
        %v3485 = vadd.f32 %v3420, %v3484
        %v3486 = vpop.f32.mrb[0].mxu0
        %v3487 = vpop.f32.mrb[0].mxu0
        %v3488 = vadd.f32 %v3423, %v3487
        %v3489 = vpop.f32.mrb[0].mxu0
        %3490 = vmatprep.mubr.bf16.mxu0 0
        %3491 = vmatmul.mubr.bf16.gmra.mrb[0].mxu0 %v3251
        %v3492 = vpop.f32.mrb[0].mxu0
        %v3493 = vadd.f32 %v3428, %v3492
        %v3494 = vpop.f32.mrb[0].mxu0
        %v3495 = vpop.f32.mrb[0].mxu0
        %v3496 = vadd.f32 %v3431, %v3495
        %v3497 = vpop.f32.mrb[0].mxu0
        %3498 = vmatprep.mubr.bf16.mxu0 0
        %3499 = vmatmul.mubr.bf16.gmra.mrb[0].mxu0 %v3254
        %v3500 = vpop.f32.mrb[0].mxu0
        %v3501 = vadd.f32 %v3436, %v3500
        %v3502 = vpop.f32.mrb[0].mxu0
        %v3503 = vpop.f32.mrb[0].mxu0
        %v3504 = vadd.f32 %v3439, %v3503
        %v3505 = vpop.f32.mrb[0].mxu0
        %3506 = vdwg.mxu0
        %v3507 = vadd.f32 %v3477, %v1432
        %v3508 = vadd.f32 %v3480, %v1432
        %v3509 = vadd.f32 %v3485, %v1432
        %v3510 = vadd.f32 %v3488, %v1432
        %v3511 = vadd.f32 %v3493, %v1432
        %v3512 = vadd.f32 %v3496, %v1432
        %v3513 = vadd.f32 %v3501, %v1432
        %v3514 = vadd.f32 %v3504, %v1432
        %v3515 = vxor.u32 %v3507, 2147483648
        %v3516 = vxor.u32 %v3508, 2147483648
        %v3517 = vxor.u32 %v3509, 2147483648
        %v3518 = vxor.u32 %v3510, 2147483648
        %v3519 = vxor.u32 %v3511, 2147483648
        %v3520 = vxor.u32 %v3512, 2147483648
        %v3521 = vxor.u32 %v3513, 2147483648
        %v3522 = vxor.u32 %v3514, 2147483648
        %v3523 = vmul.f32 %v3515, 1.442695
        %v3524 = vpow.pop %v3523
        %v3525 = vmul.f32 %v3516, 1.442695
        %v3526 = vpow.pop %v3525
        %v3527 = vmul.f32 %v3517, 1.442695
        %v3528 = vpow.pop %v3527
        %v3529 = vmul.f32 %v3518, 1.442695
        %v3530 = vpow.pop %v3529
        %v3531 = vmul.f32 %v3519, 1.442695
        %v3532 = vpow.pop %v3531
        %v3533 = vmul.f32 %v3520, 1.442695
        %v3534 = vpow.pop %v3533
        %v3535 = vmul.f32 %v3521, 1.442695
        %v3536 = vpow.pop %v3535
        %v3537 = vmul.f32 %v3522, 1.442695
        %v3538 = vpow.pop %v3537
        %v3539 = vadd.f32 %v3524, 1.0
        %v3540 = vadd.f32 %v3526, 1.0
        %v3541 = vadd.f32 %v3528, 1.0
        %v3542 = vadd.f32 %v3530, 1.0
        %v3543 = vadd.f32 %v3532, 1.0
        %v3544 = vadd.f32 %v3534, 1.0
        %v3545 = vadd.f32 %v3536, 1.0
        %v3546 = vadd.f32 %v3538, 1.0
        %v3547 = vrcp.pop %v3539
        %v3548 = vmul.f32 1.0, %v3547
        %v3549 = vrcp.pop %v3540
        %v3550 = vmul.f32 1.0, %v3549
        %v3551 = vrcp.pop %v3541
        %v3552 = vmul.f32 1.0, %v3551
        %v3553 = vrcp.pop %v3542
        %v3554 = vmul.f32 1.0, %v3553
        %v3555 = vrcp.pop %v3543
        %v3556 = vmul.f32 1.0, %v3555
        %v3557 = vrcp.pop %v3544
        %v3558 = vmul.f32 1.0, %v3557
        %v3559 = vrcp.pop %v3545
        %v3560 = vmul.f32 1.0, %v3559
        %v3561 = vrcp.pop %v3546
        %v3562 = vmul.f32 1.0, %v3561
        %3563 = vmatprep.subr.bf16.mxu0 0
        %3564 = vmatpush1.bf16.msra.mxu0 %v1506
        %3565 = vmatprep.subr.bf16.mxu0 0
        %3566 = vmatpush1.bf16.msra.mxu0 %v1507
        %3567 = vmatprep.subr.bf16.mxu0 0
        %3568 = vmatpush1.bf16.msra.mxu0 0
        %3569 = vmatprep.subr.bf16.mxu0 0
        %3570 = vmatpush1.bf16.msra.mxu0 0
        %3571 = vmatprep.subr.bf16.mxu0 0
        %3572 = vmatpush1.bf16.msra.mxu0 0
        %3573 = vmatprep.subr.bf16.mxu0 0
        %3574 = vmatpush1.bf16.msra.mxu0 0
        %3575 = vmatprep.subr.bf16.mxu0 0
        %3576 = vmatpush1.bf16.msra.mxu0 0
        %3577 = vmatprep.subr.bf16.mxu0 0
        %3578 = vmatpush1.bf16.msra.mxu0 0
        %3579 = vmatprep.subr.bf16.mxu0 0
        %3580 = vmatpush1.bf16.msra.mxu0 0
        %3581 = vmatprep.subr.bf16.mxu0 0
        %3582 = vmatpush1.bf16.msra.mxu0 0
        %3583 = vmatprep.subr.bf16.mxu0 0
        %3584 = vmatpush1.bf16.msra.mxu0 0
        %3585 = vmatprep.subr.bf16.mxu0 0
        %3586 = vmatpush1.bf16.msra.mxu0 0
        %3587 = vmatprep.subr.bf16.mxu0 0
        %3588 = vmatpush1.bf16.msra.mxu0 0
        %3589 = vmatprep.subr.bf16.mxu0 0
        %3590 = vmatpush1.bf16.msra.mxu0 0
        %3591 = vmatprep.subr.bf16.mxu0 0
        %3592 = vmatpush1.bf16.msra.mxu0 0
        %3593 = vmatprep.subr.bf16.mxu0 0
        %3594 = vmatpush1.bf16.msra.mxu0 0
        %3595 = vmatprep.mubr.bf16.mxu0 0
        %3596 = vmatmul.mubr.bf16.gmra.mrb[0].mxu0 %v3245
        %v3597 = vpop.f32.mrb[0].mxu0
        %v3598 = vadd.f32 %v1497, %v3597
        %v3599 = vpop.f32.mrb[0].mxu0
        %v3600 = vpop.f32.mrb[0].mxu0
        %v3601 = vadd.f32 %v1497, %v3600
        %v3602 = vpop.f32.mrb[0].mxu0
        %3603 = vmatprep.mubr.bf16.mxu0 0
        %3604 = vmatmul.mubr.bf16.gmra.mrb[0].mxu0 %v3248
        %v3605 = vpop.f32.mrb[0].mxu0
        %v3606 = vadd.f32 %v1497, %v3605
        %v3607 = vpop.f32.mrb[0].mxu0
        %v3608 = vpop.f32.mrb[0].mxu0
        %v3609 = vadd.f32 %v1497, %v3608
        %v3610 = vpop.f32.mrb[0].mxu0
        %3611 = vmatprep.mubr.bf16.mxu0 0
        %3612 = vmatmul.mubr.bf16.gmra.mrb[0].mxu0 %v3251
        %v3613 = vpop.f32.mrb[0].mxu0
        %v3614 = vadd.f32 %v1497, %v3613
        %v3615 = vpop.f32.mrb[0].mxu0
        %v3616 = vpop.f32.mrb[0].mxu0
        %v3617 = vadd.f32 %v1497, %v3616
        %v3618 = vpop.f32.mrb[0].mxu0
        %3619 = vmatprep.mubr.bf16.mxu0 0
        %3620 = vmatmul.mubr.bf16.gmra.mrb[0].mxu0 %v3254
        %v3621 = vpop.f32.mrb[0].mxu0
        %v3622 = vadd.f32 %v1497, %v3621
        %v3623 = vpop.f32.mrb[0].mxu0
        %v3624 = vpop.f32.mrb[0].mxu0
        %v3625 = vadd.f32 %v1497, %v3624
        %v3626 = vpop.f32.mrb[0].mxu0
        %3627 = vdwg.mxu0
        %3628 = vmatprep.subr.bf16.mxu0 0
        %3629 = vmatpush1.bf16.msra.mxu0 %v1592
        %3630 = vmatprep.subr.bf16.mxu0 0
        %3631 = vmatpush1.bf16.msra.mxu0 %v1593
        %3632 = vmatprep.subr.bf16.mxu0 0
        %3633 = vmatpush1.bf16.msra.mxu0 0
        %3634 = vmatprep.subr.bf16.mxu0 0
        %3635 = vmatpush1.bf16.msra.mxu0 0
        %3636 = vmatprep.subr.bf16.mxu0 0
        %3637 = vmatpush1.bf16.msra.mxu0 0
        %3638 = vmatprep.subr.bf16.mxu0 0
        %3639 = vmatpush1.bf16.msra.mxu0 0
        %3640 = vmatprep.subr.bf16.mxu0 0
        %3641 = vmatpush1.bf16.msra.mxu0 0
        %3642 = vmatprep.subr.bf16.mxu0 0
        %3643 = vmatpush1.bf16.msra.mxu0 0
        %3644 = vmatprep.subr.bf16.mxu0 0
        %3645 = vmatpush1.bf16.msra.mxu0 0
        %3646 = vmatprep.subr.bf16.mxu0 0
        %3647 = vmatpush1.bf16.msra.mxu0 0
        %3648 = vmatprep.subr.bf16.mxu0 0
        %3649 = vmatpush1.bf16.msra.mxu0 0
        %3650 = vmatprep.subr.bf16.mxu0 0
        %3651 = vmatpush1.bf16.msra.mxu0 0
        %3652 = vmatprep.subr.bf16.mxu0 0
        %3653 = vmatpush1.bf16.msra.mxu0 0
        %3654 = vmatprep.subr.bf16.mxu0 0
        %3655 = vmatpush1.bf16.msra.mxu0 0
        %3656 = vmatprep.subr.bf16.mxu0 0
        %3657 = vmatpush1.bf16.msra.mxu0 0
        %3658 = vmatprep.subr.bf16.mxu0 0
        %3659 = vmatpush1.bf16.msra.mxu0 0
        %3660 = vmatprep.mubr.bf16.mxu0 0
        %3661 = vmatmul.mubr.bf16.gmra.mrb[0].mxu0 %v2738
        %v3662 = vpop.f32.mrb[0].mxu0
        %v3663 = vadd.f32 %v1583, %v3662
        %v3664 = vpop.f32.mrb[0].mxu0
        %v3665 = vpop.f32.mrb[0].mxu0
        %v3666 = vadd.f32 %v1583, %v3665
        %v3667 = vpop.f32.mrb[0].mxu0
        %3668 = vmatprep.mubr.bf16.mxu0 0
        %3669 = vmatmul.mubr.bf16.gmra.mrb[0].mxu0 %v2741
        %v3670 = vpop.f32.mrb[0].mxu0
        %v3671 = vadd.f32 %v1583, %v3670
        %v3672 = vpop.f32.mrb[0].mxu0
        %v3673 = vpop.f32.mrb[0].mxu0
        %v3674 = vadd.f32 %v1583, %v3673
        %v3675 = vpop.f32.mrb[0].mxu0
        %3676 = vmatprep.mubr.bf16.mxu0 0
        %3677 = vmatmul.mubr.bf16.gmra.mrb[0].mxu0 %v2744
        %v3678 = vpop.f32.mrb[0].mxu0
        %v3679 = vadd.f32 %v1583, %v3678
        %v3680 = vpop.f32.mrb[0].mxu0
        %v3681 = vpop.f32.mrb[0].mxu0
        %v3682 = vadd.f32 %v1583, %v3681
        %v3683 = vpop.f32.mrb[0].mxu0
        %3684 = vmatprep.mubr.bf16.mxu0 0
        %3685 = vmatmul.mubr.bf16.gmra.mrb[0].mxu0 %v2747
        %v3686 = vpop.f32.mrb[0].mxu0
        %v3687 = vadd.f32 %v1583, %v3686
        %v3688 = vpop.f32.mrb[0].mxu0
        %v3689 = vpop.f32.mrb[0].mxu0
        %v3690 = vadd.f32 %v1583, %v3689
        %v3691 = vpop.f32.mrb[0].mxu0
        %3692 = vdwg.mxu0
        %v3693 = vmul.f32 %v3362, %v3663
        %v3694 = vmul.f32 %v3364, %v3666
        %v3695 = vmul.f32 %v3366, %v3671
        %v3696 = vmul.f32 %v3368, %v3674
        %v3697 = vmul.f32 %v3370, %v3679
        %v3698 = vmul.f32 %v3372, %v3682
        %v3699 = vmul.f32 %v3374, %v3687
        %v3700 = vmul.f32 %v3376, %v3690
        %v3701 = vadd.f32 %v3598, %v3693
        %v3702 = vadd.f32 %v3601, %v3694
        %v3703 = vadd.f32 %v3606, %v3695
        %v3704 = vadd.f32 %v3609, %v3696
        %v3705 = vadd.f32 %v3614, %v3697
        %v3706 = vadd.f32 %v3617, %v3698
        %v3707 = vadd.f32 %v3622, %v3699
        %v3708 = vadd.f32 %v3625, %v3700
        %v3709 = vtanh.pop %v3701
        %v3710 = vtanh.pop %v3702
        %v3711 = vtanh.pop %v3703
        %v3712 = vtanh.pop %v3704
        %v3713 = vtanh.pop %v3705
        %v3714 = vtanh.pop %v3706
        %v3715 = vtanh.pop %v3707
        %v3716 = vtanh.pop %v3708
        %v3717 = vsub.f32 1.0, %v3548
        %v3718 = vsub.f32 1.0, %v3550
        %v3719 = vsub.f32 1.0, %v3552
        %v3720 = vsub.f32 1.0, %v3554
        %v3721 = vsub.f32 1.0, %v3556
        %v3722 = vsub.f32 1.0, %v3558
        %v3723 = vsub.f32 1.0, %v3560
        %v3724 = vsub.f32 1.0, %v3562
        %v3725 = vmul.f32 %v3717, %v3709
        %v3726 = vmul.f32 %v3718, %v3710
        %v3727 = vmul.f32 %v3719, %v3711
        %v3728 = vmul.f32 %v3720, %v3712
        %v3729 = vmul.f32 %v3721, %v3713
        %v3730 = vmul.f32 %v3722, %v3714
        %v3731 = vmul.f32 %v3723, %v3715
        %v3732 = vmul.f32 %v3724, %v3716
        %v3733 = vmul.f32 %v3548, %v2725
        %v3734 = vmul.f32 %v3550, %v2726
        %v3735 = vmul.f32 %v3552, %v2727
        %v3736 = vmul.f32 %v3554, %v2728
        %v3737 = vmul.f32 %v3556, %v2729
        %v3738 = vmul.f32 %v3558, %v2730
        %v3739 = vmul.f32 %v3560, %v2731
        %v3740 = vmul.f32 %v3562, %v2732
        %v3741 = vadd.f32 %v3725, %v3733
        %v3742 = vadd.f32 %v3726, %v3734
        %v3743 = vadd.f32 %v3727, %v3735
        %v3744 = vadd.f32 %v3728, %v3736
        %v3745 = vadd.f32 %v3729, %v3737
        %v3746 = vadd.f32 %v3730, %v3738
        %v3747 = vadd.f32 %v3731, %v3739
        %v3748 = vadd.f32 %v3732, %v3740
        %v3749 = vpack.c.bf16 %v3742, %v3741
        %v3750 = vpack.c.bf16 %v3744, %v3743
        %v3751 = vpack.c.bf16 %v3746, %v3745
        %v3752 = vpack.c.bf16 %v3748, %v3747
        %v3754 = vsel %vm431, %v3749, 0
        %v3757 = vsel %vm431, %v3750, 0
        %v3760 = vsel %vm431, %v3751, 0
        %v3763 = vsel %vm431, %v3752, 0
        %3765 = vmatprep.subr.bf16.mxu0 0
        %3766 = vmatpush1.bf16.msra.mxu0 %v427
        %3767 = vmatprep.subr.bf16.mxu0 0
        %3768 = vmatpush1.bf16.msra.mxu0 %v428
        %3769 = vmatprep.subr.bf16.mxu0 0
        %3770 = vmatpush1.bf16.msra.mxu0 0
        %3771 = vmatprep.subr.bf16.mxu0 0
        %3772 = vmatpush1.bf16.msra.mxu0 0
        %3773 = vmatprep.subr.bf16.mxu0 0
        %3774 = vmatpush1.bf16.msra.mxu0 0
        %3775 = vmatprep.subr.bf16.mxu0 0
        %3776 = vmatpush1.bf16.msra.mxu0 0
        %3777 = vmatprep.subr.bf16.mxu0 0
        %3778 = vmatpush1.bf16.msra.mxu0 0
        %3779 = vmatprep.subr.bf16.mxu0 0
        %3780 = vmatpush1.bf16.msra.mxu0 0
        %3781 = vmatprep.subr.bf16.mxu0 0
        %3782 = vmatpush1.bf16.msra.mxu0 0
        %3783 = vmatprep.subr.bf16.mxu0 0
        %3784 = vmatpush1.bf16.msra.mxu0 0
        %3785 = vmatprep.subr.bf16.mxu0 0
        %3786 = vmatpush1.bf16.msra.mxu0 0
        %3787 = vmatprep.subr.bf16.mxu0 0
        %3788 = vmatpush1.bf16.msra.mxu0 0
        %3789 = vmatprep.subr.bf16.mxu0 0
        %3790 = vmatpush1.bf16.msra.mxu0 0
        %3791 = vmatprep.subr.bf16.mxu0 0
        %3792 = vmatpush1.bf16.msra.mxu0 0
        %3793 = vmatprep.subr.bf16.mxu0 0
        %3794 = vmatpush1.bf16.msra.mxu0 0
        %3795 = vmatprep.subr.bf16.mxu0 0
        %3796 = vmatpush1.bf16.msra.mxu0 0
        %3797 = vmatprep.mubr.bf16.mxu0 0
        %3798 = vmatmul.mubr.bf16.gmra.mrb[0].mxu0 %v3754
        %v3799 = vpop.f32.mrb[0].mxu0
        %v3800 = vadd.f32 0.0, %v3799
        %v3801 = vpop.f32.mrb[0].mxu0
        %v3802 = vpop.f32.mrb[0].mxu0
        %v3803 = vadd.f32 0.0, %v3802
        %v3804 = vpop.f32.mrb[0].mxu0
        %3805 = vmatprep.mubr.bf16.mxu0 0
        %3806 = vmatmul.mubr.bf16.gmra.mrb[0].mxu0 %v3757
        %v3807 = vpop.f32.mrb[0].mxu0
        %v3808 = vadd.f32 0.0, %v3807
        %v3809 = vpop.f32.mrb[0].mxu0
        %v3810 = vpop.f32.mrb[0].mxu0
        %v3811 = vadd.f32 0.0, %v3810
        %v3812 = vpop.f32.mrb[0].mxu0
        %3813 = vmatprep.mubr.bf16.mxu0 0
        %3814 = vmatmul.mubr.bf16.gmra.mrb[0].mxu0 %v3760
        %v3815 = vpop.f32.mrb[0].mxu0
        %v3816 = vadd.f32 0.0, %v3815
        %v3817 = vpop.f32.mrb[0].mxu0
        %v3818 = vpop.f32.mrb[0].mxu0
        %v3819 = vadd.f32 0.0, %v3818
        %v3820 = vpop.f32.mrb[0].mxu0
        %3821 = vmatprep.mubr.bf16.mxu0 0
        %3822 = vmatmul.mubr.bf16.gmra.mrb[0].mxu0 %v3763
        %v3823 = vpop.f32.mrb[0].mxu0
        %v3824 = vadd.f32 0.0, %v3823
        %v3825 = vpop.f32.mrb[0].mxu0
        %v3826 = vpop.f32.mrb[0].mxu0
        %v3827 = vadd.f32 0.0, %v3826
        %v3828 = vpop.f32.mrb[0].mxu0
        %3829 = vdwg.mxu0
        %v3830 = vpack.c.bf16 %v3803, %v3800
        %v3831 = vpack.c.bf16 %v3811, %v3808
        %v3832 = vpack.c.bf16 %v3819, %v3816
        %v3833 = vpack.c.bf16 %v3827, %v3824
        %3834 = vmatprep.subr.bf16.mxu0 0
        %3835 = vmatpush1.bf16.msra.mxu0 %v3830
        %3836 = vmatprep.subr.bf16.mxu0 0
        %3837 = vmatpush1.bf16.msra.mxu0 %v3831
        %3838 = vmatprep.subr.bf16.mxu0 0
        %3839 = vmatpush1.bf16.msra.mxu0 %v3832
        %3840 = vmatprep.subr.bf16.mxu0 0
        %3841 = vmatpush1.bf16.msra.mxu0 %v3833
        %3842 = vmatprep.subr.bf16.mxu0 0
        %3843 = vmatpush1.bf16.msra.mxu0 0
        %3844 = vmatprep.subr.bf16.mxu0 0
        %3845 = vmatpush1.bf16.msra.mxu0 0
        %3846 = vmatprep.subr.bf16.mxu0 0
        %3847 = vmatpush1.bf16.msra.mxu0 0
        %3848 = vmatprep.subr.bf16.mxu0 0
        %3849 = vmatpush1.bf16.msra.mxu0 0
        %3850 = vmatprep.subr.bf16.mxu0 0
        %3851 = vmatpush1.bf16.msra.mxu0 0
        %3852 = vmatprep.subr.bf16.mxu0 0
        %3853 = vmatpush1.bf16.msra.mxu0 0
        %3854 = vmatprep.subr.bf16.mxu0 0
        %3855 = vmatpush1.bf16.msra.mxu0 0
        %3856 = vmatprep.subr.bf16.mxu0 0
        %3857 = vmatpush1.bf16.msra.mxu0 0
        %3858 = vmatprep.subr.bf16.mxu0 0
        %3859 = vmatpush1.bf16.msra.mxu0 0
        %3860 = vmatprep.subr.bf16.mxu0 0
        %3861 = vmatpush1.bf16.msra.mxu0 0
        %3862 = vmatprep.subr.bf16.mxu0 0
        %3863 = vmatpush1.bf16.msra.mxu0 0
        %3864 = vmatprep.subr.bf16.mxu0 0
        %3865 = vmatpush1.bf16.msra.mxu0 0
        %3866 = vmatprep.mubr.bf16.mxu0 0
        %3867 = vmatmul.mubr.bf16.gmra.mrb[0].mxu0 %v543
        %v3868 = vpop.f32.mrb[0].mxu0
        %v3869 = vadd.f32 0.0, %v3868
        %v3870 = vpop.f32.mrb[0].mxu0
        %v3871 = vpop.f32.mrb[0].mxu0
        %v3872 = vadd.f32 0.0, %v3871
        %v3873 = vpop.f32.mrb[0].mxu0
        %3874 = vmatprep.mubr.bf16.mxu0 0
        %3875 = vmatmul.mubr.bf16.gmra.mrb[0].mxu0 %v546
        %v3876 = vpop.f32.mrb[0].mxu0
        %v3877 = vadd.f32 0.0, %v3876
        %v3878 = vpop.f32.mrb[0].mxu0
        %v3879 = vpop.f32.mrb[0].mxu0
        %v3880 = vadd.f32 0.0, %v3879
        %v3881 = vpop.f32.mrb[0].mxu0
        %3882 = vmatprep.mubr.bf16.mxu0 0
        %3883 = vmatmul.mubr.bf16.gmra.mrb[0].mxu0 %v549
        %v3884 = vpop.f32.mrb[0].mxu0
        %v3885 = vadd.f32 0.0, %v3884
        %v3886 = vpop.f32.mrb[0].mxu0
        %v3887 = vpop.f32.mrb[0].mxu0
        %v3888 = vadd.f32 0.0, %v3887
        %v3889 = vpop.f32.mrb[0].mxu0
        %3890 = vmatprep.mubr.bf16.mxu0 0
        %3891 = vmatmul.mubr.bf16.gmra.mrb[0].mxu0 %v552
        %v3892 = vpop.f32.mrb[0].mxu0
        %v3893 = vadd.f32 0.0, %v3892
        %v3894 = vpop.f32.mrb[0].mxu0
        %v3895 = vpop.f32.mrb[0].mxu0
        %v3896 = vadd.f32 0.0, %v3895
        %v3897 = vpop.f32.mrb[0].mxu0
        %3898 = vdwg.mxu0
        %v3899 = vadd.f32 %v407, %v3869
        %v3900 = vadd.f32 %v408, %v3872
        %v3901 = vadd.f32 %v409, %v3877
        %v3902 = vadd.f32 %v410, %v3880
        %v3903 = vadd.f32 %v411, %v3885
        %v3904 = vadd.f32 %v412, %v3888
        %v3905 = vadd.f32 %v413, %v3893
        %v3906 = vadd.f32 %v414, %v3896
        %3907 = vmatprep.subr.bf16.mxu0 0
        %3908 = vmatpush1.bf16.msra.mxu0 %v640
        %3909 = vmatprep.subr.bf16.mxu0 0
        %3910 = vmatpush1.bf16.msra.mxu0 %v641
        %3911 = vmatprep.subr.bf16.mxu0 0
        %3912 = vmatpush1.bf16.msra.mxu0 0
        %3913 = vmatprep.subr.bf16.mxu0 0
        %3914 = vmatpush1.bf16.msra.mxu0 0
        %3915 = vmatprep.subr.bf16.mxu0 0
        %3916 = vmatpush1.bf16.msra.mxu0 0
        %3917 = vmatprep.subr.bf16.mxu0 0
        %3918 = vmatpush1.bf16.msra.mxu0 0
        %3919 = vmatprep.subr.bf16.mxu0 0
        %3920 = vmatpush1.bf16.msra.mxu0 0
        %3921 = vmatprep.subr.bf16.mxu0 0
        %3922 = vmatpush1.bf16.msra.mxu0 0
        %3923 = vmatprep.subr.bf16.mxu0 0
        %3924 = vmatpush1.bf16.msra.mxu0 0
        %3925 = vmatprep.subr.bf16.mxu0 0
        %3926 = vmatpush1.bf16.msra.mxu0 0
        %3927 = vmatprep.subr.bf16.mxu0 0
        %3928 = vmatpush1.bf16.msra.mxu0 0
        %3929 = vmatprep.subr.bf16.mxu0 0
        %3930 = vmatpush1.bf16.msra.mxu0 0
        %3931 = vmatprep.subr.bf16.mxu0 0
        %3932 = vmatpush1.bf16.msra.mxu0 0
        %3933 = vmatprep.subr.bf16.mxu0 0
        %3934 = vmatpush1.bf16.msra.mxu0 0
        %3935 = vmatprep.subr.bf16.mxu0 0
        %3936 = vmatpush1.bf16.msra.mxu0 0
        %3937 = vmatprep.subr.bf16.mxu0 0
        %3938 = vmatpush1.bf16.msra.mxu0 0
        %3939 = vmatprep.mubr.bf16.mxu0 0
        %3940 = vmatmul.mubr.bf16.gmra.mrb[0].mxu0 %v3754
        %v3941 = vpop.f32.mrb[0].mxu0
        %v3942 = vadd.f32 0.0, %v3941
        %v3943 = vpop.f32.mrb[0].mxu0
        %v3944 = vpop.f32.mrb[0].mxu0
        %v3945 = vadd.f32 0.0, %v3944
        %v3946 = vpop.f32.mrb[0].mxu0
        %3947 = vmatprep.mubr.bf16.mxu0 0
        %3948 = vmatmul.mubr.bf16.gmra.mrb[0].mxu0 %v3757
        %v3949 = vpop.f32.mrb[0].mxu0
        %v3950 = vadd.f32 0.0, %v3949
        %v3951 = vpop.f32.mrb[0].mxu0
        %v3952 = vpop.f32.mrb[0].mxu0
        %v3953 = vadd.f32 0.0, %v3952
        %v3954 = vpop.f32.mrb[0].mxu0
        %3955 = vmatprep.mubr.bf16.mxu0 0
        %3956 = vmatmul.mubr.bf16.gmra.mrb[0].mxu0 %v3760
        %v3957 = vpop.f32.mrb[0].mxu0
        %v3958 = vadd.f32 0.0, %v3957
        %v3959 = vpop.f32.mrb[0].mxu0
        %v3960 = vpop.f32.mrb[0].mxu0
        %v3961 = vadd.f32 0.0, %v3960
        %v3962 = vpop.f32.mrb[0].mxu0
        %3963 = vmatprep.mubr.bf16.mxu0 0
        %3964 = vmatmul.mubr.bf16.gmra.mrb[0].mxu0 %v3763
        %v3965 = vpop.f32.mrb[0].mxu0
        %v3966 = vadd.f32 0.0, %v3965
        %v3967 = vpop.f32.mrb[0].mxu0
        %v3968 = vpop.f32.mrb[0].mxu0
        %v3969 = vadd.f32 0.0, %v3968
        %v3970 = vpop.f32.mrb[0].mxu0
        %3971 = vdwg.mxu0
        %v3972 = vpack.c.bf16 %v3945, %v3942
        %v3973 = vpack.c.bf16 %v3953, %v3950
        %v3974 = vpack.c.bf16 %v3961, %v3958
        %v3975 = vpack.c.bf16 %v3969, %v3966
        %3976 = vmatprep.subr.bf16.mxu0 0
        %3977 = vmatpush1.bf16.msra.mxu0 %v3972
        %3978 = vmatprep.subr.bf16.mxu0 0
        %3979 = vmatpush1.bf16.msra.mxu0 %v3973
        %3980 = vmatprep.subr.bf16.mxu0 0
        %3981 = vmatpush1.bf16.msra.mxu0 %v3974
        %3982 = vmatprep.subr.bf16.mxu0 0
        %3983 = vmatpush1.bf16.msra.mxu0 %v3975
        %3984 = vmatprep.subr.bf16.mxu0 0
        %3985 = vmatpush1.bf16.msra.mxu0 0
        %3986 = vmatprep.subr.bf16.mxu0 0
        %3987 = vmatpush1.bf16.msra.mxu0 0
        %3988 = vmatprep.subr.bf16.mxu0 0
        %3989 = vmatpush1.bf16.msra.mxu0 0
        %3990 = vmatprep.subr.bf16.mxu0 0
        %3991 = vmatpush1.bf16.msra.mxu0 0
        %3992 = vmatprep.subr.bf16.mxu0 0
        %3993 = vmatpush1.bf16.msra.mxu0 0
        %3994 = vmatprep.subr.bf16.mxu0 0
        %3995 = vmatpush1.bf16.msra.mxu0 0
        %3996 = vmatprep.subr.bf16.mxu0 0
        %3997 = vmatpush1.bf16.msra.mxu0 0
        %3998 = vmatprep.subr.bf16.mxu0 0
        %3999 = vmatpush1.bf16.msra.mxu0 0
        %4000 = vmatprep.subr.bf16.mxu0 0
        %4001 = vmatpush1.bf16.msra.mxu0 0
        %4002 = vmatprep.subr.bf16.mxu0 0
        %4003 = vmatpush1.bf16.msra.mxu0 0
        %4004 = vmatprep.subr.bf16.mxu0 0
        %4005 = vmatpush1.bf16.msra.mxu0 0
        %4006 = vmatprep.subr.bf16.mxu0 0
        %4007 = vmatpush1.bf16.msra.mxu0 0
        %4008 = vmatprep.mubr.bf16.mxu0 0
        %4009 = vmatmul.mubr.bf16.gmra.mrb[0].mxu0 %v743
        %v4010 = vpop.f32.mrb[0].mxu0
        %v4011 = vadd.f32 0.0, %v4010
        %v4012 = vpop.f32.mrb[0].mxu0
        %v4013 = vpop.f32.mrb[0].mxu0
        %v4014 = vadd.f32 0.0, %v4013
        %v4015 = vpop.f32.mrb[0].mxu0
        %4016 = vmatprep.mubr.bf16.mxu0 0
        %4017 = vmatmul.mubr.bf16.gmra.mrb[0].mxu0 %v746
        %v4018 = vpop.f32.mrb[0].mxu0
        %v4019 = vadd.f32 0.0, %v4018
        %v4020 = vpop.f32.mrb[0].mxu0
        %v4021 = vpop.f32.mrb[0].mxu0
        %v4022 = vadd.f32 0.0, %v4021
        %v4023 = vpop.f32.mrb[0].mxu0
        %4024 = vmatprep.mubr.bf16.mxu0 0
        %4025 = vmatmul.mubr.bf16.gmra.mrb[0].mxu0 %v749
        %v4026 = vpop.f32.mrb[0].mxu0
        %v4027 = vadd.f32 0.0, %v4026
        %v4028 = vpop.f32.mrb[0].mxu0
        %v4029 = vpop.f32.mrb[0].mxu0
        %v4030 = vadd.f32 0.0, %v4029
        %v4031 = vpop.f32.mrb[0].mxu0
        %4032 = vmatprep.mubr.bf16.mxu0 0
        %4033 = vmatmul.mubr.bf16.gmra.mrb[0].mxu0 %v752
        %v4034 = vpop.f32.mrb[0].mxu0
        %v4035 = vadd.f32 0.0, %v4034
        %v4036 = vpop.f32.mrb[0].mxu0
        %v4037 = vpop.f32.mrb[0].mxu0
        %v4038 = vadd.f32 0.0, %v4037
        %v4039 = vpop.f32.mrb[0].mxu0
        %4040 = vdwg.mxu0
        %v4041 = vadd.f32 %v3899, %v4011
        %v4042 = vadd.f32 %v3900, %v4014
        %v4043 = vadd.f32 %v3901, %v4019
        %v4044 = vadd.f32 %v3902, %v4022
        %v4045 = vadd.f32 %v3903, %v4027
        %v4046 = vadd.f32 %v3904, %v4030
        %v4047 = vadd.f32 %v3905, %v4035
        %v4048 = vadd.f32 %v3906, %v4038
        %4049 = vmatprep.subr.bf16.mxu0 0
        %4050 = vmatpush1.bf16.msra.mxu0 %v840
        %4051 = vmatprep.subr.bf16.mxu0 0
        %4052 = vmatpush1.bf16.msra.mxu0 %v841
        %4053 = vmatprep.subr.bf16.mxu0 0
        %4054 = vmatpush1.bf16.msra.mxu0 0
        %4055 = vmatprep.subr.bf16.mxu0 0
        %4056 = vmatpush1.bf16.msra.mxu0 0
        %4057 = vmatprep.subr.bf16.mxu0 0
        %4058 = vmatpush1.bf16.msra.mxu0 0
        %4059 = vmatprep.subr.bf16.mxu0 0
        %4060 = vmatpush1.bf16.msra.mxu0 0
        %4061 = vmatprep.subr.bf16.mxu0 0
        %4062 = vmatpush1.bf16.msra.mxu0 0
        %4063 = vmatprep.subr.bf16.mxu0 0
        %4064 = vmatpush1.bf16.msra.mxu0 0
        %4065 = vmatprep.subr.bf16.mxu0 0
        %4066 = vmatpush1.bf16.msra.mxu0 0
        %4067 = vmatprep.subr.bf16.mxu0 0
        %4068 = vmatpush1.bf16.msra.mxu0 0
        %4069 = vmatprep.subr.bf16.mxu0 0
        %4070 = vmatpush1.bf16.msra.mxu0 0
        %4071 = vmatprep.subr.bf16.mxu0 0
        %4072 = vmatpush1.bf16.msra.mxu0 0
        %4073 = vmatprep.subr.bf16.mxu0 0
        %4074 = vmatpush1.bf16.msra.mxu0 0
        %4075 = vmatprep.subr.bf16.mxu0 0
        %4076 = vmatpush1.bf16.msra.mxu0 0
        %4077 = vmatprep.subr.bf16.mxu0 0
        %4078 = vmatpush1.bf16.msra.mxu0 0
        %4079 = vmatprep.subr.bf16.mxu0 0
        %4080 = vmatpush1.bf16.msra.mxu0 0
        %4081 = vmatprep.mubr.bf16.mxu0 0
        %4082 = vmatmul.mubr.bf16.gmra.mrb[0].mxu0 %v3754
        %v4083 = vpop.f32.mrb[0].mxu0
        %v4084 = vadd.f32 0.0, %v4083
        %v4085 = vpop.f32.mrb[0].mxu0
        %v4086 = vpop.f32.mrb[0].mxu0
        %v4087 = vadd.f32 0.0, %v4086
        %v4088 = vpop.f32.mrb[0].mxu0
        %4089 = vmatprep.mubr.bf16.mxu0 0
        %4090 = vmatmul.mubr.bf16.gmra.mrb[0].mxu0 %v3757
        %v4091 = vpop.f32.mrb[0].mxu0
        %v4092 = vadd.f32 0.0, %v4091
        %v4093 = vpop.f32.mrb[0].mxu0
        %v4094 = vpop.f32.mrb[0].mxu0
        %v4095 = vadd.f32 0.0, %v4094
        %v4096 = vpop.f32.mrb[0].mxu0
        %4097 = vmatprep.mubr.bf16.mxu0 0
        %4098 = vmatmul.mubr.bf16.gmra.mrb[0].mxu0 %v3760
        %v4099 = vpop.f32.mrb[0].mxu0
        %v4100 = vadd.f32 0.0, %v4099
        %v4101 = vpop.f32.mrb[0].mxu0
        %v4102 = vpop.f32.mrb[0].mxu0
        %v4103 = vadd.f32 0.0, %v4102
        %v4104 = vpop.f32.mrb[0].mxu0
        %4105 = vmatprep.mubr.bf16.mxu0 0
        %4106 = vmatmul.mubr.bf16.gmra.mrb[0].mxu0 %v3763
        %v4107 = vpop.f32.mrb[0].mxu0
        %v4108 = vadd.f32 0.0, %v4107
        %v4109 = vpop.f32.mrb[0].mxu0
        %v4110 = vpop.f32.mrb[0].mxu0
        %v4111 = vadd.f32 0.0, %v4110
        %v4112 = vpop.f32.mrb[0].mxu0
        %4113 = vdwg.mxu0
        %v4114 = vpack.c.bf16 %v4087, %v4084
        %v4115 = vpack.c.bf16 %v4095, %v4092
        %v4116 = vpack.c.bf16 %v4103, %v4100
        %v4117 = vpack.c.bf16 %v4111, %v4108
        %4118 = vmatprep.subr.bf16.mxu0 0
        %4119 = vmatpush1.bf16.msra.mxu0 %v4114
        %4120 = vmatprep.subr.bf16.mxu0 0
        %4121 = vmatpush1.bf16.msra.mxu0 %v4115
        %4122 = vmatprep.subr.bf16.mxu0 0
        %4123 = vmatpush1.bf16.msra.mxu0 %v4116
        %4124 = vmatprep.subr.bf16.mxu0 0
        %4125 = vmatpush1.bf16.msra.mxu0 %v4117
        %4126 = vmatprep.subr.bf16.mxu0 0
        %4127 = vmatpush1.bf16.msra.mxu0 0
        %4128 = vmatprep.subr.bf16.mxu0 0
        %4129 = vmatpush1.bf16.msra.mxu0 0
        %4130 = vmatprep.subr.bf16.mxu0 0
        %4131 = vmatpush1.bf16.msra.mxu0 0
        %4132 = vmatprep.subr.bf16.mxu0 0
        %4133 = vmatpush1.bf16.msra.mxu0 0
        %4134 = vmatprep.subr.bf16.mxu0 0
        %4135 = vmatpush1.bf16.msra.mxu0 0
        %4136 = vmatprep.subr.bf16.mxu0 0
        %4137 = vmatpush1.bf16.msra.mxu0 0
        %4138 = vmatprep.subr.bf16.mxu0 0
        %4139 = vmatpush1.bf16.msra.mxu0 0
        %4140 = vmatprep.subr.bf16.mxu0 0
        %4141 = vmatpush1.bf16.msra.mxu0 0
        %4142 = vmatprep.subr.bf16.mxu0 0
        %4143 = vmatpush1.bf16.msra.mxu0 0
        %4144 = vmatprep.subr.bf16.mxu0 0
        %4145 = vmatpush1.bf16.msra.mxu0 0
        %4146 = vmatprep.subr.bf16.mxu0 0
        %4147 = vmatpush1.bf16.msra.mxu0 0
        %4148 = vmatprep.subr.bf16.mxu0 0
        %4149 = vmatpush1.bf16.msra.mxu0 0
        %4150 = vmatprep.mubr.bf16.mxu0 0
        %4151 = vmatmul.mubr.bf16.gmra.mrb[0].mxu0 %v943
        %v4152 = vpop.f32.mrb[0].mxu0
        %v4153 = vadd.f32 0.0, %v4152
        %v4154 = vpop.f32.mrb[0].mxu0
        %v4155 = vpop.f32.mrb[0].mxu0
        %v4156 = vadd.f32 0.0, %v4155
        %v4157 = vpop.f32.mrb[0].mxu0
        %4158 = vmatprep.mubr.bf16.mxu0 0
        %4159 = vmatmul.mubr.bf16.gmra.mrb[0].mxu0 %v946
        %v4160 = vpop.f32.mrb[0].mxu0
        %v4161 = vadd.f32 0.0, %v4160
        %v4162 = vpop.f32.mrb[0].mxu0
        %v4163 = vpop.f32.mrb[0].mxu0
        %v4164 = vadd.f32 0.0, %v4163
        %v4165 = vpop.f32.mrb[0].mxu0
        %4166 = vmatprep.mubr.bf16.mxu0 0
        %4167 = vmatmul.mubr.bf16.gmra.mrb[0].mxu0 %v949
        %v4168 = vpop.f32.mrb[0].mxu0
        %v4169 = vadd.f32 0.0, %v4168
        %v4170 = vpop.f32.mrb[0].mxu0
        %v4171 = vpop.f32.mrb[0].mxu0
        %v4172 = vadd.f32 0.0, %v4171
        %v4173 = vpop.f32.mrb[0].mxu0
        %4174 = vmatprep.mubr.bf16.mxu0 0
        %4175 = vmatmul.mubr.bf16.gmra.mrb[0].mxu0 %v952
        %v4176 = vpop.f32.mrb[0].mxu0
        %v4177 = vadd.f32 0.0, %v4176
        %v4178 = vpop.f32.mrb[0].mxu0
        %v4179 = vpop.f32.mrb[0].mxu0
        %v4180 = vadd.f32 0.0, %v4179
        %v4181 = vpop.f32.mrb[0].mxu0
        %4182 = vdwg.mxu0
        %v4183 = vadd.f32 %v4041, %v4153
        %v4184 = vadd.f32 %v4042, %v4156
        %v4185 = vadd.f32 %v4043, %v4161
        %v4186 = vadd.f32 %v4044, %v4164
        %v4187 = vadd.f32 %v4045, %v4169
        %v4188 = vadd.f32 %v4046, %v4172
        %v4189 = vadd.f32 %v4047, %v4177
        %v4190 = vadd.f32 %v4048, %v4180
        %v4191 = vpack.c.bf16 %v4184, %v4183
        %v4192 = vpack.c.bf16 %v4186, %v4185
        %v4193 = vpack.c.bf16 %v4188, %v4187
        %v4194 = vpack.c.bf16 %v4190, %v4189
        %4195 = vmatprep.subr.bf16.mxu0 0
        %4196 = vmatpush1.bf16.msra.mxu0 %v1047
        %4197 = vmatprep.subr.bf16.mxu0 0
        %4198 = vmatpush1.bf16.msra.mxu0 %v1048
        %4199 = vmatprep.subr.bf16.mxu0 0
        %4200 = vmatpush1.bf16.msra.mxu0 0
        %4201 = vmatprep.subr.bf16.mxu0 0
        %4202 = vmatpush1.bf16.msra.mxu0 0
        %4203 = vmatprep.subr.bf16.mxu0 0
        %4204 = vmatpush1.bf16.msra.mxu0 0
        %4205 = vmatprep.subr.bf16.mxu0 0
        %4206 = vmatpush1.bf16.msra.mxu0 0
        %4207 = vmatprep.subr.bf16.mxu0 0
        %4208 = vmatpush1.bf16.msra.mxu0 0
        %4209 = vmatprep.subr.bf16.mxu0 0
        %4210 = vmatpush1.bf16.msra.mxu0 0
        %4211 = vmatprep.subr.bf16.mxu0 0
        %4212 = vmatpush1.bf16.msra.mxu0 0
        %4213 = vmatprep.subr.bf16.mxu0 0
        %4214 = vmatpush1.bf16.msra.mxu0 0
        %4215 = vmatprep.subr.bf16.mxu0 0
        %4216 = vmatpush1.bf16.msra.mxu0 0
        %4217 = vmatprep.subr.bf16.mxu0 0
        %4218 = vmatpush1.bf16.msra.mxu0 0
        %4219 = vmatprep.subr.bf16.mxu0 0
        %4220 = vmatpush1.bf16.msra.mxu0 0
        %4221 = vmatprep.subr.bf16.mxu0 0
        %4222 = vmatpush1.bf16.msra.mxu0 0
        %4223 = vmatprep.subr.bf16.mxu0 0
        %4224 = vmatpush1.bf16.msra.mxu0 0
        %4225 = vmatprep.subr.bf16.mxu0 0
        %4226 = vmatpush1.bf16.msra.mxu0 0
        %4227 = vmatprep.mubr.bf16.mxu0 0
        %4228 = vmatmul.mubr.bf16.gmra.mrb[0].mxu0 %v3754
        %v4229 = vpop.f32.mrb[0].mxu0
        %v4230 = vadd.f32 0.0, %v4229
        %v4231 = vpop.f32.mrb[0].mxu0
        %v4232 = vpop.f32.mrb[0].mxu0
        %v4233 = vadd.f32 0.0, %v4232
        %v4234 = vpop.f32.mrb[0].mxu0
        %4235 = vmatprep.mubr.bf16.mxu0 0
        %4236 = vmatmul.mubr.bf16.gmra.mrb[0].mxu0 %v3757
        %v4237 = vpop.f32.mrb[0].mxu0
        %v4238 = vadd.f32 0.0, %v4237
        %v4239 = vpop.f32.mrb[0].mxu0
        %v4240 = vpop.f32.mrb[0].mxu0
        %v4241 = vadd.f32 0.0, %v4240
        %v4242 = vpop.f32.mrb[0].mxu0
        %4243 = vmatprep.mubr.bf16.mxu0 0
        %4244 = vmatmul.mubr.bf16.gmra.mrb[0].mxu0 %v3760
        %v4245 = vpop.f32.mrb[0].mxu0
        %v4246 = vadd.f32 0.0, %v4245
        %v4247 = vpop.f32.mrb[0].mxu0
        %v4248 = vpop.f32.mrb[0].mxu0
        %v4249 = vadd.f32 0.0, %v4248
        %v4250 = vpop.f32.mrb[0].mxu0
        %4251 = vmatprep.mubr.bf16.mxu0 0
        %4252 = vmatmul.mubr.bf16.gmra.mrb[0].mxu0 %v3763
        %v4253 = vpop.f32.mrb[0].mxu0
        %v4254 = vadd.f32 0.0, %v4253
        %v4255 = vpop.f32.mrb[0].mxu0
        %v4256 = vpop.f32.mrb[0].mxu0
        %v4257 = vadd.f32 0.0, %v4256
        %v4258 = vpop.f32.mrb[0].mxu0
        %4259 = vdwg.mxu0
        %v4261 = vsel %vm431, %v4191, 0
        %v4264 = vsel %vm431, %v4192, 0
        %v4267 = vsel %vm431, %v4193, 0
        %v4270 = vsel %vm431, %v4194, 0
        %4272 = vmatprep.subr.bf16.mxu0 0
        %4273 = vmatpush1.bf16.msra.mxu0 %v1124
        %4274 = vmatprep.subr.bf16.mxu0 0
        %4275 = vmatpush1.bf16.msra.mxu0 %v1125
        %4276 = vmatprep.subr.bf16.mxu0 0
        %4277 = vmatpush1.bf16.msra.mxu0 0
        %4278 = vmatprep.subr.bf16.mxu0 0
        %4279 = vmatpush1.bf16.msra.mxu0 0
        %4280 = vmatprep.subr.bf16.mxu0 0
        %4281 = vmatpush1.bf16.msra.mxu0 0
        %4282 = vmatprep.subr.bf16.mxu0 0
        %4283 = vmatpush1.bf16.msra.mxu0 0
        %4284 = vmatprep.subr.bf16.mxu0 0
        %4285 = vmatpush1.bf16.msra.mxu0 0
        %4286 = vmatprep.subr.bf16.mxu0 0
        %4287 = vmatpush1.bf16.msra.mxu0 0
        %4288 = vmatprep.subr.bf16.mxu0 0
        %4289 = vmatpush1.bf16.msra.mxu0 0
        %4290 = vmatprep.subr.bf16.mxu0 0
        %4291 = vmatpush1.bf16.msra.mxu0 0
        %4292 = vmatprep.subr.bf16.mxu0 0
        %4293 = vmatpush1.bf16.msra.mxu0 0
        %4294 = vmatprep.subr.bf16.mxu0 0
        %4295 = vmatpush1.bf16.msra.mxu0 0
        %4296 = vmatprep.subr.bf16.mxu0 0
        %4297 = vmatpush1.bf16.msra.mxu0 0
        %4298 = vmatprep.subr.bf16.mxu0 0
        %4299 = vmatpush1.bf16.msra.mxu0 0
        %4300 = vmatprep.subr.bf16.mxu0 0
        %4301 = vmatpush1.bf16.msra.mxu0 0
        %4302 = vmatprep.subr.bf16.mxu0 0
        %4303 = vmatpush1.bf16.msra.mxu0 0
        %4304 = vmatprep.mubr.bf16.mxu0 0
        %4305 = vmatmul.mubr.bf16.gmra.mrb[0].mxu0 %v4261
        %v4306 = vpop.f32.mrb[0].mxu0
        %v4307 = vadd.f32 %v4230, %v4306
        %v4308 = vpop.f32.mrb[0].mxu0
        %v4309 = vpop.f32.mrb[0].mxu0
        %v4310 = vadd.f32 %v4233, %v4309
        %v4311 = vpop.f32.mrb[0].mxu0
        %4312 = vmatprep.mubr.bf16.mxu0 0
        %4313 = vmatmul.mubr.bf16.gmra.mrb[0].mxu0 %v4264
        %v4314 = vpop.f32.mrb[0].mxu0
        %v4315 = vadd.f32 %v4238, %v4314
        %v4316 = vpop.f32.mrb[0].mxu0
        %v4317 = vpop.f32.mrb[0].mxu0
        %v4318 = vadd.f32 %v4241, %v4317
        %v4319 = vpop.f32.mrb[0].mxu0
        %4320 = vmatprep.mubr.bf16.mxu0 0
        %4321 = vmatmul.mubr.bf16.gmra.mrb[0].mxu0 %v4267
        %v4322 = vpop.f32.mrb[0].mxu0
        %v4323 = vadd.f32 %v4246, %v4322
        %v4324 = vpop.f32.mrb[0].mxu0
        %v4325 = vpop.f32.mrb[0].mxu0
        %v4326 = vadd.f32 %v4249, %v4325
        %v4327 = vpop.f32.mrb[0].mxu0
        %4328 = vmatprep.mubr.bf16.mxu0 0
        %4329 = vmatmul.mubr.bf16.gmra.mrb[0].mxu0 %v4270
        %v4330 = vpop.f32.mrb[0].mxu0
        %v4331 = vadd.f32 %v4254, %v4330
        %v4332 = vpop.f32.mrb[0].mxu0
        %v4333 = vpop.f32.mrb[0].mxu0
        %v4334 = vadd.f32 %v4257, %v4333
        %v4335 = vpop.f32.mrb[0].mxu0
        %4336 = vdwg.mxu0
        %v4337 = vadd.f32 %v4307, %v1208
        %v4338 = vadd.f32 %v4310, %v1208
        %v4339 = vadd.f32 %v4315, %v1208
        %v4340 = vadd.f32 %v4318, %v1208
        %v4341 = vadd.f32 %v4323, %v1208
        %v4342 = vadd.f32 %v4326, %v1208
        %v4343 = vadd.f32 %v4331, %v1208
        %v4344 = vadd.f32 %v4334, %v1208
        %v4345 = vxor.u32 %v4337, 2147483648
        %v4346 = vxor.u32 %v4338, 2147483648
        %v4347 = vxor.u32 %v4339, 2147483648
        %v4348 = vxor.u32 %v4340, 2147483648
        %v4349 = vxor.u32 %v4341, 2147483648
        %v4350 = vxor.u32 %v4342, 2147483648
        %v4351 = vxor.u32 %v4343, 2147483648
        %v4352 = vxor.u32 %v4344, 2147483648
        %v4353 = vmul.f32 %v4345, 1.442695
        %v4354 = vpow.pop %v4353
        %v4355 = vmul.f32 %v4346, 1.442695
        %v4356 = vpow.pop %v4355
        %v4357 = vmul.f32 %v4347, 1.442695
        %v4358 = vpow.pop %v4357
        %v4359 = vmul.f32 %v4348, 1.442695
        %v4360 = vpow.pop %v4359
        %v4361 = vmul.f32 %v4349, 1.442695
        %v4362 = vpow.pop %v4361
        %v4363 = vmul.f32 %v4350, 1.442695
        %v4364 = vpow.pop %v4363
        %v4365 = vmul.f32 %v4351, 1.442695
        %v4366 = vpow.pop %v4365
        %v4367 = vmul.f32 %v4352, 1.442695
        %v4368 = vpow.pop %v4367
        %v4369 = vadd.f32 %v4354, 1.0
        %v4370 = vadd.f32 %v4356, 1.0
        %v4371 = vadd.f32 %v4358, 1.0
        %v4372 = vadd.f32 %v4360, 1.0
        %v4373 = vadd.f32 %v4362, 1.0
        %v4374 = vadd.f32 %v4364, 1.0
        %v4375 = vadd.f32 %v4366, 1.0
        %v4376 = vadd.f32 %v4368, 1.0
        %v4377 = vrcp.pop %v4369
        %v4378 = vmul.f32 1.0, %v4377
        %v4379 = vrcp.pop %v4370
        %v4380 = vmul.f32 1.0, %v4379
        %v4381 = vrcp.pop %v4371
        %v4382 = vmul.f32 1.0, %v4381
        %v4383 = vrcp.pop %v4372
        %v4384 = vmul.f32 1.0, %v4383
        %v4385 = vrcp.pop %v4373
        %v4386 = vmul.f32 1.0, %v4385
        %v4387 = vrcp.pop %v4374
        %v4388 = vmul.f32 1.0, %v4387
        %v4389 = vrcp.pop %v4375
        %v4390 = vmul.f32 1.0, %v4389
        %v4391 = vrcp.pop %v4376
        %v4392 = vmul.f32 1.0, %v4391
        %4393 = vmatprep.subr.bf16.mxu0 0
        %4394 = vmatpush1.bf16.msra.mxu0 %v1283
        %4395 = vmatprep.subr.bf16.mxu0 0
        %4396 = vmatpush1.bf16.msra.mxu0 %v1284
        %4397 = vmatprep.subr.bf16.mxu0 0
        %4398 = vmatpush1.bf16.msra.mxu0 0
        %4399 = vmatprep.subr.bf16.mxu0 0
        %4400 = vmatpush1.bf16.msra.mxu0 0
        %4401 = vmatprep.subr.bf16.mxu0 0
        %4402 = vmatpush1.bf16.msra.mxu0 0
        %4403 = vmatprep.subr.bf16.mxu0 0
        %4404 = vmatpush1.bf16.msra.mxu0 0
        %4405 = vmatprep.subr.bf16.mxu0 0
        %4406 = vmatpush1.bf16.msra.mxu0 0
        %4407 = vmatprep.subr.bf16.mxu0 0
        %4408 = vmatpush1.bf16.msra.mxu0 0
        %4409 = vmatprep.subr.bf16.mxu0 0
        %4410 = vmatpush1.bf16.msra.mxu0 0
        %4411 = vmatprep.subr.bf16.mxu0 0
        %4412 = vmatpush1.bf16.msra.mxu0 0
        %4413 = vmatprep.subr.bf16.mxu0 0
        %4414 = vmatpush1.bf16.msra.mxu0 0
        %4415 = vmatprep.subr.bf16.mxu0 0
        %4416 = vmatpush1.bf16.msra.mxu0 0
        %4417 = vmatprep.subr.bf16.mxu0 0
        %4418 = vmatpush1.bf16.msra.mxu0 0
        %4419 = vmatprep.subr.bf16.mxu0 0
        %4420 = vmatpush1.bf16.msra.mxu0 0
        %4421 = vmatprep.subr.bf16.mxu0 0
        %4422 = vmatpush1.bf16.msra.mxu0 0
        %4423 = vmatprep.subr.bf16.mxu0 0
        %4424 = vmatpush1.bf16.msra.mxu0 0
        %4425 = vmatprep.mubr.bf16.mxu0 0
        %4426 = vmatmul.mubr.bf16.gmra.mrb[0].mxu0 %v3754
        %v4427 = vpop.f32.mrb[0].mxu0
        %v4428 = vadd.f32 0.0, %v4427
        %v4429 = vpop.f32.mrb[0].mxu0
        %v4430 = vpop.f32.mrb[0].mxu0
        %v4431 = vadd.f32 0.0, %v4430
        %v4432 = vpop.f32.mrb[0].mxu0
        %4433 = vmatprep.mubr.bf16.mxu0 0
        %4434 = vmatmul.mubr.bf16.gmra.mrb[0].mxu0 %v3757
        %v4435 = vpop.f32.mrb[0].mxu0
        %v4436 = vadd.f32 0.0, %v4435
        %v4437 = vpop.f32.mrb[0].mxu0
        %v4438 = vpop.f32.mrb[0].mxu0
        %v4439 = vadd.f32 0.0, %v4438
        %v4440 = vpop.f32.mrb[0].mxu0
        %4441 = vmatprep.mubr.bf16.mxu0 0
        %4442 = vmatmul.mubr.bf16.gmra.mrb[0].mxu0 %v3760
        %v4443 = vpop.f32.mrb[0].mxu0
        %v4444 = vadd.f32 0.0, %v4443
        %v4445 = vpop.f32.mrb[0].mxu0
        %v4446 = vpop.f32.mrb[0].mxu0
        %v4447 = vadd.f32 0.0, %v4446
        %v4448 = vpop.f32.mrb[0].mxu0
        %4449 = vmatprep.mubr.bf16.mxu0 0
        %4450 = vmatmul.mubr.bf16.gmra.mrb[0].mxu0 %v3763
        %v4451 = vpop.f32.mrb[0].mxu0
        %v4452 = vadd.f32 0.0, %v4451
        %v4453 = vpop.f32.mrb[0].mxu0
        %v4454 = vpop.f32.mrb[0].mxu0
        %v4455 = vadd.f32 0.0, %v4454
        %v4456 = vpop.f32.mrb[0].mxu0
        %4457 = vdwg.mxu0
        %4458 = vmatprep.subr.bf16.mxu0 0
        %4459 = vmatpush1.bf16.msra.mxu0 %v1360
        %4460 = vmatprep.subr.bf16.mxu0 0
        %4461 = vmatpush1.bf16.msra.mxu0 %v1361
        %4462 = vmatprep.subr.bf16.mxu0 0
        %4463 = vmatpush1.bf16.msra.mxu0 0
        %4464 = vmatprep.subr.bf16.mxu0 0
        %4465 = vmatpush1.bf16.msra.mxu0 0
        %4466 = vmatprep.subr.bf16.mxu0 0
        %4467 = vmatpush1.bf16.msra.mxu0 0
        %4468 = vmatprep.subr.bf16.mxu0 0
        %4469 = vmatpush1.bf16.msra.mxu0 0
        %4470 = vmatprep.subr.bf16.mxu0 0
        %4471 = vmatpush1.bf16.msra.mxu0 0
        %4472 = vmatprep.subr.bf16.mxu0 0
        %4473 = vmatpush1.bf16.msra.mxu0 0
        %4474 = vmatprep.subr.bf16.mxu0 0
        %4475 = vmatpush1.bf16.msra.mxu0 0
        %4476 = vmatprep.subr.bf16.mxu0 0
        %4477 = vmatpush1.bf16.msra.mxu0 0
        %4478 = vmatprep.subr.bf16.mxu0 0
        %4479 = vmatpush1.bf16.msra.mxu0 0
        %4480 = vmatprep.subr.bf16.mxu0 0
        %4481 = vmatpush1.bf16.msra.mxu0 0
        %4482 = vmatprep.subr.bf16.mxu0 0
        %4483 = vmatpush1.bf16.msra.mxu0 0
        %4484 = vmatprep.subr.bf16.mxu0 0
        %4485 = vmatpush1.bf16.msra.mxu0 0
        %4486 = vmatprep.subr.bf16.mxu0 0
        %4487 = vmatpush1.bf16.msra.mxu0 0
        %4488 = vmatprep.subr.bf16.mxu0 0
        %4489 = vmatpush1.bf16.msra.mxu0 0
        %4490 = vmatprep.mubr.bf16.mxu0 0
        %4491 = vmatmul.mubr.bf16.gmra.mrb[0].mxu0 %v4261
        %v4492 = vpop.f32.mrb[0].mxu0
        %v4493 = vadd.f32 %v4428, %v4492
        %v4494 = vpop.f32.mrb[0].mxu0
        %v4495 = vpop.f32.mrb[0].mxu0
        %v4496 = vadd.f32 %v4431, %v4495
        %v4497 = vpop.f32.mrb[0].mxu0
        %4498 = vmatprep.mubr.bf16.mxu0 0
        %4499 = vmatmul.mubr.bf16.gmra.mrb[0].mxu0 %v4264
        %v4500 = vpop.f32.mrb[0].mxu0
        %v4501 = vadd.f32 %v4436, %v4500
        %v4502 = vpop.f32.mrb[0].mxu0
        %v4503 = vpop.f32.mrb[0].mxu0
        %v4504 = vadd.f32 %v4439, %v4503
        %v4505 = vpop.f32.mrb[0].mxu0
        %4506 = vmatprep.mubr.bf16.mxu0 0
        %4507 = vmatmul.mubr.bf16.gmra.mrb[0].mxu0 %v4267
        %v4508 = vpop.f32.mrb[0].mxu0
        %v4509 = vadd.f32 %v4444, %v4508
        %v4510 = vpop.f32.mrb[0].mxu0
        %v4511 = vpop.f32.mrb[0].mxu0
        %v4512 = vadd.f32 %v4447, %v4511
        %v4513 = vpop.f32.mrb[0].mxu0
        %4514 = vmatprep.mubr.bf16.mxu0 0
        %4515 = vmatmul.mubr.bf16.gmra.mrb[0].mxu0 %v4270
        %v4516 = vpop.f32.mrb[0].mxu0
        %v4517 = vadd.f32 %v4452, %v4516
        %v4518 = vpop.f32.mrb[0].mxu0
        %v4519 = vpop.f32.mrb[0].mxu0
        %v4520 = vadd.f32 %v4455, %v4519
        %v4521 = vpop.f32.mrb[0].mxu0
        %4522 = vdwg.mxu0
        %v4523 = vadd.f32 %v4493, %v1432
        %v4524 = vadd.f32 %v4496, %v1432
        %v4525 = vadd.f32 %v4501, %v1432
        %v4526 = vadd.f32 %v4504, %v1432
        %v4527 = vadd.f32 %v4509, %v1432
        %v4528 = vadd.f32 %v4512, %v1432
        %v4529 = vadd.f32 %v4517, %v1432
        %v4530 = vadd.f32 %v4520, %v1432
        %v4531 = vxor.u32 %v4523, 2147483648
        %v4532 = vxor.u32 %v4524, 2147483648
        %v4533 = vxor.u32 %v4525, 2147483648
        %v4534 = vxor.u32 %v4526, 2147483648
        %v4535 = vxor.u32 %v4527, 2147483648
        %v4536 = vxor.u32 %v4528, 2147483648
        %v4537 = vxor.u32 %v4529, 2147483648
        %v4538 = vxor.u32 %v4530, 2147483648
        %v4539 = vmul.f32 %v4531, 1.442695
        %v4540 = vpow.pop %v4539
        %v4541 = vmul.f32 %v4532, 1.442695
        %v4542 = vpow.pop %v4541
        %v4543 = vmul.f32 %v4533, 1.442695
        %v4544 = vpow.pop %v4543
        %v4545 = vmul.f32 %v4534, 1.442695
        %v4546 = vpow.pop %v4545
        %v4547 = vmul.f32 %v4535, 1.442695
        %v4548 = vpow.pop %v4547
        %v4549 = vmul.f32 %v4536, 1.442695
        %v4550 = vpow.pop %v4549
        %v4551 = vmul.f32 %v4537, 1.442695
        %v4552 = vpow.pop %v4551
        %v4553 = vmul.f32 %v4538, 1.442695
        %v4554 = vpow.pop %v4553
        %v4555 = vadd.f32 %v4540, 1.0
        %v4556 = vadd.f32 %v4542, 1.0
        %v4557 = vadd.f32 %v4544, 1.0
        %v4558 = vadd.f32 %v4546, 1.0
        %v4559 = vadd.f32 %v4548, 1.0
        %v4560 = vadd.f32 %v4550, 1.0
        %v4561 = vadd.f32 %v4552, 1.0
        %v4562 = vadd.f32 %v4554, 1.0
        %v4563 = vrcp.pop %v4555
        %v4564 = vmul.f32 1.0, %v4563
        %v4565 = vrcp.pop %v4556
        %v4566 = vmul.f32 1.0, %v4565
        %v4567 = vrcp.pop %v4557
        %v4568 = vmul.f32 1.0, %v4567
        %v4569 = vrcp.pop %v4558
        %v4570 = vmul.f32 1.0, %v4569
        %v4571 = vrcp.pop %v4559
        %v4572 = vmul.f32 1.0, %v4571
        %v4573 = vrcp.pop %v4560
        %v4574 = vmul.f32 1.0, %v4573
        %v4575 = vrcp.pop %v4561
        %v4576 = vmul.f32 1.0, %v4575
        %v4577 = vrcp.pop %v4562
        %v4578 = vmul.f32 1.0, %v4577
        %4579 = vmatprep.subr.bf16.mxu0 0
        %4580 = vmatpush1.bf16.msra.mxu0 %v1506
        %4581 = vmatprep.subr.bf16.mxu0 0
        %4582 = vmatpush1.bf16.msra.mxu0 %v1507
        %4583 = vmatprep.subr.bf16.mxu0 0
        %4584 = vmatpush1.bf16.msra.mxu0 0
        %4585 = vmatprep.subr.bf16.mxu0 0
        %4586 = vmatpush1.bf16.msra.mxu0 0
        %4587 = vmatprep.subr.bf16.mxu0 0
        %4588 = vmatpush1.bf16.msra.mxu0 0
        %4589 = vmatprep.subr.bf16.mxu0 0
        %4590 = vmatpush1.bf16.msra.mxu0 0
        %4591 = vmatprep.subr.bf16.mxu0 0
        %4592 = vmatpush1.bf16.msra.mxu0 0
        %4593 = vmatprep.subr.bf16.mxu0 0
        %4594 = vmatpush1.bf16.msra.mxu0 0
        %4595 = vmatprep.subr.bf16.mxu0 0
        %4596 = vmatpush1.bf16.msra.mxu0 0
        %4597 = vmatprep.subr.bf16.mxu0 0
        %4598 = vmatpush1.bf16.msra.mxu0 0
        %4599 = vmatprep.subr.bf16.mxu0 0
        %4600 = vmatpush1.bf16.msra.mxu0 0
        %4601 = vmatprep.subr.bf16.mxu0 0
        %4602 = vmatpush1.bf16.msra.mxu0 0
        %4603 = vmatprep.subr.bf16.mxu0 0
        %4604 = vmatpush1.bf16.msra.mxu0 0
        %4605 = vmatprep.subr.bf16.mxu0 0
        %4606 = vmatpush1.bf16.msra.mxu0 0
        %4607 = vmatprep.subr.bf16.mxu0 0
        %4608 = vmatpush1.bf16.msra.mxu0 0
        %4609 = vmatprep.subr.bf16.mxu0 0
        %4610 = vmatpush1.bf16.msra.mxu0 0
        %4611 = vmatprep.mubr.bf16.mxu0 0
        %4612 = vmatmul.mubr.bf16.gmra.mrb[0].mxu0 %v4261
        %v4613 = vpop.f32.mrb[0].mxu0
        %v4614 = vadd.f32 %v1497, %v4613
        %v4615 = vpop.f32.mrb[0].mxu0
        %v4616 = vpop.f32.mrb[0].mxu0
        %v4617 = vadd.f32 %v1497, %v4616
        %v4618 = vpop.f32.mrb[0].mxu0
        %4619 = vmatprep.mubr.bf16.mxu0 0
        %4620 = vmatmul.mubr.bf16.gmra.mrb[0].mxu0 %v4264
        %v4621 = vpop.f32.mrb[0].mxu0
        %v4622 = vadd.f32 %v1497, %v4621
        %v4623 = vpop.f32.mrb[0].mxu0
        %v4624 = vpop.f32.mrb[0].mxu0
        %v4625 = vadd.f32 %v1497, %v4624
        %v4626 = vpop.f32.mrb[0].mxu0
        %4627 = vmatprep.mubr.bf16.mxu0 0
        %4628 = vmatmul.mubr.bf16.gmra.mrb[0].mxu0 %v4267
        %v4629 = vpop.f32.mrb[0].mxu0
        %v4630 = vadd.f32 %v1497, %v4629
        %v4631 = vpop.f32.mrb[0].mxu0
        %v4632 = vpop.f32.mrb[0].mxu0
        %v4633 = vadd.f32 %v1497, %v4632
        %v4634 = vpop.f32.mrb[0].mxu0
        %4635 = vmatprep.mubr.bf16.mxu0 0
        %4636 = vmatmul.mubr.bf16.gmra.mrb[0].mxu0 %v4270
        %v4637 = vpop.f32.mrb[0].mxu0
        %v4638 = vadd.f32 %v1497, %v4637
        %v4639 = vpop.f32.mrb[0].mxu0
        %v4640 = vpop.f32.mrb[0].mxu0
        %v4641 = vadd.f32 %v1497, %v4640
        %v4642 = vpop.f32.mrb[0].mxu0
        %4643 = vdwg.mxu0
        %4644 = vmatprep.subr.bf16.mxu0 0
        %4645 = vmatpush1.bf16.msra.mxu0 %v1592
        %4646 = vmatprep.subr.bf16.mxu0 0
        %4647 = vmatpush1.bf16.msra.mxu0 %v1593
        %4648 = vmatprep.subr.bf16.mxu0 0
        %4649 = vmatpush1.bf16.msra.mxu0 0
        %4650 = vmatprep.subr.bf16.mxu0 0
        %4651 = vmatpush1.bf16.msra.mxu0 0
        %4652 = vmatprep.subr.bf16.mxu0 0
        %4653 = vmatpush1.bf16.msra.mxu0 0
        %4654 = vmatprep.subr.bf16.mxu0 0
        %4655 = vmatpush1.bf16.msra.mxu0 0
        %4656 = vmatprep.subr.bf16.mxu0 0
        %4657 = vmatpush1.bf16.msra.mxu0 0
        %4658 = vmatprep.subr.bf16.mxu0 0
        %4659 = vmatpush1.bf16.msra.mxu0 0
        %4660 = vmatprep.subr.bf16.mxu0 0
        %4661 = vmatpush1.bf16.msra.mxu0 0
        %4662 = vmatprep.subr.bf16.mxu0 0
        %4663 = vmatpush1.bf16.msra.mxu0 0
        %4664 = vmatprep.subr.bf16.mxu0 0
        %4665 = vmatpush1.bf16.msra.mxu0 0
        %4666 = vmatprep.subr.bf16.mxu0 0
        %4667 = vmatpush1.bf16.msra.mxu0 0
        %4668 = vmatprep.subr.bf16.mxu0 0
        %4669 = vmatpush1.bf16.msra.mxu0 0
        %4670 = vmatprep.subr.bf16.mxu0 0
        %4671 = vmatpush1.bf16.msra.mxu0 0
        %4672 = vmatprep.subr.bf16.mxu0 0
        %4673 = vmatpush1.bf16.msra.mxu0 0
        %4674 = vmatprep.subr.bf16.mxu0 0
        %4675 = vmatpush1.bf16.msra.mxu0 0
        %4676 = vmatprep.mubr.bf16.mxu0 0
        %4677 = vmatmul.mubr.bf16.gmra.mrb[0].mxu0 %v3754
        %v4678 = vpop.f32.mrb[0].mxu0
        %v4679 = vadd.f32 %v1583, %v4678
        %v4680 = vpop.f32.mrb[0].mxu0
        %v4681 = vpop.f32.mrb[0].mxu0
        %v4682 = vadd.f32 %v1583, %v4681
        %v4683 = vpop.f32.mrb[0].mxu0
        %4684 = vmatprep.mubr.bf16.mxu0 0
        %4685 = vmatmul.mubr.bf16.gmra.mrb[0].mxu0 %v3757
        %v4686 = vpop.f32.mrb[0].mxu0
        %v4687 = vadd.f32 %v1583, %v4686
        %v4688 = vpop.f32.mrb[0].mxu0
        %v4689 = vpop.f32.mrb[0].mxu0
        %v4690 = vadd.f32 %v1583, %v4689
        %v4691 = vpop.f32.mrb[0].mxu0
        %4692 = vmatprep.mubr.bf16.mxu0 0
        %4693 = vmatmul.mubr.bf16.gmra.mrb[0].mxu0 %v3760
        %v4694 = vpop.f32.mrb[0].mxu0
        %v4695 = vadd.f32 %v1583, %v4694
        %v4696 = vpop.f32.mrb[0].mxu0
        %v4697 = vpop.f32.mrb[0].mxu0
        %v4698 = vadd.f32 %v1583, %v4697
        %v4699 = vpop.f32.mrb[0].mxu0
        %4700 = vmatprep.mubr.bf16.mxu0 0
        %4701 = vmatmul.mubr.bf16.gmra.mrb[0].mxu0 %v3763
        %v4702 = vpop.f32.mrb[0].mxu0
        %v4703 = vadd.f32 %v1583, %v4702
        %v4704 = vpop.f32.mrb[0].mxu0
        %v4705 = vpop.f32.mrb[0].mxu0
        %v4706 = vadd.f32 %v1583, %v4705
        %v4707 = vpop.f32.mrb[0].mxu0
        %4708 = vdwg.mxu0
        %v4709 = vmul.f32 %v4378, %v4679
        %v4710 = vmul.f32 %v4380, %v4682
        %v4711 = vmul.f32 %v4382, %v4687
        %v4712 = vmul.f32 %v4384, %v4690
        %v4713 = vmul.f32 %v4386, %v4695
        %v4714 = vmul.f32 %v4388, %v4698
        %v4715 = vmul.f32 %v4390, %v4703
        %v4716 = vmul.f32 %v4392, %v4706
        %v4717 = vadd.f32 %v4614, %v4709
        %v4718 = vadd.f32 %v4617, %v4710
        %v4719 = vadd.f32 %v4622, %v4711
        %v4720 = vadd.f32 %v4625, %v4712
        %v4721 = vadd.f32 %v4630, %v4713
        %v4722 = vadd.f32 %v4633, %v4714
        %v4723 = vadd.f32 %v4638, %v4715
        %v4724 = vadd.f32 %v4641, %v4716
        %v4725 = vtanh.pop %v4717
        %v4726 = vtanh.pop %v4718
        %v4727 = vtanh.pop %v4719
        %v4728 = vtanh.pop %v4720
        %v4729 = vtanh.pop %v4721
        %v4730 = vtanh.pop %v4722
        %v4731 = vtanh.pop %v4723
        %v4732 = vtanh.pop %v4724
        %v4733 = vsub.f32 1.0, %v4564
        %v4734 = vsub.f32 1.0, %v4566
        %v4735 = vsub.f32 1.0, %v4568
        %v4736 = vsub.f32 1.0, %v4570
        %v4737 = vsub.f32 1.0, %v4572
        %v4738 = vsub.f32 1.0, %v4574
        %v4739 = vsub.f32 1.0, %v4576
        %v4740 = vsub.f32 1.0, %v4578
        %v4741 = vmul.f32 %v4733, %v4725
        %v4742 = vmul.f32 %v4734, %v4726
        %v4743 = vmul.f32 %v4735, %v4727
        %v4744 = vmul.f32 %v4736, %v4728
        %v4745 = vmul.f32 %v4737, %v4729
        %v4746 = vmul.f32 %v4738, %v4730
        %v4747 = vmul.f32 %v4739, %v4731
        %v4748 = vmul.f32 %v4740, %v4732
        %v4749 = vmul.f32 %v4564, %v3741
        %v4750 = vmul.f32 %v4566, %v3742
        %v4751 = vmul.f32 %v4568, %v3743
        %v4752 = vmul.f32 %v4570, %v3744
        %v4753 = vmul.f32 %v4572, %v3745
        %v4754 = vmul.f32 %v4574, %v3746
        %v4755 = vmul.f32 %v4576, %v3747
        %v4756 = vmul.f32 %v4578, %v3748
        %v4757 = vadd.f32 %v4741, %v4749
        %v4758 = vadd.f32 %v4742, %v4750
        %v4759 = vadd.f32 %v4743, %v4751
        %v4760 = vadd.f32 %v4744, %v4752
        %v4761 = vadd.f32 %v4745, %v4753
        %v4762 = vadd.f32 %v4746, %v4754
        %v4763 = vadd.f32 %v4747, %v4755
        %v4764 = vadd.f32 %v4748, %v4756
        %v4765 = vpack.c.bf16 %v4758, %v4757
        %v4766 = vpack.c.bf16 %v4760, %v4759
        %v4767 = vpack.c.bf16 %v4762, %v4761
        %v4768 = vpack.c.bf16 %v4764, %v4763
        %v4770 = vsel %vm431, %v4765, 0
        %v4773 = vsel %vm431, %v4766, 0
        %v4776 = vsel %vm431, %v4767, 0
        %v4779 = vsel %vm431, %v4768, 0
        %4781 = vmatprep.subr.bf16.mxu0 0
        %4782 = vmatpush1.bf16.msra.mxu0 %v427
        %4783 = vmatprep.subr.bf16.mxu0 0
        %4784 = vmatpush1.bf16.msra.mxu0 %v428
        %4785 = vmatprep.subr.bf16.mxu0 0
        %4786 = vmatpush1.bf16.msra.mxu0 0
        %4787 = vmatprep.subr.bf16.mxu0 0
        %4788 = vmatpush1.bf16.msra.mxu0 0
        %4789 = vmatprep.subr.bf16.mxu0 0
        %4790 = vmatpush1.bf16.msra.mxu0 0
        %4791 = vmatprep.subr.bf16.mxu0 0
        %4792 = vmatpush1.bf16.msra.mxu0 0
        %4793 = vmatprep.subr.bf16.mxu0 0
        %4794 = vmatpush1.bf16.msra.mxu0 0
        %4795 = vmatprep.subr.bf16.mxu0 0
        %4796 = vmatpush1.bf16.msra.mxu0 0
        %4797 = vmatprep.subr.bf16.mxu0 0
        %4798 = vmatpush1.bf16.msra.mxu0 0
        %4799 = vmatprep.subr.bf16.mxu0 0
        %4800 = vmatpush1.bf16.msra.mxu0 0
        %4801 = vmatprep.subr.bf16.mxu0 0
        %4802 = vmatpush1.bf16.msra.mxu0 0
        %4803 = vmatprep.subr.bf16.mxu0 0
        %4804 = vmatpush1.bf16.msra.mxu0 0
        %4805 = vmatprep.subr.bf16.mxu0 0
        %4806 = vmatpush1.bf16.msra.mxu0 0
        %4807 = vmatprep.subr.bf16.mxu0 0
        %4808 = vmatpush1.bf16.msra.mxu0 0
        %4809 = vmatprep.subr.bf16.mxu0 0
        %4810 = vmatpush1.bf16.msra.mxu0 0
        %4811 = vmatprep.subr.bf16.mxu0 0
        %4812 = vmatpush1.bf16.msra.mxu0 0
        %4813 = vmatprep.mubr.bf16.mxu0 0
        %4814 = vmatmul.mubr.bf16.gmra.mrb[0].mxu0 %v4770
        %v4815 = vpop.f32.mrb[0].mxu0
        %v4816 = vadd.f32 0.0, %v4815
        %v4817 = vpop.f32.mrb[0].mxu0
        %v4818 = vpop.f32.mrb[0].mxu0
        %v4819 = vadd.f32 0.0, %v4818
        %v4820 = vpop.f32.mrb[0].mxu0
        %4821 = vmatprep.mubr.bf16.mxu0 0
        %4822 = vmatmul.mubr.bf16.gmra.mrb[0].mxu0 %v4773
        %v4823 = vpop.f32.mrb[0].mxu0
        %v4824 = vadd.f32 0.0, %v4823
        %v4825 = vpop.f32.mrb[0].mxu0
        %v4826 = vpop.f32.mrb[0].mxu0
        %v4827 = vadd.f32 0.0, %v4826
        %v4828 = vpop.f32.mrb[0].mxu0
        %4829 = vmatprep.mubr.bf16.mxu0 0
        %4830 = vmatmul.mubr.bf16.gmra.mrb[0].mxu0 %v4776
        %v4831 = vpop.f32.mrb[0].mxu0
        %v4832 = vadd.f32 0.0, %v4831
        %v4833 = vpop.f32.mrb[0].mxu0
        %v4834 = vpop.f32.mrb[0].mxu0
        %v4835 = vadd.f32 0.0, %v4834
        %v4836 = vpop.f32.mrb[0].mxu0
        %4837 = vmatprep.mubr.bf16.mxu0 0
        %4838 = vmatmul.mubr.bf16.gmra.mrb[0].mxu0 %v4779
        %v4839 = vpop.f32.mrb[0].mxu0
        %v4840 = vadd.f32 0.0, %v4839
        %v4841 = vpop.f32.mrb[0].mxu0
        %v4842 = vpop.f32.mrb[0].mxu0
        %v4843 = vadd.f32 0.0, %v4842
        %v4844 = vpop.f32.mrb[0].mxu0
        %4845 = vdwg.mxu0
        %v4846 = vpack.c.bf16 %v4819, %v4816
        %v4847 = vpack.c.bf16 %v4827, %v4824
        %v4848 = vpack.c.bf16 %v4835, %v4832
        %v4849 = vpack.c.bf16 %v4843, %v4840
        %4850 = vmatprep.subr.bf16.mxu0 0
        %4851 = vmatpush1.bf16.msra.mxu0 %v4846
        %4852 = vmatprep.subr.bf16.mxu0 0
        %4853 = vmatpush1.bf16.msra.mxu0 %v4847
        %4854 = vmatprep.subr.bf16.mxu0 0
        %4855 = vmatpush1.bf16.msra.mxu0 %v4848
        %4856 = vmatprep.subr.bf16.mxu0 0
        %4857 = vmatpush1.bf16.msra.mxu0 %v4849
        %4858 = vmatprep.subr.bf16.mxu0 0
        %4859 = vmatpush1.bf16.msra.mxu0 0
        %4860 = vmatprep.subr.bf16.mxu0 0
        %4861 = vmatpush1.bf16.msra.mxu0 0
        %4862 = vmatprep.subr.bf16.mxu0 0
        %4863 = vmatpush1.bf16.msra.mxu0 0
        %4864 = vmatprep.subr.bf16.mxu0 0
        %4865 = vmatpush1.bf16.msra.mxu0 0
        %4866 = vmatprep.subr.bf16.mxu0 0
        %4867 = vmatpush1.bf16.msra.mxu0 0
        %4868 = vmatprep.subr.bf16.mxu0 0
        %4869 = vmatpush1.bf16.msra.mxu0 0
        %4870 = vmatprep.subr.bf16.mxu0 0
        %4871 = vmatpush1.bf16.msra.mxu0 0
        %4872 = vmatprep.subr.bf16.mxu0 0
        %4873 = vmatpush1.bf16.msra.mxu0 0
        %4874 = vmatprep.subr.bf16.mxu0 0
        %4875 = vmatpush1.bf16.msra.mxu0 0
        %4876 = vmatprep.subr.bf16.mxu0 0
        %4877 = vmatpush1.bf16.msra.mxu0 0
        %4878 = vmatprep.subr.bf16.mxu0 0
        %4879 = vmatpush1.bf16.msra.mxu0 0
        %4880 = vmatprep.subr.bf16.mxu0 0
        %4881 = vmatpush1.bf16.msra.mxu0 0
        %4882 = vmatprep.mubr.bf16.mxu0 0
        %4883 = vmatmul.mubr.bf16.gmra.mrb[0].mxu0 %v543
        %v4884 = vpop.f32.mrb[0].mxu0
        %v4885 = vadd.f32 0.0, %v4884
        %v4886 = vpop.f32.mrb[0].mxu0
        %v4887 = vpop.f32.mrb[0].mxu0
        %v4888 = vadd.f32 0.0, %v4887
        %v4889 = vpop.f32.mrb[0].mxu0
        %4890 = vmatprep.mubr.bf16.mxu0 0
        %4891 = vmatmul.mubr.bf16.gmra.mrb[0].mxu0 %v546
        %v4892 = vpop.f32.mrb[0].mxu0
        %v4893 = vadd.f32 0.0, %v4892
        %v4894 = vpop.f32.mrb[0].mxu0
        %v4895 = vpop.f32.mrb[0].mxu0
        %v4896 = vadd.f32 0.0, %v4895
        %v4897 = vpop.f32.mrb[0].mxu0
        %4898 = vmatprep.mubr.bf16.mxu0 0
        %4899 = vmatmul.mubr.bf16.gmra.mrb[0].mxu0 %v549
        %v4900 = vpop.f32.mrb[0].mxu0
        %v4901 = vadd.f32 0.0, %v4900
        %v4902 = vpop.f32.mrb[0].mxu0
        %v4903 = vpop.f32.mrb[0].mxu0
        %v4904 = vadd.f32 0.0, %v4903
        %v4905 = vpop.f32.mrb[0].mxu0
        %4906 = vmatprep.mubr.bf16.mxu0 0
        %4907 = vmatmul.mubr.bf16.gmra.mrb[0].mxu0 %v552
        %v4908 = vpop.f32.mrb[0].mxu0
        %v4909 = vadd.f32 0.0, %v4908
        %v4910 = vpop.f32.mrb[0].mxu0
        %v4911 = vpop.f32.mrb[0].mxu0
        %v4912 = vadd.f32 0.0, %v4911
        %v4913 = vpop.f32.mrb[0].mxu0
        %4914 = vdwg.mxu0
        %v4915 = vadd.f32 %v407, %v4885
        %v4916 = vadd.f32 %v408, %v4888
        %v4917 = vadd.f32 %v409, %v4893
        %v4918 = vadd.f32 %v410, %v4896
        %v4919 = vadd.f32 %v411, %v4901
        %v4920 = vadd.f32 %v412, %v4904
        %v4921 = vadd.f32 %v413, %v4909
        %v4922 = vadd.f32 %v414, %v4912
        %4923 = vmatprep.subr.bf16.mxu0 0
        %4924 = vmatpush1.bf16.msra.mxu0 %v640
        %4925 = vmatprep.subr.bf16.mxu0 0
        %4926 = vmatpush1.bf16.msra.mxu0 %v641
        %4927 = vmatprep.subr.bf16.mxu0 0
        %4928 = vmatpush1.bf16.msra.mxu0 0
        %4929 = vmatprep.subr.bf16.mxu0 0
        %4930 = vmatpush1.bf16.msra.mxu0 0
        %4931 = vmatprep.subr.bf16.mxu0 0
        %4932 = vmatpush1.bf16.msra.mxu0 0
        %4933 = vmatprep.subr.bf16.mxu0 0
        %4934 = vmatpush1.bf16.msra.mxu0 0
        %4935 = vmatprep.subr.bf16.mxu0 0
        %4936 = vmatpush1.bf16.msra.mxu0 0
        %4937 = vmatprep.subr.bf16.mxu0 0
        %4938 = vmatpush1.bf16.msra.mxu0 0
        %4939 = vmatprep.subr.bf16.mxu0 0
        %4940 = vmatpush1.bf16.msra.mxu0 0
        %4941 = vmatprep.subr.bf16.mxu0 0
        %4942 = vmatpush1.bf16.msra.mxu0 0
        %4943 = vmatprep.subr.bf16.mxu0 0
        %4944 = vmatpush1.bf16.msra.mxu0 0
        %4945 = vmatprep.subr.bf16.mxu0 0
        %4946 = vmatpush1.bf16.msra.mxu0 0
        %4947 = vmatprep.subr.bf16.mxu0 0
        %4948 = vmatpush1.bf16.msra.mxu0 0
        %4949 = vmatprep.subr.bf16.mxu0 0
        %4950 = vmatpush1.bf16.msra.mxu0 0
        %4951 = vmatprep.subr.bf16.mxu0 0
        %4952 = vmatpush1.bf16.msra.mxu0 0
        %4953 = vmatprep.subr.bf16.mxu0 0
        %4954 = vmatpush1.bf16.msra.mxu0 0
        %4955 = vmatprep.mubr.bf16.mxu0 0
        %4956 = vmatmul.mubr.bf16.gmra.mrb[0].mxu0 %v4770
        %v4957 = vpop.f32.mrb[0].mxu0
        %v4958 = vadd.f32 0.0, %v4957
        %v4959 = vpop.f32.mrb[0].mxu0
        %v4960 = vpop.f32.mrb[0].mxu0
        %v4961 = vadd.f32 0.0, %v4960
        %v4962 = vpop.f32.mrb[0].mxu0
        %4963 = vmatprep.mubr.bf16.mxu0 0
        %4964 = vmatmul.mubr.bf16.gmra.mrb[0].mxu0 %v4773
        %v4965 = vpop.f32.mrb[0].mxu0
        %v4966 = vadd.f32 0.0, %v4965
        %v4967 = vpop.f32.mrb[0].mxu0
        %v4968 = vpop.f32.mrb[0].mxu0
        %v4969 = vadd.f32 0.0, %v4968
        %v4970 = vpop.f32.mrb[0].mxu0
        %4971 = vmatprep.mubr.bf16.mxu0 0
        %4972 = vmatmul.mubr.bf16.gmra.mrb[0].mxu0 %v4776
        %v4973 = vpop.f32.mrb[0].mxu0
        %v4974 = vadd.f32 0.0, %v4973
        %v4975 = vpop.f32.mrb[0].mxu0
        %v4976 = vpop.f32.mrb[0].mxu0
        %v4977 = vadd.f32 0.0, %v4976
        %v4978 = vpop.f32.mrb[0].mxu0
        %4979 = vmatprep.mubr.bf16.mxu0 0
        %4980 = vmatmul.mubr.bf16.gmra.mrb[0].mxu0 %v4779
        %v4981 = vpop.f32.mrb[0].mxu0
        %v4982 = vadd.f32 0.0, %v4981
        %v4983 = vpop.f32.mrb[0].mxu0
        %v4984 = vpop.f32.mrb[0].mxu0
        %v4985 = vadd.f32 0.0, %v4984
        %v4986 = vpop.f32.mrb[0].mxu0
        %4987 = vdwg.mxu0
        %v4988 = vpack.c.bf16 %v4961, %v4958
        %v4989 = vpack.c.bf16 %v4969, %v4966
        %v4990 = vpack.c.bf16 %v4977, %v4974
        %v4991 = vpack.c.bf16 %v4985, %v4982
        %4992 = vmatprep.subr.bf16.mxu0 0
        %4993 = vmatpush1.bf16.msra.mxu0 %v4988
        %4994 = vmatprep.subr.bf16.mxu0 0
        %4995 = vmatpush1.bf16.msra.mxu0 %v4989
        %4996 = vmatprep.subr.bf16.mxu0 0
        %4997 = vmatpush1.bf16.msra.mxu0 %v4990
        %4998 = vmatprep.subr.bf16.mxu0 0
        %4999 = vmatpush1.bf16.msra.mxu0 %v4991
        %5000 = vmatprep.subr.bf16.mxu0 0
        %5001 = vmatpush1.bf16.msra.mxu0 0
        %5002 = vmatprep.subr.bf16.mxu0 0
        %5003 = vmatpush1.bf16.msra.mxu0 0
        %5004 = vmatprep.subr.bf16.mxu0 0
        %5005 = vmatpush1.bf16.msra.mxu0 0
        %5006 = vmatprep.subr.bf16.mxu0 0
        %5007 = vmatpush1.bf16.msra.mxu0 0
        %5008 = vmatprep.subr.bf16.mxu0 0
        %5009 = vmatpush1.bf16.msra.mxu0 0
        %5010 = vmatprep.subr.bf16.mxu0 0
        %5011 = vmatpush1.bf16.msra.mxu0 0
        %5012 = vmatprep.subr.bf16.mxu0 0
        %5013 = vmatpush1.bf16.msra.mxu0 0
        %5014 = vmatprep.subr.bf16.mxu0 0
        %5015 = vmatpush1.bf16.msra.mxu0 0
        %5016 = vmatprep.subr.bf16.mxu0 0
        %5017 = vmatpush1.bf16.msra.mxu0 0
        %5018 = vmatprep.subr.bf16.mxu0 0
        %5019 = vmatpush1.bf16.msra.mxu0 0
        %5020 = vmatprep.subr.bf16.mxu0 0
        %5021 = vmatpush1.bf16.msra.mxu0 0
        %5022 = vmatprep.subr.bf16.mxu0 0
        %5023 = vmatpush1.bf16.msra.mxu0 0
        %5024 = vmatprep.mubr.bf16.mxu0 0
        %5025 = vmatmul.mubr.bf16.gmra.mrb[0].mxu0 %v743
        %v5026 = vpop.f32.mrb[0].mxu0
        %v5027 = vadd.f32 0.0, %v5026
        %v5028 = vpop.f32.mrb[0].mxu0
        %v5029 = vpop.f32.mrb[0].mxu0
        %v5030 = vadd.f32 0.0, %v5029
        %v5031 = vpop.f32.mrb[0].mxu0
        %5032 = vmatprep.mubr.bf16.mxu0 0
        %5033 = vmatmul.mubr.bf16.gmra.mrb[0].mxu0 %v746
        %v5034 = vpop.f32.mrb[0].mxu0
        %v5035 = vadd.f32 0.0, %v5034
        %v5036 = vpop.f32.mrb[0].mxu0
        %v5037 = vpop.f32.mrb[0].mxu0
        %v5038 = vadd.f32 0.0, %v5037
        %v5039 = vpop.f32.mrb[0].mxu0
        %5040 = vmatprep.mubr.bf16.mxu0 0
        %5041 = vmatmul.mubr.bf16.gmra.mrb[0].mxu0 %v749
        %v5042 = vpop.f32.mrb[0].mxu0
        %v5043 = vadd.f32 0.0, %v5042
        %v5044 = vpop.f32.mrb[0].mxu0
        %v5045 = vpop.f32.mrb[0].mxu0
        %v5046 = vadd.f32 0.0, %v5045
        %v5047 = vpop.f32.mrb[0].mxu0
        %5048 = vmatprep.mubr.bf16.mxu0 0
        %5049 = vmatmul.mubr.bf16.gmra.mrb[0].mxu0 %v752
        %v5050 = vpop.f32.mrb[0].mxu0
        %v5051 = vadd.f32 0.0, %v5050
        %v5052 = vpop.f32.mrb[0].mxu0
        %v5053 = vpop.f32.mrb[0].mxu0
        %v5054 = vadd.f32 0.0, %v5053
        %v5055 = vpop.f32.mrb[0].mxu0
        %5056 = vdwg.mxu0
        %v5057 = vadd.f32 %v4915, %v5027
        %v5058 = vadd.f32 %v4916, %v5030
        %v5059 = vadd.f32 %v4917, %v5035
        %v5060 = vadd.f32 %v4918, %v5038
        %v5061 = vadd.f32 %v4919, %v5043
        %v5062 = vadd.f32 %v4920, %v5046
        %v5063 = vadd.f32 %v4921, %v5051
        %v5064 = vadd.f32 %v4922, %v5054
        %5065 = vmatprep.subr.bf16.mxu0 0
        %5066 = vmatpush1.bf16.msra.mxu0 %v840
        %5067 = vmatprep.subr.bf16.mxu0 0
        %5068 = vmatpush1.bf16.msra.mxu0 %v841
        %5069 = vmatprep.subr.bf16.mxu0 0
        %5070 = vmatpush1.bf16.msra.mxu0 0
        %5071 = vmatprep.subr.bf16.mxu0 0
        %5072 = vmatpush1.bf16.msra.mxu0 0
        %5073 = vmatprep.subr.bf16.mxu0 0
        %5074 = vmatpush1.bf16.msra.mxu0 0
        %5075 = vmatprep.subr.bf16.mxu0 0
        %5076 = vmatpush1.bf16.msra.mxu0 0
        %5077 = vmatprep.subr.bf16.mxu0 0
        %5078 = vmatpush1.bf16.msra.mxu0 0
        %5079 = vmatprep.subr.bf16.mxu0 0
        %5080 = vmatpush1.bf16.msra.mxu0 0
        %5081 = vmatprep.subr.bf16.mxu0 0
        %5082 = vmatpush1.bf16.msra.mxu0 0
        %5083 = vmatprep.subr.bf16.mxu0 0
        %5084 = vmatpush1.bf16.msra.mxu0 0
        %5085 = vmatprep.subr.bf16.mxu0 0
        %5086 = vmatpush1.bf16.msra.mxu0 0
        %5087 = vmatprep.subr.bf16.mxu0 0
        %5088 = vmatpush1.bf16.msra.mxu0 0
        %5089 = vmatprep.subr.bf16.mxu0 0
        %5090 = vmatpush1.bf16.msra.mxu0 0
        %5091 = vmatprep.subr.bf16.mxu0 0
        %5092 = vmatpush1.bf16.msra.mxu0 0
        %5093 = vmatprep.subr.bf16.mxu0 0
        %5094 = vmatpush1.bf16.msra.mxu0 0
        %5095 = vmatprep.subr.bf16.mxu0 0
        %5096 = vmatpush1.bf16.msra.mxu0 0
        %5097 = vmatprep.mubr.bf16.mxu0 0
        %5098 = vmatmul.mubr.bf16.gmra.mrb[0].mxu0 %v4770
        %v5099 = vpop.f32.mrb[0].mxu0
        %v5100 = vadd.f32 0.0, %v5099
        %v5101 = vpop.f32.mrb[0].mxu0
        %v5102 = vpop.f32.mrb[0].mxu0
        %v5103 = vadd.f32 0.0, %v5102
        %v5104 = vpop.f32.mrb[0].mxu0
        %5105 = vmatprep.mubr.bf16.mxu0 0
        %5106 = vmatmul.mubr.bf16.gmra.mrb[0].mxu0 %v4773
        %v5107 = vpop.f32.mrb[0].mxu0
        %v5108 = vadd.f32 0.0, %v5107
        %v5109 = vpop.f32.mrb[0].mxu0
        %v5110 = vpop.f32.mrb[0].mxu0
        %v5111 = vadd.f32 0.0, %v5110
        %v5112 = vpop.f32.mrb[0].mxu0
        %5113 = vmatprep.mubr.bf16.mxu0 0
        %5114 = vmatmul.mubr.bf16.gmra.mrb[0].mxu0 %v4776
        %v5115 = vpop.f32.mrb[0].mxu0
        %v5116 = vadd.f32 0.0, %v5115
        %v5117 = vpop.f32.mrb[0].mxu0
        %v5118 = vpop.f32.mrb[0].mxu0
        %v5119 = vadd.f32 0.0, %v5118
        %v5120 = vpop.f32.mrb[0].mxu0
        %5121 = vmatprep.mubr.bf16.mxu0 0
        %5122 = vmatmul.mubr.bf16.gmra.mrb[0].mxu0 %v4779
        %v5123 = vpop.f32.mrb[0].mxu0
        %v5124 = vadd.f32 0.0, %v5123
        %v5125 = vpop.f32.mrb[0].mxu0
        %v5126 = vpop.f32.mrb[0].mxu0
        %v5127 = vadd.f32 0.0, %v5126
        %v5128 = vpop.f32.mrb[0].mxu0
        %5129 = vdwg.mxu0
        %v5130 = vpack.c.bf16 %v5103, %v5100
        %v5131 = vpack.c.bf16 %v5111, %v5108
        %v5132 = vpack.c.bf16 %v5119, %v5116
        %v5133 = vpack.c.bf16 %v5127, %v5124
        %5134 = vmatprep.subr.bf16.mxu0 0
        %5135 = vmatpush1.bf16.msra.mxu0 %v5130
        %5136 = vmatprep.subr.bf16.mxu0 0
        %5137 = vmatpush1.bf16.msra.mxu0 %v5131
        %5138 = vmatprep.subr.bf16.mxu0 0
        %5139 = vmatpush1.bf16.msra.mxu0 %v5132
        %5140 = vmatprep.subr.bf16.mxu0 0
        %5141 = vmatpush1.bf16.msra.mxu0 %v5133
        %5142 = vmatprep.subr.bf16.mxu0 0
        %5143 = vmatpush1.bf16.msra.mxu0 0
        %5144 = vmatprep.subr.bf16.mxu0 0
        %5145 = vmatpush1.bf16.msra.mxu0 0
        %5146 = vmatprep.subr.bf16.mxu0 0
        %5147 = vmatpush1.bf16.msra.mxu0 0
        %5148 = vmatprep.subr.bf16.mxu0 0
        %5149 = vmatpush1.bf16.msra.mxu0 0
        %5150 = vmatprep.subr.bf16.mxu0 0
        %5151 = vmatpush1.bf16.msra.mxu0 0
        %5152 = vmatprep.subr.bf16.mxu0 0
        %5153 = vmatpush1.bf16.msra.mxu0 0
        %5154 = vmatprep.subr.bf16.mxu0 0
        %5155 = vmatpush1.bf16.msra.mxu0 0
        %5156 = vmatprep.subr.bf16.mxu0 0
        %5157 = vmatpush1.bf16.msra.mxu0 0
        %5158 = vmatprep.subr.bf16.mxu0 0
        %5159 = vmatpush1.bf16.msra.mxu0 0
        %5160 = vmatprep.subr.bf16.mxu0 0
        %5161 = vmatpush1.bf16.msra.mxu0 0
        %5162 = vmatprep.subr.bf16.mxu0 0
        %5163 = vmatpush1.bf16.msra.mxu0 0
        %5164 = vmatprep.subr.bf16.mxu0 0
        %5165 = vmatpush1.bf16.msra.mxu0 0
        %5166 = vmatprep.mubr.bf16.mxu0 0
        %5167 = vmatmul.mubr.bf16.gmra.mrb[0].mxu0 %v943
        %v5168 = vpop.f32.mrb[0].mxu0
        %v5169 = vadd.f32 0.0, %v5168
        %v5170 = vpop.f32.mrb[0].mxu0
        %v5171 = vpop.f32.mrb[0].mxu0
        %v5172 = vadd.f32 0.0, %v5171
        %v5173 = vpop.f32.mrb[0].mxu0
        %5174 = vmatprep.mubr.bf16.mxu0 0
        %5175 = vmatmul.mubr.bf16.gmra.mrb[0].mxu0 %v946
        %v5176 = vpop.f32.mrb[0].mxu0
        %v5177 = vadd.f32 0.0, %v5176
        %v5178 = vpop.f32.mrb[0].mxu0
        %v5179 = vpop.f32.mrb[0].mxu0
        %v5180 = vadd.f32 0.0, %v5179
        %v5181 = vpop.f32.mrb[0].mxu0
        %5182 = vmatprep.mubr.bf16.mxu0 0
        %5183 = vmatmul.mubr.bf16.gmra.mrb[0].mxu0 %v949
        %v5184 = vpop.f32.mrb[0].mxu0
        %v5185 = vadd.f32 0.0, %v5184
        %v5186 = vpop.f32.mrb[0].mxu0
        %v5187 = vpop.f32.mrb[0].mxu0
        %v5188 = vadd.f32 0.0, %v5187
        %v5189 = vpop.f32.mrb[0].mxu0
        %5190 = vmatprep.mubr.bf16.mxu0 0
        %5191 = vmatmul.mubr.bf16.gmra.mrb[0].mxu0 %v952
        %v5192 = vpop.f32.mrb[0].mxu0
        %v5193 = vadd.f32 0.0, %v5192
        %v5194 = vpop.f32.mrb[0].mxu0
        %v5195 = vpop.f32.mrb[0].mxu0
        %v5196 = vadd.f32 0.0, %v5195
        %v5197 = vpop.f32.mrb[0].mxu0
        %5198 = vdwg.mxu0
        %v5199 = vadd.f32 %v5057, %v5169
        %v5200 = vadd.f32 %v5058, %v5172
        %v5201 = vadd.f32 %v5059, %v5177
        %v5202 = vadd.f32 %v5060, %v5180
        %v5203 = vadd.f32 %v5061, %v5185
        %v5204 = vadd.f32 %v5062, %v5188
        %v5205 = vadd.f32 %v5063, %v5193
        %v5206 = vadd.f32 %v5064, %v5196
        %v5207 = vpack.c.bf16 %v5200, %v5199
        %v5208 = vpack.c.bf16 %v5202, %v5201
        %v5209 = vpack.c.bf16 %v5204, %v5203
        %v5210 = vpack.c.bf16 %v5206, %v5205
        %5211 = vmatprep.subr.bf16.mxu0 0
        %5212 = vmatpush1.bf16.msra.mxu0 %v1047
        %5213 = vmatprep.subr.bf16.mxu0 0
        %5214 = vmatpush1.bf16.msra.mxu0 %v1048
        %5215 = vmatprep.subr.bf16.mxu0 0
        %5216 = vmatpush1.bf16.msra.mxu0 0
        %5217 = vmatprep.subr.bf16.mxu0 0
        %5218 = vmatpush1.bf16.msra.mxu0 0
        %5219 = vmatprep.subr.bf16.mxu0 0
        %5220 = vmatpush1.bf16.msra.mxu0 0
        %5221 = vmatprep.subr.bf16.mxu0 0
        %5222 = vmatpush1.bf16.msra.mxu0 0
        %5223 = vmatprep.subr.bf16.mxu0 0
        %5224 = vmatpush1.bf16.msra.mxu0 0
        %5225 = vmatprep.subr.bf16.mxu0 0
        %5226 = vmatpush1.bf16.msra.mxu0 0
        %5227 = vmatprep.subr.bf16.mxu0 0
        %5228 = vmatpush1.bf16.msra.mxu0 0
        %5229 = vmatprep.subr.bf16.mxu0 0
        %5230 = vmatpush1.bf16.msra.mxu0 0
        %5231 = vmatprep.subr.bf16.mxu0 0
        %5232 = vmatpush1.bf16.msra.mxu0 0
        %5233 = vmatprep.subr.bf16.mxu0 0
        %5234 = vmatpush1.bf16.msra.mxu0 0
        %5235 = vmatprep.subr.bf16.mxu0 0
        %5236 = vmatpush1.bf16.msra.mxu0 0
        %5237 = vmatprep.subr.bf16.mxu0 0
        %5238 = vmatpush1.bf16.msra.mxu0 0
        %5239 = vmatprep.subr.bf16.mxu0 0
        %5240 = vmatpush1.bf16.msra.mxu0 0
        %5241 = vmatprep.subr.bf16.mxu0 0
        %5242 = vmatpush1.bf16.msra.mxu0 0
        %5243 = vmatprep.mubr.bf16.mxu0 0
        %5244 = vmatmul.mubr.bf16.gmra.mrb[0].mxu0 %v4770
        %v5245 = vpop.f32.mrb[0].mxu0
        %v5246 = vadd.f32 0.0, %v5245
        %v5247 = vpop.f32.mrb[0].mxu0
        %v5248 = vpop.f32.mrb[0].mxu0
        %v5249 = vadd.f32 0.0, %v5248
        %v5250 = vpop.f32.mrb[0].mxu0
        %5251 = vmatprep.mubr.bf16.mxu0 0
        %5252 = vmatmul.mubr.bf16.gmra.mrb[0].mxu0 %v4773
        %v5253 = vpop.f32.mrb[0].mxu0
        %v5254 = vadd.f32 0.0, %v5253
        %v5255 = vpop.f32.mrb[0].mxu0
        %v5256 = vpop.f32.mrb[0].mxu0
        %v5257 = vadd.f32 0.0, %v5256
        %v5258 = vpop.f32.mrb[0].mxu0
        %5259 = vmatprep.mubr.bf16.mxu0 0
        %5260 = vmatmul.mubr.bf16.gmra.mrb[0].mxu0 %v4776
        %v5261 = vpop.f32.mrb[0].mxu0
        %v5262 = vadd.f32 0.0, %v5261
        %v5263 = vpop.f32.mrb[0].mxu0
        %v5264 = vpop.f32.mrb[0].mxu0
        %v5265 = vadd.f32 0.0, %v5264
        %v5266 = vpop.f32.mrb[0].mxu0
        %5267 = vmatprep.mubr.bf16.mxu0 0
        %5268 = vmatmul.mubr.bf16.gmra.mrb[0].mxu0 %v4779
        %v5269 = vpop.f32.mrb[0].mxu0
        %v5270 = vadd.f32 0.0, %v5269
        %v5271 = vpop.f32.mrb[0].mxu0
        %v5272 = vpop.f32.mrb[0].mxu0
        %v5273 = vadd.f32 0.0, %v5272
        %v5274 = vpop.f32.mrb[0].mxu0
        %5275 = vdwg.mxu0
        %v5277 = vsel %vm431, %v5207, 0
        %v5280 = vsel %vm431, %v5208, 0
        %v5283 = vsel %vm431, %v5209, 0
        %v5286 = vsel %vm431, %v5210, 0
        %5288 = vmatprep.subr.bf16.mxu0 0
        %5289 = vmatpush1.bf16.msra.mxu0 %v1124
        %5290 = vmatprep.subr.bf16.mxu0 0
        %5291 = vmatpush1.bf16.msra.mxu0 %v1125
        %5292 = vmatprep.subr.bf16.mxu0 0
        %5293 = vmatpush1.bf16.msra.mxu0 0
        %5294 = vmatprep.subr.bf16.mxu0 0
        %5295 = vmatpush1.bf16.msra.mxu0 0
        %5296 = vmatprep.subr.bf16.mxu0 0
        %5297 = vmatpush1.bf16.msra.mxu0 0
        %5298 = vmatprep.subr.bf16.mxu0 0
        %5299 = vmatpush1.bf16.msra.mxu0 0
        %5300 = vmatprep.subr.bf16.mxu0 0
        %5301 = vmatpush1.bf16.msra.mxu0 0
        %5302 = vmatprep.subr.bf16.mxu0 0
        %5303 = vmatpush1.bf16.msra.mxu0 0
        %5304 = vmatprep.subr.bf16.mxu0 0
        %5305 = vmatpush1.bf16.msra.mxu0 0
        %5306 = vmatprep.subr.bf16.mxu0 0
        %5307 = vmatpush1.bf16.msra.mxu0 0
        %5308 = vmatprep.subr.bf16.mxu0 0
        %5309 = vmatpush1.bf16.msra.mxu0 0
        %5310 = vmatprep.subr.bf16.mxu0 0
        %5311 = vmatpush1.bf16.msra.mxu0 0
        %5312 = vmatprep.subr.bf16.mxu0 0
        %5313 = vmatpush1.bf16.msra.mxu0 0
        %5314 = vmatprep.subr.bf16.mxu0 0
        %5315 = vmatpush1.bf16.msra.mxu0 0
        %5316 = vmatprep.subr.bf16.mxu0 0
        %5317 = vmatpush1.bf16.msra.mxu0 0
        %5318 = vmatprep.subr.bf16.mxu0 0
        %5319 = vmatpush1.bf16.msra.mxu0 0
        %5320 = vmatprep.mubr.bf16.mxu0 0
        %5321 = vmatmul.mubr.bf16.gmra.mrb[0].mxu0 %v5277
        %v5322 = vpop.f32.mrb[0].mxu0
        %v5323 = vadd.f32 %v5246, %v5322
        %v5324 = vpop.f32.mrb[0].mxu0
        %v5325 = vpop.f32.mrb[0].mxu0
        %v5326 = vadd.f32 %v5249, %v5325
        %v5327 = vpop.f32.mrb[0].mxu0
        %5328 = vmatprep.mubr.bf16.mxu0 0
        %5329 = vmatmul.mubr.bf16.gmra.mrb[0].mxu0 %v5280
        %v5330 = vpop.f32.mrb[0].mxu0
        %v5331 = vadd.f32 %v5254, %v5330
        %v5332 = vpop.f32.mrb[0].mxu0
        %v5333 = vpop.f32.mrb[0].mxu0
        %v5334 = vadd.f32 %v5257, %v5333
        %v5335 = vpop.f32.mrb[0].mxu0
        %5336 = vmatprep.mubr.bf16.mxu0 0
        %5337 = vmatmul.mubr.bf16.gmra.mrb[0].mxu0 %v5283
        %v5338 = vpop.f32.mrb[0].mxu0
        %v5339 = vadd.f32 %v5262, %v5338
        %v5340 = vpop.f32.mrb[0].mxu0
        %v5341 = vpop.f32.mrb[0].mxu0
        %v5342 = vadd.f32 %v5265, %v5341
        %v5343 = vpop.f32.mrb[0].mxu0
        %5344 = vmatprep.mubr.bf16.mxu0 0
        %5345 = vmatmul.mubr.bf16.gmra.mrb[0].mxu0 %v5286
        %v5346 = vpop.f32.mrb[0].mxu0
        %v5347 = vadd.f32 %v5270, %v5346
        %v5348 = vpop.f32.mrb[0].mxu0
        %v5349 = vpop.f32.mrb[0].mxu0
        %v5350 = vadd.f32 %v5273, %v5349
        %v5351 = vpop.f32.mrb[0].mxu0
        %5352 = vdwg.mxu0
        %v5353 = vadd.f32 %v5323, %v1208
        %v5354 = vadd.f32 %v5326, %v1208
        %v5355 = vadd.f32 %v5331, %v1208
        %v5356 = vadd.f32 %v5334, %v1208
        %v5357 = vadd.f32 %v5339, %v1208
        %v5358 = vadd.f32 %v5342, %v1208
        %v5359 = vadd.f32 %v5347, %v1208
        %v5360 = vadd.f32 %v5350, %v1208
        %v5361 = vxor.u32 %v5353, 2147483648
        %v5362 = vxor.u32 %v5354, 2147483648
        %v5363 = vxor.u32 %v5355, 2147483648
        %v5364 = vxor.u32 %v5356, 2147483648
        %v5365 = vxor.u32 %v5357, 2147483648
        %v5366 = vxor.u32 %v5358, 2147483648
        %v5367 = vxor.u32 %v5359, 2147483648
        %v5368 = vxor.u32 %v5360, 2147483648
        %v5369 = vmul.f32 %v5361, 1.442695
        %v5370 = vpow.pop %v5369
        %v5371 = vmul.f32 %v5362, 1.442695
        %v5372 = vpow.pop %v5371
        %v5373 = vmul.f32 %v5363, 1.442695
        %v5374 = vpow.pop %v5373
        %v5375 = vmul.f32 %v5364, 1.442695
        %v5376 = vpow.pop %v5375
        %v5377 = vmul.f32 %v5365, 1.442695
        %v5378 = vpow.pop %v5377
        %v5379 = vmul.f32 %v5366, 1.442695
        %v5380 = vpow.pop %v5379
        %v5381 = vmul.f32 %v5367, 1.442695
        %v5382 = vpow.pop %v5381
        %v5383 = vmul.f32 %v5368, 1.442695
        %v5384 = vpow.pop %v5383
        %v5385 = vadd.f32 %v5370, 1.0
        %v5386 = vadd.f32 %v5372, 1.0
        %v5387 = vadd.f32 %v5374, 1.0
        %v5388 = vadd.f32 %v5376, 1.0
        %v5389 = vadd.f32 %v5378, 1.0
        %v5390 = vadd.f32 %v5380, 1.0
        %v5391 = vadd.f32 %v5382, 1.0
        %v5392 = vadd.f32 %v5384, 1.0
        %v5393 = vrcp.pop %v5385
        %v5394 = vmul.f32 1.0, %v5393
        %v5395 = vrcp.pop %v5386
        %v5396 = vmul.f32 1.0, %v5395
        %v5397 = vrcp.pop %v5387
        %v5398 = vmul.f32 1.0, %v5397
        %v5399 = vrcp.pop %v5388
        %v5400 = vmul.f32 1.0, %v5399
        %v5401 = vrcp.pop %v5389
        %v5402 = vmul.f32 1.0, %v5401
        %v5403 = vrcp.pop %v5390
        %v5404 = vmul.f32 1.0, %v5403
        %v5405 = vrcp.pop %v5391
        %v5406 = vmul.f32 1.0, %v5405
        %v5407 = vrcp.pop %v5392
        %v5408 = vmul.f32 1.0, %v5407
        %5409 = vmatprep.subr.bf16.mxu0 0
        %5410 = vmatpush1.bf16.msra.mxu0 %v1283
        %5411 = vmatprep.subr.bf16.mxu0 0
        %5412 = vmatpush1.bf16.msra.mxu0 %v1284
        %5413 = vmatprep.subr.bf16.mxu0 0
        %5414 = vmatpush1.bf16.msra.mxu0 0
        %5415 = vmatprep.subr.bf16.mxu0 0
        %5416 = vmatpush1.bf16.msra.mxu0 0
        %5417 = vmatprep.subr.bf16.mxu0 0
        %5418 = vmatpush1.bf16.msra.mxu0 0
        %5419 = vmatprep.subr.bf16.mxu0 0
        %5420 = vmatpush1.bf16.msra.mxu0 0
        %5421 = vmatprep.subr.bf16.mxu0 0
        %5422 = vmatpush1.bf16.msra.mxu0 0
        %5423 = vmatprep.subr.bf16.mxu0 0
        %5424 = vmatpush1.bf16.msra.mxu0 0
        %5425 = vmatprep.subr.bf16.mxu0 0
        %5426 = vmatpush1.bf16.msra.mxu0 0
        %5427 = vmatprep.subr.bf16.mxu0 0
        %5428 = vmatpush1.bf16.msra.mxu0 0
        %5429 = vmatprep.subr.bf16.mxu0 0
        %5430 = vmatpush1.bf16.msra.mxu0 0
        %5431 = vmatprep.subr.bf16.mxu0 0
        %5432 = vmatpush1.bf16.msra.mxu0 0
        %5433 = vmatprep.subr.bf16.mxu0 0
        %5434 = vmatpush1.bf16.msra.mxu0 0
        %5435 = vmatprep.subr.bf16.mxu0 0
        %5436 = vmatpush1.bf16.msra.mxu0 0
        %5437 = vmatprep.subr.bf16.mxu0 0
        %5438 = vmatpush1.bf16.msra.mxu0 0
        %5439 = vmatprep.subr.bf16.mxu0 0
        %5440 = vmatpush1.bf16.msra.mxu0 0
        %5441 = vmatprep.mubr.bf16.mxu0 0
        %5442 = vmatmul.mubr.bf16.gmra.mrb[0].mxu0 %v4770
        %v5443 = vpop.f32.mrb[0].mxu0
        %v5444 = vadd.f32 0.0, %v5443
        %v5445 = vpop.f32.mrb[0].mxu0
        %v5446 = vpop.f32.mrb[0].mxu0
        %v5447 = vadd.f32 0.0, %v5446
        %v5448 = vpop.f32.mrb[0].mxu0
        %5449 = vmatprep.mubr.bf16.mxu0 0
        %5450 = vmatmul.mubr.bf16.gmra.mrb[0].mxu0 %v4773
        %v5451 = vpop.f32.mrb[0].mxu0
        %v5452 = vadd.f32 0.0, %v5451
        %v5453 = vpop.f32.mrb[0].mxu0
        %v5454 = vpop.f32.mrb[0].mxu0
        %v5455 = vadd.f32 0.0, %v5454
        %v5456 = vpop.f32.mrb[0].mxu0
        %5457 = vmatprep.mubr.bf16.mxu0 0
        %5458 = vmatmul.mubr.bf16.gmra.mrb[0].mxu0 %v4776
        %v5459 = vpop.f32.mrb[0].mxu0
        %v5460 = vadd.f32 0.0, %v5459
        %v5461 = vpop.f32.mrb[0].mxu0
        %v5462 = vpop.f32.mrb[0].mxu0
        %v5463 = vadd.f32 0.0, %v5462
        %v5464 = vpop.f32.mrb[0].mxu0
        %5465 = vmatprep.mubr.bf16.mxu0 0
        %5466 = vmatmul.mubr.bf16.gmra.mrb[0].mxu0 %v4779
        %v5467 = vpop.f32.mrb[0].mxu0
        %v5468 = vadd.f32 0.0, %v5467
        %v5469 = vpop.f32.mrb[0].mxu0
        %v5470 = vpop.f32.mrb[0].mxu0
        %v5471 = vadd.f32 0.0, %v5470
        %v5472 = vpop.f32.mrb[0].mxu0
        %5473 = vdwg.mxu0
        %5474 = vmatprep.subr.bf16.mxu0 0
        %5475 = vmatpush1.bf16.msra.mxu0 %v1360
        %5476 = vmatprep.subr.bf16.mxu0 0
        %5477 = vmatpush1.bf16.msra.mxu0 %v1361
        %5478 = vmatprep.subr.bf16.mxu0 0
        %5479 = vmatpush1.bf16.msra.mxu0 0
        %5480 = vmatprep.subr.bf16.mxu0 0
        %5481 = vmatpush1.bf16.msra.mxu0 0
        %5482 = vmatprep.subr.bf16.mxu0 0
        %5483 = vmatpush1.bf16.msra.mxu0 0
        %5484 = vmatprep.subr.bf16.mxu0 0
        %5485 = vmatpush1.bf16.msra.mxu0 0
        %5486 = vmatprep.subr.bf16.mxu0 0
        %5487 = vmatpush1.bf16.msra.mxu0 0
        %5488 = vmatprep.subr.bf16.mxu0 0
        %5489 = vmatpush1.bf16.msra.mxu0 0
        %5490 = vmatprep.subr.bf16.mxu0 0
        %5491 = vmatpush1.bf16.msra.mxu0 0
        %5492 = vmatprep.subr.bf16.mxu0 0
        %5493 = vmatpush1.bf16.msra.mxu0 0
        %5494 = vmatprep.subr.bf16.mxu0 0
        %5495 = vmatpush1.bf16.msra.mxu0 0
        %5496 = vmatprep.subr.bf16.mxu0 0
        %5497 = vmatpush1.bf16.msra.mxu0 0
        %5498 = vmatprep.subr.bf16.mxu0 0
        %5499 = vmatpush1.bf16.msra.mxu0 0
        %5500 = vmatprep.subr.bf16.mxu0 0
        %5501 = vmatpush1.bf16.msra.mxu0 0
        %5502 = vmatprep.subr.bf16.mxu0 0
        %5503 = vmatpush1.bf16.msra.mxu0 0
        %5504 = vmatprep.subr.bf16.mxu0 0
        %5505 = vmatpush1.bf16.msra.mxu0 0
        %5506 = vmatprep.mubr.bf16.mxu0 0
        %5507 = vmatmul.mubr.bf16.gmra.mrb[0].mxu0 %v5277
        %v5508 = vpop.f32.mrb[0].mxu0
        %v5509 = vadd.f32 %v5444, %v5508
        %v5510 = vpop.f32.mrb[0].mxu0
        %v5511 = vpop.f32.mrb[0].mxu0
        %v5512 = vadd.f32 %v5447, %v5511
        %v5513 = vpop.f32.mrb[0].mxu0
        %5514 = vmatprep.mubr.bf16.mxu0 0
        %5515 = vmatmul.mubr.bf16.gmra.mrb[0].mxu0 %v5280
        %v5516 = vpop.f32.mrb[0].mxu0
        %v5517 = vadd.f32 %v5452, %v5516
        %v5518 = vpop.f32.mrb[0].mxu0
        %v5519 = vpop.f32.mrb[0].mxu0
        %v5520 = vadd.f32 %v5455, %v5519
        %v5521 = vpop.f32.mrb[0].mxu0
        %5522 = vmatprep.mubr.bf16.mxu0 0
        %5523 = vmatmul.mubr.bf16.gmra.mrb[0].mxu0 %v5283
        %v5524 = vpop.f32.mrb[0].mxu0
        %v5525 = vadd.f32 %v5460, %v5524
        %v5526 = vpop.f32.mrb[0].mxu0
        %v5527 = vpop.f32.mrb[0].mxu0
        %v5528 = vadd.f32 %v5463, %v5527
        %v5529 = vpop.f32.mrb[0].mxu0
        %5530 = vmatprep.mubr.bf16.mxu0 0
        %5531 = vmatmul.mubr.bf16.gmra.mrb[0].mxu0 %v5286
        %v5532 = vpop.f32.mrb[0].mxu0
        %v5533 = vadd.f32 %v5468, %v5532
        %v5534 = vpop.f32.mrb[0].mxu0
        %v5535 = vpop.f32.mrb[0].mxu0
        %v5536 = vadd.f32 %v5471, %v5535
        %v5537 = vpop.f32.mrb[0].mxu0
        %5538 = vdwg.mxu0
        %v5539 = vadd.f32 %v5509, %v1432
        %v5540 = vadd.f32 %v5512, %v1432
        %v5541 = vadd.f32 %v5517, %v1432
        %v5542 = vadd.f32 %v5520, %v1432
        %v5543 = vadd.f32 %v5525, %v1432
        %v5544 = vadd.f32 %v5528, %v1432
        %v5545 = vadd.f32 %v5533, %v1432
        %v5546 = vadd.f32 %v5536, %v1432
        %v5547 = vxor.u32 %v5539, 2147483648
        %v5548 = vxor.u32 %v5540, 2147483648
        %v5549 = vxor.u32 %v5541, 2147483648
        %v5550 = vxor.u32 %v5542, 2147483648
        %v5551 = vxor.u32 %v5543, 2147483648
        %v5552 = vxor.u32 %v5544, 2147483648
        %v5553 = vxor.u32 %v5545, 2147483648
        %v5554 = vxor.u32 %v5546, 2147483648
        %v5555 = vmul.f32 %v5547, 1.442695
        %v5556 = vpow.pop %v5555
        %v5557 = vmul.f32 %v5548, 1.442695
        %v5558 = vpow.pop %v5557
        %v5559 = vmul.f32 %v5549, 1.442695
        %v5560 = vpow.pop %v5559
        %v5561 = vmul.f32 %v5550, 1.442695
        %v5562 = vpow.pop %v5561
        %v5563 = vmul.f32 %v5551, 1.442695
        %v5564 = vpow.pop %v5563
        %v5565 = vmul.f32 %v5552, 1.442695
        %v5566 = vpow.pop %v5565
        %v5567 = vmul.f32 %v5553, 1.442695
        %v5568 = vpow.pop %v5567
        %v5569 = vmul.f32 %v5554, 1.442695
        %v5570 = vpow.pop %v5569
        %v5571 = vadd.f32 %v5556, 1.0
        %v5572 = vadd.f32 %v5558, 1.0
        %v5573 = vadd.f32 %v5560, 1.0
        %v5574 = vadd.f32 %v5562, 1.0
        %v5575 = vadd.f32 %v5564, 1.0
        %v5576 = vadd.f32 %v5566, 1.0
        %v5577 = vadd.f32 %v5568, 1.0
        %v5578 = vadd.f32 %v5570, 1.0
        %v5579 = vrcp.pop %v5571
        %v5580 = vmul.f32 1.0, %v5579
        %v5581 = vrcp.pop %v5572
        %v5582 = vmul.f32 1.0, %v5581
        %v5583 = vrcp.pop %v5573
        %v5584 = vmul.f32 1.0, %v5583
        %v5585 = vrcp.pop %v5574
        %v5586 = vmul.f32 1.0, %v5585
        %v5587 = vrcp.pop %v5575
        %v5588 = vmul.f32 1.0, %v5587
        %v5589 = vrcp.pop %v5576
        %v5590 = vmul.f32 1.0, %v5589
        %v5591 = vrcp.pop %v5577
        %v5592 = vmul.f32 1.0, %v5591
        %v5593 = vrcp.pop %v5578
        %v5594 = vmul.f32 1.0, %v5593
        %5595 = vmatprep.subr.bf16.mxu0 0
        %5596 = vmatpush1.bf16.msra.mxu0 %v1506
        %5597 = vmatprep.subr.bf16.mxu0 0
        %5598 = vmatpush1.bf16.msra.mxu0 %v1507
        %5599 = vmatprep.subr.bf16.mxu0 0
        %5600 = vmatpush1.bf16.msra.mxu0 0
        %5601 = vmatprep.subr.bf16.mxu0 0
        %5602 = vmatpush1.bf16.msra.mxu0 0
        %5603 = vmatprep.subr.bf16.mxu0 0
        %5604 = vmatpush1.bf16.msra.mxu0 0
        %5605 = vmatprep.subr.bf16.mxu0 0
        %5606 = vmatpush1.bf16.msra.mxu0 0
        %5607 = vmatprep.subr.bf16.mxu0 0
        %5608 = vmatpush1.bf16.msra.mxu0 0
        %5609 = vmatprep.subr.bf16.mxu0 0
        %5610 = vmatpush1.bf16.msra.mxu0 0
        %5611 = vmatprep.subr.bf16.mxu0 0
        %5612 = vmatpush1.bf16.msra.mxu0 0
        %5613 = vmatprep.subr.bf16.mxu0 0
        %5614 = vmatpush1.bf16.msra.mxu0 0
        %5615 = vmatprep.subr.bf16.mxu0 0
        %5616 = vmatpush1.bf16.msra.mxu0 0
        %5617 = vmatprep.subr.bf16.mxu0 0
        %5618 = vmatpush1.bf16.msra.mxu0 0
        %5619 = vmatprep.subr.bf16.mxu0 0
        %5620 = vmatpush1.bf16.msra.mxu0 0
        %5621 = vmatprep.subr.bf16.mxu0 0
        %5622 = vmatpush1.bf16.msra.mxu0 0
        %5623 = vmatprep.subr.bf16.mxu0 0
        %5624 = vmatpush1.bf16.msra.mxu0 0
        %5625 = vmatprep.subr.bf16.mxu0 0
        %5626 = vmatpush1.bf16.msra.mxu0 0
        %5627 = vmatprep.mubr.bf16.mxu0 0
        %5628 = vmatmul.mubr.bf16.gmra.mrb[0].mxu0 %v5277
        %v5629 = vpop.f32.mrb[0].mxu0
        %v5630 = vadd.f32 %v1497, %v5629
        %v5631 = vpop.f32.mrb[0].mxu0
        %v5632 = vpop.f32.mrb[0].mxu0
        %v5633 = vadd.f32 %v1497, %v5632
        %v5634 = vpop.f32.mrb[0].mxu0
        %5635 = vmatprep.mubr.bf16.mxu0 0
        %5636 = vmatmul.mubr.bf16.gmra.mrb[0].mxu0 %v5280
        %v5637 = vpop.f32.mrb[0].mxu0
        %v5638 = vadd.f32 %v1497, %v5637
        %v5639 = vpop.f32.mrb[0].mxu0
        %v5640 = vpop.f32.mrb[0].mxu0
        %v5641 = vadd.f32 %v1497, %v5640
        %v5642 = vpop.f32.mrb[0].mxu0
        %5643 = vmatprep.mubr.bf16.mxu0 0
        %5644 = vmatmul.mubr.bf16.gmra.mrb[0].mxu0 %v5283
        %v5645 = vpop.f32.mrb[0].mxu0
        %v5646 = vadd.f32 %v1497, %v5645
        %v5647 = vpop.f32.mrb[0].mxu0
        %v5648 = vpop.f32.mrb[0].mxu0
        %v5649 = vadd.f32 %v1497, %v5648
        %v5650 = vpop.f32.mrb[0].mxu0
        %5651 = vmatprep.mubr.bf16.mxu0 0
        %5652 = vmatmul.mubr.bf16.gmra.mrb[0].mxu0 %v5286
        %v5653 = vpop.f32.mrb[0].mxu0
        %v5654 = vadd.f32 %v1497, %v5653
        %v5655 = vpop.f32.mrb[0].mxu0
        %v5656 = vpop.f32.mrb[0].mxu0
        %v5657 = vadd.f32 %v1497, %v5656
        %v5658 = vpop.f32.mrb[0].mxu0
        %5659 = vdwg.mxu0
        %5660 = vmatprep.subr.bf16.mxu0 0
        %5661 = vmatpush1.bf16.msra.mxu0 %v1592
        %5662 = vmatprep.subr.bf16.mxu0 0
        %5663 = vmatpush1.bf16.msra.mxu0 %v1593
        %5664 = vmatprep.subr.bf16.mxu0 0
        %5665 = vmatpush1.bf16.msra.mxu0 0
        %5666 = vmatprep.subr.bf16.mxu0 0
        %5667 = vmatpush1.bf16.msra.mxu0 0
        %5668 = vmatprep.subr.bf16.mxu0 0
        %5669 = vmatpush1.bf16.msra.mxu0 0
        %5670 = vmatprep.subr.bf16.mxu0 0
        %5671 = vmatpush1.bf16.msra.mxu0 0
        %5672 = vmatprep.subr.bf16.mxu0 0
        %5673 = vmatpush1.bf16.msra.mxu0 0
        %5674 = vmatprep.subr.bf16.mxu0 0
        %5675 = vmatpush1.bf16.msra.mxu0 0
        %5676 = vmatprep.subr.bf16.mxu0 0
        %5677 = vmatpush1.bf16.msra.mxu0 0
        %5678 = vmatprep.subr.bf16.mxu0 0
        %5679 = vmatpush1.bf16.msra.mxu0 0
        %5680 = vmatprep.subr.bf16.mxu0 0
        %5681 = vmatpush1.bf16.msra.mxu0 0
        %5682 = vmatprep.subr.bf16.mxu0 0
        %5683 = vmatpush1.bf16.msra.mxu0 0
        %5684 = vmatprep.subr.bf16.mxu0 0
        %5685 = vmatpush1.bf16.msra.mxu0 0
        %5686 = vmatprep.subr.bf16.mxu0 0
        %5687 = vmatpush1.bf16.msra.mxu0 0
        %5688 = vmatprep.subr.bf16.mxu0 0
        %5689 = vmatpush1.bf16.msra.mxu0 0
        %5690 = vmatprep.subr.bf16.mxu0 0
        %5691 = vmatpush1.bf16.msra.mxu0 0
        %5692 = vmatprep.mubr.bf16.mxu0 0
        %5693 = vmatmul.mubr.bf16.gmra.mrb[0].mxu0 %v4770
        %v5694 = vpop.f32.mrb[0].mxu0
        %v5695 = vadd.f32 %v1583, %v5694
        %v5696 = vpop.f32.mrb[0].mxu0
        %v5697 = vpop.f32.mrb[0].mxu0
        %v5698 = vadd.f32 %v1583, %v5697
        %v5699 = vpop.f32.mrb[0].mxu0
        %5700 = vmatprep.mubr.bf16.mxu0 0
        %5701 = vmatmul.mubr.bf16.gmra.mrb[0].mxu0 %v4773
        %v5702 = vpop.f32.mrb[0].mxu0
        %v5703 = vadd.f32 %v1583, %v5702
        %v5704 = vpop.f32.mrb[0].mxu0
        %v5705 = vpop.f32.mrb[0].mxu0
        %v5706 = vadd.f32 %v1583, %v5705
        %v5707 = vpop.f32.mrb[0].mxu0
        %5708 = vmatprep.mubr.bf16.mxu0 0
        %5709 = vmatmul.mubr.bf16.gmra.mrb[0].mxu0 %v4776
        %v5710 = vpop.f32.mrb[0].mxu0
        %v5711 = vadd.f32 %v1583, %v5710
        %v5712 = vpop.f32.mrb[0].mxu0
        %v5713 = vpop.f32.mrb[0].mxu0
        %v5714 = vadd.f32 %v1583, %v5713
        %v5715 = vpop.f32.mrb[0].mxu0
        %5716 = vmatprep.mubr.bf16.mxu0 0
        %5717 = vmatmul.mubr.bf16.gmra.mrb[0].mxu0 %v4779
        %v5718 = vpop.f32.mrb[0].mxu0
        %v5719 = vadd.f32 %v1583, %v5718
        %v5720 = vpop.f32.mrb[0].mxu0
        %v5721 = vpop.f32.mrb[0].mxu0
        %v5722 = vadd.f32 %v1583, %v5721
        %v5723 = vpop.f32.mrb[0].mxu0
        %5724 = vdwg.mxu0
        %v5725 = vmul.f32 %v5394, %v5695
        %v5726 = vmul.f32 %v5396, %v5698
        %v5727 = vmul.f32 %v5398, %v5703
        %v5728 = vmul.f32 %v5400, %v5706
        %v5729 = vmul.f32 %v5402, %v5711
        %v5730 = vmul.f32 %v5404, %v5714
        %v5731 = vmul.f32 %v5406, %v5719
        %v5732 = vmul.f32 %v5408, %v5722
        %v5733 = vadd.f32 %v5630, %v5725
        %v5734 = vadd.f32 %v5633, %v5726
        %v5735 = vadd.f32 %v5638, %v5727
        %v5736 = vadd.f32 %v5641, %v5728
        %v5737 = vadd.f32 %v5646, %v5729
        %v5738 = vadd.f32 %v5649, %v5730
        %v5739 = vadd.f32 %v5654, %v5731
        %v5740 = vadd.f32 %v5657, %v5732
        %v5741 = vtanh.pop %v5733
        %v5742 = vtanh.pop %v5734
        %v5743 = vtanh.pop %v5735
        %v5744 = vtanh.pop %v5736
        %v5745 = vtanh.pop %v5737
        %v5746 = vtanh.pop %v5738
        %v5747 = vtanh.pop %v5739
        %v5748 = vtanh.pop %v5740
        %v5749 = vsub.f32 1.0, %v5580
        %v5750 = vsub.f32 1.0, %v5582
        %v5751 = vsub.f32 1.0, %v5584
        %v5752 = vsub.f32 1.0, %v5586
        %v5753 = vsub.f32 1.0, %v5588
        %v5754 = vsub.f32 1.0, %v5590
        %v5755 = vsub.f32 1.0, %v5592
        %v5756 = vsub.f32 1.0, %v5594
        %v5757 = vmul.f32 %v5749, %v5741
        %v5758 = vmul.f32 %v5750, %v5742
        %v5759 = vmul.f32 %v5751, %v5743
        %v5760 = vmul.f32 %v5752, %v5744
        %v5761 = vmul.f32 %v5753, %v5745
        %v5762 = vmul.f32 %v5754, %v5746
        %v5763 = vmul.f32 %v5755, %v5747
        %v5764 = vmul.f32 %v5756, %v5748
        %v5765 = vmul.f32 %v5580, %v4757
        %v5766 = vmul.f32 %v5582, %v4758
        %v5767 = vmul.f32 %v5584, %v4759
        %v5768 = vmul.f32 %v5586, %v4760
        %v5769 = vmul.f32 %v5588, %v4761
        %v5770 = vmul.f32 %v5590, %v4762
        %v5771 = vmul.f32 %v5592, %v4763
        %v5772 = vmul.f32 %v5594, %v4764
        %v5773 = vadd.f32 %v5757, %v5765
        %v5774 = vadd.f32 %v5758, %v5766
        %v5775 = vadd.f32 %v5759, %v5767
        %v5776 = vadd.f32 %v5760, %v5768
        %v5777 = vadd.f32 %v5761, %v5769
        %v5778 = vadd.f32 %v5762, %v5770
        %v5779 = vadd.f32 %v5763, %v5771
        %v5780 = vadd.f32 %v5764, %v5772
        %v5781 = vpack.c.bf16 %v5774, %v5773
        %v5782 = vpack.c.bf16 %v5776, %v5775
        %v5783 = vpack.c.bf16 %v5778, %v5777
        %v5784 = vpack.c.bf16 %v5780, %v5779
        %v5786 = vsel %vm431, %v5781, 0
        %v5789 = vsel %vm431, %v5782, 0
        %v5792 = vsel %vm431, %v5783, 0
        %v5795 = vsel %vm431, %v5784, 0
        %5797 = vmatprep.subr.bf16.mxu0 0
        %5798 = vmatpush1.bf16.msra.mxu0 %v427
        %5799 = vmatprep.subr.bf16.mxu0 0
        %5800 = vmatpush1.bf16.msra.mxu0 %v428
        %5801 = vmatprep.subr.bf16.mxu0 0
        %5802 = vmatpush1.bf16.msra.mxu0 0
        %5803 = vmatprep.subr.bf16.mxu0 0
        %5804 = vmatpush1.bf16.msra.mxu0 0
        %5805 = vmatprep.subr.bf16.mxu0 0
        %5806 = vmatpush1.bf16.msra.mxu0 0
        %5807 = vmatprep.subr.bf16.mxu0 0
        %5808 = vmatpush1.bf16.msra.mxu0 0
        %5809 = vmatprep.subr.bf16.mxu0 0
        %5810 = vmatpush1.bf16.msra.mxu0 0
        %5811 = vmatprep.subr.bf16.mxu0 0
        %5812 = vmatpush1.bf16.msra.mxu0 0
        %5813 = vmatprep.subr.bf16.mxu0 0
        %5814 = vmatpush1.bf16.msra.mxu0 0
        %5815 = vmatprep.subr.bf16.mxu0 0
        %5816 = vmatpush1.bf16.msra.mxu0 0
        %5817 = vmatprep.subr.bf16.mxu0 0
        %5818 = vmatpush1.bf16.msra.mxu0 0
        %5819 = vmatprep.subr.bf16.mxu0 0
        %5820 = vmatpush1.bf16.msra.mxu0 0
        %5821 = vmatprep.subr.bf16.mxu0 0
        %5822 = vmatpush1.bf16.msra.mxu0 0
        %5823 = vmatprep.subr.bf16.mxu0 0
        %5824 = vmatpush1.bf16.msra.mxu0 0
        %5825 = vmatprep.subr.bf16.mxu0 0
        %5826 = vmatpush1.bf16.msra.mxu0 0
        %5827 = vmatprep.subr.bf16.mxu0 0
        %5828 = vmatpush1.bf16.msra.mxu0 0
        %5829 = vmatprep.mubr.bf16.mxu0 0
        %5830 = vmatmul.mubr.bf16.gmra.mrb[0].mxu0 %v5786
        %v5831 = vpop.f32.mrb[0].mxu0
        %v5832 = vadd.f32 0.0, %v5831
        %v5833 = vpop.f32.mrb[0].mxu0
        %v5834 = vpop.f32.mrb[0].mxu0
        %v5835 = vadd.f32 0.0, %v5834
        %v5836 = vpop.f32.mrb[0].mxu0
        %5837 = vmatprep.mubr.bf16.mxu0 0
        %5838 = vmatmul.mubr.bf16.gmra.mrb[0].mxu0 %v5789
        %v5839 = vpop.f32.mrb[0].mxu0
        %v5840 = vadd.f32 0.0, %v5839
        %v5841 = vpop.f32.mrb[0].mxu0
        %v5842 = vpop.f32.mrb[0].mxu0
        %v5843 = vadd.f32 0.0, %v5842
        %v5844 = vpop.f32.mrb[0].mxu0
        %5845 = vmatprep.mubr.bf16.mxu0 0
        %5846 = vmatmul.mubr.bf16.gmra.mrb[0].mxu0 %v5792
        %v5847 = vpop.f32.mrb[0].mxu0
        %v5848 = vadd.f32 0.0, %v5847
        %v5849 = vpop.f32.mrb[0].mxu0
        %v5850 = vpop.f32.mrb[0].mxu0
        %v5851 = vadd.f32 0.0, %v5850
        %v5852 = vpop.f32.mrb[0].mxu0
        %5853 = vmatprep.mubr.bf16.mxu0 0
        %5854 = vmatmul.mubr.bf16.gmra.mrb[0].mxu0 %v5795
        %v5855 = vpop.f32.mrb[0].mxu0
        %v5856 = vadd.f32 0.0, %v5855
        %v5857 = vpop.f32.mrb[0].mxu0
        %v5858 = vpop.f32.mrb[0].mxu0
        %v5859 = vadd.f32 0.0, %v5858
        %v5860 = vpop.f32.mrb[0].mxu0
        %5861 = vdwg.mxu0
        %v5862 = vpack.c.bf16 %v5835, %v5832
        %v5863 = vpack.c.bf16 %v5843, %v5840
        %v5864 = vpack.c.bf16 %v5851, %v5848
        %v5865 = vpack.c.bf16 %v5859, %v5856
        %5866 = vmatprep.subr.bf16.mxu0 0
        %5867 = vmatpush1.bf16.msra.mxu0 %v5862
        %5868 = vmatprep.subr.bf16.mxu0 0
        %5869 = vmatpush1.bf16.msra.mxu0 %v5863
        %5870 = vmatprep.subr.bf16.mxu0 0
        %5871 = vmatpush1.bf16.msra.mxu0 %v5864
        %5872 = vmatprep.subr.bf16.mxu0 0
        %5873 = vmatpush1.bf16.msra.mxu0 %v5865
        %5874 = vmatprep.subr.bf16.mxu0 0
        %5875 = vmatpush1.bf16.msra.mxu0 0
        %5876 = vmatprep.subr.bf16.mxu0 0
        %5877 = vmatpush1.bf16.msra.mxu0 0
        %5878 = vmatprep.subr.bf16.mxu0 0
        %5879 = vmatpush1.bf16.msra.mxu0 0
        %5880 = vmatprep.subr.bf16.mxu0 0
        %5881 = vmatpush1.bf16.msra.mxu0 0
        %5882 = vmatprep.subr.bf16.mxu0 0
        %5883 = vmatpush1.bf16.msra.mxu0 0
        %5884 = vmatprep.subr.bf16.mxu0 0
        %5885 = vmatpush1.bf16.msra.mxu0 0
        %5886 = vmatprep.subr.bf16.mxu0 0
        %5887 = vmatpush1.bf16.msra.mxu0 0
        %5888 = vmatprep.subr.bf16.mxu0 0
        %5889 = vmatpush1.bf16.msra.mxu0 0
        %5890 = vmatprep.subr.bf16.mxu0 0
        %5891 = vmatpush1.bf16.msra.mxu0 0
        %5892 = vmatprep.subr.bf16.mxu0 0
        %5893 = vmatpush1.bf16.msra.mxu0 0
        %5894 = vmatprep.subr.bf16.mxu0 0
        %5895 = vmatpush1.bf16.msra.mxu0 0
        %5896 = vmatprep.subr.bf16.mxu0 0
        %5897 = vmatpush1.bf16.msra.mxu0 0
        %5898 = vmatprep.mubr.bf16.mxu0 0
        %5899 = vmatmul.mubr.bf16.gmra.mrb[0].mxu0 %v543
        %v5900 = vpop.f32.mrb[0].mxu0
        %v5901 = vadd.f32 0.0, %v5900
        %v5902 = vpop.f32.mrb[0].mxu0
        %v5903 = vpop.f32.mrb[0].mxu0
        %v5904 = vadd.f32 0.0, %v5903
        %v5905 = vpop.f32.mrb[0].mxu0
        %5906 = vmatprep.mubr.bf16.mxu0 0
        %5907 = vmatmul.mubr.bf16.gmra.mrb[0].mxu0 %v546
        %v5908 = vpop.f32.mrb[0].mxu0
        %v5909 = vadd.f32 0.0, %v5908
        %v5910 = vpop.f32.mrb[0].mxu0
        %v5911 = vpop.f32.mrb[0].mxu0
        %v5912 = vadd.f32 0.0, %v5911
        %v5913 = vpop.f32.mrb[0].mxu0
        %5914 = vmatprep.mubr.bf16.mxu0 0
        %5915 = vmatmul.mubr.bf16.gmra.mrb[0].mxu0 %v549
        %v5916 = vpop.f32.mrb[0].mxu0
        %v5917 = vadd.f32 0.0, %v5916
        %v5918 = vpop.f32.mrb[0].mxu0
        %v5919 = vpop.f32.mrb[0].mxu0
        %v5920 = vadd.f32 0.0, %v5919
        %v5921 = vpop.f32.mrb[0].mxu0
        %5922 = vmatprep.mubr.bf16.mxu0 0
        %5923 = vmatmul.mubr.bf16.gmra.mrb[0].mxu0 %v552
        %v5924 = vpop.f32.mrb[0].mxu0
        %v5925 = vadd.f32 0.0, %v5924
        %v5926 = vpop.f32.mrb[0].mxu0
        %v5927 = vpop.f32.mrb[0].mxu0
        %v5928 = vadd.f32 0.0, %v5927
        %v5929 = vpop.f32.mrb[0].mxu0
        %5930 = vdwg.mxu0
        %v5931 = vadd.f32 %v407, %v5901
        %v5932 = vadd.f32 %v408, %v5904
        %v5933 = vadd.f32 %v409, %v5909
        %v5934 = vadd.f32 %v410, %v5912
        %v5935 = vadd.f32 %v411, %v5917
        %v5936 = vadd.f32 %v412, %v5920
        %v5937 = vadd.f32 %v413, %v5925
        %v5938 = vadd.f32 %v414, %v5928
        %5939 = vmatprep.subr.bf16.mxu0 0
        %5940 = vmatpush1.bf16.msra.mxu0 %v640
        %5941 = vmatprep.subr.bf16.mxu0 0
        %5942 = vmatpush1.bf16.msra.mxu0 %v641
        %5943 = vmatprep.subr.bf16.mxu0 0
        %5944 = vmatpush1.bf16.msra.mxu0 0
        %5945 = vmatprep.subr.bf16.mxu0 0
        %5946 = vmatpush1.bf16.msra.mxu0 0
        %5947 = vmatprep.subr.bf16.mxu0 0
        %5948 = vmatpush1.bf16.msra.mxu0 0
        %5949 = vmatprep.subr.bf16.mxu0 0
        %5950 = vmatpush1.bf16.msra.mxu0 0
        %5951 = vmatprep.subr.bf16.mxu0 0
        %5952 = vmatpush1.bf16.msra.mxu0 0
        %5953 = vmatprep.subr.bf16.mxu0 0
        %5954 = vmatpush1.bf16.msra.mxu0 0
        %5955 = vmatprep.subr.bf16.mxu0 0
        %5956 = vmatpush1.bf16.msra.mxu0 0
        %5957 = vmatprep.subr.bf16.mxu0 0
        %5958 = vmatpush1.bf16.msra.mxu0 0
        %5959 = vmatprep.subr.bf16.mxu0 0
        %5960 = vmatpush1.bf16.msra.mxu0 0
        %5961 = vmatprep.subr.bf16.mxu0 0
        %5962 = vmatpush1.bf16.msra.mxu0 0
        %5963 = vmatprep.subr.bf16.mxu0 0
        %5964 = vmatpush1.bf16.msra.mxu0 0
        %5965 = vmatprep.subr.bf16.mxu0 0
        %5966 = vmatpush1.bf16.msra.mxu0 0
        %5967 = vmatprep.subr.bf16.mxu0 0
        %5968 = vmatpush1.bf16.msra.mxu0 0
        %5969 = vmatprep.subr.bf16.mxu0 0
        %5970 = vmatpush1.bf16.msra.mxu0 0
        %5971 = vmatprep.mubr.bf16.mxu0 0
        %5972 = vmatmul.mubr.bf16.gmra.mrb[0].mxu0 %v5786
        %v5973 = vpop.f32.mrb[0].mxu0
        %v5974 = vadd.f32 0.0, %v5973
        %v5975 = vpop.f32.mrb[0].mxu0
        %v5976 = vpop.f32.mrb[0].mxu0
        %v5977 = vadd.f32 0.0, %v5976
        %v5978 = vpop.f32.mrb[0].mxu0
        %5979 = vmatprep.mubr.bf16.mxu0 0
        %5980 = vmatmul.mubr.bf16.gmra.mrb[0].mxu0 %v5789
        %v5981 = vpop.f32.mrb[0].mxu0
        %v5982 = vadd.f32 0.0, %v5981
        %v5983 = vpop.f32.mrb[0].mxu0
        %v5984 = vpop.f32.mrb[0].mxu0
        %v5985 = vadd.f32 0.0, %v5984
        %v5986 = vpop.f32.mrb[0].mxu0
        %5987 = vmatprep.mubr.bf16.mxu0 0
        %5988 = vmatmul.mubr.bf16.gmra.mrb[0].mxu0 %v5792
        %v5989 = vpop.f32.mrb[0].mxu0
        %v5990 = vadd.f32 0.0, %v5989
        %v5991 = vpop.f32.mrb[0].mxu0
        %v5992 = vpop.f32.mrb[0].mxu0
        %v5993 = vadd.f32 0.0, %v5992
        %v5994 = vpop.f32.mrb[0].mxu0
        %5995 = vmatprep.mubr.bf16.mxu0 0
        %5996 = vmatmul.mubr.bf16.gmra.mrb[0].mxu0 %v5795
        %v5997 = vpop.f32.mrb[0].mxu0
        %v5998 = vadd.f32 0.0, %v5997
        %v5999 = vpop.f32.mrb[0].mxu0
        %v6000 = vpop.f32.mrb[0].mxu0
        %v6001 = vadd.f32 0.0, %v6000
        %v6002 = vpop.f32.mrb[0].mxu0
        %6003 = vdwg.mxu0
        %v6004 = vpack.c.bf16 %v5977, %v5974
        %v6005 = vpack.c.bf16 %v5985, %v5982
        %v6006 = vpack.c.bf16 %v5993, %v5990
        %v6007 = vpack.c.bf16 %v6001, %v5998
        %6008 = vmatprep.subr.bf16.mxu0 0
        %6009 = vmatpush1.bf16.msra.mxu0 %v6004
        %6010 = vmatprep.subr.bf16.mxu0 0
        %6011 = vmatpush1.bf16.msra.mxu0 %v6005
        %6012 = vmatprep.subr.bf16.mxu0 0
        %6013 = vmatpush1.bf16.msra.mxu0 %v6006
        %6014 = vmatprep.subr.bf16.mxu0 0
        %6015 = vmatpush1.bf16.msra.mxu0 %v6007
        %6016 = vmatprep.subr.bf16.mxu0 0
        %6017 = vmatpush1.bf16.msra.mxu0 0
        %6018 = vmatprep.subr.bf16.mxu0 0
        %6019 = vmatpush1.bf16.msra.mxu0 0
        %6020 = vmatprep.subr.bf16.mxu0 0
        %6021 = vmatpush1.bf16.msra.mxu0 0
        %6022 = vmatprep.subr.bf16.mxu0 0
        %6023 = vmatpush1.bf16.msra.mxu0 0
        %6024 = vmatprep.subr.bf16.mxu0 0
        %6025 = vmatpush1.bf16.msra.mxu0 0
        %6026 = vmatprep.subr.bf16.mxu0 0
        %6027 = vmatpush1.bf16.msra.mxu0 0
        %6028 = vmatprep.subr.bf16.mxu0 0
        %6029 = vmatpush1.bf16.msra.mxu0 0
        %6030 = vmatprep.subr.bf16.mxu0 0
        %6031 = vmatpush1.bf16.msra.mxu0 0
        %6032 = vmatprep.subr.bf16.mxu0 0
        %6033 = vmatpush1.bf16.msra.mxu0 0
        %6034 = vmatprep.subr.bf16.mxu0 0
        %6035 = vmatpush1.bf16.msra.mxu0 0
        %6036 = vmatprep.subr.bf16.mxu0 0
        %6037 = vmatpush1.bf16.msra.mxu0 0
        %6038 = vmatprep.subr.bf16.mxu0 0
        %6039 = vmatpush1.bf16.msra.mxu0 0
        %6040 = vmatprep.mubr.bf16.mxu0 0
        %6041 = vmatmul.mubr.bf16.gmra.mrb[0].mxu0 %v743
        %v6042 = vpop.f32.mrb[0].mxu0
        %v6043 = vadd.f32 0.0, %v6042
        %v6044 = vpop.f32.mrb[0].mxu0
        %v6045 = vpop.f32.mrb[0].mxu0
        %v6046 = vadd.f32 0.0, %v6045
        %v6047 = vpop.f32.mrb[0].mxu0
        %6048 = vmatprep.mubr.bf16.mxu0 0
        %6049 = vmatmul.mubr.bf16.gmra.mrb[0].mxu0 %v746
        %v6050 = vpop.f32.mrb[0].mxu0
        %v6051 = vadd.f32 0.0, %v6050
        %v6052 = vpop.f32.mrb[0].mxu0
        %v6053 = vpop.f32.mrb[0].mxu0
        %v6054 = vadd.f32 0.0, %v6053
        %v6055 = vpop.f32.mrb[0].mxu0
        %6056 = vmatprep.mubr.bf16.mxu0 0
        %6057 = vmatmul.mubr.bf16.gmra.mrb[0].mxu0 %v749
        %v6058 = vpop.f32.mrb[0].mxu0
        %v6059 = vadd.f32 0.0, %v6058
        %v6060 = vpop.f32.mrb[0].mxu0
        %v6061 = vpop.f32.mrb[0].mxu0
        %v6062 = vadd.f32 0.0, %v6061
        %v6063 = vpop.f32.mrb[0].mxu0
        %6064 = vmatprep.mubr.bf16.mxu0 0
        %6065 = vmatmul.mubr.bf16.gmra.mrb[0].mxu0 %v752
        %v6066 = vpop.f32.mrb[0].mxu0
        %v6067 = vadd.f32 0.0, %v6066
        %v6068 = vpop.f32.mrb[0].mxu0
        %v6069 = vpop.f32.mrb[0].mxu0
        %v6070 = vadd.f32 0.0, %v6069
        %v6071 = vpop.f32.mrb[0].mxu0
        %6072 = vdwg.mxu0
        %v6073 = vadd.f32 %v5931, %v6043
        %v6074 = vadd.f32 %v5932, %v6046
        %v6075 = vadd.f32 %v5933, %v6051
        %v6076 = vadd.f32 %v5934, %v6054
        %v6077 = vadd.f32 %v5935, %v6059
        %v6078 = vadd.f32 %v5936, %v6062
        %v6079 = vadd.f32 %v5937, %v6067
        %v6080 = vadd.f32 %v5938, %v6070
        %6081 = vmatprep.subr.bf16.mxu0 0
        %6082 = vmatpush1.bf16.msra.mxu0 %v840
        %6083 = vmatprep.subr.bf16.mxu0 0
        %6084 = vmatpush1.bf16.msra.mxu0 %v841
        %6085 = vmatprep.subr.bf16.mxu0 0
        %6086 = vmatpush1.bf16.msra.mxu0 0
        %6087 = vmatprep.subr.bf16.mxu0 0
        %6088 = vmatpush1.bf16.msra.mxu0 0
        %6089 = vmatprep.subr.bf16.mxu0 0
        %6090 = vmatpush1.bf16.msra.mxu0 0
        %6091 = vmatprep.subr.bf16.mxu0 0
        %6092 = vmatpush1.bf16.msra.mxu0 0
        %6093 = vmatprep.subr.bf16.mxu0 0
        %6094 = vmatpush1.bf16.msra.mxu0 0
        %6095 = vmatprep.subr.bf16.mxu0 0
        %6096 = vmatpush1.bf16.msra.mxu0 0
        %6097 = vmatprep.subr.bf16.mxu0 0
        %6098 = vmatpush1.bf16.msra.mxu0 0
        %6099 = vmatprep.subr.bf16.mxu0 0
        %6100 = vmatpush1.bf16.msra.mxu0 0
        %6101 = vmatprep.subr.bf16.mxu0 0
        %6102 = vmatpush1.bf16.msra.mxu0 0
        %6103 = vmatprep.subr.bf16.mxu0 0
        %6104 = vmatpush1.bf16.msra.mxu0 0
        %6105 = vmatprep.subr.bf16.mxu0 0
        %6106 = vmatpush1.bf16.msra.mxu0 0
        %6107 = vmatprep.subr.bf16.mxu0 0
        %6108 = vmatpush1.bf16.msra.mxu0 0
        %6109 = vmatprep.subr.bf16.mxu0 0
        %6110 = vmatpush1.bf16.msra.mxu0 0
        %6111 = vmatprep.subr.bf16.mxu0 0
        %6112 = vmatpush1.bf16.msra.mxu0 0
        %6113 = vmatprep.mubr.bf16.mxu0 0
        %6114 = vmatmul.mubr.bf16.gmra.mrb[0].mxu0 %v5786
        %v6115 = vpop.f32.mrb[0].mxu0
        %v6116 = vadd.f32 0.0, %v6115
        %v6117 = vpop.f32.mrb[0].mxu0
        %v6118 = vpop.f32.mrb[0].mxu0
        %v6119 = vadd.f32 0.0, %v6118
        %v6120 = vpop.f32.mrb[0].mxu0
        %6121 = vmatprep.mubr.bf16.mxu0 0
        %6122 = vmatmul.mubr.bf16.gmra.mrb[0].mxu0 %v5789
        %v6123 = vpop.f32.mrb[0].mxu0
        %v6124 = vadd.f32 0.0, %v6123
        %v6125 = vpop.f32.mrb[0].mxu0
        %v6126 = vpop.f32.mrb[0].mxu0
        %v6127 = vadd.f32 0.0, %v6126
        %v6128 = vpop.f32.mrb[0].mxu0
        %6129 = vmatprep.mubr.bf16.mxu0 0
        %6130 = vmatmul.mubr.bf16.gmra.mrb[0].mxu0 %v5792
        %v6131 = vpop.f32.mrb[0].mxu0
        %v6132 = vadd.f32 0.0, %v6131
        %v6133 = vpop.f32.mrb[0].mxu0
        %v6134 = vpop.f32.mrb[0].mxu0
        %v6135 = vadd.f32 0.0, %v6134
        %v6136 = vpop.f32.mrb[0].mxu0
        %6137 = vmatprep.mubr.bf16.mxu0 0
        %6138 = vmatmul.mubr.bf16.gmra.mrb[0].mxu0 %v5795
        %v6139 = vpop.f32.mrb[0].mxu0
        %v6140 = vadd.f32 0.0, %v6139
        %v6141 = vpop.f32.mrb[0].mxu0
        %v6142 = vpop.f32.mrb[0].mxu0
        %v6143 = vadd.f32 0.0, %v6142
        %v6144 = vpop.f32.mrb[0].mxu0
        %6145 = vdwg.mxu0
        %v6146 = vpack.c.bf16 %v6119, %v6116
        %v6147 = vpack.c.bf16 %v6127, %v6124
        %v6148 = vpack.c.bf16 %v6135, %v6132
        %v6149 = vpack.c.bf16 %v6143, %v6140
        %6150 = vmatprep.subr.bf16.mxu0 0
        %6151 = vmatpush1.bf16.msra.mxu0 %v6146
        %6152 = vmatprep.subr.bf16.mxu0 0
        %6153 = vmatpush1.bf16.msra.mxu0 %v6147
        %6154 = vmatprep.subr.bf16.mxu0 0
        %6155 = vmatpush1.bf16.msra.mxu0 %v6148
        %6156 = vmatprep.subr.bf16.mxu0 0
        %6157 = vmatpush1.bf16.msra.mxu0 %v6149
        %6158 = vmatprep.subr.bf16.mxu0 0
        %6159 = vmatpush1.bf16.msra.mxu0 0
        %6160 = vmatprep.subr.bf16.mxu0 0
        %6161 = vmatpush1.bf16.msra.mxu0 0
        %6162 = vmatprep.subr.bf16.mxu0 0
        %6163 = vmatpush1.bf16.msra.mxu0 0
        %6164 = vmatprep.subr.bf16.mxu0 0
        %6165 = vmatpush1.bf16.msra.mxu0 0
        %6166 = vmatprep.subr.bf16.mxu0 0
        %6167 = vmatpush1.bf16.msra.mxu0 0
        %6168 = vmatprep.subr.bf16.mxu0 0
        %6169 = vmatpush1.bf16.msra.mxu0 0
        %6170 = vmatprep.subr.bf16.mxu0 0
        %6171 = vmatpush1.bf16.msra.mxu0 0
        %6172 = vmatprep.subr.bf16.mxu0 0
        %6173 = vmatpush1.bf16.msra.mxu0 0
        %6174 = vmatprep.subr.bf16.mxu0 0
        %6175 = vmatpush1.bf16.msra.mxu0 0
        %6176 = vmatprep.subr.bf16.mxu0 0
        %6177 = vmatpush1.bf16.msra.mxu0 0
        %6178 = vmatprep.subr.bf16.mxu0 0
        %6179 = vmatpush1.bf16.msra.mxu0 0
        %6180 = vmatprep.subr.bf16.mxu0 0
        %6181 = vmatpush1.bf16.msra.mxu0 0
        %6182 = vmatprep.mubr.bf16.mxu0 0
        %6183 = vmatmul.mubr.bf16.gmra.mrb[0].mxu0 %v943
        %v6184 = vpop.f32.mrb[0].mxu0
        %v6185 = vadd.f32 0.0, %v6184
        %v6186 = vpop.f32.mrb[0].mxu0
        %v6187 = vpop.f32.mrb[0].mxu0
        %v6188 = vadd.f32 0.0, %v6187
        %v6189 = vpop.f32.mrb[0].mxu0
        %6190 = vmatprep.mubr.bf16.mxu0 0
        %6191 = vmatmul.mubr.bf16.gmra.mrb[0].mxu0 %v946
        %v6192 = vpop.f32.mrb[0].mxu0
        %v6193 = vadd.f32 0.0, %v6192
        %v6194 = vpop.f32.mrb[0].mxu0
        %v6195 = vpop.f32.mrb[0].mxu0
        %v6196 = vadd.f32 0.0, %v6195
        %v6197 = vpop.f32.mrb[0].mxu0
        %6198 = vmatprep.mubr.bf16.mxu0 0
        %6199 = vmatmul.mubr.bf16.gmra.mrb[0].mxu0 %v949
        %v6200 = vpop.f32.mrb[0].mxu0
        %v6201 = vadd.f32 0.0, %v6200
        %v6202 = vpop.f32.mrb[0].mxu0
        %v6203 = vpop.f32.mrb[0].mxu0
        %v6204 = vadd.f32 0.0, %v6203
        %v6205 = vpop.f32.mrb[0].mxu0
        %6206 = vmatprep.mubr.bf16.mxu0 0
        %6207 = vmatmul.mubr.bf16.gmra.mrb[0].mxu0 %v952
        %v6208 = vpop.f32.mrb[0].mxu0
        %v6209 = vadd.f32 0.0, %v6208
        %v6210 = vpop.f32.mrb[0].mxu0
        %v6211 = vpop.f32.mrb[0].mxu0
        %v6212 = vadd.f32 0.0, %v6211
        %v6213 = vpop.f32.mrb[0].mxu0
        %6214 = vdwg.mxu0
        %v6215 = vadd.f32 %v6073, %v6185
        %v6216 = vadd.f32 %v6074, %v6188
        %v6217 = vadd.f32 %v6075, %v6193
        %v6218 = vadd.f32 %v6076, %v6196
        %v6219 = vadd.f32 %v6077, %v6201
        %v6220 = vadd.f32 %v6078, %v6204
        %v6221 = vadd.f32 %v6079, %v6209
        %v6222 = vadd.f32 %v6080, %v6212
        %v6223 = vpack.c.bf16 %v6216, %v6215
        %v6224 = vpack.c.bf16 %v6218, %v6217
        %v6225 = vpack.c.bf16 %v6220, %v6219
        %v6226 = vpack.c.bf16 %v6222, %v6221
        %6227 = vmatprep.subr.bf16.mxu0 0
        %6228 = vmatpush1.bf16.msra.mxu0 %v1047
        %6229 = vmatprep.subr.bf16.mxu0 0
        %6230 = vmatpush1.bf16.msra.mxu0 %v1048
        %6231 = vmatprep.subr.bf16.mxu0 0
        %6232 = vmatpush1.bf16.msra.mxu0 0
        %6233 = vmatprep.subr.bf16.mxu0 0
        %6234 = vmatpush1.bf16.msra.mxu0 0
        %6235 = vmatprep.subr.bf16.mxu0 0
        %6236 = vmatpush1.bf16.msra.mxu0 0
        %6237 = vmatprep.subr.bf16.mxu0 0
        %6238 = vmatpush1.bf16.msra.mxu0 0
        %6239 = vmatprep.subr.bf16.mxu0 0
        %6240 = vmatpush1.bf16.msra.mxu0 0
        %6241 = vmatprep.subr.bf16.mxu0 0
        %6242 = vmatpush1.bf16.msra.mxu0 0
        %6243 = vmatprep.subr.bf16.mxu0 0
        %6244 = vmatpush1.bf16.msra.mxu0 0
        %6245 = vmatprep.subr.bf16.mxu0 0
        %6246 = vmatpush1.bf16.msra.mxu0 0
        %6247 = vmatprep.subr.bf16.mxu0 0
        %6248 = vmatpush1.bf16.msra.mxu0 0
        %6249 = vmatprep.subr.bf16.mxu0 0
        %6250 = vmatpush1.bf16.msra.mxu0 0
        %6251 = vmatprep.subr.bf16.mxu0 0
        %6252 = vmatpush1.bf16.msra.mxu0 0
        %6253 = vmatprep.subr.bf16.mxu0 0
        %6254 = vmatpush1.bf16.msra.mxu0 0
        %6255 = vmatprep.subr.bf16.mxu0 0
        %6256 = vmatpush1.bf16.msra.mxu0 0
        %6257 = vmatprep.subr.bf16.mxu0 0
        %6258 = vmatpush1.bf16.msra.mxu0 0
        %6259 = vmatprep.mubr.bf16.mxu0 0
        %6260 = vmatmul.mubr.bf16.gmra.mrb[0].mxu0 %v5786
        %v6261 = vpop.f32.mrb[0].mxu0
        %v6262 = vadd.f32 0.0, %v6261
        %v6263 = vpop.f32.mrb[0].mxu0
        %v6264 = vpop.f32.mrb[0].mxu0
        %v6265 = vadd.f32 0.0, %v6264
        %v6266 = vpop.f32.mrb[0].mxu0
        %6267 = vmatprep.mubr.bf16.mxu0 0
        %6268 = vmatmul.mubr.bf16.gmra.mrb[0].mxu0 %v5789
        %v6269 = vpop.f32.mrb[0].mxu0
        %v6270 = vadd.f32 0.0, %v6269
        %v6271 = vpop.f32.mrb[0].mxu0
        %v6272 = vpop.f32.mrb[0].mxu0
        %v6273 = vadd.f32 0.0, %v6272
        %v6274 = vpop.f32.mrb[0].mxu0
        %6275 = vmatprep.mubr.bf16.mxu0 0
        %6276 = vmatmul.mubr.bf16.gmra.mrb[0].mxu0 %v5792
        %v6277 = vpop.f32.mrb[0].mxu0
        %v6278 = vadd.f32 0.0, %v6277
        %v6279 = vpop.f32.mrb[0].mxu0
        %v6280 = vpop.f32.mrb[0].mxu0
        %v6281 = vadd.f32 0.0, %v6280
        %v6282 = vpop.f32.mrb[0].mxu0
        %6283 = vmatprep.mubr.bf16.mxu0 0
        %6284 = vmatmul.mubr.bf16.gmra.mrb[0].mxu0 %v5795
        %v6285 = vpop.f32.mrb[0].mxu0
        %v6286 = vadd.f32 0.0, %v6285
        %v6287 = vpop.f32.mrb[0].mxu0
        %v6288 = vpop.f32.mrb[0].mxu0
        %v6289 = vadd.f32 0.0, %v6288
        %v6290 = vpop.f32.mrb[0].mxu0
        %6291 = vdwg.mxu0
        %v6293 = vsel %vm431, %v6223, 0
        %v6296 = vsel %vm431, %v6224, 0
        %v6299 = vsel %vm431, %v6225, 0
        %v6302 = vsel %vm431, %v6226, 0
        %6304 = vmatprep.subr.bf16.mxu0 0
        %6305 = vmatpush1.bf16.msra.mxu0 %v1124
        %6306 = vmatprep.subr.bf16.mxu0 0
        %6307 = vmatpush1.bf16.msra.mxu0 %v1125
        %6308 = vmatprep.subr.bf16.mxu0 0
        %6309 = vmatpush1.bf16.msra.mxu0 0
        %6310 = vmatprep.subr.bf16.mxu0 0
        %6311 = vmatpush1.bf16.msra.mxu0 0
        %6312 = vmatprep.subr.bf16.mxu0 0
        %6313 = vmatpush1.bf16.msra.mxu0 0
        %6314 = vmatprep.subr.bf16.mxu0 0
        %6315 = vmatpush1.bf16.msra.mxu0 0
        %6316 = vmatprep.subr.bf16.mxu0 0
        %6317 = vmatpush1.bf16.msra.mxu0 0
        %6318 = vmatprep.subr.bf16.mxu0 0
        %6319 = vmatpush1.bf16.msra.mxu0 0
        %6320 = vmatprep.subr.bf16.mxu0 0
        %6321 = vmatpush1.bf16.msra.mxu0 0
        %6322 = vmatprep.subr.bf16.mxu0 0
        %6323 = vmatpush1.bf16.msra.mxu0 0
        %6324 = vmatprep.subr.bf16.mxu0 0
        %6325 = vmatpush1.bf16.msra.mxu0 0
        %6326 = vmatprep.subr.bf16.mxu0 0
        %6327 = vmatpush1.bf16.msra.mxu0 0
        %6328 = vmatprep.subr.bf16.mxu0 0
        %6329 = vmatpush1.bf16.msra.mxu0 0
        %6330 = vmatprep.subr.bf16.mxu0 0
        %6331 = vmatpush1.bf16.msra.mxu0 0
        %6332 = vmatprep.subr.bf16.mxu0 0
        %6333 = vmatpush1.bf16.msra.mxu0 0
        %6334 = vmatprep.subr.bf16.mxu0 0
        %6335 = vmatpush1.bf16.msra.mxu0 0
        %6336 = vmatprep.mubr.bf16.mxu0 0
        %6337 = vmatmul.mubr.bf16.gmra.mrb[0].mxu0 %v6293
        %v6338 = vpop.f32.mrb[0].mxu0
        %v6339 = vadd.f32 %v6262, %v6338
        %v6340 = vpop.f32.mrb[0].mxu0
        %v6341 = vpop.f32.mrb[0].mxu0
        %v6342 = vadd.f32 %v6265, %v6341
        %v6343 = vpop.f32.mrb[0].mxu0
        %6344 = vmatprep.mubr.bf16.mxu0 0
        %6345 = vmatmul.mubr.bf16.gmra.mrb[0].mxu0 %v6296
        %v6346 = vpop.f32.mrb[0].mxu0
        %v6347 = vadd.f32 %v6270, %v6346
        %v6348 = vpop.f32.mrb[0].mxu0
        %v6349 = vpop.f32.mrb[0].mxu0
        %v6350 = vadd.f32 %v6273, %v6349
        %v6351 = vpop.f32.mrb[0].mxu0
        %6352 = vmatprep.mubr.bf16.mxu0 0
        %6353 = vmatmul.mubr.bf16.gmra.mrb[0].mxu0 %v6299
        %v6354 = vpop.f32.mrb[0].mxu0
        %v6355 = vadd.f32 %v6278, %v6354
        %v6356 = vpop.f32.mrb[0].mxu0
        %v6357 = vpop.f32.mrb[0].mxu0
        %v6358 = vadd.f32 %v6281, %v6357
        %v6359 = vpop.f32.mrb[0].mxu0
        %6360 = vmatprep.mubr.bf16.mxu0 0
        %6361 = vmatmul.mubr.bf16.gmra.mrb[0].mxu0 %v6302
        %v6362 = vpop.f32.mrb[0].mxu0
        %v6363 = vadd.f32 %v6286, %v6362
        %v6364 = vpop.f32.mrb[0].mxu0
        %v6365 = vpop.f32.mrb[0].mxu0
        %v6366 = vadd.f32 %v6289, %v6365
        %v6367 = vpop.f32.mrb[0].mxu0
        %6368 = vdwg.mxu0
        %v6369 = vadd.f32 %v6339, %v1208
        %v6370 = vadd.f32 %v6342, %v1208
        %v6371 = vadd.f32 %v6347, %v1208
        %v6372 = vadd.f32 %v6350, %v1208
        %v6373 = vadd.f32 %v6355, %v1208
        %v6374 = vadd.f32 %v6358, %v1208
        %v6375 = vadd.f32 %v6363, %v1208
        %v6376 = vadd.f32 %v6366, %v1208
        %v6377 = vxor.u32 %v6369, 2147483648
        %v6378 = vxor.u32 %v6370, 2147483648
        %v6379 = vxor.u32 %v6371, 2147483648
        %v6380 = vxor.u32 %v6372, 2147483648
        %v6381 = vxor.u32 %v6373, 2147483648
        %v6382 = vxor.u32 %v6374, 2147483648
        %v6383 = vxor.u32 %v6375, 2147483648
        %v6384 = vxor.u32 %v6376, 2147483648
        %v6385 = vmul.f32 %v6377, 1.442695
        %v6386 = vpow.pop %v6385
        %v6387 = vmul.f32 %v6378, 1.442695
        %v6388 = vpow.pop %v6387
        %v6389 = vmul.f32 %v6379, 1.442695
        %v6390 = vpow.pop %v6389
        %v6391 = vmul.f32 %v6380, 1.442695
        %v6392 = vpow.pop %v6391
        %v6393 = vmul.f32 %v6381, 1.442695
        %v6394 = vpow.pop %v6393
        %v6395 = vmul.f32 %v6382, 1.442695
        %v6396 = vpow.pop %v6395
        %v6397 = vmul.f32 %v6383, 1.442695
        %v6398 = vpow.pop %v6397
        %v6399 = vmul.f32 %v6384, 1.442695
        %v6400 = vpow.pop %v6399
        %v6401 = vadd.f32 %v6386, 1.0
        %v6402 = vadd.f32 %v6388, 1.0
        %v6403 = vadd.f32 %v6390, 1.0
        %v6404 = vadd.f32 %v6392, 1.0
        %v6405 = vadd.f32 %v6394, 1.0
        %v6406 = vadd.f32 %v6396, 1.0
        %v6407 = vadd.f32 %v6398, 1.0
        %v6408 = vadd.f32 %v6400, 1.0
        %v6409 = vrcp.pop %v6401
        %v6410 = vmul.f32 1.0, %v6409
        %v6411 = vrcp.pop %v6402
        %v6412 = vmul.f32 1.0, %v6411
        %v6413 = vrcp.pop %v6403
        %v6414 = vmul.f32 1.0, %v6413
        %v6415 = vrcp.pop %v6404
        %v6416 = vmul.f32 1.0, %v6415
        %v6417 = vrcp.pop %v6405
        %v6418 = vmul.f32 1.0, %v6417
        %v6419 = vrcp.pop %v6406
        %v6420 = vmul.f32 1.0, %v6419
        %v6421 = vrcp.pop %v6407
        %v6422 = vmul.f32 1.0, %v6421
        %v6423 = vrcp.pop %v6408
        %v6424 = vmul.f32 1.0, %v6423
        %6425 = vmatprep.subr.bf16.mxu0 0
        %6426 = vmatpush1.bf16.msra.mxu0 %v1283
        %6427 = vmatprep.subr.bf16.mxu0 0
        %6428 = vmatpush1.bf16.msra.mxu0 %v1284
        %6429 = vmatprep.subr.bf16.mxu0 0
        %6430 = vmatpush1.bf16.msra.mxu0 0
        %6431 = vmatprep.subr.bf16.mxu0 0
        %6432 = vmatpush1.bf16.msra.mxu0 0
        %6433 = vmatprep.subr.bf16.mxu0 0
        %6434 = vmatpush1.bf16.msra.mxu0 0
        %6435 = vmatprep.subr.bf16.mxu0 0
        %6436 = vmatpush1.bf16.msra.mxu0 0
        %6437 = vmatprep.subr.bf16.mxu0 0
        %6438 = vmatpush1.bf16.msra.mxu0 0
        %6439 = vmatprep.subr.bf16.mxu0 0
        %6440 = vmatpush1.bf16.msra.mxu0 0
        %6441 = vmatprep.subr.bf16.mxu0 0
        %6442 = vmatpush1.bf16.msra.mxu0 0
        %6443 = vmatprep.subr.bf16.mxu0 0
        %6444 = vmatpush1.bf16.msra.mxu0 0
        %6445 = vmatprep.subr.bf16.mxu0 0
        %6446 = vmatpush1.bf16.msra.mxu0 0
        %6447 = vmatprep.subr.bf16.mxu0 0
        %6448 = vmatpush1.bf16.msra.mxu0 0
        %6449 = vmatprep.subr.bf16.mxu0 0
        %6450 = vmatpush1.bf16.msra.mxu0 0
        %6451 = vmatprep.subr.bf16.mxu0 0
        %6452 = vmatpush1.bf16.msra.mxu0 0
        %6453 = vmatprep.subr.bf16.mxu0 0
        %6454 = vmatpush1.bf16.msra.mxu0 0
        %6455 = vmatprep.subr.bf16.mxu0 0
        %6456 = vmatpush1.bf16.msra.mxu0 0
        %6457 = vmatprep.mubr.bf16.mxu0 0
        %6458 = vmatmul.mubr.bf16.gmra.mrb[0].mxu0 %v5786
        %v6459 = vpop.f32.mrb[0].mxu0
        %v6460 = vadd.f32 0.0, %v6459
        %v6461 = vpop.f32.mrb[0].mxu0
        %v6462 = vpop.f32.mrb[0].mxu0
        %v6463 = vadd.f32 0.0, %v6462
        %v6464 = vpop.f32.mrb[0].mxu0
        %6465 = vmatprep.mubr.bf16.mxu0 0
        %6466 = vmatmul.mubr.bf16.gmra.mrb[0].mxu0 %v5789
        %v6467 = vpop.f32.mrb[0].mxu0
        %v6468 = vadd.f32 0.0, %v6467
        %v6469 = vpop.f32.mrb[0].mxu0
        %v6470 = vpop.f32.mrb[0].mxu0
        %v6471 = vadd.f32 0.0, %v6470
        %v6472 = vpop.f32.mrb[0].mxu0
        %6473 = vmatprep.mubr.bf16.mxu0 0
        %6474 = vmatmul.mubr.bf16.gmra.mrb[0].mxu0 %v5792
        %v6475 = vpop.f32.mrb[0].mxu0
        %v6476 = vadd.f32 0.0, %v6475
        %v6477 = vpop.f32.mrb[0].mxu0
        %v6478 = vpop.f32.mrb[0].mxu0
        %v6479 = vadd.f32 0.0, %v6478
        %v6480 = vpop.f32.mrb[0].mxu0
        %6481 = vmatprep.mubr.bf16.mxu0 0
        %6482 = vmatmul.mubr.bf16.gmra.mrb[0].mxu0 %v5795
        %v6483 = vpop.f32.mrb[0].mxu0
        %v6484 = vadd.f32 0.0, %v6483
        %v6485 = vpop.f32.mrb[0].mxu0
        %v6486 = vpop.f32.mrb[0].mxu0
        %v6487 = vadd.f32 0.0, %v6486
        %v6488 = vpop.f32.mrb[0].mxu0
        %6489 = vdwg.mxu0
        %6490 = vmatprep.subr.bf16.mxu0 0
        %6491 = vmatpush1.bf16.msra.mxu0 %v1360
        %6492 = vmatprep.subr.bf16.mxu0 0
        %6493 = vmatpush1.bf16.msra.mxu0 %v1361
        %6494 = vmatprep.subr.bf16.mxu0 0
        %6495 = vmatpush1.bf16.msra.mxu0 0
        %6496 = vmatprep.subr.bf16.mxu0 0
        %6497 = vmatpush1.bf16.msra.mxu0 0
        %6498 = vmatprep.subr.bf16.mxu0 0
        %6499 = vmatpush1.bf16.msra.mxu0 0
        %6500 = vmatprep.subr.bf16.mxu0 0
        %6501 = vmatpush1.bf16.msra.mxu0 0
        %6502 = vmatprep.subr.bf16.mxu0 0
        %6503 = vmatpush1.bf16.msra.mxu0 0
        %6504 = vmatprep.subr.bf16.mxu0 0
        %6505 = vmatpush1.bf16.msra.mxu0 0
        %6506 = vmatprep.subr.bf16.mxu0 0
        %6507 = vmatpush1.bf16.msra.mxu0 0
        %6508 = vmatprep.subr.bf16.mxu0 0
        %6509 = vmatpush1.bf16.msra.mxu0 0
        %6510 = vmatprep.subr.bf16.mxu0 0
        %6511 = vmatpush1.bf16.msra.mxu0 0
        %6512 = vmatprep.subr.bf16.mxu0 0
        %6513 = vmatpush1.bf16.msra.mxu0 0
        %6514 = vmatprep.subr.bf16.mxu0 0
        %6515 = vmatpush1.bf16.msra.mxu0 0
        %6516 = vmatprep.subr.bf16.mxu0 0
        %6517 = vmatpush1.bf16.msra.mxu0 0
        %6518 = vmatprep.subr.bf16.mxu0 0
        %6519 = vmatpush1.bf16.msra.mxu0 0
        %6520 = vmatprep.subr.bf16.mxu0 0
        %6521 = vmatpush1.bf16.msra.mxu0 0
        %6522 = vmatprep.mubr.bf16.mxu0 0
        %6523 = vmatmul.mubr.bf16.gmra.mrb[0].mxu0 %v6293
        %v6524 = vpop.f32.mrb[0].mxu0
        %v6525 = vadd.f32 %v6460, %v6524
        %v6526 = vpop.f32.mrb[0].mxu0
        %v6527 = vpop.f32.mrb[0].mxu0
        %v6528 = vadd.f32 %v6463, %v6527
        %v6529 = vpop.f32.mrb[0].mxu0
        %6530 = vmatprep.mubr.bf16.mxu0 0
        %6531 = vmatmul.mubr.bf16.gmra.mrb[0].mxu0 %v6296
        %v6532 = vpop.f32.mrb[0].mxu0
        %v6533 = vadd.f32 %v6468, %v6532
        %v6534 = vpop.f32.mrb[0].mxu0
        %v6535 = vpop.f32.mrb[0].mxu0
        %v6536 = vadd.f32 %v6471, %v6535
        %v6537 = vpop.f32.mrb[0].mxu0
        %6538 = vmatprep.mubr.bf16.mxu0 0
        %6539 = vmatmul.mubr.bf16.gmra.mrb[0].mxu0 %v6299
        %v6540 = vpop.f32.mrb[0].mxu0
        %v6541 = vadd.f32 %v6476, %v6540
        %v6542 = vpop.f32.mrb[0].mxu0
        %v6543 = vpop.f32.mrb[0].mxu0
        %v6544 = vadd.f32 %v6479, %v6543
        %v6545 = vpop.f32.mrb[0].mxu0
        %6546 = vmatprep.mubr.bf16.mxu0 0
        %6547 = vmatmul.mubr.bf16.gmra.mrb[0].mxu0 %v6302
        %v6548 = vpop.f32.mrb[0].mxu0
        %v6549 = vadd.f32 %v6484, %v6548
        %v6550 = vpop.f32.mrb[0].mxu0
        %v6551 = vpop.f32.mrb[0].mxu0
        %v6552 = vadd.f32 %v6487, %v6551
        %v6553 = vpop.f32.mrb[0].mxu0
        %6554 = vdwg.mxu0
        %v6555 = vadd.f32 %v6525, %v1432
        %v6556 = vadd.f32 %v6528, %v1432
        %v6557 = vadd.f32 %v6533, %v1432
        %v6558 = vadd.f32 %v6536, %v1432
        %v6559 = vadd.f32 %v6541, %v1432
        %v6560 = vadd.f32 %v6544, %v1432
        %v6561 = vadd.f32 %v6549, %v1432
        %v6562 = vadd.f32 %v6552, %v1432
        %v6563 = vxor.u32 %v6555, 2147483648
        %v6564 = vxor.u32 %v6556, 2147483648
        %v6565 = vxor.u32 %v6557, 2147483648
        %v6566 = vxor.u32 %v6558, 2147483648
        %v6567 = vxor.u32 %v6559, 2147483648
        %v6568 = vxor.u32 %v6560, 2147483648
        %v6569 = vxor.u32 %v6561, 2147483648
        %v6570 = vxor.u32 %v6562, 2147483648
        %v6571 = vmul.f32 %v6563, 1.442695
        %v6572 = vpow.pop %v6571
        %v6573 = vmul.f32 %v6564, 1.442695
        %v6574 = vpow.pop %v6573
        %v6575 = vmul.f32 %v6565, 1.442695
        %v6576 = vpow.pop %v6575
        %v6577 = vmul.f32 %v6566, 1.442695
        %v6578 = vpow.pop %v6577
        %v6579 = vmul.f32 %v6567, 1.442695
        %v6580 = vpow.pop %v6579
        %v6581 = vmul.f32 %v6568, 1.442695
        %v6582 = vpow.pop %v6581
        %v6583 = vmul.f32 %v6569, 1.442695
        %v6584 = vpow.pop %v6583
        %v6585 = vmul.f32 %v6570, 1.442695
        %v6586 = vpow.pop %v6585
        %v6587 = vadd.f32 %v6572, 1.0
        %v6588 = vadd.f32 %v6574, 1.0
        %v6589 = vadd.f32 %v6576, 1.0
        %v6590 = vadd.f32 %v6578, 1.0
        %v6591 = vadd.f32 %v6580, 1.0
        %v6592 = vadd.f32 %v6582, 1.0
        %v6593 = vadd.f32 %v6584, 1.0
        %v6594 = vadd.f32 %v6586, 1.0
        %v6595 = vrcp.pop %v6587
        %v6596 = vmul.f32 1.0, %v6595
        %v6597 = vrcp.pop %v6588
        %v6598 = vmul.f32 1.0, %v6597
        %v6599 = vrcp.pop %v6589
        %v6600 = vmul.f32 1.0, %v6599
        %v6601 = vrcp.pop %v6590
        %v6602 = vmul.f32 1.0, %v6601
        %v6603 = vrcp.pop %v6591
        %v6604 = vmul.f32 1.0, %v6603
        %v6605 = vrcp.pop %v6592
        %v6606 = vmul.f32 1.0, %v6605
        %v6607 = vrcp.pop %v6593
        %v6608 = vmul.f32 1.0, %v6607
        %v6609 = vrcp.pop %v6594
        %v6610 = vmul.f32 1.0, %v6609
        %6611 = vmatprep.subr.bf16.mxu0 0
        %6612 = vmatpush1.bf16.msra.mxu0 %v1506
        %6613 = vmatprep.subr.bf16.mxu0 0
        %6614 = vmatpush1.bf16.msra.mxu0 %v1507
        %6615 = vmatprep.subr.bf16.mxu0 0
        %6616 = vmatpush1.bf16.msra.mxu0 0
        %6617 = vmatprep.subr.bf16.mxu0 0
        %6618 = vmatpush1.bf16.msra.mxu0 0
        %6619 = vmatprep.subr.bf16.mxu0 0
        %6620 = vmatpush1.bf16.msra.mxu0 0
        %6621 = vmatprep.subr.bf16.mxu0 0
        %6622 = vmatpush1.bf16.msra.mxu0 0
        %6623 = vmatprep.subr.bf16.mxu0 0
        %6624 = vmatpush1.bf16.msra.mxu0 0
        %6625 = vmatprep.subr.bf16.mxu0 0
        %6626 = vmatpush1.bf16.msra.mxu0 0
        %6627 = vmatprep.subr.bf16.mxu0 0
        %6628 = vmatpush1.bf16.msra.mxu0 0
        %6629 = vmatprep.subr.bf16.mxu0 0
        %6630 = vmatpush1.bf16.msra.mxu0 0
        %6631 = vmatprep.subr.bf16.mxu0 0
        %6632 = vmatpush1.bf16.msra.mxu0 0
        %6633 = vmatprep.subr.bf16.mxu0 0
        %6634 = vmatpush1.bf16.msra.mxu0 0
        %6635 = vmatprep.subr.bf16.mxu0 0
        %6636 = vmatpush1.bf16.msra.mxu0 0
        %6637 = vmatprep.subr.bf16.mxu0 0
        %6638 = vmatpush1.bf16.msra.mxu0 0
        %6639 = vmatprep.subr.bf16.mxu0 0
        %6640 = vmatpush1.bf16.msra.mxu0 0
        %6641 = vmatprep.subr.bf16.mxu0 0
        %6642 = vmatpush1.bf16.msra.mxu0 0
        %6643 = vmatprep.mubr.bf16.mxu0 0
        %6644 = vmatmul.mubr.bf16.gmra.mrb[0].mxu0 %v6293
        %v6645 = vpop.f32.mrb[0].mxu0
        %v6646 = vadd.f32 %v1497, %v6645
        %v6647 = vpop.f32.mrb[0].mxu0
        %v6648 = vpop.f32.mrb[0].mxu0
        %v6649 = vadd.f32 %v1497, %v6648
        %v6650 = vpop.f32.mrb[0].mxu0
        %6651 = vmatprep.mubr.bf16.mxu0 0
        %6652 = vmatmul.mubr.bf16.gmra.mrb[0].mxu0 %v6296
        %v6653 = vpop.f32.mrb[0].mxu0
        %v6654 = vadd.f32 %v1497, %v6653
        %v6655 = vpop.f32.mrb[0].mxu0
        %v6656 = vpop.f32.mrb[0].mxu0
        %v6657 = vadd.f32 %v1497, %v6656
        %v6658 = vpop.f32.mrb[0].mxu0
        %6659 = vmatprep.mubr.bf16.mxu0 0
        %6660 = vmatmul.mubr.bf16.gmra.mrb[0].mxu0 %v6299
        %v6661 = vpop.f32.mrb[0].mxu0
        %v6662 = vadd.f32 %v1497, %v6661
        %v6663 = vpop.f32.mrb[0].mxu0
        %v6664 = vpop.f32.mrb[0].mxu0
        %v6665 = vadd.f32 %v1497, %v6664
        %v6666 = vpop.f32.mrb[0].mxu0
        %6667 = vmatprep.mubr.bf16.mxu0 0
        %6668 = vmatmul.mubr.bf16.gmra.mrb[0].mxu0 %v6302
        %v6669 = vpop.f32.mrb[0].mxu0
        %v6670 = vadd.f32 %v1497, %v6669
        %v6671 = vpop.f32.mrb[0].mxu0
        %v6672 = vpop.f32.mrb[0].mxu0
        %v6673 = vadd.f32 %v1497, %v6672
        %v6674 = vpop.f32.mrb[0].mxu0
        %6675 = vdwg.mxu0
        %6676 = vmatprep.subr.bf16.mxu0 0
        %6677 = vmatpush1.bf16.msra.mxu0 %v1592
        %6678 = vmatprep.subr.bf16.mxu0 0
        %6679 = vmatpush1.bf16.msra.mxu0 %v1593
        %6680 = vmatprep.subr.bf16.mxu0 0
        %6681 = vmatpush1.bf16.msra.mxu0 0
        %6682 = vmatprep.subr.bf16.mxu0 0
        %6683 = vmatpush1.bf16.msra.mxu0 0
        %6684 = vmatprep.subr.bf16.mxu0 0
        %6685 = vmatpush1.bf16.msra.mxu0 0
        %6686 = vmatprep.subr.bf16.mxu0 0
        %6687 = vmatpush1.bf16.msra.mxu0 0
        %6688 = vmatprep.subr.bf16.mxu0 0
        %6689 = vmatpush1.bf16.msra.mxu0 0
        %6690 = vmatprep.subr.bf16.mxu0 0
        %6691 = vmatpush1.bf16.msra.mxu0 0
        %6692 = vmatprep.subr.bf16.mxu0 0
        %6693 = vmatpush1.bf16.msra.mxu0 0
        %6694 = vmatprep.subr.bf16.mxu0 0
        %6695 = vmatpush1.bf16.msra.mxu0 0
        %6696 = vmatprep.subr.bf16.mxu0 0
        %6697 = vmatpush1.bf16.msra.mxu0 0
        %6698 = vmatprep.subr.bf16.mxu0 0
        %6699 = vmatpush1.bf16.msra.mxu0 0
        %6700 = vmatprep.subr.bf16.mxu0 0
        %6701 = vmatpush1.bf16.msra.mxu0 0
        %6702 = vmatprep.subr.bf16.mxu0 0
        %6703 = vmatpush1.bf16.msra.mxu0 0
        %6704 = vmatprep.subr.bf16.mxu0 0
        %6705 = vmatpush1.bf16.msra.mxu0 0
        %6706 = vmatprep.subr.bf16.mxu0 0
        %6707 = vmatpush1.bf16.msra.mxu0 0
        %6708 = vmatprep.mubr.bf16.mxu0 0
        %6709 = vmatmul.mubr.bf16.gmra.mrb[0].mxu0 %v5786
        %v6710 = vpop.f32.mrb[0].mxu0
        %v6711 = vadd.f32 %v1583, %v6710
        %v6712 = vpop.f32.mrb[0].mxu0
        %v6713 = vpop.f32.mrb[0].mxu0
        %v6714 = vadd.f32 %v1583, %v6713
        %v6715 = vpop.f32.mrb[0].mxu0
        %6716 = vmatprep.mubr.bf16.mxu0 0
        %6717 = vmatmul.mubr.bf16.gmra.mrb[0].mxu0 %v5789
        %v6718 = vpop.f32.mrb[0].mxu0
        %v6719 = vadd.f32 %v1583, %v6718
        %v6720 = vpop.f32.mrb[0].mxu0
        %v6721 = vpop.f32.mrb[0].mxu0
        %v6722 = vadd.f32 %v1583, %v6721
        %v6723 = vpop.f32.mrb[0].mxu0
        %6724 = vmatprep.mubr.bf16.mxu0 0
        %6725 = vmatmul.mubr.bf16.gmra.mrb[0].mxu0 %v5792
        %v6726 = vpop.f32.mrb[0].mxu0
        %v6727 = vadd.f32 %v1583, %v6726
        %v6728 = vpop.f32.mrb[0].mxu0
        %v6729 = vpop.f32.mrb[0].mxu0
        %v6730 = vadd.f32 %v1583, %v6729
        %v6731 = vpop.f32.mrb[0].mxu0
        %6732 = vmatprep.mubr.bf16.mxu0 0
        %6733 = vmatmul.mubr.bf16.gmra.mrb[0].mxu0 %v5795
        %v6734 = vpop.f32.mrb[0].mxu0
        %v6735 = vadd.f32 %v1583, %v6734
        %v6736 = vpop.f32.mrb[0].mxu0
        %v6737 = vpop.f32.mrb[0].mxu0
        %v6738 = vadd.f32 %v1583, %v6737
        %v6739 = vpop.f32.mrb[0].mxu0
        %6740 = vdwg.mxu0
        %v6741 = vmul.f32 %v6410, %v6711
        %v6742 = vmul.f32 %v6412, %v6714
        %v6743 = vmul.f32 %v6414, %v6719
        %v6744 = vmul.f32 %v6416, %v6722
        %v6745 = vmul.f32 %v6418, %v6727
        %v6746 = vmul.f32 %v6420, %v6730
        %v6747 = vmul.f32 %v6422, %v6735
        %v6748 = vmul.f32 %v6424, %v6738
        %v6749 = vadd.f32 %v6646, %v6741
        %v6750 = vadd.f32 %v6649, %v6742
        %v6751 = vadd.f32 %v6654, %v6743
        %v6752 = vadd.f32 %v6657, %v6744
        %v6753 = vadd.f32 %v6662, %v6745
        %v6754 = vadd.f32 %v6665, %v6746
        %v6755 = vadd.f32 %v6670, %v6747
        %v6756 = vadd.f32 %v6673, %v6748
        %v6757 = vtanh.pop %v6749
        %v6758 = vtanh.pop %v6750
        %v6759 = vtanh.pop %v6751
        %v6760 = vtanh.pop %v6752
        %v6761 = vtanh.pop %v6753
        %v6762 = vtanh.pop %v6754
        %v6763 = vtanh.pop %v6755
        %v6764 = vtanh.pop %v6756
        %v6765 = vsub.f32 1.0, %v6596
        %v6766 = vsub.f32 1.0, %v6598
        %v6767 = vsub.f32 1.0, %v6600
        %v6768 = vsub.f32 1.0, %v6602
        %v6769 = vsub.f32 1.0, %v6604
        %v6770 = vsub.f32 1.0, %v6606
        %v6771 = vsub.f32 1.0, %v6608
        %v6772 = vsub.f32 1.0, %v6610
        %v6773 = vmul.f32 %v6765, %v6757
        %v6774 = vmul.f32 %v6766, %v6758
        %v6775 = vmul.f32 %v6767, %v6759
        %v6776 = vmul.f32 %v6768, %v6760
        %v6777 = vmul.f32 %v6769, %v6761
        %v6778 = vmul.f32 %v6770, %v6762
        %v6779 = vmul.f32 %v6771, %v6763
        %v6780 = vmul.f32 %v6772, %v6764
        %v6781 = vmul.f32 %v6596, %v5773
        %v6782 = vmul.f32 %v6598, %v5774
        %v6783 = vmul.f32 %v6600, %v5775
        %v6784 = vmul.f32 %v6602, %v5776
        %v6785 = vmul.f32 %v6604, %v5777
        %v6786 = vmul.f32 %v6606, %v5778
        %v6787 = vmul.f32 %v6608, %v5779
        %v6788 = vmul.f32 %v6610, %v5780
        %v6789 = vadd.f32 %v6773, %v6781
        %v6790 = vadd.f32 %v6774, %v6782
        %v6791 = vadd.f32 %v6775, %v6783
        %v6792 = vadd.f32 %v6776, %v6784
        %v6793 = vadd.f32 %v6777, %v6785
        %v6794 = vadd.f32 %v6778, %v6786
        %v6795 = vadd.f32 %v6779, %v6787
        %v6796 = vadd.f32 %v6780, %v6788
        %v6797 = vpack.c.bf16 %v6790, %v6789
        %v6798 = vpack.c.bf16 %v6792, %v6791
        %v6799 = vpack.c.bf16 %v6794, %v6793
        %v6800 = vpack.c.bf16 %v6796, %v6795
        %v6802 = vsel %vm431, %v6797, 0
        %v6805 = vsel %vm431, %v6798, 0
        %v6808 = vsel %vm431, %v6799, 0
        %v6811 = vsel %vm431, %v6800, 0
        %6813 = vmatprep.subr.bf16.mxu0 0
        %6814 = vmatpush1.bf16.msra.mxu0 %v427
        %6815 = vmatprep.subr.bf16.mxu0 0
        %6816 = vmatpush1.bf16.msra.mxu0 %v428
        %6817 = vmatprep.subr.bf16.mxu0 0
        %6818 = vmatpush1.bf16.msra.mxu0 0
        %6819 = vmatprep.subr.bf16.mxu0 0
        %6820 = vmatpush1.bf16.msra.mxu0 0
        %6821 = vmatprep.subr.bf16.mxu0 0
        %6822 = vmatpush1.bf16.msra.mxu0 0
        %6823 = vmatprep.subr.bf16.mxu0 0
        %6824 = vmatpush1.bf16.msra.mxu0 0
        %6825 = vmatprep.subr.bf16.mxu0 0
        %6826 = vmatpush1.bf16.msra.mxu0 0
        %6827 = vmatprep.subr.bf16.mxu0 0
        %6828 = vmatpush1.bf16.msra.mxu0 0
        %6829 = vmatprep.subr.bf16.mxu0 0
        %6830 = vmatpush1.bf16.msra.mxu0 0
        %6831 = vmatprep.subr.bf16.mxu0 0
        %6832 = vmatpush1.bf16.msra.mxu0 0
        %6833 = vmatprep.subr.bf16.mxu0 0
        %6834 = vmatpush1.bf16.msra.mxu0 0
        %6835 = vmatprep.subr.bf16.mxu0 0
        %6836 = vmatpush1.bf16.msra.mxu0 0
        %6837 = vmatprep.subr.bf16.mxu0 0
        %6838 = vmatpush1.bf16.msra.mxu0 0
        %6839 = vmatprep.subr.bf16.mxu0 0
        %6840 = vmatpush1.bf16.msra.mxu0 0
        %6841 = vmatprep.subr.bf16.mxu0 0
        %6842 = vmatpush1.bf16.msra.mxu0 0
        %6843 = vmatprep.subr.bf16.mxu0 0
        %6844 = vmatpush1.bf16.msra.mxu0 0
        %6845 = vmatprep.mubr.bf16.mxu0 0
        %6846 = vmatmul.mubr.bf16.gmra.mrb[0].mxu0 %v6802
        %v6847 = vpop.f32.mrb[0].mxu0
        %v6848 = vadd.f32 0.0, %v6847
        %v6849 = vpop.f32.mrb[0].mxu0
        %v6850 = vpop.f32.mrb[0].mxu0
        %v6851 = vadd.f32 0.0, %v6850
        %v6852 = vpop.f32.mrb[0].mxu0
        %6853 = vmatprep.mubr.bf16.mxu0 0
        %6854 = vmatmul.mubr.bf16.gmra.mrb[0].mxu0 %v6805
        %v6855 = vpop.f32.mrb[0].mxu0
        %v6856 = vadd.f32 0.0, %v6855
        %v6857 = vpop.f32.mrb[0].mxu0
        %v6858 = vpop.f32.mrb[0].mxu0
        %v6859 = vadd.f32 0.0, %v6858
        %v6860 = vpop.f32.mrb[0].mxu0
        %6861 = vmatprep.mubr.bf16.mxu0 0
        %6862 = vmatmul.mubr.bf16.gmra.mrb[0].mxu0 %v6808
        %v6863 = vpop.f32.mrb[0].mxu0
        %v6864 = vadd.f32 0.0, %v6863
        %v6865 = vpop.f32.mrb[0].mxu0
        %v6866 = vpop.f32.mrb[0].mxu0
        %v6867 = vadd.f32 0.0, %v6866
        %v6868 = vpop.f32.mrb[0].mxu0
        %6869 = vmatprep.mubr.bf16.mxu0 0
        %6870 = vmatmul.mubr.bf16.gmra.mrb[0].mxu0 %v6811
        %v6871 = vpop.f32.mrb[0].mxu0
        %v6872 = vadd.f32 0.0, %v6871
        %v6873 = vpop.f32.mrb[0].mxu0
        %v6874 = vpop.f32.mrb[0].mxu0
        %v6875 = vadd.f32 0.0, %v6874
        %v6876 = vpop.f32.mrb[0].mxu0
        %6877 = vdwg.mxu0
        %v6878 = vpack.c.bf16 %v6851, %v6848
        %v6879 = vpack.c.bf16 %v6859, %v6856
        %v6880 = vpack.c.bf16 %v6867, %v6864
        %v6881 = vpack.c.bf16 %v6875, %v6872
        %6882 = vmatprep.subr.bf16.mxu0 0
        %6883 = vmatpush1.bf16.msra.mxu0 %v6878
        %6884 = vmatprep.subr.bf16.mxu0 0
        %6885 = vmatpush1.bf16.msra.mxu0 %v6879
        %6886 = vmatprep.subr.bf16.mxu0 0
        %6887 = vmatpush1.bf16.msra.mxu0 %v6880
        %6888 = vmatprep.subr.bf16.mxu0 0
        %6889 = vmatpush1.bf16.msra.mxu0 %v6881
        %6890 = vmatprep.subr.bf16.mxu0 0
        %6891 = vmatpush1.bf16.msra.mxu0 0
        %6892 = vmatprep.subr.bf16.mxu0 0
        %6893 = vmatpush1.bf16.msra.mxu0 0
        %6894 = vmatprep.subr.bf16.mxu0 0
        %6895 = vmatpush1.bf16.msra.mxu0 0
        %6896 = vmatprep.subr.bf16.mxu0 0
        %6897 = vmatpush1.bf16.msra.mxu0 0
        %6898 = vmatprep.subr.bf16.mxu0 0
        %6899 = vmatpush1.bf16.msra.mxu0 0
        %6900 = vmatprep.subr.bf16.mxu0 0
        %6901 = vmatpush1.bf16.msra.mxu0 0
        %6902 = vmatprep.subr.bf16.mxu0 0
        %6903 = vmatpush1.bf16.msra.mxu0 0
        %6904 = vmatprep.subr.bf16.mxu0 0
        %6905 = vmatpush1.bf16.msra.mxu0 0
        %6906 = vmatprep.subr.bf16.mxu0 0
        %6907 = vmatpush1.bf16.msra.mxu0 0
        %6908 = vmatprep.subr.bf16.mxu0 0
        %6909 = vmatpush1.bf16.msra.mxu0 0
        %6910 = vmatprep.subr.bf16.mxu0 0
        %6911 = vmatpush1.bf16.msra.mxu0 0
        %6912 = vmatprep.subr.bf16.mxu0 0
        %6913 = vmatpush1.bf16.msra.mxu0 0
        %6914 = vmatprep.mubr.bf16.mxu0 0
        %6915 = vmatmul.mubr.bf16.gmra.mrb[0].mxu0 %v543
        %v6916 = vpop.f32.mrb[0].mxu0
        %v6917 = vadd.f32 0.0, %v6916
        %v6918 = vpop.f32.mrb[0].mxu0
        %v6919 = vpop.f32.mrb[0].mxu0
        %v6920 = vadd.f32 0.0, %v6919
        %v6921 = vpop.f32.mrb[0].mxu0
        %6922 = vmatprep.mubr.bf16.mxu0 0
        %6923 = vmatmul.mubr.bf16.gmra.mrb[0].mxu0 %v546
        %v6924 = vpop.f32.mrb[0].mxu0
        %v6925 = vadd.f32 0.0, %v6924
        %v6926 = vpop.f32.mrb[0].mxu0
        %v6927 = vpop.f32.mrb[0].mxu0
        %v6928 = vadd.f32 0.0, %v6927
        %v6929 = vpop.f32.mrb[0].mxu0
        %6930 = vmatprep.mubr.bf16.mxu0 0
        %6931 = vmatmul.mubr.bf16.gmra.mrb[0].mxu0 %v549
        %v6932 = vpop.f32.mrb[0].mxu0
        %v6933 = vadd.f32 0.0, %v6932
        %v6934 = vpop.f32.mrb[0].mxu0
        %v6935 = vpop.f32.mrb[0].mxu0
        %v6936 = vadd.f32 0.0, %v6935
        %v6937 = vpop.f32.mrb[0].mxu0
        %6938 = vmatprep.mubr.bf16.mxu0 0
        %6939 = vmatmul.mubr.bf16.gmra.mrb[0].mxu0 %v552
        %v6940 = vpop.f32.mrb[0].mxu0
        %v6941 = vadd.f32 0.0, %v6940
        %v6942 = vpop.f32.mrb[0].mxu0
        %v6943 = vpop.f32.mrb[0].mxu0
        %v6944 = vadd.f32 0.0, %v6943
        %v6945 = vpop.f32.mrb[0].mxu0
        %6946 = vdwg.mxu0
        %v6947 = vadd.f32 %v407, %v6917
        %v6948 = vadd.f32 %v408, %v6920
        %v6949 = vadd.f32 %v409, %v6925
        %v6950 = vadd.f32 %v410, %v6928
        %v6951 = vadd.f32 %v411, %v6933
        %v6952 = vadd.f32 %v412, %v6936
        %v6953 = vadd.f32 %v413, %v6941
        %v6954 = vadd.f32 %v414, %v6944
        %6955 = vmatprep.subr.bf16.mxu0 0
        %6956 = vmatpush1.bf16.msra.mxu0 %v640
        %6957 = vmatprep.subr.bf16.mxu0 0
        %6958 = vmatpush1.bf16.msra.mxu0 %v641
        %6959 = vmatprep.subr.bf16.mxu0 0
        %6960 = vmatpush1.bf16.msra.mxu0 0
        %6961 = vmatprep.subr.bf16.mxu0 0
        %6962 = vmatpush1.bf16.msra.mxu0 0
        %6963 = vmatprep.subr.bf16.mxu0 0
        %6964 = vmatpush1.bf16.msra.mxu0 0
        %6965 = vmatprep.subr.bf16.mxu0 0
        %6966 = vmatpush1.bf16.msra.mxu0 0
        %6967 = vmatprep.subr.bf16.mxu0 0
        %6968 = vmatpush1.bf16.msra.mxu0 0
        %6969 = vmatprep.subr.bf16.mxu0 0
        %6970 = vmatpush1.bf16.msra.mxu0 0
        %6971 = vmatprep.subr.bf16.mxu0 0
        %6972 = vmatpush1.bf16.msra.mxu0 0
        %6973 = vmatprep.subr.bf16.mxu0 0
        %6974 = vmatpush1.bf16.msra.mxu0 0
        %6975 = vmatprep.subr.bf16.mxu0 0
        %6976 = vmatpush1.bf16.msra.mxu0 0
        %6977 = vmatprep.subr.bf16.mxu0 0
        %6978 = vmatpush1.bf16.msra.mxu0 0
        %6979 = vmatprep.subr.bf16.mxu0 0
        %6980 = vmatpush1.bf16.msra.mxu0 0
        %6981 = vmatprep.subr.bf16.mxu0 0
        %6982 = vmatpush1.bf16.msra.mxu0 0
        %6983 = vmatprep.subr.bf16.mxu0 0
        %6984 = vmatpush1.bf16.msra.mxu0 0
        %6985 = vmatprep.subr.bf16.mxu0 0
        %6986 = vmatpush1.bf16.msra.mxu0 0
        %6987 = vmatprep.mubr.bf16.mxu0 0
        %6988 = vmatmul.mubr.bf16.gmra.mrb[0].mxu0 %v6802
        %v6989 = vpop.f32.mrb[0].mxu0
        %v6990 = vadd.f32 0.0, %v6989
        %v6991 = vpop.f32.mrb[0].mxu0
        %v6992 = vpop.f32.mrb[0].mxu0
        %v6993 = vadd.f32 0.0, %v6992
        %v6994 = vpop.f32.mrb[0].mxu0
        %6995 = vmatprep.mubr.bf16.mxu0 0
        %6996 = vmatmul.mubr.bf16.gmra.mrb[0].mxu0 %v6805
        %v6997 = vpop.f32.mrb[0].mxu0
        %v6998 = vadd.f32 0.0, %v6997
        %v6999 = vpop.f32.mrb[0].mxu0
        %v7000 = vpop.f32.mrb[0].mxu0
        %v7001 = vadd.f32 0.0, %v7000
        %v7002 = vpop.f32.mrb[0].mxu0
        %7003 = vmatprep.mubr.bf16.mxu0 0
        %7004 = vmatmul.mubr.bf16.gmra.mrb[0].mxu0 %v6808
        %v7005 = vpop.f32.mrb[0].mxu0
        %v7006 = vadd.f32 0.0, %v7005
        %v7007 = vpop.f32.mrb[0].mxu0
        %v7008 = vpop.f32.mrb[0].mxu0
        %v7009 = vadd.f32 0.0, %v7008
        %v7010 = vpop.f32.mrb[0].mxu0
        %7011 = vmatprep.mubr.bf16.mxu0 0
        %7012 = vmatmul.mubr.bf16.gmra.mrb[0].mxu0 %v6811
        %v7013 = vpop.f32.mrb[0].mxu0
        %v7014 = vadd.f32 0.0, %v7013
        %v7015 = vpop.f32.mrb[0].mxu0
        %v7016 = vpop.f32.mrb[0].mxu0
        %v7017 = vadd.f32 0.0, %v7016
        %v7018 = vpop.f32.mrb[0].mxu0
        %7019 = vdwg.mxu0
        %v7020 = vpack.c.bf16 %v6993, %v6990
        %v7021 = vpack.c.bf16 %v7001, %v6998
        %v7022 = vpack.c.bf16 %v7009, %v7006
        %v7023 = vpack.c.bf16 %v7017, %v7014
        %7024 = vmatprep.subr.bf16.mxu0 0
        %7025 = vmatpush1.bf16.msra.mxu0 %v7020
        %7026 = vmatprep.subr.bf16.mxu0 0
        %7027 = vmatpush1.bf16.msra.mxu0 %v7021
        %7028 = vmatprep.subr.bf16.mxu0 0
        %7029 = vmatpush1.bf16.msra.mxu0 %v7022
        %7030 = vmatprep.subr.bf16.mxu0 0
        %7031 = vmatpush1.bf16.msra.mxu0 %v7023
        %7032 = vmatprep.subr.bf16.mxu0 0
        %7033 = vmatpush1.bf16.msra.mxu0 0
        %7034 = vmatprep.subr.bf16.mxu0 0
        %7035 = vmatpush1.bf16.msra.mxu0 0
        %7036 = vmatprep.subr.bf16.mxu0 0
        %7037 = vmatpush1.bf16.msra.mxu0 0
        %7038 = vmatprep.subr.bf16.mxu0 0
        %7039 = vmatpush1.bf16.msra.mxu0 0
        %7040 = vmatprep.subr.bf16.mxu0 0
        %7041 = vmatpush1.bf16.msra.mxu0 0
        %7042 = vmatprep.subr.bf16.mxu0 0
        %7043 = vmatpush1.bf16.msra.mxu0 0
        %7044 = vmatprep.subr.bf16.mxu0 0
        %7045 = vmatpush1.bf16.msra.mxu0 0
        %7046 = vmatprep.subr.bf16.mxu0 0
        %7047 = vmatpush1.bf16.msra.mxu0 0
        %7048 = vmatprep.subr.bf16.mxu0 0
        %7049 = vmatpush1.bf16.msra.mxu0 0
        %7050 = vmatprep.subr.bf16.mxu0 0
        %7051 = vmatpush1.bf16.msra.mxu0 0
        %7052 = vmatprep.subr.bf16.mxu0 0
        %7053 = vmatpush1.bf16.msra.mxu0 0
        %7054 = vmatprep.subr.bf16.mxu0 0
        %7055 = vmatpush1.bf16.msra.mxu0 0
        %7056 = vmatprep.mubr.bf16.mxu0 0
        %7057 = vmatmul.mubr.bf16.gmra.mrb[0].mxu0 %v743
        %v7058 = vpop.f32.mrb[0].mxu0
        %v7059 = vadd.f32 0.0, %v7058
        %v7060 = vpop.f32.mrb[0].mxu0
        %v7061 = vpop.f32.mrb[0].mxu0
        %v7062 = vadd.f32 0.0, %v7061
        %v7063 = vpop.f32.mrb[0].mxu0
        %7064 = vmatprep.mubr.bf16.mxu0 0
        %7065 = vmatmul.mubr.bf16.gmra.mrb[0].mxu0 %v746
        %v7066 = vpop.f32.mrb[0].mxu0
        %v7067 = vadd.f32 0.0, %v7066
        %v7068 = vpop.f32.mrb[0].mxu0
        %v7069 = vpop.f32.mrb[0].mxu0
        %v7070 = vadd.f32 0.0, %v7069
        %v7071 = vpop.f32.mrb[0].mxu0
        %7072 = vmatprep.mubr.bf16.mxu0 0
        %7073 = vmatmul.mubr.bf16.gmra.mrb[0].mxu0 %v749
        %v7074 = vpop.f32.mrb[0].mxu0
        %v7075 = vadd.f32 0.0, %v7074
        %v7076 = vpop.f32.mrb[0].mxu0
        %v7077 = vpop.f32.mrb[0].mxu0
        %v7078 = vadd.f32 0.0, %v7077
        %v7079 = vpop.f32.mrb[0].mxu0
        %7080 = vmatprep.mubr.bf16.mxu0 0
        %7081 = vmatmul.mubr.bf16.gmra.mrb[0].mxu0 %v752
        %v7082 = vpop.f32.mrb[0].mxu0
        %v7083 = vadd.f32 0.0, %v7082
        %v7084 = vpop.f32.mrb[0].mxu0
        %v7085 = vpop.f32.mrb[0].mxu0
        %v7086 = vadd.f32 0.0, %v7085
        %v7087 = vpop.f32.mrb[0].mxu0
        %7088 = vdwg.mxu0
        %v7089 = vadd.f32 %v6947, %v7059
        %v7090 = vadd.f32 %v6948, %v7062
        %v7091 = vadd.f32 %v6949, %v7067
        %v7092 = vadd.f32 %v6950, %v7070
        %v7093 = vadd.f32 %v6951, %v7075
        %v7094 = vadd.f32 %v6952, %v7078
        %v7095 = vadd.f32 %v6953, %v7083
        %v7096 = vadd.f32 %v6954, %v7086
        %7097 = vmatprep.subr.bf16.mxu0 0
        %7098 = vmatpush1.bf16.msra.mxu0 %v840
        %7099 = vmatprep.subr.bf16.mxu0 0
        %7100 = vmatpush1.bf16.msra.mxu0 %v841
        %7101 = vmatprep.subr.bf16.mxu0 0
        %7102 = vmatpush1.bf16.msra.mxu0 0
        %7103 = vmatprep.subr.bf16.mxu0 0
        %7104 = vmatpush1.bf16.msra.mxu0 0
        %7105 = vmatprep.subr.bf16.mxu0 0
        %7106 = vmatpush1.bf16.msra.mxu0 0
        %7107 = vmatprep.subr.bf16.mxu0 0
        %7108 = vmatpush1.bf16.msra.mxu0 0
        %7109 = vmatprep.subr.bf16.mxu0 0
        %7110 = vmatpush1.bf16.msra.mxu0 0
        %7111 = vmatprep.subr.bf16.mxu0 0
        %7112 = vmatpush1.bf16.msra.mxu0 0
        %7113 = vmatprep.subr.bf16.mxu0 0
        %7114 = vmatpush1.bf16.msra.mxu0 0
        %7115 = vmatprep.subr.bf16.mxu0 0
        %7116 = vmatpush1.bf16.msra.mxu0 0
        %7117 = vmatprep.subr.bf16.mxu0 0
        %7118 = vmatpush1.bf16.msra.mxu0 0
        %7119 = vmatprep.subr.bf16.mxu0 0
        %7120 = vmatpush1.bf16.msra.mxu0 0
        %7121 = vmatprep.subr.bf16.mxu0 0
        %7122 = vmatpush1.bf16.msra.mxu0 0
        %7123 = vmatprep.subr.bf16.mxu0 0
        %7124 = vmatpush1.bf16.msra.mxu0 0
        %7125 = vmatprep.subr.bf16.mxu0 0
        %7126 = vmatpush1.bf16.msra.mxu0 0
        %7127 = vmatprep.subr.bf16.mxu0 0
        %7128 = vmatpush1.bf16.msra.mxu0 0
        %7129 = vmatprep.mubr.bf16.mxu0 0
        %7130 = vmatmul.mubr.bf16.gmra.mrb[0].mxu0 %v6802
        %v7131 = vpop.f32.mrb[0].mxu0
        %v7132 = vadd.f32 0.0, %v7131
        %v7133 = vpop.f32.mrb[0].mxu0
        %v7134 = vpop.f32.mrb[0].mxu0
        %v7135 = vadd.f32 0.0, %v7134
        %v7136 = vpop.f32.mrb[0].mxu0
        %7137 = vmatprep.mubr.bf16.mxu0 0
        %7138 = vmatmul.mubr.bf16.gmra.mrb[0].mxu0 %v6805
        %v7139 = vpop.f32.mrb[0].mxu0
        %v7140 = vadd.f32 0.0, %v7139
        %v7141 = vpop.f32.mrb[0].mxu0
        %v7142 = vpop.f32.mrb[0].mxu0
        %v7143 = vadd.f32 0.0, %v7142
        %v7144 = vpop.f32.mrb[0].mxu0
        %7145 = vmatprep.mubr.bf16.mxu0 0
        %7146 = vmatmul.mubr.bf16.gmra.mrb[0].mxu0 %v6808
        %v7147 = vpop.f32.mrb[0].mxu0
        %v7148 = vadd.f32 0.0, %v7147
        %v7149 = vpop.f32.mrb[0].mxu0
        %v7150 = vpop.f32.mrb[0].mxu0
        %v7151 = vadd.f32 0.0, %v7150
        %v7152 = vpop.f32.mrb[0].mxu0
        %7153 = vmatprep.mubr.bf16.mxu0 0
        %7154 = vmatmul.mubr.bf16.gmra.mrb[0].mxu0 %v6811
        %v7155 = vpop.f32.mrb[0].mxu0
        %v7156 = vadd.f32 0.0, %v7155
        %v7157 = vpop.f32.mrb[0].mxu0
        %v7158 = vpop.f32.mrb[0].mxu0
        %v7159 = vadd.f32 0.0, %v7158
        %v7160 = vpop.f32.mrb[0].mxu0
        %7161 = vdwg.mxu0
        %v7162 = vpack.c.bf16 %v7135, %v7132
        %v7163 = vpack.c.bf16 %v7143, %v7140
        %v7164 = vpack.c.bf16 %v7151, %v7148
        %v7165 = vpack.c.bf16 %v7159, %v7156
        %7166 = vmatprep.subr.bf16.mxu0 0
        %7167 = vmatpush1.bf16.msra.mxu0 %v7162
        %7168 = vmatprep.subr.bf16.mxu0 0
        %7169 = vmatpush1.bf16.msra.mxu0 %v7163
        %7170 = vmatprep.subr.bf16.mxu0 0
        %7171 = vmatpush1.bf16.msra.mxu0 %v7164
        %7172 = vmatprep.subr.bf16.mxu0 0
        %7173 = vmatpush1.bf16.msra.mxu0 %v7165
        %7174 = vmatprep.subr.bf16.mxu0 0
        %7175 = vmatpush1.bf16.msra.mxu0 0
        %7176 = vmatprep.subr.bf16.mxu0 0
        %7177 = vmatpush1.bf16.msra.mxu0 0
        %7178 = vmatprep.subr.bf16.mxu0 0
        %7179 = vmatpush1.bf16.msra.mxu0 0
        %7180 = vmatprep.subr.bf16.mxu0 0
        %7181 = vmatpush1.bf16.msra.mxu0 0
        %7182 = vmatprep.subr.bf16.mxu0 0
        %7183 = vmatpush1.bf16.msra.mxu0 0
        %7184 = vmatprep.subr.bf16.mxu0 0
        %7185 = vmatpush1.bf16.msra.mxu0 0
        %7186 = vmatprep.subr.bf16.mxu0 0
        %7187 = vmatpush1.bf16.msra.mxu0 0
        %7188 = vmatprep.subr.bf16.mxu0 0
        %7189 = vmatpush1.bf16.msra.mxu0 0
        %7190 = vmatprep.subr.bf16.mxu0 0
        %7191 = vmatpush1.bf16.msra.mxu0 0
        %7192 = vmatprep.subr.bf16.mxu0 0
        %7193 = vmatpush1.bf16.msra.mxu0 0
        %7194 = vmatprep.subr.bf16.mxu0 0
        %7195 = vmatpush1.bf16.msra.mxu0 0
        %7196 = vmatprep.subr.bf16.mxu0 0
        %7197 = vmatpush1.bf16.msra.mxu0 0
        %7198 = vmatprep.mubr.bf16.mxu0 0
        %7199 = vmatmul.mubr.bf16.gmra.mrb[0].mxu0 %v943
        %v7200 = vpop.f32.mrb[0].mxu0
        %v7201 = vadd.f32 0.0, %v7200
        %v7202 = vpop.f32.mrb[0].mxu0
        %v7203 = vpop.f32.mrb[0].mxu0
        %v7204 = vadd.f32 0.0, %v7203
        %v7205 = vpop.f32.mrb[0].mxu0
        %7206 = vmatprep.mubr.bf16.mxu0 0
        %7207 = vmatmul.mubr.bf16.gmra.mrb[0].mxu0 %v946
        %v7208 = vpop.f32.mrb[0].mxu0
        %v7209 = vadd.f32 0.0, %v7208
        %v7210 = vpop.f32.mrb[0].mxu0
        %v7211 = vpop.f32.mrb[0].mxu0
        %v7212 = vadd.f32 0.0, %v7211
        %v7213 = vpop.f32.mrb[0].mxu0
        %7214 = vmatprep.mubr.bf16.mxu0 0
        %7215 = vmatmul.mubr.bf16.gmra.mrb[0].mxu0 %v949
        %v7216 = vpop.f32.mrb[0].mxu0
        %v7217 = vadd.f32 0.0, %v7216
        %v7218 = vpop.f32.mrb[0].mxu0
        %v7219 = vpop.f32.mrb[0].mxu0
        %v7220 = vadd.f32 0.0, %v7219
        %v7221 = vpop.f32.mrb[0].mxu0
        %7222 = vmatprep.mubr.bf16.mxu0 0
        %7223 = vmatmul.mubr.bf16.gmra.mrb[0].mxu0 %v952
        %v7224 = vpop.f32.mrb[0].mxu0
        %v7225 = vadd.f32 0.0, %v7224
        %v7226 = vpop.f32.mrb[0].mxu0
        %v7227 = vpop.f32.mrb[0].mxu0
        %v7228 = vadd.f32 0.0, %v7227
        %v7229 = vpop.f32.mrb[0].mxu0
        %7230 = vdwg.mxu0
        %v7231 = vadd.f32 %v7089, %v7201
        %v7232 = vadd.f32 %v7090, %v7204
        %v7233 = vadd.f32 %v7091, %v7209
        %v7234 = vadd.f32 %v7092, %v7212
        %v7235 = vadd.f32 %v7093, %v7217
        %v7236 = vadd.f32 %v7094, %v7220
        %v7237 = vadd.f32 %v7095, %v7225
        %v7238 = vadd.f32 %v7096, %v7228
        %v7239 = vpack.c.bf16 %v7232, %v7231
        %v7240 = vpack.c.bf16 %v7234, %v7233
        %v7241 = vpack.c.bf16 %v7236, %v7235
        %v7242 = vpack.c.bf16 %v7238, %v7237
        %7243 = vmatprep.subr.bf16.mxu0 0
        %7244 = vmatpush1.bf16.msra.mxu0 %v1047
        %7245 = vmatprep.subr.bf16.mxu0 0
        %7246 = vmatpush1.bf16.msra.mxu0 %v1048
        %7247 = vmatprep.subr.bf16.mxu0 0
        %7248 = vmatpush1.bf16.msra.mxu0 0
        %7249 = vmatprep.subr.bf16.mxu0 0
        %7250 = vmatpush1.bf16.msra.mxu0 0
        %7251 = vmatprep.subr.bf16.mxu0 0
        %7252 = vmatpush1.bf16.msra.mxu0 0
        %7253 = vmatprep.subr.bf16.mxu0 0
        %7254 = vmatpush1.bf16.msra.mxu0 0
        %7255 = vmatprep.subr.bf16.mxu0 0
        %7256 = vmatpush1.bf16.msra.mxu0 0
        %7257 = vmatprep.subr.bf16.mxu0 0
        %7258 = vmatpush1.bf16.msra.mxu0 0
        %7259 = vmatprep.subr.bf16.mxu0 0
        %7260 = vmatpush1.bf16.msra.mxu0 0
        %7261 = vmatprep.subr.bf16.mxu0 0
        %7262 = vmatpush1.bf16.msra.mxu0 0
        %7263 = vmatprep.subr.bf16.mxu0 0
        %7264 = vmatpush1.bf16.msra.mxu0 0
        %7265 = vmatprep.subr.bf16.mxu0 0
        %7266 = vmatpush1.bf16.msra.mxu0 0
        %7267 = vmatprep.subr.bf16.mxu0 0
        %7268 = vmatpush1.bf16.msra.mxu0 0
        %7269 = vmatprep.subr.bf16.mxu0 0
        %7270 = vmatpush1.bf16.msra.mxu0 0
        %7271 = vmatprep.subr.bf16.mxu0 0
        %7272 = vmatpush1.bf16.msra.mxu0 0
        %7273 = vmatprep.subr.bf16.mxu0 0
        %7274 = vmatpush1.bf16.msra.mxu0 0
        %7275 = vmatprep.mubr.bf16.mxu0 0
        %7276 = vmatmul.mubr.bf16.gmra.mrb[0].mxu0 %v6802
        %v7277 = vpop.f32.mrb[0].mxu0
        %v7278 = vadd.f32 0.0, %v7277
        %v7279 = vpop.f32.mrb[0].mxu0
        %v7280 = vpop.f32.mrb[0].mxu0
        %v7281 = vadd.f32 0.0, %v7280
        %v7282 = vpop.f32.mrb[0].mxu0
        %7283 = vmatprep.mubr.bf16.mxu0 0
        %7284 = vmatmul.mubr.bf16.gmra.mrb[0].mxu0 %v6805
        %v7285 = vpop.f32.mrb[0].mxu0
        %v7286 = vadd.f32 0.0, %v7285
        %v7287 = vpop.f32.mrb[0].mxu0
        %v7288 = vpop.f32.mrb[0].mxu0
        %v7289 = vadd.f32 0.0, %v7288
        %v7290 = vpop.f32.mrb[0].mxu0
        %7291 = vmatprep.mubr.bf16.mxu0 0
        %7292 = vmatmul.mubr.bf16.gmra.mrb[0].mxu0 %v6808
        %v7293 = vpop.f32.mrb[0].mxu0
        %v7294 = vadd.f32 0.0, %v7293
        %v7295 = vpop.f32.mrb[0].mxu0
        %v7296 = vpop.f32.mrb[0].mxu0
        %v7297 = vadd.f32 0.0, %v7296
        %v7298 = vpop.f32.mrb[0].mxu0
        %7299 = vmatprep.mubr.bf16.mxu0 0
        %7300 = vmatmul.mubr.bf16.gmra.mrb[0].mxu0 %v6811
        %v7301 = vpop.f32.mrb[0].mxu0
        %v7302 = vadd.f32 0.0, %v7301
        %v7303 = vpop.f32.mrb[0].mxu0
        %v7304 = vpop.f32.mrb[0].mxu0
        %v7305 = vadd.f32 0.0, %v7304
        %v7306 = vpop.f32.mrb[0].mxu0
        %7307 = vdwg.mxu0
        %v7309 = vsel %vm431, %v7239, 0
        %v7312 = vsel %vm431, %v7240, 0
        %v7315 = vsel %vm431, %v7241, 0
        %v7318 = vsel %vm431, %v7242, 0
        %7320 = vmatprep.subr.bf16.mxu0 0
        %7321 = vmatpush1.bf16.msra.mxu0 %v1124
        %7322 = vmatprep.subr.bf16.mxu0 0
        %7323 = vmatpush1.bf16.msra.mxu0 %v1125
        %7324 = vmatprep.subr.bf16.mxu0 0
        %7325 = vmatpush1.bf16.msra.mxu0 0
        %7326 = vmatprep.subr.bf16.mxu0 0
        %7327 = vmatpush1.bf16.msra.mxu0 0
        %7328 = vmatprep.subr.bf16.mxu0 0
        %7329 = vmatpush1.bf16.msra.mxu0 0
        %7330 = vmatprep.subr.bf16.mxu0 0
        %7331 = vmatpush1.bf16.msra.mxu0 0
        %7332 = vmatprep.subr.bf16.mxu0 0
        %7333 = vmatpush1.bf16.msra.mxu0 0
        %7334 = vmatprep.subr.bf16.mxu0 0
        %7335 = vmatpush1.bf16.msra.mxu0 0
        %7336 = vmatprep.subr.bf16.mxu0 0
        %7337 = vmatpush1.bf16.msra.mxu0 0
        %7338 = vmatprep.subr.bf16.mxu0 0
        %7339 = vmatpush1.bf16.msra.mxu0 0
        %7340 = vmatprep.subr.bf16.mxu0 0
        %7341 = vmatpush1.bf16.msra.mxu0 0
        %7342 = vmatprep.subr.bf16.mxu0 0
        %7343 = vmatpush1.bf16.msra.mxu0 0
        %7344 = vmatprep.subr.bf16.mxu0 0
        %7345 = vmatpush1.bf16.msra.mxu0 0
        %7346 = vmatprep.subr.bf16.mxu0 0
        %7347 = vmatpush1.bf16.msra.mxu0 0
        %7348 = vmatprep.subr.bf16.mxu0 0
        %7349 = vmatpush1.bf16.msra.mxu0 0
        %7350 = vmatprep.subr.bf16.mxu0 0
        %7351 = vmatpush1.bf16.msra.mxu0 0
        %7352 = vmatprep.mubr.bf16.mxu0 0
        %7353 = vmatmul.mubr.bf16.gmra.mrb[0].mxu0 %v7309
        %v7354 = vpop.f32.mrb[0].mxu0
        %v7355 = vadd.f32 %v7278, %v7354
        %v7356 = vpop.f32.mrb[0].mxu0
        %v7357 = vpop.f32.mrb[0].mxu0
        %v7358 = vadd.f32 %v7281, %v7357
        %v7359 = vpop.f32.mrb[0].mxu0
        %7360 = vmatprep.mubr.bf16.mxu0 0
        %7361 = vmatmul.mubr.bf16.gmra.mrb[0].mxu0 %v7312
        %v7362 = vpop.f32.mrb[0].mxu0
        %v7363 = vadd.f32 %v7286, %v7362
        %v7364 = vpop.f32.mrb[0].mxu0
        %v7365 = vpop.f32.mrb[0].mxu0
        %v7366 = vadd.f32 %v7289, %v7365
        %v7367 = vpop.f32.mrb[0].mxu0
        %7368 = vmatprep.mubr.bf16.mxu0 0
        %7369 = vmatmul.mubr.bf16.gmra.mrb[0].mxu0 %v7315
        %v7370 = vpop.f32.mrb[0].mxu0
        %v7371 = vadd.f32 %v7294, %v7370
        %v7372 = vpop.f32.mrb[0].mxu0
        %v7373 = vpop.f32.mrb[0].mxu0
        %v7374 = vadd.f32 %v7297, %v7373
        %v7375 = vpop.f32.mrb[0].mxu0
        %7376 = vmatprep.mubr.bf16.mxu0 0
        %7377 = vmatmul.mubr.bf16.gmra.mrb[0].mxu0 %v7318
        %v7378 = vpop.f32.mrb[0].mxu0
        %v7379 = vadd.f32 %v7302, %v7378
        %v7380 = vpop.f32.mrb[0].mxu0
        %v7381 = vpop.f32.mrb[0].mxu0
        %v7382 = vadd.f32 %v7305, %v7381
        %v7383 = vpop.f32.mrb[0].mxu0
        %7384 = vdwg.mxu0
        %v7385 = vadd.f32 %v7355, %v1208
        %v7386 = vadd.f32 %v7358, %v1208
        %v7387 = vadd.f32 %v7363, %v1208
        %v7388 = vadd.f32 %v7366, %v1208
        %v7389 = vadd.f32 %v7371, %v1208
        %v7390 = vadd.f32 %v7374, %v1208
        %v7391 = vadd.f32 %v7379, %v1208
        %v7392 = vadd.f32 %v7382, %v1208
        %v7393 = vxor.u32 %v7385, 2147483648
        %v7394 = vxor.u32 %v7386, 2147483648
        %v7395 = vxor.u32 %v7387, 2147483648
        %v7396 = vxor.u32 %v7388, 2147483648
        %v7397 = vxor.u32 %v7389, 2147483648
        %v7398 = vxor.u32 %v7390, 2147483648
        %v7399 = vxor.u32 %v7391, 2147483648
        %v7400 = vxor.u32 %v7392, 2147483648
        %v7401 = vmul.f32 %v7393, 1.442695
        %v7402 = vpow.pop %v7401
        %v7403 = vmul.f32 %v7394, 1.442695
        %v7404 = vpow.pop %v7403
        %v7405 = vmul.f32 %v7395, 1.442695
        %v7406 = vpow.pop %v7405
        %v7407 = vmul.f32 %v7396, 1.442695
        %v7408 = vpow.pop %v7407
        %v7409 = vmul.f32 %v7397, 1.442695
        %v7410 = vpow.pop %v7409
        %v7411 = vmul.f32 %v7398, 1.442695
        %v7412 = vpow.pop %v7411
        %v7413 = vmul.f32 %v7399, 1.442695
        %v7414 = vpow.pop %v7413
        %v7415 = vmul.f32 %v7400, 1.442695
        %v7416 = vpow.pop %v7415
        %v7417 = vadd.f32 %v7402, 1.0
        %v7418 = vadd.f32 %v7404, 1.0
        %v7419 = vadd.f32 %v7406, 1.0
        %v7420 = vadd.f32 %v7408, 1.0
        %v7421 = vadd.f32 %v7410, 1.0
        %v7422 = vadd.f32 %v7412, 1.0
        %v7423 = vadd.f32 %v7414, 1.0
        %v7424 = vadd.f32 %v7416, 1.0
        %v7425 = vrcp.pop %v7417
        %v7426 = vmul.f32 1.0, %v7425
        %v7427 = vrcp.pop %v7418
        %v7428 = vmul.f32 1.0, %v7427
        %v7429 = vrcp.pop %v7419
        %v7430 = vmul.f32 1.0, %v7429
        %v7431 = vrcp.pop %v7420
        %v7432 = vmul.f32 1.0, %v7431
        %v7433 = vrcp.pop %v7421
        %v7434 = vmul.f32 1.0, %v7433
        %v7435 = vrcp.pop %v7422
        %v7436 = vmul.f32 1.0, %v7435
        %v7437 = vrcp.pop %v7423
        %v7438 = vmul.f32 1.0, %v7437
        %v7439 = vrcp.pop %v7424
        %v7440 = vmul.f32 1.0, %v7439
        %7441 = vmatprep.subr.bf16.mxu0 0
        %7442 = vmatpush1.bf16.msra.mxu0 %v1283
        %7443 = vmatprep.subr.bf16.mxu0 0
        %7444 = vmatpush1.bf16.msra.mxu0 %v1284
        %7445 = vmatprep.subr.bf16.mxu0 0
        %7446 = vmatpush1.bf16.msra.mxu0 0
        %7447 = vmatprep.subr.bf16.mxu0 0
        %7448 = vmatpush1.bf16.msra.mxu0 0
        %7449 = vmatprep.subr.bf16.mxu0 0
        %7450 = vmatpush1.bf16.msra.mxu0 0
        %7451 = vmatprep.subr.bf16.mxu0 0
        %7452 = vmatpush1.bf16.msra.mxu0 0
        %7453 = vmatprep.subr.bf16.mxu0 0
        %7454 = vmatpush1.bf16.msra.mxu0 0
        %7455 = vmatprep.subr.bf16.mxu0 0
        %7456 = vmatpush1.bf16.msra.mxu0 0
        %7457 = vmatprep.subr.bf16.mxu0 0
        %7458 = vmatpush1.bf16.msra.mxu0 0
        %7459 = vmatprep.subr.bf16.mxu0 0
        %7460 = vmatpush1.bf16.msra.mxu0 0
        %7461 = vmatprep.subr.bf16.mxu0 0
        %7462 = vmatpush1.bf16.msra.mxu0 0
        %7463 = vmatprep.subr.bf16.mxu0 0
        %7464 = vmatpush1.bf16.msra.mxu0 0
        %7465 = vmatprep.subr.bf16.mxu0 0
        %7466 = vmatpush1.bf16.msra.mxu0 0
        %7467 = vmatprep.subr.bf16.mxu0 0
        %7468 = vmatpush1.bf16.msra.mxu0 0
        %7469 = vmatprep.subr.bf16.mxu0 0
        %7470 = vmatpush1.bf16.msra.mxu0 0
        %7471 = vmatprep.subr.bf16.mxu0 0
        %7472 = vmatpush1.bf16.msra.mxu0 0
        %7473 = vmatprep.mubr.bf16.mxu0 0
        %7474 = vmatmul.mubr.bf16.gmra.mrb[0].mxu0 %v6802
        %v7475 = vpop.f32.mrb[0].mxu0
        %v7476 = vadd.f32 0.0, %v7475
        %v7477 = vpop.f32.mrb[0].mxu0
        %v7478 = vpop.f32.mrb[0].mxu0
        %v7479 = vadd.f32 0.0, %v7478
        %v7480 = vpop.f32.mrb[0].mxu0
        %7481 = vmatprep.mubr.bf16.mxu0 0
        %7482 = vmatmul.mubr.bf16.gmra.mrb[0].mxu0 %v6805
        %v7483 = vpop.f32.mrb[0].mxu0
        %v7484 = vadd.f32 0.0, %v7483
        %v7485 = vpop.f32.mrb[0].mxu0
        %v7486 = vpop.f32.mrb[0].mxu0
        %v7487 = vadd.f32 0.0, %v7486
        %v7488 = vpop.f32.mrb[0].mxu0
        %7489 = vmatprep.mubr.bf16.mxu0 0
        %7490 = vmatmul.mubr.bf16.gmra.mrb[0].mxu0 %v6808
        %v7491 = vpop.f32.mrb[0].mxu0
        %v7492 = vadd.f32 0.0, %v7491
        %v7493 = vpop.f32.mrb[0].mxu0
        %v7494 = vpop.f32.mrb[0].mxu0
        %v7495 = vadd.f32 0.0, %v7494
        %v7496 = vpop.f32.mrb[0].mxu0
        %7497 = vmatprep.mubr.bf16.mxu0 0
        %7498 = vmatmul.mubr.bf16.gmra.mrb[0].mxu0 %v6811
        %v7499 = vpop.f32.mrb[0].mxu0
        %v7500 = vadd.f32 0.0, %v7499
        %v7501 = vpop.f32.mrb[0].mxu0
        %v7502 = vpop.f32.mrb[0].mxu0
        %v7503 = vadd.f32 0.0, %v7502
        %v7504 = vpop.f32.mrb[0].mxu0
        %7505 = vdwg.mxu0
        %7506 = vmatprep.subr.bf16.mxu0 0
        %7507 = vmatpush1.bf16.msra.mxu0 %v1360
        %7508 = vmatprep.subr.bf16.mxu0 0
        %7509 = vmatpush1.bf16.msra.mxu0 %v1361
        %7510 = vmatprep.subr.bf16.mxu0 0
        %7511 = vmatpush1.bf16.msra.mxu0 0
        %7512 = vmatprep.subr.bf16.mxu0 0
        %7513 = vmatpush1.bf16.msra.mxu0 0
        %7514 = vmatprep.subr.bf16.mxu0 0
        %7515 = vmatpush1.bf16.msra.mxu0 0
        %7516 = vmatprep.subr.bf16.mxu0 0
        %7517 = vmatpush1.bf16.msra.mxu0 0
        %7518 = vmatprep.subr.bf16.mxu0 0
        %7519 = vmatpush1.bf16.msra.mxu0 0
        %7520 = vmatprep.subr.bf16.mxu0 0
        %7521 = vmatpush1.bf16.msra.mxu0 0
        %7522 = vmatprep.subr.bf16.mxu0 0
        %7523 = vmatpush1.bf16.msra.mxu0 0
        %7524 = vmatprep.subr.bf16.mxu0 0
        %7525 = vmatpush1.bf16.msra.mxu0 0
        %7526 = vmatprep.subr.bf16.mxu0 0
        %7527 = vmatpush1.bf16.msra.mxu0 0
        %7528 = vmatprep.subr.bf16.mxu0 0
        %7529 = vmatpush1.bf16.msra.mxu0 0
        %7530 = vmatprep.subr.bf16.mxu0 0
        %7531 = vmatpush1.bf16.msra.mxu0 0
        %7532 = vmatprep.subr.bf16.mxu0 0
        %7533 = vmatpush1.bf16.msra.mxu0 0
        %7534 = vmatprep.subr.bf16.mxu0 0
        %7535 = vmatpush1.bf16.msra.mxu0 0
        %7536 = vmatprep.subr.bf16.mxu0 0
        %7537 = vmatpush1.bf16.msra.mxu0 0
        %7538 = vmatprep.mubr.bf16.mxu0 0
        %7539 = vmatmul.mubr.bf16.gmra.mrb[0].mxu0 %v7309
        %v7540 = vpop.f32.mrb[0].mxu0
        %v7541 = vadd.f32 %v7476, %v7540
        %v7542 = vpop.f32.mrb[0].mxu0
        %v7543 = vpop.f32.mrb[0].mxu0
        %v7544 = vadd.f32 %v7479, %v7543
        %v7545 = vpop.f32.mrb[0].mxu0
        %7546 = vmatprep.mubr.bf16.mxu0 0
        %7547 = vmatmul.mubr.bf16.gmra.mrb[0].mxu0 %v7312
        %v7548 = vpop.f32.mrb[0].mxu0
        %v7549 = vadd.f32 %v7484, %v7548
        %v7550 = vpop.f32.mrb[0].mxu0
        %v7551 = vpop.f32.mrb[0].mxu0
        %v7552 = vadd.f32 %v7487, %v7551
        %v7553 = vpop.f32.mrb[0].mxu0
        %7554 = vmatprep.mubr.bf16.mxu0 0
        %7555 = vmatmul.mubr.bf16.gmra.mrb[0].mxu0 %v7315
        %v7556 = vpop.f32.mrb[0].mxu0
        %v7557 = vadd.f32 %v7492, %v7556
        %v7558 = vpop.f32.mrb[0].mxu0
        %v7559 = vpop.f32.mrb[0].mxu0
        %v7560 = vadd.f32 %v7495, %v7559
        %v7561 = vpop.f32.mrb[0].mxu0
        %7562 = vmatprep.mubr.bf16.mxu0 0
        %7563 = vmatmul.mubr.bf16.gmra.mrb[0].mxu0 %v7318
        %v7564 = vpop.f32.mrb[0].mxu0
        %v7565 = vadd.f32 %v7500, %v7564
        %v7566 = vpop.f32.mrb[0].mxu0
        %v7567 = vpop.f32.mrb[0].mxu0
        %v7568 = vadd.f32 %v7503, %v7567
        %v7569 = vpop.f32.mrb[0].mxu0
        %7570 = vdwg.mxu0
        %v7571 = vadd.f32 %v7541, %v1432
        %v7572 = vadd.f32 %v7544, %v1432
        %v7573 = vadd.f32 %v7549, %v1432
        %v7574 = vadd.f32 %v7552, %v1432
        %v7575 = vadd.f32 %v7557, %v1432
        %v7576 = vadd.f32 %v7560, %v1432
        %v7577 = vadd.f32 %v7565, %v1432
        %v7578 = vadd.f32 %v7568, %v1432
        %v7579 = vxor.u32 %v7571, 2147483648
        %v7580 = vxor.u32 %v7572, 2147483648
        %v7581 = vxor.u32 %v7573, 2147483648
        %v7582 = vxor.u32 %v7574, 2147483648
        %v7583 = vxor.u32 %v7575, 2147483648
        %v7584 = vxor.u32 %v7576, 2147483648
        %v7585 = vxor.u32 %v7577, 2147483648
        %v7586 = vxor.u32 %v7578, 2147483648
        %v7587 = vmul.f32 %v7579, 1.442695
        %v7588 = vpow.pop %v7587
        %v7589 = vmul.f32 %v7580, 1.442695
        %v7590 = vpow.pop %v7589
        %v7591 = vmul.f32 %v7581, 1.442695
        %v7592 = vpow.pop %v7591
        %v7593 = vmul.f32 %v7582, 1.442695
        %v7594 = vpow.pop %v7593
        %v7595 = vmul.f32 %v7583, 1.442695
        %v7596 = vpow.pop %v7595
        %v7597 = vmul.f32 %v7584, 1.442695
        %v7598 = vpow.pop %v7597
        %v7599 = vmul.f32 %v7585, 1.442695
        %v7600 = vpow.pop %v7599
        %v7601 = vmul.f32 %v7586, 1.442695
        %v7602 = vpow.pop %v7601
        %v7603 = vadd.f32 %v7588, 1.0
        %v7604 = vadd.f32 %v7590, 1.0
        %v7605 = vadd.f32 %v7592, 1.0
        %v7606 = vadd.f32 %v7594, 1.0
        %v7607 = vadd.f32 %v7596, 1.0
        %v7608 = vadd.f32 %v7598, 1.0
        %v7609 = vadd.f32 %v7600, 1.0
        %v7610 = vadd.f32 %v7602, 1.0
        %v7611 = vrcp.pop %v7603
        %v7612 = vmul.f32 1.0, %v7611
        %v7613 = vrcp.pop %v7604
        %v7614 = vmul.f32 1.0, %v7613
        %v7615 = vrcp.pop %v7605
        %v7616 = vmul.f32 1.0, %v7615
        %v7617 = vrcp.pop %v7606
        %v7618 = vmul.f32 1.0, %v7617
        %v7619 = vrcp.pop %v7607
        %v7620 = vmul.f32 1.0, %v7619
        %v7621 = vrcp.pop %v7608
        %v7622 = vmul.f32 1.0, %v7621
        %v7623 = vrcp.pop %v7609
        %v7624 = vmul.f32 1.0, %v7623
        %v7625 = vrcp.pop %v7610
        %v7626 = vmul.f32 1.0, %v7625
        %7627 = vmatprep.subr.bf16.mxu0 0
        %7628 = vmatpush1.bf16.msra.mxu0 %v1506
        %7629 = vmatprep.subr.bf16.mxu0 0
        %7630 = vmatpush1.bf16.msra.mxu0 %v1507
        %7631 = vmatprep.subr.bf16.mxu0 0
        %7632 = vmatpush1.bf16.msra.mxu0 0
        %7633 = vmatprep.subr.bf16.mxu0 0
        %7634 = vmatpush1.bf16.msra.mxu0 0
        %7635 = vmatprep.subr.bf16.mxu0 0
        %7636 = vmatpush1.bf16.msra.mxu0 0
        %7637 = vmatprep.subr.bf16.mxu0 0
        %7638 = vmatpush1.bf16.msra.mxu0 0
        %7639 = vmatprep.subr.bf16.mxu0 0
        %7640 = vmatpush1.bf16.msra.mxu0 0
        %7641 = vmatprep.subr.bf16.mxu0 0
        %7642 = vmatpush1.bf16.msra.mxu0 0
        %7643 = vmatprep.subr.bf16.mxu0 0
        %7644 = vmatpush1.bf16.msra.mxu0 0
        %7645 = vmatprep.subr.bf16.mxu0 0
        %7646 = vmatpush1.bf16.msra.mxu0 0
        %7647 = vmatprep.subr.bf16.mxu0 0
        %7648 = vmatpush1.bf16.msra.mxu0 0
        %7649 = vmatprep.subr.bf16.mxu0 0
        %7650 = vmatpush1.bf16.msra.mxu0 0
        %7651 = vmatprep.subr.bf16.mxu0 0
        %7652 = vmatpush1.bf16.msra.mxu0 0
        %7653 = vmatprep.subr.bf16.mxu0 0
        %7654 = vmatpush1.bf16.msra.mxu0 0
        %7655 = vmatprep.subr.bf16.mxu0 0
        %7656 = vmatpush1.bf16.msra.mxu0 0
        %7657 = vmatprep.subr.bf16.mxu0 0
        %7658 = vmatpush1.bf16.msra.mxu0 0
        %7659 = vmatprep.mubr.bf16.mxu0 0
        %7660 = vmatmul.mubr.bf16.gmra.mrb[0].mxu0 %v7309
        %v7661 = vpop.f32.mrb[0].mxu0
        %v7662 = vadd.f32 %v1497, %v7661
        %v7663 = vpop.f32.mrb[0].mxu0
        %v7664 = vpop.f32.mrb[0].mxu0
        %v7665 = vadd.f32 %v1497, %v7664
        %v7666 = vpop.f32.mrb[0].mxu0
        %7667 = vmatprep.mubr.bf16.mxu0 0
        %7668 = vmatmul.mubr.bf16.gmra.mrb[0].mxu0 %v7312
        %v7669 = vpop.f32.mrb[0].mxu0
        %v7670 = vadd.f32 %v1497, %v7669
        %v7671 = vpop.f32.mrb[0].mxu0
        %v7672 = vpop.f32.mrb[0].mxu0
        %v7673 = vadd.f32 %v1497, %v7672
        %v7674 = vpop.f32.mrb[0].mxu0
        %7675 = vmatprep.mubr.bf16.mxu0 0
        %7676 = vmatmul.mubr.bf16.gmra.mrb[0].mxu0 %v7315
        %v7677 = vpop.f32.mrb[0].mxu0
        %v7678 = vadd.f32 %v1497, %v7677
        %v7679 = vpop.f32.mrb[0].mxu0
        %v7680 = vpop.f32.mrb[0].mxu0
        %v7681 = vadd.f32 %v1497, %v7680
        %v7682 = vpop.f32.mrb[0].mxu0
        %7683 = vmatprep.mubr.bf16.mxu0 0
        %7684 = vmatmul.mubr.bf16.gmra.mrb[0].mxu0 %v7318
        %v7685 = vpop.f32.mrb[0].mxu0
        %v7686 = vadd.f32 %v1497, %v7685
        %v7687 = vpop.f32.mrb[0].mxu0
        %v7688 = vpop.f32.mrb[0].mxu0
        %v7689 = vadd.f32 %v1497, %v7688
        %v7690 = vpop.f32.mrb[0].mxu0
        %7691 = vdwg.mxu0
        %7692 = vmatprep.subr.bf16.mxu0 0
        %7693 = vmatpush1.bf16.msra.mxu0 %v1592
        %7694 = vmatprep.subr.bf16.mxu0 0
        %7695 = vmatpush1.bf16.msra.mxu0 %v1593
        %7696 = vmatprep.subr.bf16.mxu0 0
        %7697 = vmatpush1.bf16.msra.mxu0 0
        %7698 = vmatprep.subr.bf16.mxu0 0
        %7699 = vmatpush1.bf16.msra.mxu0 0
        %7700 = vmatprep.subr.bf16.mxu0 0
        %7701 = vmatpush1.bf16.msra.mxu0 0
        %7702 = vmatprep.subr.bf16.mxu0 0
        %7703 = vmatpush1.bf16.msra.mxu0 0
        %7704 = vmatprep.subr.bf16.mxu0 0
        %7705 = vmatpush1.bf16.msra.mxu0 0
        %7706 = vmatprep.subr.bf16.mxu0 0
        %7707 = vmatpush1.bf16.msra.mxu0 0
        %7708 = vmatprep.subr.bf16.mxu0 0
        %7709 = vmatpush1.bf16.msra.mxu0 0
        %7710 = vmatprep.subr.bf16.mxu0 0
        %7711 = vmatpush1.bf16.msra.mxu0 0
        %7712 = vmatprep.subr.bf16.mxu0 0
        %7713 = vmatpush1.bf16.msra.mxu0 0
        %7714 = vmatprep.subr.bf16.mxu0 0
        %7715 = vmatpush1.bf16.msra.mxu0 0
        %7716 = vmatprep.subr.bf16.mxu0 0
        %7717 = vmatpush1.bf16.msra.mxu0 0
        %7718 = vmatprep.subr.bf16.mxu0 0
        %7719 = vmatpush1.bf16.msra.mxu0 0
        %7720 = vmatprep.subr.bf16.mxu0 0
        %7721 = vmatpush1.bf16.msra.mxu0 0
        %7722 = vmatprep.subr.bf16.mxu0 0
        %7723 = vmatpush1.bf16.msra.mxu0 0
        %7724 = vmatprep.mubr.bf16.mxu0 0
        %7725 = vmatmul.mubr.bf16.gmra.mrb[0].mxu0 %v6802
        %v7726 = vpop.f32.mrb[0].mxu0
        %v7727 = vadd.f32 %v1583, %v7726
        %v7728 = vpop.f32.mrb[0].mxu0
        %v7729 = vpop.f32.mrb[0].mxu0
        %v7730 = vadd.f32 %v1583, %v7729
        %v7731 = vpop.f32.mrb[0].mxu0
        %7732 = vmatprep.mubr.bf16.mxu0 0
        %7733 = vmatmul.mubr.bf16.gmra.mrb[0].mxu0 %v6805
        %v7734 = vpop.f32.mrb[0].mxu0
        %v7735 = vadd.f32 %v1583, %v7734
        %v7736 = vpop.f32.mrb[0].mxu0
        %v7737 = vpop.f32.mrb[0].mxu0
        %v7738 = vadd.f32 %v1583, %v7737
        %v7739 = vpop.f32.mrb[0].mxu0
        %7740 = vmatprep.mubr.bf16.mxu0 0
        %7741 = vmatmul.mubr.bf16.gmra.mrb[0].mxu0 %v6808
        %v7742 = vpop.f32.mrb[0].mxu0
        %v7743 = vadd.f32 %v1583, %v7742
        %v7744 = vpop.f32.mrb[0].mxu0
        %v7745 = vpop.f32.mrb[0].mxu0
        %v7746 = vadd.f32 %v1583, %v7745
        %v7747 = vpop.f32.mrb[0].mxu0
        %7748 = vmatprep.mubr.bf16.mxu0 0
        %7749 = vmatmul.mubr.bf16.gmra.mrb[0].mxu0 %v6811
        %v7750 = vpop.f32.mrb[0].mxu0
        %v7751 = vadd.f32 %v1583, %v7750
        %v7752 = vpop.f32.mrb[0].mxu0
        %v7753 = vpop.f32.mrb[0].mxu0
        %v7754 = vadd.f32 %v1583, %v7753
        %v7755 = vpop.f32.mrb[0].mxu0
        %7756 = vdwg.mxu0
        %v7757 = vmul.f32 %v7426, %v7727
        %v7758 = vmul.f32 %v7428, %v7730
        %v7759 = vmul.f32 %v7430, %v7735
        %v7760 = vmul.f32 %v7432, %v7738
        %v7761 = vmul.f32 %v7434, %v7743
        %v7762 = vmul.f32 %v7436, %v7746
        %v7763 = vmul.f32 %v7438, %v7751
        %v7764 = vmul.f32 %v7440, %v7754
        %v7765 = vadd.f32 %v7662, %v7757
        %v7766 = vadd.f32 %v7665, %v7758
        %v7767 = vadd.f32 %v7670, %v7759
        %v7768 = vadd.f32 %v7673, %v7760
        %v7769 = vadd.f32 %v7678, %v7761
        %v7770 = vadd.f32 %v7681, %v7762
        %v7771 = vadd.f32 %v7686, %v7763
        %v7772 = vadd.f32 %v7689, %v7764
        %v7773 = vtanh.pop %v7765
        %v7774 = vtanh.pop %v7766
        %v7775 = vtanh.pop %v7767
        %v7776 = vtanh.pop %v7768
        %v7777 = vtanh.pop %v7769
        %v7778 = vtanh.pop %v7770
        %v7779 = vtanh.pop %v7771
        %v7780 = vtanh.pop %v7772
        %v7781 = vsub.f32 1.0, %v7612
        %v7782 = vsub.f32 1.0, %v7614
        %v7783 = vsub.f32 1.0, %v7616
        %v7784 = vsub.f32 1.0, %v7618
        %v7785 = vsub.f32 1.0, %v7620
        %v7786 = vsub.f32 1.0, %v7622
        %v7787 = vsub.f32 1.0, %v7624
        %v7788 = vsub.f32 1.0, %v7626
        %v7789 = vmul.f32 %v7781, %v7773
        %v7790 = vmul.f32 %v7782, %v7774
        %v7791 = vmul.f32 %v7783, %v7775
        %v7792 = vmul.f32 %v7784, %v7776
        %v7793 = vmul.f32 %v7785, %v7777
        %v7794 = vmul.f32 %v7786, %v7778
        %v7795 = vmul.f32 %v7787, %v7779
        %v7796 = vmul.f32 %v7788, %v7780
        %v7797 = vmul.f32 %v7612, %v6789
        %v7798 = vmul.f32 %v7614, %v6790
        %v7799 = vmul.f32 %v7616, %v6791
        %v7800 = vmul.f32 %v7618, %v6792
        %v7801 = vmul.f32 %v7620, %v6793
        %v7802 = vmul.f32 %v7622, %v6794
        %v7803 = vmul.f32 %v7624, %v6795
        %v7804 = vmul.f32 %v7626, %v6796
        %v7805 = vadd.f32 %v7789, %v7797
        %v7806 = vadd.f32 %v7790, %v7798
        %v7807 = vadd.f32 %v7791, %v7799
        %v7808 = vadd.f32 %v7792, %v7800
        %v7809 = vadd.f32 %v7793, %v7801
        %v7810 = vadd.f32 %v7794, %v7802
        %v7811 = vadd.f32 %v7795, %v7803
        %v7812 = vadd.f32 %v7796, %v7804
        %v7813 = vpack.c.bf16 %v7806, %v7805
        %v7814 = vpack.c.bf16 %v7808, %v7807
        %v7815 = vpack.c.bf16 %v7810, %v7809
        %v7816 = vpack.c.bf16 %v7812, %v7811
        %v7818 = vsel %vm431, %v7813, 0
        %v7821 = vsel %vm431, %v7814, 0
        %v7824 = vsel %vm431, %v7815, 0
        %v7827 = vsel %vm431, %v7816, 0
        %7829 = vmatprep.subr.bf16.mxu0 0
        %7830 = vmatpush1.bf16.msra.mxu0 %v427
        %7831 = vmatprep.subr.bf16.mxu0 0
        %7832 = vmatpush1.bf16.msra.mxu0 %v428
        %7833 = vmatprep.subr.bf16.mxu0 0
        %7834 = vmatpush1.bf16.msra.mxu0 0
        %7835 = vmatprep.subr.bf16.mxu0 0
        %7836 = vmatpush1.bf16.msra.mxu0 0
        %7837 = vmatprep.subr.bf16.mxu0 0
        %7838 = vmatpush1.bf16.msra.mxu0 0
        %7839 = vmatprep.subr.bf16.mxu0 0
        %7840 = vmatpush1.bf16.msra.mxu0 0
        %7841 = vmatprep.subr.bf16.mxu0 0
        %7842 = vmatpush1.bf16.msra.mxu0 0
        %7843 = vmatprep.subr.bf16.mxu0 0
        %7844 = vmatpush1.bf16.msra.mxu0 0
        %7845 = vmatprep.subr.bf16.mxu0 0
        %7846 = vmatpush1.bf16.msra.mxu0 0
        %7847 = vmatprep.subr.bf16.mxu0 0
        %7848 = vmatpush1.bf16.msra.mxu0 0
        %7849 = vmatprep.subr.bf16.mxu0 0
        %7850 = vmatpush1.bf16.msra.mxu0 0
        %7851 = vmatprep.subr.bf16.mxu0 0
        %7852 = vmatpush1.bf16.msra.mxu0 0
        %7853 = vmatprep.subr.bf16.mxu0 0
        %7854 = vmatpush1.bf16.msra.mxu0 0
        %7855 = vmatprep.subr.bf16.mxu0 0
        %7856 = vmatpush1.bf16.msra.mxu0 0
        %7857 = vmatprep.subr.bf16.mxu0 0
        %7858 = vmatpush1.bf16.msra.mxu0 0
        %7859 = vmatprep.subr.bf16.mxu0 0
        %7860 = vmatpush1.bf16.msra.mxu0 0
        %7861 = vmatprep.mubr.bf16.mxu0 0
        %7862 = vmatmul.mubr.bf16.gmra.mrb[0].mxu0 %v7818
        %v7863 = vpop.f32.mrb[0].mxu0
        %v7864 = vadd.f32 0.0, %v7863
        %v7865 = vpop.f32.mrb[0].mxu0
        %v7866 = vpop.f32.mrb[0].mxu0
        %v7867 = vadd.f32 0.0, %v7866
        %v7868 = vpop.f32.mrb[0].mxu0
        %7869 = vmatprep.mubr.bf16.mxu0 0
        %7870 = vmatmul.mubr.bf16.gmra.mrb[0].mxu0 %v7821
        %v7871 = vpop.f32.mrb[0].mxu0
        %v7872 = vadd.f32 0.0, %v7871
        %v7873 = vpop.f32.mrb[0].mxu0
        %v7874 = vpop.f32.mrb[0].mxu0
        %v7875 = vadd.f32 0.0, %v7874
        %v7876 = vpop.f32.mrb[0].mxu0
        %7877 = vmatprep.mubr.bf16.mxu0 0
        %7878 = vmatmul.mubr.bf16.gmra.mrb[0].mxu0 %v7824
        %v7879 = vpop.f32.mrb[0].mxu0
        %v7880 = vadd.f32 0.0, %v7879
        %v7881 = vpop.f32.mrb[0].mxu0
        %v7882 = vpop.f32.mrb[0].mxu0
        %v7883 = vadd.f32 0.0, %v7882
        %v7884 = vpop.f32.mrb[0].mxu0
        %7885 = vmatprep.mubr.bf16.mxu0 0
        %7886 = vmatmul.mubr.bf16.gmra.mrb[0].mxu0 %v7827
        %v7887 = vpop.f32.mrb[0].mxu0
        %v7888 = vadd.f32 0.0, %v7887
        %v7889 = vpop.f32.mrb[0].mxu0
        %v7890 = vpop.f32.mrb[0].mxu0
        %v7891 = vadd.f32 0.0, %v7890
        %v7892 = vpop.f32.mrb[0].mxu0
        %7893 = vdwg.mxu0
        %v7894 = vpack.c.bf16 %v7867, %v7864
        %v7895 = vpack.c.bf16 %v7875, %v7872
        %v7896 = vpack.c.bf16 %v7883, %v7880
        %v7897 = vpack.c.bf16 %v7891, %v7888
        %7898 = vmatprep.subr.bf16.mxu0 0
        %7899 = vmatpush1.bf16.msra.mxu0 %v7894
        %7900 = vmatprep.subr.bf16.mxu0 0
        %7901 = vmatpush1.bf16.msra.mxu0 %v7895
        %7902 = vmatprep.subr.bf16.mxu0 0
        %7903 = vmatpush1.bf16.msra.mxu0 %v7896
        %7904 = vmatprep.subr.bf16.mxu0 0
        %7905 = vmatpush1.bf16.msra.mxu0 %v7897
        %7906 = vmatprep.subr.bf16.mxu0 0
        %7907 = vmatpush1.bf16.msra.mxu0 0
        %7908 = vmatprep.subr.bf16.mxu0 0
        %7909 = vmatpush1.bf16.msra.mxu0 0
        %7910 = vmatprep.subr.bf16.mxu0 0
        %7911 = vmatpush1.bf16.msra.mxu0 0
        %7912 = vmatprep.subr.bf16.mxu0 0
        %7913 = vmatpush1.bf16.msra.mxu0 0
        %7914 = vmatprep.subr.bf16.mxu0 0
        %7915 = vmatpush1.bf16.msra.mxu0 0
        %7916 = vmatprep.subr.bf16.mxu0 0
        %7917 = vmatpush1.bf16.msra.mxu0 0
        %7918 = vmatprep.subr.bf16.mxu0 0
        %7919 = vmatpush1.bf16.msra.mxu0 0
        %7920 = vmatprep.subr.bf16.mxu0 0
        %7921 = vmatpush1.bf16.msra.mxu0 0
        %7922 = vmatprep.subr.bf16.mxu0 0
        %7923 = vmatpush1.bf16.msra.mxu0 0
        %7924 = vmatprep.subr.bf16.mxu0 0
        %7925 = vmatpush1.bf16.msra.mxu0 0
        %7926 = vmatprep.subr.bf16.mxu0 0
        %7927 = vmatpush1.bf16.msra.mxu0 0
        %7928 = vmatprep.subr.bf16.mxu0 0
        %7929 = vmatpush1.bf16.msra.mxu0 0
        %7930 = vmatprep.mubr.bf16.mxu0 0
        %7931 = vmatmul.mubr.bf16.gmra.mrb[0].mxu0 %v543
        %v7932 = vpop.f32.mrb[0].mxu0
        %v7933 = vadd.f32 0.0, %v7932
        %v7934 = vpop.f32.mrb[0].mxu0
        %v7935 = vpop.f32.mrb[0].mxu0
        %v7936 = vadd.f32 0.0, %v7935
        %v7937 = vpop.f32.mrb[0].mxu0
        %7938 = vmatprep.mubr.bf16.mxu0 0
        %7939 = vmatmul.mubr.bf16.gmra.mrb[0].mxu0 %v546
        %v7940 = vpop.f32.mrb[0].mxu0
        %v7941 = vadd.f32 0.0, %v7940
        %v7942 = vpop.f32.mrb[0].mxu0
        %v7943 = vpop.f32.mrb[0].mxu0
        %v7944 = vadd.f32 0.0, %v7943
        %v7945 = vpop.f32.mrb[0].mxu0
        %7946 = vmatprep.mubr.bf16.mxu0 0
        %7947 = vmatmul.mubr.bf16.gmra.mrb[0].mxu0 %v549
        %v7948 = vpop.f32.mrb[0].mxu0
        %v7949 = vadd.f32 0.0, %v7948
        %v7950 = vpop.f32.mrb[0].mxu0
        %v7951 = vpop.f32.mrb[0].mxu0
        %v7952 = vadd.f32 0.0, %v7951
        %v7953 = vpop.f32.mrb[0].mxu0
        %7954 = vmatprep.mubr.bf16.mxu0 0
        %7955 = vmatmul.mubr.bf16.gmra.mrb[0].mxu0 %v552
        %v7956 = vpop.f32.mrb[0].mxu0
        %v7957 = vadd.f32 0.0, %v7956
        %v7958 = vpop.f32.mrb[0].mxu0
        %v7959 = vpop.f32.mrb[0].mxu0
        %v7960 = vadd.f32 0.0, %v7959
        %v7961 = vpop.f32.mrb[0].mxu0
        %7962 = vdwg.mxu0
        %v7963 = vadd.f32 %v407, %v7933
        %v7964 = vadd.f32 %v408, %v7936
        %v7965 = vadd.f32 %v409, %v7941
        %v7966 = vadd.f32 %v410, %v7944
        %v7967 = vadd.f32 %v411, %v7949
        %v7968 = vadd.f32 %v412, %v7952
        %v7969 = vadd.f32 %v413, %v7957
        %v7970 = vadd.f32 %v414, %v7960
        %7971 = vmatprep.subr.bf16.mxu0 0
        %7972 = vmatpush1.bf16.msra.mxu0 %v640
        %7973 = vmatprep.subr.bf16.mxu0 0
        %7974 = vmatpush1.bf16.msra.mxu0 %v641
        %7975 = vmatprep.subr.bf16.mxu0 0
        %7976 = vmatpush1.bf16.msra.mxu0 0
        %7977 = vmatprep.subr.bf16.mxu0 0
        %7978 = vmatpush1.bf16.msra.mxu0 0
        %7979 = vmatprep.subr.bf16.mxu0 0
        %7980 = vmatpush1.bf16.msra.mxu0 0
        %7981 = vmatprep.subr.bf16.mxu0 0
        %7982 = vmatpush1.bf16.msra.mxu0 0
        %7983 = vmatprep.subr.bf16.mxu0 0
        %7984 = vmatpush1.bf16.msra.mxu0 0
        %7985 = vmatprep.subr.bf16.mxu0 0
        %7986 = vmatpush1.bf16.msra.mxu0 0
        %7987 = vmatprep.subr.bf16.mxu0 0
        %7988 = vmatpush1.bf16.msra.mxu0 0
        %7989 = vmatprep.subr.bf16.mxu0 0
        %7990 = vmatpush1.bf16.msra.mxu0 0
        %7991 = vmatprep.subr.bf16.mxu0 0
        %7992 = vmatpush1.bf16.msra.mxu0 0
        %7993 = vmatprep.subr.bf16.mxu0 0
        %7994 = vmatpush1.bf16.msra.mxu0 0
        %7995 = vmatprep.subr.bf16.mxu0 0
        %7996 = vmatpush1.bf16.msra.mxu0 0
        %7997 = vmatprep.subr.bf16.mxu0 0
        %7998 = vmatpush1.bf16.msra.mxu0 0
        %7999 = vmatprep.subr.bf16.mxu0 0
        %8000 = vmatpush1.bf16.msra.mxu0 0
        %8001 = vmatprep.subr.bf16.mxu0 0
        %8002 = vmatpush1.bf16.msra.mxu0 0
        %8003 = vmatprep.mubr.bf16.mxu0 0
        %8004 = vmatmul.mubr.bf16.gmra.mrb[0].mxu0 %v7818
        %v8005 = vpop.f32.mrb[0].mxu0
        %v8006 = vadd.f32 0.0, %v8005
        %v8007 = vpop.f32.mrb[0].mxu0
        %v8008 = vpop.f32.mrb[0].mxu0
        %v8009 = vadd.f32 0.0, %v8008
        %v8010 = vpop.f32.mrb[0].mxu0
        %8011 = vmatprep.mubr.bf16.mxu0 0
        %8012 = vmatmul.mubr.bf16.gmra.mrb[0].mxu0 %v7821
        %v8013 = vpop.f32.mrb[0].mxu0
        %v8014 = vadd.f32 0.0, %v8013
        %v8015 = vpop.f32.mrb[0].mxu0
        %v8016 = vpop.f32.mrb[0].mxu0
        %v8017 = vadd.f32 0.0, %v8016
        %v8018 = vpop.f32.mrb[0].mxu0
        %8019 = vmatprep.mubr.bf16.mxu0 0
        %8020 = vmatmul.mubr.bf16.gmra.mrb[0].mxu0 %v7824
        %v8021 = vpop.f32.mrb[0].mxu0
        %v8022 = vadd.f32 0.0, %v8021
        %v8023 = vpop.f32.mrb[0].mxu0
        %v8024 = vpop.f32.mrb[0].mxu0
        %v8025 = vadd.f32 0.0, %v8024
        %v8026 = vpop.f32.mrb[0].mxu0
        %8027 = vmatprep.mubr.bf16.mxu0 0
        %8028 = vmatmul.mubr.bf16.gmra.mrb[0].mxu0 %v7827
        %v8029 = vpop.f32.mrb[0].mxu0
        %v8030 = vadd.f32 0.0, %v8029
        %v8031 = vpop.f32.mrb[0].mxu0
        %v8032 = vpop.f32.mrb[0].mxu0
        %v8033 = vadd.f32 0.0, %v8032
        %v8034 = vpop.f32.mrb[0].mxu0
        %8035 = vdwg.mxu0
        %v8036 = vpack.c.bf16 %v8009, %v8006
        %v8037 = vpack.c.bf16 %v8017, %v8014
        %v8038 = vpack.c.bf16 %v8025, %v8022
        %v8039 = vpack.c.bf16 %v8033, %v8030
        %8040 = vmatprep.subr.bf16.mxu0 0
        %8041 = vmatpush1.bf16.msra.mxu0 %v8036
        %8042 = vmatprep.subr.bf16.mxu0 0
        %8043 = vmatpush1.bf16.msra.mxu0 %v8037
        %8044 = vmatprep.subr.bf16.mxu0 0
        %8045 = vmatpush1.bf16.msra.mxu0 %v8038
        %8046 = vmatprep.subr.bf16.mxu0 0
        %8047 = vmatpush1.bf16.msra.mxu0 %v8039
        %8048 = vmatprep.subr.bf16.mxu0 0
        %8049 = vmatpush1.bf16.msra.mxu0 0
        %8050 = vmatprep.subr.bf16.mxu0 0
        %8051 = vmatpush1.bf16.msra.mxu0 0
        %8052 = vmatprep.subr.bf16.mxu0 0
        %8053 = vmatpush1.bf16.msra.mxu0 0
        %8054 = vmatprep.subr.bf16.mxu0 0
        %8055 = vmatpush1.bf16.msra.mxu0 0
        %8056 = vmatprep.subr.bf16.mxu0 0
        %8057 = vmatpush1.bf16.msra.mxu0 0
        %8058 = vmatprep.subr.bf16.mxu0 0
        %8059 = vmatpush1.bf16.msra.mxu0 0
        %8060 = vmatprep.subr.bf16.mxu0 0
        %8061 = vmatpush1.bf16.msra.mxu0 0
        %8062 = vmatprep.subr.bf16.mxu0 0
        %8063 = vmatpush1.bf16.msra.mxu0 0
        %8064 = vmatprep.subr.bf16.mxu0 0
        %8065 = vmatpush1.bf16.msra.mxu0 0
        %8066 = vmatprep.subr.bf16.mxu0 0
        %8067 = vmatpush1.bf16.msra.mxu0 0
        %8068 = vmatprep.subr.bf16.mxu0 0
        %8069 = vmatpush1.bf16.msra.mxu0 0
        %8070 = vmatprep.subr.bf16.mxu0 0
        %8071 = vmatpush1.bf16.msra.mxu0 0
        %8072 = vmatprep.mubr.bf16.mxu0 0
        %8073 = vmatmul.mubr.bf16.gmra.mrb[0].mxu0 %v743
        %v8074 = vpop.f32.mrb[0].mxu0
        %v8075 = vadd.f32 0.0, %v8074
        %v8076 = vpop.f32.mrb[0].mxu0
        %v8077 = vpop.f32.mrb[0].mxu0
        %v8078 = vadd.f32 0.0, %v8077
        %v8079 = vpop.f32.mrb[0].mxu0
        %8080 = vmatprep.mubr.bf16.mxu0 0
        %8081 = vmatmul.mubr.bf16.gmra.mrb[0].mxu0 %v746
        %v8082 = vpop.f32.mrb[0].mxu0
        %v8083 = vadd.f32 0.0, %v8082
        %v8084 = vpop.f32.mrb[0].mxu0
        %v8085 = vpop.f32.mrb[0].mxu0
        %v8086 = vadd.f32 0.0, %v8085
        %v8087 = vpop.f32.mrb[0].mxu0
        %8088 = vmatprep.mubr.bf16.mxu0 0
        %8089 = vmatmul.mubr.bf16.gmra.mrb[0].mxu0 %v749
        %v8090 = vpop.f32.mrb[0].mxu0
        %v8091 = vadd.f32 0.0, %v8090
        %v8092 = vpop.f32.mrb[0].mxu0
        %v8093 = vpop.f32.mrb[0].mxu0
        %v8094 = vadd.f32 0.0, %v8093
        %v8095 = vpop.f32.mrb[0].mxu0
        %8096 = vmatprep.mubr.bf16.mxu0 0
        %8097 = vmatmul.mubr.bf16.gmra.mrb[0].mxu0 %v752
        %v8098 = vpop.f32.mrb[0].mxu0
        %v8099 = vadd.f32 0.0, %v8098
        %v8100 = vpop.f32.mrb[0].mxu0
        %v8101 = vpop.f32.mrb[0].mxu0
        %v8102 = vadd.f32 0.0, %v8101
        %v8103 = vpop.f32.mrb[0].mxu0
        %8104 = vdwg.mxu0
        %v8105 = vadd.f32 %v7963, %v8075
        %v8106 = vadd.f32 %v7964, %v8078
        %v8107 = vadd.f32 %v7965, %v8083
        %v8108 = vadd.f32 %v7966, %v8086
        %v8109 = vadd.f32 %v7967, %v8091
        %v8110 = vadd.f32 %v7968, %v8094
        %v8111 = vadd.f32 %v7969, %v8099
        %v8112 = vadd.f32 %v7970, %v8102
        %8113 = vmatprep.subr.bf16.mxu0 0
        %8114 = vmatpush1.bf16.msra.mxu0 %v840
        %8115 = vmatprep.subr.bf16.mxu0 0
        %8116 = vmatpush1.bf16.msra.mxu0 %v841
        %8117 = vmatprep.subr.bf16.mxu0 0
        %8118 = vmatpush1.bf16.msra.mxu0 0
        %8119 = vmatprep.subr.bf16.mxu0 0
        %8120 = vmatpush1.bf16.msra.mxu0 0
        %8121 = vmatprep.subr.bf16.mxu0 0
        %8122 = vmatpush1.bf16.msra.mxu0 0
        %8123 = vmatprep.subr.bf16.mxu0 0
        %8124 = vmatpush1.bf16.msra.mxu0 0
        %8125 = vmatprep.subr.bf16.mxu0 0
        %8126 = vmatpush1.bf16.msra.mxu0 0
        %8127 = vmatprep.subr.bf16.mxu0 0
        %8128 = vmatpush1.bf16.msra.mxu0 0
        %8129 = vmatprep.subr.bf16.mxu0 0
        %8130 = vmatpush1.bf16.msra.mxu0 0
        %8131 = vmatprep.subr.bf16.mxu0 0
        %8132 = vmatpush1.bf16.msra.mxu0 0
        %8133 = vmatprep.subr.bf16.mxu0 0
        %8134 = vmatpush1.bf16.msra.mxu0 0
        %8135 = vmatprep.subr.bf16.mxu0 0
        %8136 = vmatpush1.bf16.msra.mxu0 0
        %8137 = vmatprep.subr.bf16.mxu0 0
        %8138 = vmatpush1.bf16.msra.mxu0 0
        %8139 = vmatprep.subr.bf16.mxu0 0
        %8140 = vmatpush1.bf16.msra.mxu0 0
        %8141 = vmatprep.subr.bf16.mxu0 0
        %8142 = vmatpush1.bf16.msra.mxu0 0
        %8143 = vmatprep.subr.bf16.mxu0 0
        %8144 = vmatpush1.bf16.msra.mxu0 0
        %8145 = vmatprep.mubr.bf16.mxu0 0
        %8146 = vmatmul.mubr.bf16.gmra.mrb[0].mxu0 %v7818
        %v8147 = vpop.f32.mrb[0].mxu0
        %v8148 = vadd.f32 0.0, %v8147
        %v8149 = vpop.f32.mrb[0].mxu0
        %v8150 = vpop.f32.mrb[0].mxu0
        %v8151 = vadd.f32 0.0, %v8150
        %v8152 = vpop.f32.mrb[0].mxu0
        %8153 = vmatprep.mubr.bf16.mxu0 0
        %8154 = vmatmul.mubr.bf16.gmra.mrb[0].mxu0 %v7821
        %v8155 = vpop.f32.mrb[0].mxu0
        %v8156 = vadd.f32 0.0, %v8155
        %v8157 = vpop.f32.mrb[0].mxu0
        %v8158 = vpop.f32.mrb[0].mxu0
        %v8159 = vadd.f32 0.0, %v8158
        %v8160 = vpop.f32.mrb[0].mxu0
        %8161 = vmatprep.mubr.bf16.mxu0 0
        %8162 = vmatmul.mubr.bf16.gmra.mrb[0].mxu0 %v7824
        %v8163 = vpop.f32.mrb[0].mxu0
        %v8164 = vadd.f32 0.0, %v8163
        %v8165 = vpop.f32.mrb[0].mxu0
        %v8166 = vpop.f32.mrb[0].mxu0
        %v8167 = vadd.f32 0.0, %v8166
        %v8168 = vpop.f32.mrb[0].mxu0
        %8169 = vmatprep.mubr.bf16.mxu0 0
        %8170 = vmatmul.mubr.bf16.gmra.mrb[0].mxu0 %v7827
        %v8171 = vpop.f32.mrb[0].mxu0
        %v8172 = vadd.f32 0.0, %v8171
        %v8173 = vpop.f32.mrb[0].mxu0
        %v8174 = vpop.f32.mrb[0].mxu0
        %v8175 = vadd.f32 0.0, %v8174
        %v8176 = vpop.f32.mrb[0].mxu0
        %8177 = vdwg.mxu0
        %v8178 = vpack.c.bf16 %v8151, %v8148
        %v8179 = vpack.c.bf16 %v8159, %v8156
        %v8180 = vpack.c.bf16 %v8167, %v8164
        %v8181 = vpack.c.bf16 %v8175, %v8172
        %8182 = vmatprep.subr.bf16.mxu0 0
        %8183 = vmatpush1.bf16.msra.mxu0 %v8178
        %8184 = vmatprep.subr.bf16.mxu0 0
        %8185 = vmatpush1.bf16.msra.mxu0 %v8179
        %8186 = vmatprep.subr.bf16.mxu0 0
        %8187 = vmatpush1.bf16.msra.mxu0 %v8180
        %8188 = vmatprep.subr.bf16.mxu0 0
        %8189 = vmatpush1.bf16.msra.mxu0 %v8181
        %8190 = vmatprep.subr.bf16.mxu0 0
        %8191 = vmatpush1.bf16.msra.mxu0 0
        %8192 = vmatprep.subr.bf16.mxu0 0
        %8193 = vmatpush1.bf16.msra.mxu0 0
        %8194 = vmatprep.subr.bf16.mxu0 0
        %8195 = vmatpush1.bf16.msra.mxu0 0
        %8196 = vmatprep.subr.bf16.mxu0 0
        %8197 = vmatpush1.bf16.msra.mxu0 0
        %8198 = vmatprep.subr.bf16.mxu0 0
        %8199 = vmatpush1.bf16.msra.mxu0 0
        %8200 = vmatprep.subr.bf16.mxu0 0
        %8201 = vmatpush1.bf16.msra.mxu0 0
        %8202 = vmatprep.subr.bf16.mxu0 0
        %8203 = vmatpush1.bf16.msra.mxu0 0
        %8204 = vmatprep.subr.bf16.mxu0 0
        %8205 = vmatpush1.bf16.msra.mxu0 0
        %8206 = vmatprep.subr.bf16.mxu0 0
        %8207 = vmatpush1.bf16.msra.mxu0 0
        %8208 = vmatprep.subr.bf16.mxu0 0
        %8209 = vmatpush1.bf16.msra.mxu0 0
        %8210 = vmatprep.subr.bf16.mxu0 0
        %8211 = vmatpush1.bf16.msra.mxu0 0
        %8212 = vmatprep.subr.bf16.mxu0 0
        %8213 = vmatpush1.bf16.msra.mxu0 0
        %8214 = vmatprep.mubr.bf16.mxu0 0
        %8215 = vmatmul.mubr.bf16.gmra.mrb[0].mxu0 %v943
        %v8216 = vpop.f32.mrb[0].mxu0
        %v8217 = vadd.f32 0.0, %v8216
        %v8218 = vpop.f32.mrb[0].mxu0
        %v8219 = vpop.f32.mrb[0].mxu0
        %v8220 = vadd.f32 0.0, %v8219
        %v8221 = vpop.f32.mrb[0].mxu0
        %8222 = vmatprep.mubr.bf16.mxu0 0
        %8223 = vmatmul.mubr.bf16.gmra.mrb[0].mxu0 %v946
        %v8224 = vpop.f32.mrb[0].mxu0
        %v8225 = vadd.f32 0.0, %v8224
        %v8226 = vpop.f32.mrb[0].mxu0
        %v8227 = vpop.f32.mrb[0].mxu0
        %v8228 = vadd.f32 0.0, %v8227
        %v8229 = vpop.f32.mrb[0].mxu0
        %8230 = vmatprep.mubr.bf16.mxu0 0
        %8231 = vmatmul.mubr.bf16.gmra.mrb[0].mxu0 %v949
        %v8232 = vpop.f32.mrb[0].mxu0
        %v8233 = vadd.f32 0.0, %v8232
        %v8234 = vpop.f32.mrb[0].mxu0
        %v8235 = vpop.f32.mrb[0].mxu0
        %v8236 = vadd.f32 0.0, %v8235
        %v8237 = vpop.f32.mrb[0].mxu0
        %8238 = vmatprep.mubr.bf16.mxu0 0
        %8239 = vmatmul.mubr.bf16.gmra.mrb[0].mxu0 %v952
        %v8240 = vpop.f32.mrb[0].mxu0
        %v8241 = vadd.f32 0.0, %v8240
        %v8242 = vpop.f32.mrb[0].mxu0
        %v8243 = vpop.f32.mrb[0].mxu0
        %v8244 = vadd.f32 0.0, %v8243
        %v8245 = vpop.f32.mrb[0].mxu0
        %8246 = vdwg.mxu0
        %v8247 = vadd.f32 %v8105, %v8217
        %v8248 = vadd.f32 %v8106, %v8220
        %v8249 = vadd.f32 %v8107, %v8225
        %v8250 = vadd.f32 %v8108, %v8228
        %v8251 = vadd.f32 %v8109, %v8233
        %v8252 = vadd.f32 %v8110, %v8236
        %v8253 = vadd.f32 %v8111, %v8241
        %v8254 = vadd.f32 %v8112, %v8244
        %v8255 = vpack.c.bf16 %v8248, %v8247
        %v8256 = vpack.c.bf16 %v8250, %v8249
        %v8257 = vpack.c.bf16 %v8252, %v8251
        %v8258 = vpack.c.bf16 %v8254, %v8253
        %8259 = vmatprep.subr.bf16.mxu0 0
        %8260 = vmatpush1.bf16.msra.mxu0 %v1047
        %8261 = vmatprep.subr.bf16.mxu0 0
        %8262 = vmatpush1.bf16.msra.mxu0 %v1048
        %8263 = vmatprep.subr.bf16.mxu0 0
        %8264 = vmatpush1.bf16.msra.mxu0 0
        %8265 = vmatprep.subr.bf16.mxu0 0
        %8266 = vmatpush1.bf16.msra.mxu0 0
        %8267 = vmatprep.subr.bf16.mxu0 0
        %8268 = vmatpush1.bf16.msra.mxu0 0
        %8269 = vmatprep.subr.bf16.mxu0 0
        %8270 = vmatpush1.bf16.msra.mxu0 0
        %8271 = vmatprep.subr.bf16.mxu0 0
        %8272 = vmatpush1.bf16.msra.mxu0 0
        %8273 = vmatprep.subr.bf16.mxu0 0
        %8274 = vmatpush1.bf16.msra.mxu0 0
        %8275 = vmatprep.subr.bf16.mxu0 0
        %8276 = vmatpush1.bf16.msra.mxu0 0
        %8277 = vmatprep.subr.bf16.mxu0 0
        %8278 = vmatpush1.bf16.msra.mxu0 0
        %8279 = vmatprep.subr.bf16.mxu0 0
        %8280 = vmatpush1.bf16.msra.mxu0 0
        %8281 = vmatprep.subr.bf16.mxu0 0
        %8282 = vmatpush1.bf16.msra.mxu0 0
        %8283 = vmatprep.subr.bf16.mxu0 0
        %8284 = vmatpush1.bf16.msra.mxu0 0
        %8285 = vmatprep.subr.bf16.mxu0 0
        %8286 = vmatpush1.bf16.msra.mxu0 0
        %8287 = vmatprep.subr.bf16.mxu0 0
        %8288 = vmatpush1.bf16.msra.mxu0 0
        %8289 = vmatprep.subr.bf16.mxu0 0
        %8290 = vmatpush1.bf16.msra.mxu0 0
        %8291 = vmatprep.mubr.bf16.mxu0 0
        %8292 = vmatmul.mubr.bf16.gmra.mrb[0].mxu0 %v7818
        %v8293 = vpop.f32.mrb[0].mxu0
        %v8294 = vadd.f32 0.0, %v8293
        %v8295 = vpop.f32.mrb[0].mxu0
        %v8296 = vpop.f32.mrb[0].mxu0
        %v8297 = vadd.f32 0.0, %v8296
        %v8298 = vpop.f32.mrb[0].mxu0
        %8299 = vmatprep.mubr.bf16.mxu0 0
        %8300 = vmatmul.mubr.bf16.gmra.mrb[0].mxu0 %v7821
        %v8301 = vpop.f32.mrb[0].mxu0
        %v8302 = vadd.f32 0.0, %v8301
        %v8303 = vpop.f32.mrb[0].mxu0
        %v8304 = vpop.f32.mrb[0].mxu0
        %v8305 = vadd.f32 0.0, %v8304
        %v8306 = vpop.f32.mrb[0].mxu0
        %8307 = vmatprep.mubr.bf16.mxu0 0
        %8308 = vmatmul.mubr.bf16.gmra.mrb[0].mxu0 %v7824
        %v8309 = vpop.f32.mrb[0].mxu0
        %v8310 = vadd.f32 0.0, %v8309
        %v8311 = vpop.f32.mrb[0].mxu0
        %v8312 = vpop.f32.mrb[0].mxu0
        %v8313 = vadd.f32 0.0, %v8312
        %v8314 = vpop.f32.mrb[0].mxu0
        %8315 = vmatprep.mubr.bf16.mxu0 0
        %8316 = vmatmul.mubr.bf16.gmra.mrb[0].mxu0 %v7827
        %v8317 = vpop.f32.mrb[0].mxu0
        %v8318 = vadd.f32 0.0, %v8317
        %v8319 = vpop.f32.mrb[0].mxu0
        %v8320 = vpop.f32.mrb[0].mxu0
        %v8321 = vadd.f32 0.0, %v8320
        %v8322 = vpop.f32.mrb[0].mxu0
        %8323 = vdwg.mxu0
        %v8325 = vsel %vm431, %v8255, 0
        %v8328 = vsel %vm431, %v8256, 0
        %v8331 = vsel %vm431, %v8257, 0
        %v8334 = vsel %vm431, %v8258, 0
        %8336 = vmatprep.subr.bf16.mxu0 0
        %8337 = vmatpush1.bf16.msra.mxu0 %v1124
        %8338 = vmatprep.subr.bf16.mxu0 0
        %8339 = vmatpush1.bf16.msra.mxu0 %v1125
        %8340 = vmatprep.subr.bf16.mxu0 0
        %8341 = vmatpush1.bf16.msra.mxu0 0
        %8342 = vmatprep.subr.bf16.mxu0 0
        %8343 = vmatpush1.bf16.msra.mxu0 0
        %8344 = vmatprep.subr.bf16.mxu0 0
        %8345 = vmatpush1.bf16.msra.mxu0 0
        %8346 = vmatprep.subr.bf16.mxu0 0
        %8347 = vmatpush1.bf16.msra.mxu0 0
        %8348 = vmatprep.subr.bf16.mxu0 0
        %8349 = vmatpush1.bf16.msra.mxu0 0
        %8350 = vmatprep.subr.bf16.mxu0 0
        %8351 = vmatpush1.bf16.msra.mxu0 0
        %8352 = vmatprep.subr.bf16.mxu0 0
        %8353 = vmatpush1.bf16.msra.mxu0 0
        %8354 = vmatprep.subr.bf16.mxu0 0
        %8355 = vmatpush1.bf16.msra.mxu0 0
        %8356 = vmatprep.subr.bf16.mxu0 0
        %8357 = vmatpush1.bf16.msra.mxu0 0
        %8358 = vmatprep.subr.bf16.mxu0 0
        %8359 = vmatpush1.bf16.msra.mxu0 0
        %8360 = vmatprep.subr.bf16.mxu0 0
        %8361 = vmatpush1.bf16.msra.mxu0 0
        %8362 = vmatprep.subr.bf16.mxu0 0
        %8363 = vmatpush1.bf16.msra.mxu0 0
        %8364 = vmatprep.subr.bf16.mxu0 0
        %8365 = vmatpush1.bf16.msra.mxu0 0
        %8366 = vmatprep.subr.bf16.mxu0 0
        %8367 = vmatpush1.bf16.msra.mxu0 0
        %8368 = vmatprep.mubr.bf16.mxu0 0
        %8369 = vmatmul.mubr.bf16.gmra.mrb[0].mxu0 %v8325
        %v8370 = vpop.f32.mrb[0].mxu0
        %v8371 = vadd.f32 %v8294, %v8370
        %v8372 = vpop.f32.mrb[0].mxu0
        %v8373 = vpop.f32.mrb[0].mxu0
        %v8374 = vadd.f32 %v8297, %v8373
        %v8375 = vpop.f32.mrb[0].mxu0
        %8376 = vmatprep.mubr.bf16.mxu0 0
        %8377 = vmatmul.mubr.bf16.gmra.mrb[0].mxu0 %v8328
        %v8378 = vpop.f32.mrb[0].mxu0
        %v8379 = vadd.f32 %v8302, %v8378
        %v8380 = vpop.f32.mrb[0].mxu0
        %v8381 = vpop.f32.mrb[0].mxu0
        %v8382 = vadd.f32 %v8305, %v8381
        %v8383 = vpop.f32.mrb[0].mxu0
        %8384 = vmatprep.mubr.bf16.mxu0 0
        %8385 = vmatmul.mubr.bf16.gmra.mrb[0].mxu0 %v8331
        %v8386 = vpop.f32.mrb[0].mxu0
        %v8387 = vadd.f32 %v8310, %v8386
        %v8388 = vpop.f32.mrb[0].mxu0
        %v8389 = vpop.f32.mrb[0].mxu0
        %v8390 = vadd.f32 %v8313, %v8389
        %v8391 = vpop.f32.mrb[0].mxu0
        %8392 = vmatprep.mubr.bf16.mxu0 0
        %8393 = vmatmul.mubr.bf16.gmra.mrb[0].mxu0 %v8334
        %v8394 = vpop.f32.mrb[0].mxu0
        %v8395 = vadd.f32 %v8318, %v8394
        %v8396 = vpop.f32.mrb[0].mxu0
        %v8397 = vpop.f32.mrb[0].mxu0
        %v8398 = vadd.f32 %v8321, %v8397
        %v8399 = vpop.f32.mrb[0].mxu0
        %8400 = vdwg.mxu0
        %v8401 = vadd.f32 %v8371, %v1208
        %v8402 = vadd.f32 %v8374, %v1208
        %v8403 = vadd.f32 %v8379, %v1208
        %v8404 = vadd.f32 %v8382, %v1208
        %v8405 = vadd.f32 %v8387, %v1208
        %v8406 = vadd.f32 %v8390, %v1208
        %v8407 = vadd.f32 %v8395, %v1208
        %v8408 = vadd.f32 %v8398, %v1208
        %v8409 = vxor.u32 %v8401, 2147483648
        %v8410 = vxor.u32 %v8402, 2147483648
        %v8411 = vxor.u32 %v8403, 2147483648
        %v8412 = vxor.u32 %v8404, 2147483648
        %v8413 = vxor.u32 %v8405, 2147483648
        %v8414 = vxor.u32 %v8406, 2147483648
        %v8415 = vxor.u32 %v8407, 2147483648
        %v8416 = vxor.u32 %v8408, 2147483648
        %v8417 = vmul.f32 %v8409, 1.442695
        %v8418 = vpow.pop %v8417
        %v8419 = vmul.f32 %v8410, 1.442695
        %v8420 = vpow.pop %v8419
        %v8421 = vmul.f32 %v8411, 1.442695
        %v8422 = vpow.pop %v8421
        %v8423 = vmul.f32 %v8412, 1.442695
        %v8424 = vpow.pop %v8423
        %v8425 = vmul.f32 %v8413, 1.442695
        %v8426 = vpow.pop %v8425
        %v8427 = vmul.f32 %v8414, 1.442695
        %v8428 = vpow.pop %v8427
        %v8429 = vmul.f32 %v8415, 1.442695
        %v8430 = vpow.pop %v8429
        %v8431 = vmul.f32 %v8416, 1.442695
        %v8432 = vpow.pop %v8431
        %v8433 = vadd.f32 %v8418, 1.0
        %v8434 = vadd.f32 %v8420, 1.0
        %v8435 = vadd.f32 %v8422, 1.0
        %v8436 = vadd.f32 %v8424, 1.0
        %v8437 = vadd.f32 %v8426, 1.0
        %v8438 = vadd.f32 %v8428, 1.0
        %v8439 = vadd.f32 %v8430, 1.0
        %v8440 = vadd.f32 %v8432, 1.0
        %v8441 = vrcp.pop %v8433
        %v8442 = vmul.f32 1.0, %v8441
        %v8443 = vrcp.pop %v8434
        %v8444 = vmul.f32 1.0, %v8443
        %v8445 = vrcp.pop %v8435
        %v8446 = vmul.f32 1.0, %v8445
        %v8447 = vrcp.pop %v8436
        %v8448 = vmul.f32 1.0, %v8447
        %v8449 = vrcp.pop %v8437
        %v8450 = vmul.f32 1.0, %v8449
        %v8451 = vrcp.pop %v8438
        %v8452 = vmul.f32 1.0, %v8451
        %v8453 = vrcp.pop %v8439
        %v8454 = vmul.f32 1.0, %v8453
        %v8455 = vrcp.pop %v8440
        %v8456 = vmul.f32 1.0, %v8455
        %8457 = vmatprep.subr.bf16.mxu0 0
        %8458 = vmatpush1.bf16.msra.mxu0 %v1283
        %8459 = vmatprep.subr.bf16.mxu0 0
        %8460 = vmatpush1.bf16.msra.mxu0 %v1284
        %8461 = vmatprep.subr.bf16.mxu0 0
        %8462 = vmatpush1.bf16.msra.mxu0 0
        %8463 = vmatprep.subr.bf16.mxu0 0
        %8464 = vmatpush1.bf16.msra.mxu0 0
        %8465 = vmatprep.subr.bf16.mxu0 0
        %8466 = vmatpush1.bf16.msra.mxu0 0
        %8467 = vmatprep.subr.bf16.mxu0 0
        %8468 = vmatpush1.bf16.msra.mxu0 0
        %8469 = vmatprep.subr.bf16.mxu0 0
        %8470 = vmatpush1.bf16.msra.mxu0 0
        %8471 = vmatprep.subr.bf16.mxu0 0
        %8472 = vmatpush1.bf16.msra.mxu0 0
        %8473 = vmatprep.subr.bf16.mxu0 0
        %8474 = vmatpush1.bf16.msra.mxu0 0
        %8475 = vmatprep.subr.bf16.mxu0 0
        %8476 = vmatpush1.bf16.msra.mxu0 0
        %8477 = vmatprep.subr.bf16.mxu0 0
        %8478 = vmatpush1.bf16.msra.mxu0 0
        %8479 = vmatprep.subr.bf16.mxu0 0
        %8480 = vmatpush1.bf16.msra.mxu0 0
        %8481 = vmatprep.subr.bf16.mxu0 0
        %8482 = vmatpush1.bf16.msra.mxu0 0
        %8483 = vmatprep.subr.bf16.mxu0 0
        %8484 = vmatpush1.bf16.msra.mxu0 0
        %8485 = vmatprep.subr.bf16.mxu0 0
        %8486 = vmatpush1.bf16.msra.mxu0 0
        %8487 = vmatprep.subr.bf16.mxu0 0
        %8488 = vmatpush1.bf16.msra.mxu0 0
        %8489 = vmatprep.mubr.bf16.mxu0 0
        %8490 = vmatmul.mubr.bf16.gmra.mrb[0].mxu0 %v7818
        %v8491 = vpop.f32.mrb[0].mxu0
        %v8492 = vadd.f32 0.0, %v8491
        %v8493 = vpop.f32.mrb[0].mxu0
        %v8494 = vpop.f32.mrb[0].mxu0
        %v8495 = vadd.f32 0.0, %v8494
        %v8496 = vpop.f32.mrb[0].mxu0
        %8497 = vmatprep.mubr.bf16.mxu0 0
        %8498 = vmatmul.mubr.bf16.gmra.mrb[0].mxu0 %v7821
        %v8499 = vpop.f32.mrb[0].mxu0
        %v8500 = vadd.f32 0.0, %v8499
        %v8501 = vpop.f32.mrb[0].mxu0
        %v8502 = vpop.f32.mrb[0].mxu0
        %v8503 = vadd.f32 0.0, %v8502
        %v8504 = vpop.f32.mrb[0].mxu0
        %8505 = vmatprep.mubr.bf16.mxu0 0
        %8506 = vmatmul.mubr.bf16.gmra.mrb[0].mxu0 %v7824
        %v8507 = vpop.f32.mrb[0].mxu0
        %v8508 = vadd.f32 0.0, %v8507
        %v8509 = vpop.f32.mrb[0].mxu0
        %v8510 = vpop.f32.mrb[0].mxu0
        %v8511 = vadd.f32 0.0, %v8510
        %v8512 = vpop.f32.mrb[0].mxu0
        %8513 = vmatprep.mubr.bf16.mxu0 0
        %8514 = vmatmul.mubr.bf16.gmra.mrb[0].mxu0 %v7827
        %v8515 = vpop.f32.mrb[0].mxu0
        %v8516 = vadd.f32 0.0, %v8515
        %v8517 = vpop.f32.mrb[0].mxu0
        %v8518 = vpop.f32.mrb[0].mxu0
        %v8519 = vadd.f32 0.0, %v8518
        %v8520 = vpop.f32.mrb[0].mxu0
        %8521 = vdwg.mxu0
        %8522 = vmatprep.subr.bf16.mxu0 0
        %8523 = vmatpush1.bf16.msra.mxu0 %v1360
        %8524 = vmatprep.subr.bf16.mxu0 0
        %8525 = vmatpush1.bf16.msra.mxu0 %v1361
        %8526 = vmatprep.subr.bf16.mxu0 0
        %8527 = vmatpush1.bf16.msra.mxu0 0
        %8528 = vmatprep.subr.bf16.mxu0 0
        %8529 = vmatpush1.bf16.msra.mxu0 0
        %8530 = vmatprep.subr.bf16.mxu0 0
        %8531 = vmatpush1.bf16.msra.mxu0 0
        %8532 = vmatprep.subr.bf16.mxu0 0
        %8533 = vmatpush1.bf16.msra.mxu0 0
        %8534 = vmatprep.subr.bf16.mxu0 0
        %8535 = vmatpush1.bf16.msra.mxu0 0
        %8536 = vmatprep.subr.bf16.mxu0 0
        %8537 = vmatpush1.bf16.msra.mxu0 0
        %8538 = vmatprep.subr.bf16.mxu0 0
        %8539 = vmatpush1.bf16.msra.mxu0 0
        %8540 = vmatprep.subr.bf16.mxu0 0
        %8541 = vmatpush1.bf16.msra.mxu0 0
        %8542 = vmatprep.subr.bf16.mxu0 0
        %8543 = vmatpush1.bf16.msra.mxu0 0
        %8544 = vmatprep.subr.bf16.mxu0 0
        %8545 = vmatpush1.bf16.msra.mxu0 0
        %8546 = vmatprep.subr.bf16.mxu0 0
        %8547 = vmatpush1.bf16.msra.mxu0 0
        %8548 = vmatprep.subr.bf16.mxu0 0
        %8549 = vmatpush1.bf16.msra.mxu0 0
        %8550 = vmatprep.subr.bf16.mxu0 0
        %8551 = vmatpush1.bf16.msra.mxu0 0
        %8552 = vmatprep.subr.bf16.mxu0 0
        %8553 = vmatpush1.bf16.msra.mxu0 0
        %8554 = vmatprep.mubr.bf16.mxu0 0
        %8555 = vmatmul.mubr.bf16.gmra.mrb[0].mxu0 %v8325
        %v8556 = vpop.f32.mrb[0].mxu0
        %v8557 = vadd.f32 %v8492, %v8556
        %v8558 = vpop.f32.mrb[0].mxu0
        %v8559 = vpop.f32.mrb[0].mxu0
        %v8560 = vadd.f32 %v8495, %v8559
        %v8561 = vpop.f32.mrb[0].mxu0
        %8562 = vmatprep.mubr.bf16.mxu0 0
        %8563 = vmatmul.mubr.bf16.gmra.mrb[0].mxu0 %v8328
        %v8564 = vpop.f32.mrb[0].mxu0
        %v8565 = vadd.f32 %v8500, %v8564
        %v8566 = vpop.f32.mrb[0].mxu0
        %v8567 = vpop.f32.mrb[0].mxu0
        %v8568 = vadd.f32 %v8503, %v8567
        %v8569 = vpop.f32.mrb[0].mxu0
        %8570 = vmatprep.mubr.bf16.mxu0 0
        %8571 = vmatmul.mubr.bf16.gmra.mrb[0].mxu0 %v8331
        %v8572 = vpop.f32.mrb[0].mxu0
        %v8573 = vadd.f32 %v8508, %v8572
        %v8574 = vpop.f32.mrb[0].mxu0
        %v8575 = vpop.f32.mrb[0].mxu0
        %v8576 = vadd.f32 %v8511, %v8575
        %v8577 = vpop.f32.mrb[0].mxu0
        %8578 = vmatprep.mubr.bf16.mxu0 0
        %8579 = vmatmul.mubr.bf16.gmra.mrb[0].mxu0 %v8334
        %v8580 = vpop.f32.mrb[0].mxu0
        %v8581 = vadd.f32 %v8516, %v8580
        %v8582 = vpop.f32.mrb[0].mxu0
        %v8583 = vpop.f32.mrb[0].mxu0
        %v8584 = vadd.f32 %v8519, %v8583
        %v8585 = vpop.f32.mrb[0].mxu0
        %8586 = vdwg.mxu0
        %v8587 = vadd.f32 %v8557, %v1432
        %v8588 = vadd.f32 %v8560, %v1432
        %v8589 = vadd.f32 %v8565, %v1432
        %v8590 = vadd.f32 %v8568, %v1432
        %v8591 = vadd.f32 %v8573, %v1432
        %v8592 = vadd.f32 %v8576, %v1432
        %v8593 = vadd.f32 %v8581, %v1432
        %v8594 = vadd.f32 %v8584, %v1432
        %v8595 = vxor.u32 %v8587, 2147483648
        %v8596 = vxor.u32 %v8588, 2147483648
        %v8597 = vxor.u32 %v8589, 2147483648
        %v8598 = vxor.u32 %v8590, 2147483648
        %v8599 = vxor.u32 %v8591, 2147483648
        %v8600 = vxor.u32 %v8592, 2147483648
        %v8601 = vxor.u32 %v8593, 2147483648
        %v8602 = vxor.u32 %v8594, 2147483648
        %v8603 = vmul.f32 %v8595, 1.442695
        %v8604 = vpow.pop %v8603
        %v8605 = vmul.f32 %v8596, 1.442695
        %v8606 = vpow.pop %v8605
        %v8607 = vmul.f32 %v8597, 1.442695
        %v8608 = vpow.pop %v8607
        %v8609 = vmul.f32 %v8598, 1.442695
        %v8610 = vpow.pop %v8609
        %v8611 = vmul.f32 %v8599, 1.442695
        %v8612 = vpow.pop %v8611
        %v8613 = vmul.f32 %v8600, 1.442695
        %v8614 = vpow.pop %v8613
        %v8615 = vmul.f32 %v8601, 1.442695
        %v8616 = vpow.pop %v8615
        %v8617 = vmul.f32 %v8602, 1.442695
        %v8618 = vpow.pop %v8617
        %v8619 = vadd.f32 %v8604, 1.0
        %v8620 = vadd.f32 %v8606, 1.0
        %v8621 = vadd.f32 %v8608, 1.0
        %v8622 = vadd.f32 %v8610, 1.0
        %v8623 = vadd.f32 %v8612, 1.0
        %v8624 = vadd.f32 %v8614, 1.0
        %v8625 = vadd.f32 %v8616, 1.0
        %v8626 = vadd.f32 %v8618, 1.0
        %v8627 = vrcp.pop %v8619
        %v8628 = vmul.f32 1.0, %v8627
        %v8629 = vrcp.pop %v8620
        %v8630 = vmul.f32 1.0, %v8629
        %v8631 = vrcp.pop %v8621
        %v8632 = vmul.f32 1.0, %v8631
        %v8633 = vrcp.pop %v8622
        %v8634 = vmul.f32 1.0, %v8633
        %v8635 = vrcp.pop %v8623
        %v8636 = vmul.f32 1.0, %v8635
        %v8637 = vrcp.pop %v8624
        %v8638 = vmul.f32 1.0, %v8637
        %v8639 = vrcp.pop %v8625
        %v8640 = vmul.f32 1.0, %v8639
        %v8641 = vrcp.pop %v8626
        %v8642 = vmul.f32 1.0, %v8641
        %8643 = vmatprep.subr.bf16.mxu0 0
        %8644 = vmatpush1.bf16.msra.mxu0 %v1506
        %8645 = vmatprep.subr.bf16.mxu0 0
        %8646 = vmatpush1.bf16.msra.mxu0 %v1507
        %8647 = vmatprep.subr.bf16.mxu0 0
        %8648 = vmatpush1.bf16.msra.mxu0 0
        %8649 = vmatprep.subr.bf16.mxu0 0
        %8650 = vmatpush1.bf16.msra.mxu0 0
        %8651 = vmatprep.subr.bf16.mxu0 0
        %8652 = vmatpush1.bf16.msra.mxu0 0
        %8653 = vmatprep.subr.bf16.mxu0 0
        %8654 = vmatpush1.bf16.msra.mxu0 0
        %8655 = vmatprep.subr.bf16.mxu0 0
        %8656 = vmatpush1.bf16.msra.mxu0 0
        %8657 = vmatprep.subr.bf16.mxu0 0
        %8658 = vmatpush1.bf16.msra.mxu0 0
        %8659 = vmatprep.subr.bf16.mxu0 0
        %8660 = vmatpush1.bf16.msra.mxu0 0
        %8661 = vmatprep.subr.bf16.mxu0 0
        %8662 = vmatpush1.bf16.msra.mxu0 0
        %8663 = vmatprep.subr.bf16.mxu0 0
        %8664 = vmatpush1.bf16.msra.mxu0 0
        %8665 = vmatprep.subr.bf16.mxu0 0
        %8666 = vmatpush1.bf16.msra.mxu0 0
        %8667 = vmatprep.subr.bf16.mxu0 0
        %8668 = vmatpush1.bf16.msra.mxu0 0
        %8669 = vmatprep.subr.bf16.mxu0 0
        %8670 = vmatpush1.bf16.msra.mxu0 0
        %8671 = vmatprep.subr.bf16.mxu0 0
        %8672 = vmatpush1.bf16.msra.mxu0 0
        %8673 = vmatprep.subr.bf16.mxu0 0
        %8674 = vmatpush1.bf16.msra.mxu0 0
        %8675 = vmatprep.mubr.bf16.mxu0 0
        %8676 = vmatmul.mubr.bf16.gmra.mrb[0].mxu0 %v8325
        %v8677 = vpop.f32.mrb[0].mxu0
        %v8678 = vadd.f32 %v1497, %v8677
        %v8679 = vpop.f32.mrb[0].mxu0
        %v8680 = vpop.f32.mrb[0].mxu0
        %v8681 = vadd.f32 %v1497, %v8680
        %v8682 = vpop.f32.mrb[0].mxu0
        %8683 = vmatprep.mubr.bf16.mxu0 0
        %8684 = vmatmul.mubr.bf16.gmra.mrb[0].mxu0 %v8328
        %v8685 = vpop.f32.mrb[0].mxu0
        %v8686 = vadd.f32 %v1497, %v8685
        %v8687 = vpop.f32.mrb[0].mxu0
        %v8688 = vpop.f32.mrb[0].mxu0
        %v8689 = vadd.f32 %v1497, %v8688
        %v8690 = vpop.f32.mrb[0].mxu0
        %8691 = vmatprep.mubr.bf16.mxu0 0
        %8692 = vmatmul.mubr.bf16.gmra.mrb[0].mxu0 %v8331
        %v8693 = vpop.f32.mrb[0].mxu0
        %v8694 = vadd.f32 %v1497, %v8693
        %v8695 = vpop.f32.mrb[0].mxu0
        %v8696 = vpop.f32.mrb[0].mxu0
        %v8697 = vadd.f32 %v1497, %v8696
        %v8698 = vpop.f32.mrb[0].mxu0
        %8699 = vmatprep.mubr.bf16.mxu0 0
        %8700 = vmatmul.mubr.bf16.gmra.mrb[0].mxu0 %v8334
        %v8701 = vpop.f32.mrb[0].mxu0
        %v8702 = vadd.f32 %v1497, %v8701
        %v8703 = vpop.f32.mrb[0].mxu0
        %v8704 = vpop.f32.mrb[0].mxu0
        %v8705 = vadd.f32 %v1497, %v8704
        %v8706 = vpop.f32.mrb[0].mxu0
        %8707 = vdwg.mxu0
        %8708 = vmatprep.subr.bf16.mxu0 0
        %8709 = vmatpush1.bf16.msra.mxu0 %v1592
        %8710 = vmatprep.subr.bf16.mxu0 0
        %8711 = vmatpush1.bf16.msra.mxu0 %v1593
        %8712 = vmatprep.subr.bf16.mxu0 0
        %8713 = vmatpush1.bf16.msra.mxu0 0
        %8714 = vmatprep.subr.bf16.mxu0 0
        %8715 = vmatpush1.bf16.msra.mxu0 0
        %8716 = vmatprep.subr.bf16.mxu0 0
        %8717 = vmatpush1.bf16.msra.mxu0 0
        %8718 = vmatprep.subr.bf16.mxu0 0
        %8719 = vmatpush1.bf16.msra.mxu0 0
        %8720 = vmatprep.subr.bf16.mxu0 0
        %8721 = vmatpush1.bf16.msra.mxu0 0
        %8722 = vmatprep.subr.bf16.mxu0 0
        %8723 = vmatpush1.bf16.msra.mxu0 0
        %8724 = vmatprep.subr.bf16.mxu0 0
        %8725 = vmatpush1.bf16.msra.mxu0 0
        %8726 = vmatprep.subr.bf16.mxu0 0
        %8727 = vmatpush1.bf16.msra.mxu0 0
        %8728 = vmatprep.subr.bf16.mxu0 0
        %8729 = vmatpush1.bf16.msra.mxu0 0
        %8730 = vmatprep.subr.bf16.mxu0 0
        %8731 = vmatpush1.bf16.msra.mxu0 0
        %8732 = vmatprep.subr.bf16.mxu0 0
        %8733 = vmatpush1.bf16.msra.mxu0 0
        %8734 = vmatprep.subr.bf16.mxu0 0
        %8735 = vmatpush1.bf16.msra.mxu0 0
        %8736 = vmatprep.subr.bf16.mxu0 0
        %8737 = vmatpush1.bf16.msra.mxu0 0
        %8738 = vmatprep.subr.bf16.mxu0 0
        %8739 = vmatpush1.bf16.msra.mxu0 0
        %8740 = vmatprep.mubr.bf16.mxu0 0
        %8741 = vmatmul.mubr.bf16.gmra.mrb[0].mxu0 %v7818
        %v8742 = vpop.f32.mrb[0].mxu0
        %v8743 = vadd.f32 %v1583, %v8742
        %v8744 = vpop.f32.mrb[0].mxu0
        %v8745 = vpop.f32.mrb[0].mxu0
        %v8746 = vadd.f32 %v1583, %v8745
        %v8747 = vpop.f32.mrb[0].mxu0
        %8748 = vmatprep.mubr.bf16.mxu0 0
        %8749 = vmatmul.mubr.bf16.gmra.mrb[0].mxu0 %v7821
        %v8750 = vpop.f32.mrb[0].mxu0
        %v8751 = vadd.f32 %v1583, %v8750
        %v8752 = vpop.f32.mrb[0].mxu0
        %v8753 = vpop.f32.mrb[0].mxu0
        %v8754 = vadd.f32 %v1583, %v8753
        %v8755 = vpop.f32.mrb[0].mxu0
        %8756 = vmatprep.mubr.bf16.mxu0 0
        %8757 = vmatmul.mubr.bf16.gmra.mrb[0].mxu0 %v7824
        %v8758 = vpop.f32.mrb[0].mxu0
        %v8759 = vadd.f32 %v1583, %v8758
        %v8760 = vpop.f32.mrb[0].mxu0
        %v8761 = vpop.f32.mrb[0].mxu0
        %v8762 = vadd.f32 %v1583, %v8761
        %v8763 = vpop.f32.mrb[0].mxu0
        %8764 = vmatprep.mubr.bf16.mxu0 0
        %8765 = vmatmul.mubr.bf16.gmra.mrb[0].mxu0 %v7827
        %v8766 = vpop.f32.mrb[0].mxu0
        %v8767 = vadd.f32 %v1583, %v8766
        %v8768 = vpop.f32.mrb[0].mxu0
        %v8769 = vpop.f32.mrb[0].mxu0
        %v8770 = vadd.f32 %v1583, %v8769
        %v8771 = vpop.f32.mrb[0].mxu0
        %8772 = vdwg.mxu0
        %v8773 = vmul.f32 %v8442, %v8743
        %v8774 = vmul.f32 %v8444, %v8746
        %v8775 = vmul.f32 %v8446, %v8751
        %v8776 = vmul.f32 %v8448, %v8754
        %v8777 = vmul.f32 %v8450, %v8759
        %v8778 = vmul.f32 %v8452, %v8762
        %v8779 = vmul.f32 %v8454, %v8767
        %v8780 = vmul.f32 %v8456, %v8770
        %v8781 = vadd.f32 %v8678, %v8773
        %v8782 = vadd.f32 %v8681, %v8774
        %v8783 = vadd.f32 %v8686, %v8775
        %v8784 = vadd.f32 %v8689, %v8776
        %v8785 = vadd.f32 %v8694, %v8777
        %v8786 = vadd.f32 %v8697, %v8778
        %v8787 = vadd.f32 %v8702, %v8779
        %v8788 = vadd.f32 %v8705, %v8780
        %v8789 = vtanh.pop %v8781
        %v8790 = vtanh.pop %v8782
        %v8791 = vtanh.pop %v8783
        %v8792 = vtanh.pop %v8784
        %v8793 = vtanh.pop %v8785
        %v8794 = vtanh.pop %v8786
        %v8795 = vtanh.pop %v8787
        %v8796 = vtanh.pop %v8788
        %v8797 = vsub.f32 1.0, %v8628
        %v8798 = vsub.f32 1.0, %v8630
        %v8799 = vsub.f32 1.0, %v8632
        %v8800 = vsub.f32 1.0, %v8634
        %v8801 = vsub.f32 1.0, %v8636
        %v8802 = vsub.f32 1.0, %v8638
        %v8803 = vsub.f32 1.0, %v8640
        %v8804 = vsub.f32 1.0, %v8642
        %v8805 = vmul.f32 %v8797, %v8789
        %v8806 = vmul.f32 %v8798, %v8790
        %v8807 = vmul.f32 %v8799, %v8791
        %v8808 = vmul.f32 %v8800, %v8792
        %v8809 = vmul.f32 %v8801, %v8793
        %v8810 = vmul.f32 %v8802, %v8794
        %v8811 = vmul.f32 %v8803, %v8795
        %v8812 = vmul.f32 %v8804, %v8796
        %v8813 = vmul.f32 %v8628, %v7805
        %v8814 = vmul.f32 %v8630, %v7806
        %v8815 = vmul.f32 %v8632, %v7807
        %v8816 = vmul.f32 %v8634, %v7808
        %v8817 = vmul.f32 %v8636, %v7809
        %v8818 = vmul.f32 %v8638, %v7810
        %v8819 = vmul.f32 %v8640, %v7811
        %v8820 = vmul.f32 %v8642, %v7812
        %v8821 = vadd.f32 %v8805, %v8813
        %v8822 = vadd.f32 %v8806, %v8814
        %v8823 = vadd.f32 %v8807, %v8815
        %v8824 = vadd.f32 %v8808, %v8816
        %v8825 = vadd.f32 %v8809, %v8817
        %v8826 = vadd.f32 %v8810, %v8818
        %v8827 = vadd.f32 %v8811, %v8819
        %v8828 = vadd.f32 %v8812, %v8820
        %v8829 = vsel %vm431, %v8821, 0.0
        %v8830 = vsel %vm431, %v8822, 0.0
        %v8831 = vadd.f32 %v8829, %v8830
        %v8832 = vrot.slane %v8831, 4
        %v8833 = vadd.f32 %v8831, %v8832
        %v8834 = vrot.slane %v8833, 2
        %v8835 = vadd.f32 %v8833, %v8834
        %v8836 = vrot.slane %v8835, 1
        %v8837 = vadd.f32 %v8835, %v8836
        %v8838 = vsel %vm431, %v8823, 0.0
        %v8839 = vsel %vm431, %v8824, 0.0
        %v8840 = vadd.f32 %v8838, %v8839
        %v8841 = vrot.slane %v8840, 4
        %v8842 = vadd.f32 %v8840, %v8841
        %v8843 = vrot.slane %v8842, 2
        %v8844 = vadd.f32 %v8842, %v8843
        %v8845 = vrot.slane %v8844, 1
        %v8846 = vadd.f32 %v8844, %v8845
        %v8847 = vsel %vm431, %v8825, 0.0
        %v8848 = vsel %vm431, %v8826, 0.0
        %v8849 = vadd.f32 %v8847, %v8848
        %v8850 = vrot.slane %v8849, 4
        %v8851 = vadd.f32 %v8849, %v8850
        %v8852 = vrot.slane %v8851, 2
        %v8853 = vadd.f32 %v8851, %v8852
        %v8854 = vrot.slane %v8853, 1
        %v8855 = vadd.f32 %v8853, %v8854
        %v8856 = vsel %vm431, %v8827, 0.0
        %v8857 = vsel %vm431, %v8828, 0.0
        %v8858 = vadd.f32 %v8856, %v8857
        %v8859 = vrot.slane %v8858, 4
        %v8860 = vadd.f32 %v8858, %v8859
        %v8861 = vrot.slane %v8860, 2
        %v8862 = vadd.f32 %v8860, %v8861
        %v8863 = vrot.slane %v8862, 1
        %v8864 = vadd.f32 %v8862, %v8863
        %vm8865 = vcmask 1040384
        %v8866 = vsel %vm8865, %v8837, %v8846
        %vm8867 = vcmask 1041408
        %v8868 = vsel %vm8867, %v8866, %v8855
        %vm8869 = vcmask 1042432
        %v8870 = vsel %vm8869, %v8868, %v8864
        %vm8871 = vcmask 1043456
        %v8872 = vsel %vm8871, %v8870, 0.0
        %v8873 = vld [vmem:[#allocation2] sm:$0xff]
        %v8874 = vld [vmem:[#allocation2 + $0x8] sm:$0xff]
        %v8875 = vld [vmem:[#allocation2 + $0x10] sm:$0xff]
        %v8876 = vld [vmem:[#allocation2 + $0x18] sm:$0xff]
        %v8877 = vld [vmem:[%s8] sm:$0x1]
        %v8879 = vlaneseq
        %v8880 = vshrl.u32 %v8879, 7
        %v8881 = vsub.s32 0, %v8880
        %v8882 = vrot.slane %v8877, %v8881
        %v8885 = vsel %vm431, %v8872, 0
        %8887 = vmatprep.subr.mxu0 0.0
        %8888 = vmatpush1.msra.mxu0 %v8873
        %8889 = vmatprep.subr.mxu0 0.0
        %8890 = vmatpush1.msra.mxu0 %v8874
        %8891 = vmatprep.subr.mxu0 0.0
        %8892 = vmatpush1.msra.mxu0 %v8875
        %8893 = vmatprep.subr.mxu0 0.0
        %8894 = vmatpush1.msra.mxu0 %v8876
        %8895 = vmatprep.subr.mxu0 0.0
        %8896 = vmatpush1.msra.mxu0 0.0
        %8897 = vmatprep.subr.mxu0 0.0
        %8898 = vmatpush1.msra.mxu0 0.0
        %8899 = vmatprep.subr.mxu0 0.0
        %8900 = vmatpush1.msra.mxu0 0.0
        %8901 = vmatprep.subr.mxu0 0.0
        %8902 = vmatpush1.msra.mxu0 0.0
        %8903 = vmatprep.subr.mxu0 0.0
        %8904 = vmatpush1.msra.mxu0 0.0
        %8905 = vmatprep.subr.mxu0 0.0
        %8906 = vmatpush1.msra.mxu0 0.0
        %8907 = vmatprep.subr.mxu0 0.0
        %8908 = vmatpush1.msra.mxu0 0.0
        %8909 = vmatprep.subr.mxu0 0.0
        %8910 = vmatpush1.msra.mxu0 0.0
        %8911 = vmatprep.subr.mxu0 0.0
        %8912 = vmatpush1.msra.mxu0 0.0
        %8913 = vmatprep.subr.mxu0 0.0
        %8914 = vmatpush1.msra.mxu0 0.0
        %8915 = vmatprep.subr.mxu0 0.0
        %8916 = vmatpush1.msra.mxu0 0.0
        %8917 = vmatprep.subr.mxu0 0.0
        %8918 = vmatpush1.msra.mxu0 0.0
        %8919 = vmatprep.subr.mxu0 0.0
        %8920 = vmatpush1.msra.mxu0 0.0
        %8921 = vmatprep.subr.mxu0 0.0
        %8922 = vmatpush1.msra.mxu0 0.0
        %8923 = vmatprep.subr.mxu0 0.0
        %8924 = vmatpush1.msra.mxu0 0.0
        %8925 = vmatprep.subr.mxu0 0.0
        %8926 = vmatpush1.msra.mxu0 0.0
        %8927 = vmatprep.subr.mxu0 0.0
        %8928 = vmatpush1.msra.mxu0 0.0
        %8929 = vmatprep.subr.mxu0 0.0
        %8930 = vmatpush1.msra.mxu0 0.0
        %8931 = vmatprep.subr.mxu0 0.0
        %8932 = vmatpush1.msra.mxu0 0.0
        %8933 = vmatprep.subr.mxu0 0.0
        %8934 = vmatpush1.msra.mxu0 0.0
        %8935 = vmatprep.subr.mxu0 0.0
        %8936 = vmatpush1.msra.mxu0 0.0
        %8937 = vmatprep.subr.mxu0 0.0
        %8938 = vmatpush1.msra.mxu0 0.0
        %8939 = vmatprep.subr.mxu0 0.0
        %8940 = vmatpush1.msra.mxu0 0.0
        %8941 = vmatprep.subr.mxu0 0.0
        %8942 = vmatpush1.msra.mxu0 0.0
        %8943 = vmatprep.subr.mxu0 0.0
        %8944 = vmatpush1.msra.mxu0 0.0
        %8945 = vmatprep.subr.mxu0 0.0
        %8946 = vmatpush1.msra.mxu0 0.0
        %8947 = vmatprep.subr.mxu0 0.0
        %8948 = vmatpush1.msra.mxu0 0.0
        %8949 = vmatprep.subr.mxu0 0.0
        %8950 = vmatpush1.msra.mxu0 0.0
        %8951 = vmatprep.mubr.f32.mxu0 0.0
        %8952 = vmatmul.mubr.f32.gmra.mrb[0].mxu0 %v8885
        %v8953 = vpop.f32.mrb[0].mxu0
        %v8954 = vadd.f32 %v8882, %v8953
        %v8955 = vpop.f32.mrb[0].mxu0
        %8956 = vdwg.mxu0
        %8957 = vmax.xlane.f32.xlu0 %v8954
        %v8958 = vpop.xlane.xlu0 %8957
        %v8959 = vsub.f32 %v8954, %v8958
        %v8960 = vmul.f32 %v8959, 1.442695
        %v8961 = vpow.pop %v8960
        %8962 = vadd.xlane.f32.xlu0 %v8961
        %v8963 = vpop.xlane.xlu0 %8962
        %v8964 = vrcp.pop %v8963
        %v8965 = vmul.f32 %v8961, %v8964
        %8966 = vst [vmem:[%s372] sm:$0xff] %v8965
        %s8967 = sand.u32 %s236, 1
        %s8968 = scalar_lea.sflag [#allocation4], %s8967
        %s8969 = sand.u32 %s236, 1
        %s8970 = smul.addr %s8969, 8
        %s8971 = scalar_lea.vmem [#allocation5], %s8970
        // Predicated region
        $region61: #{tpu_custom_call.1} parent=55 // pred_check
          %p8972 = pneg %p246
        $region62: #{tpu_custom_call.1} parent=55 // pred_check_branch
          %8974 = sbr.rel (%p8972) target = $region64
        $region63: #{tpu_custom_call.1} parent=55 // pred_region
          %s8976 = ssub.s32 128, 128
          %8977 = vsyncadd %s8968, %s8976
          %s8978 = smul.addr %s24, 128
          %s8979 = scalar_lea.hbm %s9, %s8978
          %s8981 = sshll.u32 %s8971, 4
          %s8982 = int_to_ptr.vmem [resolvable:$true] %s8981
          %8984 = dma.vmem_to_hbm [thread:$0]  %s8982, 128, %s8979, %s8968
        $region64: #{tpu_custom_call.1} parent=55 // pred_fallthru
          _
      $region56: #{tpu_custom_call.1} parent=5 // pred_fallthru
        _
      %p8985 = scmp.le.s32.totalorder 2, %s19
      // Predicated region
      $region65: #{tpu_custom_call.1} parent=5 // pred_check
        %p8986 = pneg %p8985
      $region66: #{tpu_custom_call.1} parent=5 // pred_check_branch
        %8988 = sbr.rel (%p8986) target = $region68
      $region67: #{tpu_custom_call.1} parent=5 // pred_region
        %s8989 = ssub.s32 %s19, 2
        // Predicated region
        $region69: #{tpu_custom_call.1} parent=67 // pred_check
          %p8990 = pneg %p252
        $region70: #{tpu_custom_call.1} parent=67 // pred_check_branch
          %8992 = sbr.rel (%p8990) target = $region72
        $region71: #{tpu_custom_call.1} parent=67 // pred_region
          %s8993 = sand.u32 %s237, 1
          %s8994 = scalar_lea.sflag [#allocation4], %s8993
          %s8995 = sand.u32 %s237, 1
          %s8996 = smul.addr %s8995, 8
          %s8997 = scalar_lea.vmem [#allocation5], %s8996
          %8998 = dma.done %s8994, 128
        $region72: #{tpu_custom_call.1} parent=67 // pred_fallthru
          _
      $region68: #{tpu_custom_call.1} parent=5 // pred_fallthru
        _
    $region6: #{tpu_custom_call.1} parent=1 // loop_footer
      %s23 = sadd.s32 1, %s19
    $region7: #{tpu_custom_call.1} parent=1 // loop_footer_branch
      %18 = sbr.rel target = $region3
    $region8: #{tpu_custom_call.1} parent=1 // loop_exit
      _
    %8999 = vsyncpa [#allocation3], 1
    %s9000 = scalar_lea.sflag [#allocation3], 1
    %9001 = vsyncpa %s9000, 1
    %9002 = vsyncpa [#allocation4], 1
    %s9003 = scalar_lea.sflag [#allocation4], 1
    %9004 = vsyncpa %s9003, 1

</llo_original>
